<compile_context>
chip_gen: v7x
topology: tpu7x:2x2x1
jax: 0.10.0
libtpu: 0.0.40
codegen_flags: <defaults>
</compile_context>

<pallas_src>
import functools
import math

import jax
import jax.numpy as jnp
from jax.experimental import pallas as pl
from jax.experimental.pallas import tpu as pltpu

BN_EPS = 1e-5
VMEM_LIMIT = 32 * 1024 * 1024  # explicit scoped-VMEM budget (safe on v5e/v6e/v7x)


def _round_up(x, m):
    return ((x + m - 1) // m) * m


def _next_pow2(x):
    return 1 << (max(1, int(x)) - 1).bit_length()


# ----------------------------------------------------------------------------- fused MLP

def _fused_mlp_kernel(*refs, relus, final_log_softmax):
    """refs = (x_tile, W0, b0, W1, b1, ..., out_tile).  All layers chained in VMEM."""
    n_layers = len(relus)
    x_ref = refs[0]
    o_ref = refs[-1]
    h = x_ref[...]
    for l in range(n_layers):
        w = refs[1 + 2 * l][...]
        b = refs[2 + 2 * l][...]
        h = jnp.dot(h, w, preferred_element_type=jnp.float32) + b
        if relus[l]:
            h = jnp.maximum(h, 0.0)
    if final_log_softmax:
        m = jnp.max(h, axis=-1, keepdims=True)
        h = h - m
        h = h - jnp.log(jnp.sum(jnp.exp(h), axis=-1, keepdims=True))
    o_ref[...] = h


def fused_mlp(x, layers, final_log_softmax=False, block_rows=256):
    """One pallas_call for a whole PyG-style MLP (Linear + folded eval-BN + ReLU per layer,
    plain last layer).  Activations never round-trip through HBM between layers; weights
    stay resident across row tiles."""
    m, _ = x.shape
    cout = layers[-1]["W"].shape[1]
    tm = min(block_rows, _round_up(m, 8))
    m_pad = _round_up(m, tm)
    if m_pad != m:
        x = jnp.pad(x, ((0, m_pad - m), (0, 0)))

    in_specs = [pl.BlockSpec((tm, x.shape[1]), lambda i: (i, 0))]
    args = [x]
    for layer in layers:
        ci, co = layer["W"].shape
        in_specs.append(pl.BlockSpec((ci, co), lambda i: (0, 0)))   # resident weight
        in_specs.append(pl.BlockSpec((1, co), lambda i: (0, 0)))    # resident bias
        args += [layer["W"], layer["b"]]
    relus = tuple(bool(l["relu"]) for l in layers)

    out = pl.pallas_call(
        functools.partial(_fused_mlp_kernel, relus=relus,
                          final_log_softmax=final_log_softmax),
        out_shape=jax.ShapeDtypeStruct((m_pad, cout), jnp.float32),
        grid=(m_pad // tm,),
        in_specs=in_specs,
        out_specs=pl.BlockSpec((tm, cout), lambda i: (i, 0)),
        compiler_params=pltpu.CompilerParams(
            dimension_semantics=("parallel",),
            vmem_limit_bytes=VMEM_LIMIT),
    )(*args)
    return out[:m] if m_pad != m else out


# ----------------------------------------------------------------------------- fused PointNetConv

def _pointnet_conv_kernel(*refs, relus, r2):
    """Fused edge-feature construction + edge MLP + masked max over neighbours.

    Flat edge layout within a (target-tile, source-tile) pair: row = j_src * T + i_tgt.
    Edge rows are built from per-node tiles via two local one-hot expansion matrices
    (pure matmuls), layer 1 uses the linearity of Linear over cat[x_j, pos_j - pos_i],
    and the per-target max over sources is a log2(T) contiguous-halving fold.
    """
    n_layers = len(relus)
    (e_src_ref, e_tgt_ref, x_ref, pos_s_ref, bat_s_ref,
     pos_t_ref, bat_t_ref, w1x_ref, w1p_ref, b1_ref) = refs[:10]
    rest = refs[10:]
    tail = rest[:2 * (n_layers - 1)]
    o_ref = rest[-2]
    acc_ref = rest[-1]

    s_idx = pl.program_id(1)

    @pl.when(s_idx == 0)
    def _init():
        acc_ref[...] = jnp.full_like(acc_ref, -jnp.inf)

    e_src = e_src_ref[...]          # (T*T, T): row -> one-hot(source j)
    e_tgt = e_tgt_ref[...]          # (T*T, T): row -> one-hot(target i)
    x_s = x_ref[...]                # (T, F)   source-tile features
    pos_s = pos_s_ref[...]          # (T, 2)
    bat_s = bat_s_ref[...]          # (T, 1)
    pos_t = pos_t_ref[...]          # (T, 2)
    bat_t = bat_t_ref[...]          # (T, 1)

    # Per-edge geometry / validity, all in flat (T*T, .) layout.
    pos_sf = jnp.dot(e_src, pos_s, preferred_element_type=jnp.float32)
    pos_tf = jnp.dot(e_tgt, pos_t, preferred_element_type=jnp.float32)
    rel = pos_sf - pos_tf                              # pos_j - pos_i
    d2 = jnp.sum(rel * rel, axis=1, keepdims=True)     # (T*T, 1)
    bat_sf = jnp.dot(e_src, bat_s, preferred_element_type=jnp.float32)
    bat_tf = jnp.dot(e_tgt, bat_t, preferred_element_type=jnp.float32)
    valid = (jnp.abs(bat_sf - bat_tf) < 0.5) & (d2 <= r2)   # (T*T, 1)

    # Layer 1 via linearity:  cat[x_j, pos_j - pos_i] @ W1 + b1
    #   = E_src @ (x W1x + pos W1p) - E_tgt @ (pos_t W1p) + b1
    a_src = (jnp.dot(x_s, w1x_ref[...], preferred_element_type=jnp.float32)
             + jnp.dot(pos_s, w1p_ref[...], preferred_element_type=jnp.float32))
    b_tgt = jnp.dot(pos_t, w1p_ref[...], preferred_element_type=jnp.float32)
    h = (jnp.dot(e_src, a_src, preferred_element_type=jnp.float32)
         - jnp.dot(e_tgt, b_tgt, preferred_element_type=jnp.float32)
         + b1_ref[...])
    if relus[0]:
        h = jnp.maximum(h, 0.0)

    for l in range(n_layers - 1):
        w = tail[2 * l][...]
        b = tail[2 * l + 1][...]
        h = jnp.dot(h, w, preferred_element_type=jnp.float32) + b
        if relus[l + 1]:
            h = jnp.maximum(h, 0.0)

    # Masked max over this source tile for each target (contiguous-halving folds).
    h = jnp.where(valid, h, -jnp.inf)
    t = e_tgt.shape[1]
    rows = h.shape[0]
    while rows > t:
        half = rows // 2
        h = jnp.maximum(h[:half, :], h[half:, :])
        rows = half
    acc_ref[...] = jnp.maximum(acc_ref[...], h)

    @pl.when(s_idx == pl.num_programs(1) - 1)
    def _finish():
        acc = acc_ref[...]
        # Targets with zero valid neighbours (only padded rows here) get 0, not -inf.
        o_ref[...] = jnp.where(acc == -jnp.inf, 0.0, acc)


def pointnet_conv(x, pos, batch_col, radius_r, layers, tile=32):
    """Dense PointNetConv (same-graph, within-radius neighbours, max aggregation),
    fully fused: the O(N^2) edge tensor never touches HBM.
    TODO(synk): torch_cluster's max_num_neighbors truncation (first-K by index) is not
    implemented; the example uses max_neighbors >= N so it is a no-op."""
    n, f = x.shape
    cout = layers[-1]["W"].shape[1]
    t = max(8, min(tile, _next_pow2(n)))          # power-of-two tile, >= 8 sublanes
    n_pad = _round_up(n, t)
    if n_pad != n:
        pad = n_pad - n
        x = jnp.pad(x, ((0, pad), (0, 0)))
        pos = jnp.pad(pos, ((0, pad), (0, 0)))
        batch_col = jnp.pad(batch_col, ((0, pad), (0, 0)), constant_values=-1.0)
    nt = n_pad // t

    # Local one-hot expansion matrices for the flat edge layout (row = j*t + i).
    r_idx = jnp.arange(t * t)
    c_idx = jnp.arange(t)
    e_src = (r_idx[:, None] // t == c_idx[None, :]).astype(jnp.float32)
    e_tgt = (r_idx[:, None] % t == c_idx[None, :]).astype(jnp.float32)

    w1 = layers[0]["W"]
    w1x, w1p = w1[:f, :], w1[f:, :]
    c1 = w1.shape[1]
    relus = tuple(bool(l["relu"]) for l in layers)

    in_specs = [
        pl.BlockSpec((t * t, t), lambda i, s: (0, 0)),   # e_src (resident)
        pl.BlockSpec((t * t, t), lambda i, s: (0, 0)),   # e_tgt (resident)
        pl.BlockSpec((t, f), lambda i, s: (s, 0)),       # x       (source tile)
        pl.BlockSpec((t, 2), lambda i, s: (s, 0)),       # pos     (source tile)
        pl.BlockSpec((t, 1), lambda i, s: (s, 0)),       # batch   (source tile)
        pl.BlockSpec((t, 2), lambda i, s: (i, 0)),       # pos     (target tile)
        pl.BlockSpec((t, 1), lambda i, s: (i, 0)),       # batch   (target tile)
        pl.BlockSpec((f, c1), lambda i, s: (0, 0)),      # W1[:f]
        pl.BlockSpec((2, c1), lambda i, s: (0, 0)),      # W1[f:]
        pl.BlockSpec((1, c1), lambda i, s: (0, 0)),      # b1
    ]
    args = [e_src, e_tgt, x, pos, batch_col, pos, batch_col, w1x, w1p, layers[0]["b"]]
    for layer in layers[1:]:
        ci, co = layer["W"].shape
        in_specs.append(pl.BlockSpec((ci, co), lambda i, s: (0, 0)))
        in_specs.append(pl.BlockSpec((1, co), lambda i, s: (0, 0)))
        args += [layer["W"], layer["b"]]

    mlp_flops = sum(2 * l["W"].shape[0] * l["W"].shape[1] for l in layers)
    per_edge_flops = mlp_flops + 4 * t * c1
    cost = pl.CostEstimate(
        flops=int(nt * nt * t * t * per_edge_flops),
        transcendentals=0,
        bytes_accessed=int(4 * (nt * n_pad * (f + 3) + n_pad * cout)),
    )

    out = pl.pallas_call(
        functools.partial(_pointnet_conv_kernel, relus=relus,
                          r2=float(radius_r) ** 2),
        out_shape=jax.ShapeDtypeStruct((n_pad, cout), jnp.float32),
        grid=(nt, nt),                                   # (target tiles, source tiles)
        in_specs=in_specs,
        out_specs=pl.BlockSpec((t, cout), lambda i, s: (i, 0)),
        scratch_shapes=[pltpu.VMEM((t, cout), jnp.float32)],
        compiler_params=pltpu.CompilerParams(
            dimension_semantics=("parallel", "arbitrary"),
            vmem_limit_bytes=VMEM_LIMIT),
        cost_estimate=cost,
    )(*args)
    return out[:n] if n_pad != n else out


# ----------------------------------------------------------------------------- global max pool

def _global_max_pool_kernel(x_ref, bat_ref, o_ref, *, num_rows_out):
    x = x_ref[...]          # (N, TC)
    bat = bat_ref[...]      # (N, 1)
    for g in range(num_rows_out):
        sel = jnp.abs(bat - jnp.float32(g)) < 0.5            # (N, 1), broadcast over lanes
        xm = jnp.where(sel, x, -jnp.inf)
        row = jnp.max(xm, axis=0, keepdims=True)             # (1, TC)
        o_ref[pl.ds(g, 1), :] = jnp.where(row == -jnp.inf, 0.0, row)


def global_max_pool(x, batch_col, num_graphs, block_cols=256):
    """Per-graph max over nodes; mask computed in-kernel from the batch column (no
    (G, N, C) broadcast in HBM).  Tiled + pipelined over channels."""
    n, c = x.shape
    g_pad = _round_up(max(int(num_graphs), 1), 8)
    tc = block_cols if (c >= block_cols and c % block_cols == 0) else c
    out = pl.pallas_call(
        functools.partial(_global_max_pool_kernel, num_rows_out=g_pad),
        out_shape=jax.ShapeDtypeStruct((g_pad, c), jnp.float32),
        grid=(c // tc,),
        in_specs=[pl.BlockSpec((n, tc), lambda i: (0, i)),
                  pl.BlockSpec((n, 1), lambda i: (0, 0))],
        out_specs=pl.BlockSpec((g_pad, tc), lambda i: (0, i)),
        compiler_params=pltpu.CompilerParams(
            dimension_semantics=("parallel",),
            vmem_limit_bytes=VMEM_LIMIT),
    )(x, batch_col)
    return out[:num_graphs]


# ----------------------------------------------------------------------------- knn interpolate

def knn_interpolate(x, pos_src, batch_src, pos_dst, batch_dst, k):
    """torch_geometric.nn.unpool.knn_interpolate: inverse-squared-distance weighted mean
    of the k nearest same-graph source points.  O(T*k*C) gather + weighted sum.
    TODO(synk): the top_k/gather stays in plain JAX (data-dependent row gather)."""
    diff = pos_dst[:, None, :] - pos_src[None, :, :]
    d2 = jnp.sum(diff * diff, axis=-1)                        # (T, S)
    same = batch_dst[:, None] == batch_src[None, :]
    d2m = jnp.where(same, d2, jnp.float32(1e30))
    k_eff = min(int(k), pos_src.shape[0])
    neg_d, idx = jax.lax.top_k(-d2m, k_eff)                   # (T, k)
    w = 1.0 / jnp.maximum(-neg_d, 1e-16)                      # clamp(min=1e-16)
    w = w / jnp.sum(w, axis=1, keepdims=True)
    gathered = jnp.take(x, idx, axis=0)                       # (T, k, C)
    return jnp.sum(gathered * w[:, :, None], axis=1)


# ----------------------------------------------------------------------------- MLP params (PyG semantics)

def make_mlp_params(key, channels, plain_last=True):
    """torch_geometric.nn.MLP: Linear + BatchNorm1d + ReLU per layer, last layer plain.
    Eval-mode BatchNorm with fresh running stats (mean=0, var=1, gamma=1, beta=0) is
    folded directly into W/b (W' = W*scale, b' = b*scale + shift).  Dropout is identity
    in eval mode."""
    layers = []
    n = len(channels) - 1
    keys = jax.random.split(key, 2 * n)
    for i in range(n):
        cin, cout = channels[i], channels[i + 1]
        W = jax.random.normal(keys[2 * i], (cin, cout), jnp.float32) / math.sqrt(cin)
        b = 0.01 * jax.random.normal(keys[2 * i + 1], (cout,), jnp.float32)
        is_plain = plain_last and (i == n - 1)
        if is_plain:
            scale, relu = 1.0, False
        else:
            scale, relu = 1.0 / math.sqrt(1.0 + BN_EPS), True
        layers.append(dict(W=W * scale, b=(b * scale).reshape(1, cout), relu=relu))
    return layers


# ----------------------------------------------------------------------------- model

class PointNetSegPallas:
    def __init__(self, input_features, sa_ratio_1, sa_ratio_2, sa_radius_1, sa_radius_2,
                 max_neighbors, dropout, n_outputs, key):
        # The reference SetAbstraction keeps every point (idx = range(N)), so the ratios
        # are unused; dropout is identity in eval mode.
        del sa_ratio_1, sa_ratio_2, dropout
        self.r1 = float(sa_radius_1)
        self.r2 = float(sa_radius_2)
        self.max_neighbors = max_neighbors
        keys = jax.random.split(key, 7)
        self.sa1 = make_mlp_params(keys[0], [2 + input_features, 64, 64, 128])
        self.sa2 = make_mlp_params(keys[1], [128 + 2, 128, 128, 256])
        self.sa3 = make_mlp_params(keys[2], [256 + 2, 256, 512, 1024])
        self.fp3 = make_mlp_params(keys[3], [1024 + 256, 256, 256])
        self.fp2 = make_mlp_params(keys[4], [256 + 128, 256, 128])
        self.fp1 = make_mlp_params(keys[5], [128 + input_features, 128, 128, 128])
        self.head = make_mlp_params(keys[6], [128, 128, 128, n_outputs])

    def __call__(self, x, pos, batch, num_graphs):
        batch_col = batch.astype(jnp.float32).reshape(-1, 1)
        sa0_x, sa0_pos = x, pos

        # SetAbstraction 1 / 2 (all points kept) — fused conv kernels
        sa1_x = pointnet_conv(sa0_x, sa0_pos, batch_col, self.r1, self.sa1)
        sa2_x = pointnet_conv(sa1_x, sa0_pos, batch_col, self.r2, self.sa2)

        # GlobalSetAbstraction
        h = jnp.concatenate([sa2_x, sa0_pos], axis=1)
        h = fused_mlp(h, self.sa3)
        sa3_x = global_max_pool(h, batch_col, num_graphs)
        sa3_pos = jnp.zeros((num_graphs, sa0_pos.shape[1]), jnp.float32)
        sa3_batch = jnp.arange(num_graphs, dtype=jnp.int32)

        # FeaturePropagation 3 (k=1)
        xi = knn_interpolate(sa3_x, sa3_pos, sa3_batch, sa0_pos, batch, k=1)
        fp3_x = fused_mlp(jnp.concatenate([xi, sa2_x], axis=1), self.fp3)

        # FeaturePropagation 2 (k=3)
        xi = knn_interpolate(fp3_x, sa0_pos, batch, sa0_pos, batch, k=3)
        fp2_x = fused_mlp(jnp.concatenate([xi, sa1_x], axis=1), self.fp2)

        # FeaturePropagation 1 (k=3)
        xi = knn_interpolate(fp2_x, sa0_pos, batch, sa0_pos, batch, k=3)
        fp1_x = fused_mlp(jnp.concatenate([xi, sa0_x], axis=1), self.fp1)

        # Head MLP + fused log_softmax
        return fused_mlp(fp1_x, self.head, final_log_softmax=True)


# ----------------------------------------------------------------------------- main

if __name__ == "__main__":
    key = jax.random.PRNGKey(0)
    k_model, k_pos, k_x = jax.random.split(key, 3)

    B = 2            # graphs in the batch
    N_PER = 16       # points per graph
    F_IN = 3         # input_features
    N_OUT = 4        # n_outputs
    N = B * N_PER

    pos = jax.random.uniform(k_pos, (N, 2), jnp.float32)          # 2-D positions
    x = jax.random.normal(k_x, (N, F_IN), jnp.float32)            # node features
    batch = jnp.repeat(jnp.arange(B, dtype=jnp.int32), N_PER)     # graph id per node

    model = PointNetSegPallas(
        input_features=F_IN,
        sa_ratio_1=0.5, sa_ratio_2=0.25,
        sa_radius_1=0.5, sa_radius_2=1.0,
        max_neighbors=64,                 # >= N so radius truncation is a no-op
        dropout=0.1,
        n_outputs=N_OUT,
        key=k_model,
    )

    out = model(x, pos, batch, B)
    out = jax.block_until_ready(out)
    assert out.shape == (N, N_OUT)
    assert bool(jnp.all(jnp.isfinite(out)))
    print("KERNEL_OK")
</pallas_src>

<mosaic_0001>
module attributes {stable_mosaic.version = 11 : i64} {
  func.func @_pointnet_conv_kernel(%arg0: i32, %arg1: i32, %arg2: memref<1024x32xf32, #tpu.memory_space<vmem>>, %arg3: memref<1024x32xf32, #tpu.memory_space<vmem>>, %arg4: memref<32x3xf32, #tpu.memory_space<vmem>>, %arg5: memref<32x2xf32, #tpu.memory_space<vmem>>, %arg6: memref<32x1xf32, #tpu.memory_space<vmem>>, %arg7: memref<32x2xf32, #tpu.memory_space<vmem>>, %arg8: memref<32x1xf32, #tpu.memory_space<vmem>>, %arg9: memref<3x64xf32, #tpu.memory_space<vmem>>, %arg10: memref<2x64xf32, #tpu.memory_space<vmem>>, %arg11: memref<1x64xf32, #tpu.memory_space<vmem>>, %arg12: memref<64x64xf32, #tpu.memory_space<vmem>>, %arg13: memref<1x64xf32, #tpu.memory_space<vmem>>, %arg14: memref<64x128xf32, #tpu.memory_space<vmem>>, %arg15: memref<1x128xf32, #tpu.memory_space<vmem>>, %arg16: memref<32x128xf32, #tpu.memory_space<vmem>>, %arg17: memref<32x128xf32, #tpu.memory_space<vmem>>) attributes {dimension_semantics = [#tpu.dimension_semantics<parallel>, #tpu.dimension_semantics<arbitrary>], iteration_bounds = array<i64: 1, 1>, scalar_prefetch = 0 : i64, scratch_operands = 1 : i64, tpu.core_type = #tpu.core_type<tc>, window_params = [{pipeline_mode = #tpu.pipeline_mode<synchronous>, transform_indices = @transform_0, window_bounds = array<i64: 1024, 32>}, {pipeline_mode = #tpu.pipeline_mode<synchronous>, transform_indices = @transform_1, window_bounds = array<i64: 1024, 32>}, {transform_indices = @transform_2, window_bounds = array<i64: 32, 3>}, {transform_indices = @transform_3, window_bounds = array<i64: 32, 2>}, {transform_indices = @transform_4, window_bounds = array<i64: 32, 1>}, {transform_indices = @transform_5, window_bounds = array<i64: 32, 2>}, {transform_indices = @transform_6, window_bounds = array<i64: 32, 1>}, {pipeline_mode = #tpu.pipeline_mode<synchronous>, transform_indices = @transform_7, window_bounds = array<i64: 3, 64>}, {pipeline_mode = #tpu.pipeline_mode<synchronous>, transform_indices = @transform_8, window_bounds = array<i64: 2, 64>}, {pipeline_mode = #tpu.pipeline_mode<synchronous>, transform_indices = @transform_9, window_bounds = array<i64: 1, 64>}, {pipeline_mode = #tpu.pipeline_mode<synchronous>, transform_indices = @transform_10, window_bounds = array<i64: 64, 64>}, {pipeline_mode = #tpu.pipeline_mode<synchronous>, transform_indices = @transform_11, window_bounds = array<i64: 1, 64>}, {pipeline_mode = #tpu.pipeline_mode<synchronous>, transform_indices = @transform_12, window_bounds = array<i64: 64, 128>}, {pipeline_mode = #tpu.pipeline_mode<synchronous>, transform_indices = @transform_13, window_bounds = array<i64: 1, 128>}, {transform_indices = @transform_14, window_bounds = array<i64: 32, 128>}]} {
    %c0_i32 = arith.constant 0 : i32
    %0 = arith.cmpi eq, %arg1, %c0_i32 : i32
    %1 = arith.extui %0 : i1 to i32
    %c0_i32_0 = arith.constant 0 : i32
    %2 = arith.cmpi ne, %1, %c0_i32_0 : i32
    scf.if %2 {
      %cst_52 = arith.constant 0xFF800000 : f32
      %77 = vector.broadcast %cst_52 : f32 to vector<32x128xf32>
      %c0_53 = arith.constant 0 : index
      %c0_54 = arith.constant 0 : index
      %78 = vector.load %arg17[%c0_53, %c0_54] : memref<32x128xf32, #tpu.memory_space<vmem>>, vector<32x128xf32>
      tpu.vector_store %arg17[%c0_53, %c0_54], %77 {strides = array<i32>} : memref<32x128xf32, #tpu.memory_space<vmem>>, vector<32x128xf32>,
    } else {
    }
    %c0 = arith.constant 0 : index
    %c0_1 = arith.constant 0 : index
    %3 = vector.load %arg2[%c0, %c0_1] : memref<1024x32xf32, #tpu.memory_space<vmem>>, vector<1024x32xf32>
    %c0_2 = arith.constant 0 : index
    %c0_3 = arith.constant 0 : index
    %4 = vector.load %arg3[%c0_2, %c0_3] : memref<1024x32xf32, #tpu.memory_space<vmem>>, vector<1024x32xf32>
    %c0_4 = arith.constant 0 : index
    %c0_5 = arith.constant 0 : index
    %5 = vector.load %arg4[%c0_4, %c0_5] : memref<32x3xf32, #tpu.memory_space<vmem>>, vector<32x3xf32>
    %c0_6 = arith.constant 0 : index
    %c0_7 = arith.constant 0 : index
    %6 = vector.load %arg5[%c0_6, %c0_7] : memref<32x2xf32, #tpu.memory_space<vmem>>, vector<32x2xf32>
    %c0_8 = arith.constant 0 : index
    %c0_9 = arith.constant 0 : index
    %7 = vector.load %arg6[%c0_8, %c0_9] : memref<32x1xf32, #tpu.memory_space<vmem>>, vector<32x1xf32>
    %c0_10 = arith.constant 0 : index
    %c0_11 = arith.constant 0 : index
    %8 = vector.load %arg7[%c0_10, %c0_11] : memref<32x2xf32, #tpu.memory_space<vmem>>, vector<32x2xf32>
    %c0_12 = arith.constant 0 : index
    %c0_13 = arith.constant 0 : index
    %9 = vector.load %arg8[%c0_12, %c0_13] : memref<32x1xf32, #tpu.memory_space<vmem>>, vector<32x1xf32>
    %cst = arith.constant dense<0.000000e+00> : vector<1024x2xf32>
    %10 = tpu.matmul %3, %6, %cst {dimension_numbers = #tpu.dot_dimension_numbers<[1], [0], [0], [1], [0, 0, 1, 1], [], []>} : vector<1024x32xf32>, vector<32x2xf32>, vector<1024x2xf32> -> vector<1024x2xf32>
    %cst_14 = arith.constant dense<0.000000e+00> : vector<1024x2xf32>
    %11 = tpu.matmul %4, %8, %cst_14 {dimension_numbers = #tpu.dot_dimension_numbers<[1], [0], [0], [1], [0, 0, 1, 1], [], []>} : vector<1024x32xf32>, vector<32x2xf32>, vector<1024x2xf32> -> vector<1024x2xf32>
    %12 = arith.subf %10, %11 : vector<1024x2xf32>
    %13 = arith.mulf %12, %12 : vector<1024x2xf32>
    %cst_15 = arith.constant dense<0.000000e+00> : vector<1024xf32>
    %14 = vector.multi_reduction <add>, %13, %cst_15 [1] : vector<1024x2xf32> to vector<1024xf32>
    %15 = vector.shape_cast %14 : vector<1024xf32> to vector<1024x1xf32>
    %cst_16 = arith.constant dense<0.000000e+00> : vector<1024x1xf32>
    %16 = tpu.matmul %3, %7, %cst_16 {dimension_numbers = #tpu.dot_dimension_numbers<[1], [0], [0], [1], [0, 0, 1, 1], [], []>} : vector<1024x32xf32>, vector<32x1xf32>, vector<1024x1xf32> -> vector<1024x1xf32>
    %cst_17 = arith.constant dense<0.000000e+00> : vector<1024x1xf32>
    %17 = tpu.matmul %4, %9, %cst_17 {dimension_numbers = #tpu.dot_dimension_numbers<[1], [0], [0], [1], [0, 0, 1, 1], [], []>} : vector<1024x32xf32>, vector<32x1xf32>, vector<1024x1xf32> -> vector<1024x1xf32>
    %18 = arith.subf %16, %17 : vector<1024x1xf32>
    %19 = math.absf %18 : vector<1024x1xf32>
    %cst_18 = arith.constant 5.000000e-01 : f32
    %20 = vector.broadcast %cst_18 : f32 to vector<1024x1xf32>
    %21 = arith.cmpf olt, %19, %20 : vector<1024x1xf32>
    %cst_19 = arith.constant 2.500000e-01 : f32
    %22 = vector.broadcast %cst_19 : f32 to vector<1024x1xf32>
    %23 = arith.cmpf ole, %15, %22 : vector<1024x1xf32>
    %24 = arith.andi %21, %23 : vector<1024x1xi1>
    %c0_20 = arith.constant 0 : index
    %c0_21 = arith.constant 0 : index
    %25 = vector.load %arg9[%c0_20, %c0_21] : memref<3x64xf32, #tpu.memory_space<vmem>>, vector<3x64xf32>
    %cst_22 = arith.constant dense<0.000000e+00> : vector<32x64xf32>
    %26 = tpu.matmul %5, %25, %cst_22 {dimension_numbers = #tpu.dot_dimension_numbers<[1], [0], [0], [1], [0, 0, 1, 1], [], []>} : vector<32x3xf32>, vector<3x64xf32>, vector<32x64xf32> -> vector<32x64xf32>
    %c0_23 = arith.constant 0 : index
    %c0_24 = arith.constant 0 : index
    %27 = vector.load %arg10[%c0_23, %c0_24] : memref<2x64xf32, #tpu.memory_space<vmem>>, vector<2x64xf32>
    %cst_25 = arith.constant dense<0.000000e+00> : vector<32x64xf32>
    %28 = tpu.matmul %6, %27, %cst_25 {dimension_numbers = #tpu.dot_dimension_numbers<[1], [0], [0], [1], [0, 0, 1, 1], [], []>} : vector<32x2xf32>, vector<2x64xf32>, vector<32x64xf32> -> vector<32x64xf32>
    %29 = arith.addf %26, %28 : vector<32x64xf32>
    %c0_26 = arith.constant 0 : index
    %c0_27 = arith.constant 0 : index
    %30 = vector.load %arg10[%c0_26, %c0_27] : memref<2x64xf32, #tpu.memory_space<vmem>>, vector<2x64xf32>
    %cst_28 = arith.constant dense<0.000000e+00> : vector<32x64xf32>
    %31 = tpu.matmul %8, %30, %cst_28 {dimension_numbers = #tpu.dot_dimension_numbers<[1], [0], [0], [1], [0, 0, 1, 1], [], []>} : vector<32x2xf32>, vector<2x64xf32>, vector<32x64xf32> -> vector<32x64xf32>
    %cst_29 = arith.constant dense<0.000000e+00> : vector<1024x64xf32>
    %32 = tpu.matmul %3, %29, %cst_29 {dimension_numbers = #tpu.dot_dimension_numbers<[1], [0], [0], [1], [0, 0, 1, 1], [], []>} : vector<1024x32xf32>, vector<32x64xf32>, vector<1024x64xf32> -> vector<1024x64xf32>
    %cst_30 = arith.constant dense<0.000000e+00> : vector<1024x64xf32>
    %33 = tpu.matmul %4, %31, %cst_30 {dimension_numbers = #tpu.dot_dimension_numbers<[1], [0], [0], [1], [0, 0, 1, 1], [], []>} : vector<1024x32xf32>, vector<32x64xf32>, vector<1024x64xf32> -> vector<1024x64xf32>
    %34 = arith.subf %32, %33 : vector<1024x64xf32>
    %c0_31 = arith.constant 0 : index
    %c0_32 = arith.constant 0 : index
    %35 = vector.load %arg11[%c0_31, %c0_32] : memref<1x64xf32, #tpu.memory_space<vmem>>, vector<1x64xf32>
    %36 = vector.broadcast %35 : vector<1x64xf32> to vector<1024x64xf32>
    %37 = arith.addf %34, %36 : vector<1024x64xf32>
    %cst_33 = arith.constant 0.000000e+00 : f32
    %38 = vector.broadcast %cst_33 : f32 to vector<1024x64xf32>
    %39 = arith.maximumf %37, %38 : vector<1024x64xf32>
    %c0_34 = arith.constant 0 : index
    %c0_35 = arith.constant 0 : index
    %40 = vector.load %arg12[%c0_34, %c0_35] : memref<64x64xf32, #tpu.memory_space<vmem>>, vector<64x64xf32>
    %c0_36 = arith.constant 0 : index
    %c0_37 = arith.constant 0 : index
    %41 = vector.load %arg13[%c0_36, %c0_37] : memref<1x64xf32, #tpu.memory_space<vmem>>, vector<1x64xf32>
    %cst_38 = arith.constant dense<0.000000e+00> : vector<1024x64xf32>
    %42 = tpu.matmul %39, %40, %cst_38 {dimension_numbers = #tpu.dot_dimension_numbers<[1], [0], [0], [1], [0, 0, 1, 1], [], []>} : vector<1024x64xf32>, vector<64x64xf32>, vector<1024x64xf32> -> vector<1024x64xf32>
    %43 = vector.broadcast %41 : vector<1x64xf32> to vector<1024x64xf32>
    %44 = arith.addf %42, %43 : vector<1024x64xf32>
    %cst_39 = arith.constant 0.000000e+00 : f32
    %45 = vector.broadcast %cst_39 : f32 to vector<1024x64xf32>
    %46 = arith.maximumf %44, %45 : vector<1024x64xf32>
    %c0_40 = arith.constant 0 : index
    %c0_41 = arith.constant 0 : index
    %47 = vector.load %arg14[%c0_40, %c0_41] : memref<64x128xf32, #tpu.memory_space<vmem>>, vector<64x128xf32>
    %c0_42 = arith.constant 0 : index
    %c0_43 = arith.constant 0 : index
    %48 = vector.load %arg15[%c0_42, %c0_43] : memref<1x128xf32, #tpu.memory_space<vmem>>, vector<1x128xf32>
    %cst_44 = arith.constant dense<0.000000e+00> : vector<1024x128xf32>
    %49 = tpu.matmul %46, %47, %cst_44 {dimension_numbers = #tpu.dot_dimension_numbers<[1], [0], [0], [1], [0, 0, 1, 1], [], []>} : vector<1024x64xf32>, vector<64x128xf32>, vector<1024x128xf32> -> vector<1024x128xf32>
    %50 = vector.broadcast %48 : vector<1x128xf32> to vector<1024x128xf32>
    %51 = arith.addf %49, %50 : vector<1024x128xf32>
    %cst_45 = arith.constant 0xFF800000 : f32
    %52 = vector.shape_cast %24 : vector<1024x1xi1> to vector<1024x1xi1>
    %53 = vector.broadcast %52 : vector<1024x1xi1> to vector<1024x128xi1>
    %54 = vector.broadcast %cst_45 : f32 to vector<1024x128xf32>
    %55 = arith.select %53, %51, %54 : vector<1024x128xi1>, vector<1024x128xf32>
    %56 = vector.extract_strided_slice %55 {offsets = [0, 0], sizes = [512, 128], strides = [1, 1]} : vector<1024x128xf32> to vector<512x128xf32>
    %57 = vector.extract_strided_slice %55 {offsets = [512, 0], sizes = [512, 128], strides = [1, 1]} : vector<1024x128xf32> to vector<512x128xf32>
    %58 = arith.maximumf %56, %57 : vector<512x128xf32>
    %59 = vector.extract_strided_slice %58 {offsets = [0, 0], sizes = [256, 128], strides = [1, 1]} : vector<512x128xf32> to vector<256x128xf32>
    %60 = vector.extract_strided_slice %58 {offsets = [256, 0], sizes = [256, 128], strides = [1, 1]} : vector<512x128xf32> to vector<256x128xf32>
    %61 = arith.maximumf %59, %60 : vector<256x128xf32>
    %62 = vector.extract_strided_slice %61 {offsets = [0, 0], sizes = [128, 128], strides = [1, 1]} : vector<256x128xf32> to vector<128x128xf32>
    %63 = vector.extract_strided_slice %61 {offsets = [128, 0], sizes = [128, 128], strides = [1, 1]} : vector<256x128xf32> to vector<128x128xf32>
    %64 = arith.maximumf %62, %63 : vector<128x128xf32>
    %65 = vector.extract_strided_slice %64 {offsets = [0, 0], sizes = [64, 128], strides = [1, 1]} : vector<128x128xf32> to vector<64x128xf32>
    %66 = vector.extract_strided_slice %64 {offsets = [64, 0], sizes = [64, 128], strides = [1, 1]} : vector<128x128xf32> to vector<64x128xf32>
    %67 = arith.maximumf %65, %66 : vector<64x128xf32>
    %68 = vector.extract_strided_slice %67 {offsets = [0, 0], sizes = [32, 128], strides = [1, 1]} : vector<64x128xf32> to vector<32x128xf32>
    %69 = vector.extract_strided_slice %67 {offsets = [32, 0], sizes = [32, 128], strides = [1, 1]} : vector<64x128xf32> to vector<32x128xf32>
    %70 = arith.maximumf %68, %69 : vector<32x128xf32>
    %c0_46 = arith.constant 0 : index
    %c0_47 = arith.constant 0 : index
    %71 = vector.load %arg17[%c0_46, %c0_47] : memref<32x128xf32, #tpu.memory_space<vmem>>, vector<32x128xf32>
    %72 = arith.maximumf %71, %70 : vector<32x128xf32>
    %c0_48 = arith.constant 0 : index
    %c0_49 = arith.constant 0 : index
    %73 = vector.load %arg17[%c0_48, %c0_49] : memref<32x128xf32, #tpu.memory_space<vmem>>, vector<32x128xf32>
    tpu.vector_store %arg17[%c0_48, %c0_49], %72 {strides = array<i32>} : memref<32x128xf32, #tpu.memory_space<vmem>>, vector<32x128xf32>,
    %c0_i32_50 = arith.constant 0 : i32
    %74 = arith.cmpi eq, %arg1, %c0_i32_50 : i32
    %75 = arith.extui %74 : i1 to i32
    %c0_i32_51 = arith.constant 0 : i32
    %76 = arith.cmpi ne, %75, %c0_i32_51 : i32
    scf.if %76 {
      %c0_52 = arith.constant 0 : index
      %c0_53 = arith.constant 0 : index
      %77 = vector.load %arg17[%c0_52, %c0_53] : memref<32x128xf32, #tpu.memory_space<vmem>>, vector<32x128xf32>
      %cst_54 = arith.constant 0xFF800000 : f32
      %78 = vector.broadcast %cst_54 : f32 to vector<32x128xf32>
      %79 = arith.cmpf oeq, %77, %78 : vector<32x128xf32>
      %cst_55 = arith.constant 0.000000e+00 : f32
      %80 = vector.broadcast %cst_55 : f32 to vector<32x128xf32>
      %81 = arith.select %79, %80, %77 : vector<32x128xi1>, vector<32x128xf32>
      %c0_56 = arith.constant 0 : index
      %c0_57 = arith.constant 0 : index
      %82 = vector.load %arg16[%c0_56, %c0_57] : memref<32x128xf32, #tpu.memory_space<vmem>>, vector<32x128xf32>
      tpu.vector_store %arg16[%c0_56, %c0_57], %81 {strides = array<i32>} : memref<32x128xf32, #tpu.memory_space<vmem>>, vector<32x128xf32>,
    } else {
    }
    return
  }
  func.func @transform_0(%arg0: i32, %arg1: i32) -> (i32, i32) {
    %c0_i32 = arith.constant 0 : i32
    %c0_i32_0 = arith.constant 0 : i32
    %c0_i32_1 = arith.constant 0 : i32
    return %c0_i32, %c0_i32_0 : i32, i32
  }
  func.func @transform_1(%arg0: i32, %arg1: i32) -> (i32, i32) {
    %c0_i32 = arith.constant 0 : i32
    %c0_i32_0 = arith.constant 0 : i32
    %c0_i32_1 = arith.constant 0 : i32
    return %c0_i32, %c0_i32_0 : i32, i32
  }
  func.func @transform_2(%arg0: i32, %arg1: i32) -> (i32, i32) {
    %c0_i32 = arith.constant 0 : i32
    %c0_i32_0 = arith.constant 0 : i32
    return %arg1, %c0_i32 : i32, i32
  }
  func.func @transform_3(%arg0: i32, %arg1: i32) -> (i32, i32) {
    %c0_i32 = arith.constant 0 : i32
    %c0_i32_0 = arith.constant 0 : i32
    return %arg1, %c0_i32 : i32, i32
  }
  func.func @transform_4(%arg0: i32, %arg1: i32) -> (i32, i32) {
    %c0_i32 = arith.constant 0 : i32
    %c0_i32_0 = arith.constant 0 : i32
    return %arg1, %c0_i32 : i32, i32
  }
  func.func @transform_5(%arg0: i32, %arg1: i32) -> (i32, i32) {
    %c0_i32 = arith.constant 0 : i32
    %c0_i32_0 = arith.constant 0 : i32
    return %arg0, %c0_i32 : i32, i32
  }
  func.func @transform_6(%arg0: i32, %arg1: i32) -> (i32, i32) {
    %c0_i32 = arith.constant 0 : i32
    %c0_i32_0 = arith.constant 0 : i32
    return %arg0, %c0_i32 : i32, i32
  }
  func.func @transform_7(%arg0: i32, %arg1: i32) -> (i32, i32) {
    %c0_i32 = arith.constant 0 : i32
    %c0_i32_0 = arith.constant 0 : i32
    %c0_i32_1 = arith.constant 0 : i32
    return %c0_i32, %c0_i32_0 : i32, i32
  }
  func.func @transform_8(%arg0: i32, %arg1: i32) -> (i32, i32) {
    %c0_i32 = arith.constant 0 : i32
    %c0_i32_0 = arith.constant 0 : i32
    %c0_i32_1 = arith.constant 0 : i32
    return %c0_i32, %c0_i32_0 : i32, i32
  }
  func.func @transform_9(%arg0: i32, %arg1: i32) -> (i32, i32) {
    %c0_i32 = arith.constant 0 : i32
    %c0_i32_0 = arith.constant 0 : i32
    %c0_i32_1 = arith.constant 0 : i32
    return %c0_i32, %c0_i32_0 : i32, i32
  }
  func.func @transform_10(%arg0: i32, %arg1: i32) -> (i32, i32) {
    %c0_i32 = arith.constant 0 : i32
    %c0_i32_0 = arith.constant 0 : i32
    %c0_i32_1 = arith.constant 0 : i32
    return %c0_i32, %c0_i32_0 : i32, i32
  }
  func.func @transform_11(%arg0: i32, %arg1: i32) -> (i32, i32) {
    %c0_i32 = arith.constant 0 : i32
    %c0_i32_0 = arith.constant 0 : i32
    %c0_i32_1 = arith.constant 0 : i32
    return %c0_i32, %c0_i32_0 : i32, i32
  }
  func.func @transform_12(%arg0: i32, %arg1: i32) -> (i32, i32) {
    %c0_i32 = arith.constant 0 : i32
    %c0_i32_0 = arith.constant 0 : i32
    %c0_i32_1 = arith.constant 0 : i32
    return %c0_i32, %c0_i32_0 : i32, i32
  }
  func.func @transform_13(%arg0: i32, %arg1: i32) -> (i32, i32) {
    %c0_i32 = arith.constant 0 : i32
    %c0_i32_0 = arith.constant 0 : i32
    %c0_i32_1 = arith.constant 0 : i32
    return %c0_i32, %c0_i32_0 : i32, i32
  }
  func.func @transform_14(%arg0: i32, %arg1: i32) -> (i32, i32) {
    %c0_i32 = arith.constant 0 : i32
    %c0_i32_0 = arith.constant 0 : i32
    return %arg0, %c0_i32 : i32, i32
  }
}

</mosaic_0001>

<llo_original>
// kernel: tpu_custom_call.1
$region0: #{tpu_custom_call.1}
  #allocation0 [shape = 'u32[]', space=smem, size = 0x4, offset = 0x4, fixed_abs, tag = 'smem constant byte address 0x4 - core index']
  #allocation1 [shape = 'u32[144,128]{1,0:T(1,128)}', space=vmem, size = 0x12000, scoped, tag = 'internal scratch']
  #allocation2 [shape = 'f32[32,128]{1,0:T(8,128)}', space=vmem, size = 0x4000, scoped, tag = 'scratch operand']
  %s0 = inlined_call_operand.vmem [shape: f32[1024,32], index: 0, kind: input, shape index: {}]
  %s1 = inlined_call_operand.vmem [shape: f32[1024,32], index: 1, kind: input, shape index: {}]
  %s2 = inlined_call_operand.vmem [shape: f32[32,3], index: 2, kind: input, shape index: {}]
  %s3 = inlined_call_operand.vmem [shape: f32[32,2], index: 3, kind: input, shape index: {}]
  %s4 = inlined_call_operand.vmem [shape: f32[32,1], index: 4, kind: input, shape index: {}]
  %s5 = inlined_call_operand.vmem [shape: f32[32,2], index: 5, kind: input, shape index: {}]
  %s6 = inlined_call_operand.vmem [shape: f32[32,1], index: 6, kind: input, shape index: {}]
  %s7 = inlined_call_operand.vmem [shape: f32[3,64], index: 7, kind: input, shape index: {}]
  %s8 = inlined_call_operand.vmem [shape: f32[2,64], index: 8, kind: input, shape index: {}]
  %s9 = inlined_call_operand.vmem [shape: f32[1,64], index: 9, kind: input, shape index: {}]
  %s10 = inlined_call_operand.vmem [shape: f32[64,64], index: 10, kind: input, shape index: {}]
  %s11 = inlined_call_operand.vmem [shape: f32[1,64], index: 11, kind: input, shape index: {}]
  %s12 = inlined_call_operand.vmem [shape: f32[64,128], index: 12, kind: input, shape index: {}]
  %s13 = inlined_call_operand.vmem [shape: f32[1,128], index: 13, kind: input, shape index: {}]
  %s14 = inlined_call_operand.hbm [shape: f32[32,128], index: 14, kind: output, shape index: {}]
  %s15 = sld [smem:[#allocation0]]
  $region74: #{tpu_custom_call.1} parent=0
    _
  %s17 = ssub.s32 1, %s15
  %s18 = scalar_select 0, %s17, %s15
  $region1: #{tpu_custom_call.1} parent=0
    #allocation3 [shape = 'u8[16384]{0}', space=vmem, size = 0x4000, scoped, tag = 'output window, operand 0, single buffered']
    #allocation4 [shape = 's32[1]{0}', space=sflag, size = 0x4, scoped, tag = 'scoped memory for tpu_custom_call.1']
    %19 = vsyncpa [#allocation4], 0
    // Predicated region
    $region2: #{tpu_custom_call.1} parent=1 // pred_check
      _
    $region3: #{tpu_custom_call.1} parent=1 // pred_check_branch
      %21 = sbr.rel (0) target = $region5
    $region4: #{tpu_custom_call.1} parent=1 // pred_region
      _
    $region5: #{tpu_custom_call.1} parent=1 // pred_fallthru
      _
    // Predicated region
    $region6: #{tpu_custom_call.1} parent=1 // pred_check
      _
    $region7: #{tpu_custom_call.1} parent=1 // pred_check_branch
      %23 = sbr.rel (0) target = $region9
    $region8: #{tpu_custom_call.1} parent=1 // pred_region
      _
    $region9: #{tpu_custom_call.1} parent=1 // pred_fallthru
      _
    // Predicated region
    $region10: #{tpu_custom_call.1} parent=1 // pred_check
      _
    $region11: #{tpu_custom_call.1} parent=1 // pred_check_branch
      %25 = sbr.rel (0) target = $region13
    $region12: #{tpu_custom_call.1} parent=1 // pred_region
      _
    $region13: #{tpu_custom_call.1} parent=1 // pred_fallthru
      _
    // Predicated region
    $region14: #{tpu_custom_call.1} parent=1 // pred_check
      _
    $region15: #{tpu_custom_call.1} parent=1 // pred_check_branch
      %27 = sbr.rel (0) target = $region17
    $region16: #{tpu_custom_call.1} parent=1 // pred_region
      _
    $region17: #{tpu_custom_call.1} parent=1 // pred_fallthru
      _
    // Predicated region
    $region18: #{tpu_custom_call.1} parent=1 // pred_check
      _
    $region19: #{tpu_custom_call.1} parent=1 // pred_check_branch
      %29 = sbr.rel (0) target = $region21
    $region20: #{tpu_custom_call.1} parent=1 // pred_region
      _
    $region21: #{tpu_custom_call.1} parent=1 // pred_fallthru
      _
    // Predicated region
    $region22: #{tpu_custom_call.1} parent=1 // pred_check
      _
    $region23: #{tpu_custom_call.1} parent=1 // pred_check_branch
      %31 = sbr.rel (0) target = $region25
    $region24: #{tpu_custom_call.1} parent=1 // pred_region
      _
    $region25: #{tpu_custom_call.1} parent=1 // pred_fallthru
      _
    // Predicated region
    $region26: #{tpu_custom_call.1} parent=1 // pred_check
      _
    $region27: #{tpu_custom_call.1} parent=1 // pred_check_branch
      %33 = sbr.rel (0) target = $region29
    $region28: #{tpu_custom_call.1} parent=1 // pred_region
      _
    $region29: #{tpu_custom_call.1} parent=1 // pred_fallthru
      _
    // Predicated region
    $region30: #{tpu_custom_call.1} parent=1 // pred_check
      _
    $region31: #{tpu_custom_call.1} parent=1 // pred_check_branch
      %35 = sbr.rel (0) target = $region33
    $region32: #{tpu_custom_call.1} parent=1 // pred_region
      _
    $region33: #{tpu_custom_call.1} parent=1 // pred_fallthru
      _
    // Predicated region
    $region34: #{tpu_custom_call.1} parent=1 // pred_check
      _
    $region35: #{tpu_custom_call.1} parent=1 // pred_check_branch
      %37 = sbr.rel (0) target = $region37
    $region36: #{tpu_custom_call.1} parent=1 // pred_region
      _
    $region37: #{tpu_custom_call.1} parent=1 // pred_fallthru
      _
    // Predicated region
    $region38: #{tpu_custom_call.1} parent=1 // pred_check
      _
    $region39: #{tpu_custom_call.1} parent=1 // pred_check_branch
      %39 = sbr.rel (0) target = $region41
    $region40: #{tpu_custom_call.1} parent=1 // pred_region
      _
    $region41: #{tpu_custom_call.1} parent=1 // pred_fallthru
      _
    // Predicated region
    $region42: #{tpu_custom_call.1} parent=1 // pred_check
      _
    $region43: #{tpu_custom_call.1} parent=1 // pred_check_branch
      %41 = sbr.rel (0) target = $region45
    $region44: #{tpu_custom_call.1} parent=1 // pred_region
      _
    $region45: #{tpu_custom_call.1} parent=1 // pred_fallthru
      _
    // Predicated region
    $region46: #{tpu_custom_call.1} parent=1 // pred_check
      _
    $region47: #{tpu_custom_call.1} parent=1 // pred_check_branch
      %43 = sbr.rel (0) target = $region49
    $region48: #{tpu_custom_call.1} parent=1 // pred_region
      _
    $region49: #{tpu_custom_call.1} parent=1 // pred_fallthru
      _
    // Predicated region
    $region50: #{tpu_custom_call.1} parent=1 // pred_check
      _
    $region51: #{tpu_custom_call.1} parent=1 // pred_check_branch
      %45 = sbr.rel (0) target = $region53
    $region52: #{tpu_custom_call.1} parent=1 // pred_region
      _
    $region53: #{tpu_custom_call.1} parent=1 // pred_fallthru
      _
    // Predicated region
    $region54: #{tpu_custom_call.1} parent=1 // pred_check
      _
    $region55: #{tpu_custom_call.1} parent=1 // pred_check_branch
      %47 = sbr.rel (0) target = $region57
    $region56: #{tpu_custom_call.1} parent=1 // pred_region
      _
    $region57: #{tpu_custom_call.1} parent=1 // pred_fallthru
      _
    %p48 = scmp.eq.s32.totalorder 0, 0
    // Predicated region
    $region58: #{tpu_custom_call.1} parent=1 // pred_check
      %p49 = pneg %p48
    $region59: #{tpu_custom_call.1} parent=1 // pred_check_branch
      %51 = sbr.rel (%p49) target = $region61
    $region60: #{tpu_custom_call.1} parent=1 // pred_region
      %52 = vst [vmem:[#allocation2] sm:$0xff] -inf
      %53 = vst [vmem:[#allocation2 + $0x8] sm:$0xff] -inf
      %54 = vst [vmem:[#allocation2 + $0x10] sm:$0xff] -inf
      %55 = vst [vmem:[#allocation2 + $0x18] sm:$0xff] -inf
    $region61: #{tpu_custom_call.1} parent=1 // pred_fallthru
      _
    %v56 = vld [vmem:[%s0] sm:$0xff]
    %v57 = vld [vmem:[%s0 + $0x8] sm:$0xff]
    %v58 = vld [vmem:[%s0 + $0x10] sm:$0xff]
    %v59 = vld [vmem:[%s0 + $0x18] sm:$0xff]
    %v60 = vld [vmem:[%s0 + $0x20] sm:$0xff]
    %v61 = vld [vmem:[%s0 + $0x28] sm:$0xff]
    %v62 = vld [vmem:[%s0 + $0x30] sm:$0xff]
    %v63 = vld [vmem:[%s0 + $0x38] sm:$0xff]
    %v64 = vld [vmem:[%s0 + $0x40] sm:$0xff]
    %v65 = vld [vmem:[%s0 + $0x48] sm:$0xff]
    %v66 = vld [vmem:[%s0 + $0x50] sm:$0xff]
    %v67 = vld [vmem:[%s0 + $0x58] sm:$0xff]
    %v68 = vld [vmem:[%s0 + $0x60] sm:$0xff]
    %v69 = vld [vmem:[%s0 + $0x68] sm:$0xff]
    %v70 = vld [vmem:[%s0 + $0x70] sm:$0xff]
    %v71 = vld [vmem:[%s0 + $0x78] sm:$0xff]
    %v72 = vld [vmem:[%s0 + $0x80] sm:$0xff]
    %v73 = vld [vmem:[%s0 + $0x88] sm:$0xff]
    %v74 = vld [vmem:[%s0 + $0x90] sm:$0xff]
    %v75 = vld [vmem:[%s0 + $0x98] sm:$0xff]
    %v76 = vld [vmem:[%s0 + $0xa0] sm:$0xff]
    %v77 = vld [vmem:[%s0 + $0xa8] sm:$0xff]
    %v78 = vld [vmem:[%s0 + $0xb0] sm:$0xff]
    %v79 = vld [vmem:[%s0 + $0xb8] sm:$0xff]
    %v80 = vld [vmem:[%s0 + $0xc0] sm:$0xff]
    %v81 = vld [vmem:[%s0 + $0xc8] sm:$0xff]
    %v82 = vld [vmem:[%s0 + $0xd0] sm:$0xff]
    %v83 = vld [vmem:[%s0 + $0xd8] sm:$0xff]
    %v84 = vld [vmem:[%s0 + $0xe0] sm:$0xff]
    %v85 = vld [vmem:[%s0 + $0xe8] sm:$0xff]
    %v86 = vld [vmem:[%s0 + $0xf0] sm:$0xff]
    %v87 = vld [vmem:[%s0 + $0xf8] sm:$0xff]
    %v88 = vld [vmem:[%s0 + $0x100] sm:$0xff]
    %v89 = vld [vmem:[%s0 + $0x108] sm:$0xff]
    %v90 = vld [vmem:[%s0 + $0x110] sm:$0xff]
    %v91 = vld [vmem:[%s0 + $0x118] sm:$0xff]
    %v92 = vld [vmem:[%s0 + $0x120] sm:$0xff]
    %v93 = vld [vmem:[%s0 + $0x128] sm:$0xff]
    %v94 = vld [vmem:[%s0 + $0x130] sm:$0xff]
    %v95 = vld [vmem:[%s0 + $0x138] sm:$0xff]
    %v96 = vld [vmem:[%s0 + $0x140] sm:$0xff]
    %v97 = vld [vmem:[%s0 + $0x148] sm:$0xff]
    %v98 = vld [vmem:[%s0 + $0x150] sm:$0xff]
    %v99 = vld [vmem:[%s0 + $0x158] sm:$0xff]
    %v100 = vld [vmem:[%s0 + $0x160] sm:$0xff]
    %v101 = vld [vmem:[%s0 + $0x168] sm:$0xff]
    %v102 = vld [vmem:[%s0 + $0x170] sm:$0xff]
    %v103 = vld [vmem:[%s0 + $0x178] sm:$0xff]
    %v104 = vld [vmem:[%s0 + $0x180] sm:$0xff]
    %v105 = vld [vmem:[%s0 + $0x188] sm:$0xff]
    %v106 = vld [vmem:[%s0 + $0x190] sm:$0xff]
    %v107 = vld [vmem:[%s0 + $0x198] sm:$0xff]
    %v108 = vld [vmem:[%s0 + $0x1a0] sm:$0xff]
    %v109 = vld [vmem:[%s0 + $0x1a8] sm:$0xff]
    %v110 = vld [vmem:[%s0 + $0x1b0] sm:$0xff]
    %v111 = vld [vmem:[%s0 + $0x1b8] sm:$0xff]
    %v112 = vld [vmem:[%s0 + $0x1c0] sm:$0xff]
    %v113 = vld [vmem:[%s0 + $0x1c8] sm:$0xff]
    %v114 = vld [vmem:[%s0 + $0x1d0] sm:$0xff]
    %v115 = vld [vmem:[%s0 + $0x1d8] sm:$0xff]
    %v116 = vld [vmem:[%s0 + $0x1e0] sm:$0xff]
    %v117 = vld [vmem:[%s0 + $0x1e8] sm:$0xff]
    %v118 = vld [vmem:[%s0 + $0x1f0] sm:$0xff]
    %v119 = vld [vmem:[%s0 + $0x1f8] sm:$0xff]
    %v120 = vld [vmem:[%s0 + $0x200] sm:$0xff]
    %v121 = vld [vmem:[%s0 + $0x208] sm:$0xff]
    %v122 = vld [vmem:[%s0 + $0x210] sm:$0xff]
    %v123 = vld [vmem:[%s0 + $0x218] sm:$0xff]
    %v124 = vld [vmem:[%s0 + $0x220] sm:$0xff]
    %v125 = vld [vmem:[%s0 + $0x228] sm:$0xff]
    %v126 = vld [vmem:[%s0 + $0x230] sm:$0xff]
    %v127 = vld [vmem:[%s0 + $0x238] sm:$0xff]
    %v128 = vld [vmem:[%s0 + $0x240] sm:$0xff]
    %v129 = vld [vmem:[%s0 + $0x248] sm:$0xff]
    %v130 = vld [vmem:[%s0 + $0x250] sm:$0xff]
    %v131 = vld [vmem:[%s0 + $0x258] sm:$0xff]
    %v132 = vld [vmem:[%s0 + $0x260] sm:$0xff]
    %v133 = vld [vmem:[%s0 + $0x268] sm:$0xff]
    %v134 = vld [vmem:[%s0 + $0x270] sm:$0xff]
    %v135 = vld [vmem:[%s0 + $0x278] sm:$0xff]
    %v136 = vld [vmem:[%s0 + $0x280] sm:$0xff]
    %v137 = vld [vmem:[%s0 + $0x288] sm:$0xff]
    %v138 = vld [vmem:[%s0 + $0x290] sm:$0xff]
    %v139 = vld [vmem:[%s0 + $0x298] sm:$0xff]
    %v140 = vld [vmem:[%s0 + $0x2a0] sm:$0xff]
    %v141 = vld [vmem:[%s0 + $0x2a8] sm:$0xff]
    %v142 = vld [vmem:[%s0 + $0x2b0] sm:$0xff]
    %v143 = vld [vmem:[%s0 + $0x2b8] sm:$0xff]
    %v144 = vld [vmem:[%s0 + $0x2c0] sm:$0xff]
    %v145 = vld [vmem:[%s0 + $0x2c8] sm:$0xff]
    %v146 = vld [vmem:[%s0 + $0x2d0] sm:$0xff]
    %v147 = vld [vmem:[%s0 + $0x2d8] sm:$0xff]
    %v148 = vld [vmem:[%s0 + $0x2e0] sm:$0xff]
    %v149 = vld [vmem:[%s0 + $0x2e8] sm:$0xff]
    %v150 = vld [vmem:[%s0 + $0x2f0] sm:$0xff]
    %v151 = vld [vmem:[%s0 + $0x2f8] sm:$0xff]
    %v152 = vld [vmem:[%s0 + $0x300] sm:$0xff]
    %v153 = vld [vmem:[%s0 + $0x308] sm:$0xff]
    %v154 = vld [vmem:[%s0 + $0x310] sm:$0xff]
    %v155 = vld [vmem:[%s0 + $0x318] sm:$0xff]
    %v156 = vld [vmem:[%s0 + $0x320] sm:$0xff]
    %v157 = vld [vmem:[%s0 + $0x328] sm:$0xff]
    %v158 = vld [vmem:[%s0 + $0x330] sm:$0xff]
    %v159 = vld [vmem:[%s0 + $0x338] sm:$0xff]
    %v160 = vld [vmem:[%s0 + $0x340] sm:$0xff]
    %v161 = vld [vmem:[%s0 + $0x348] sm:$0xff]
    %v162 = vld [vmem:[%s0 + $0x350] sm:$0xff]
    %v163 = vld [vmem:[%s0 + $0x358] sm:$0xff]
    %v164 = vld [vmem:[%s0 + $0x360] sm:$0xff]
    %v165 = vld [vmem:[%s0 + $0x368] sm:$0xff]
    %v166 = vld [vmem:[%s0 + $0x370] sm:$0xff]
    %v167 = vld [vmem:[%s0 + $0x378] sm:$0xff]
    %v168 = vld [vmem:[%s0 + $0x380] sm:$0xff]
    %v169 = vld [vmem:[%s0 + $0x388] sm:$0xff]
    %v170 = vld [vmem:[%s0 + $0x390] sm:$0xff]
    %v171 = vld [vmem:[%s0 + $0x398] sm:$0xff]
    %v172 = vld [vmem:[%s0 + $0x3a0] sm:$0xff]
    %v173 = vld [vmem:[%s0 + $0x3a8] sm:$0xff]
    %v174 = vld [vmem:[%s0 + $0x3b0] sm:$0xff]
    %v175 = vld [vmem:[%s0 + $0x3b8] sm:$0xff]
    %v176 = vld [vmem:[%s0 + $0x3c0] sm:$0xff]
    %v177 = vld [vmem:[%s0 + $0x3c8] sm:$0xff]
    %v178 = vld [vmem:[%s0 + $0x3d0] sm:$0xff]
    %v179 = vld [vmem:[%s0 + $0x3d8] sm:$0xff]
    %v180 = vld [vmem:[%s0 + $0x3e0] sm:$0xff]
    %v181 = vld [vmem:[%s0 + $0x3e8] sm:$0xff]
    %v182 = vld [vmem:[%s0 + $0x3f0] sm:$0xff]
    %v183 = vld [vmem:[%s0 + $0x3f8] sm:$0xff]
    %v184 = vld [vmem:[%s1] sm:$0xff]
    %v185 = vld [vmem:[%s1 + $0x8] sm:$0xff]
    %v186 = vld [vmem:[%s1 + $0x10] sm:$0xff]
    %v187 = vld [vmem:[%s1 + $0x18] sm:$0xff]
    %v188 = vld [vmem:[%s1 + $0x20] sm:$0xff]
    %v189 = vld [vmem:[%s1 + $0x28] sm:$0xff]
    %v190 = vld [vmem:[%s1 + $0x30] sm:$0xff]
    %v191 = vld [vmem:[%s1 + $0x38] sm:$0xff]
    %v192 = vld [vmem:[%s1 + $0x40] sm:$0xff]
    %v193 = vld [vmem:[%s1 + $0x48] sm:$0xff]
    %v194 = vld [vmem:[%s1 + $0x50] sm:$0xff]
    %v195 = vld [vmem:[%s1 + $0x58] sm:$0xff]
    %v196 = vld [vmem:[%s1 + $0x60] sm:$0xff]
    %v197 = vld [vmem:[%s1 + $0x68] sm:$0xff]
    %v198 = vld [vmem:[%s1 + $0x70] sm:$0xff]
    %v199 = vld [vmem:[%s1 + $0x78] sm:$0xff]
    %v200 = vld [vmem:[%s1 + $0x80] sm:$0xff]
    %v201 = vld [vmem:[%s1 + $0x88] sm:$0xff]
    %v202 = vld [vmem:[%s1 + $0x90] sm:$0xff]
    %v203 = vld [vmem:[%s1 + $0x98] sm:$0xff]
    %v204 = vld [vmem:[%s1 + $0xa0] sm:$0xff]
    %v205 = vld [vmem:[%s1 + $0xa8] sm:$0xff]
    %v206 = vld [vmem:[%s1 + $0xb0] sm:$0xff]
    %v207 = vld [vmem:[%s1 + $0xb8] sm:$0xff]
    %v208 = vld [vmem:[%s1 + $0xc0] sm:$0xff]
    %v209 = vld [vmem:[%s1 + $0xc8] sm:$0xff]
    %v210 = vld [vmem:[%s1 + $0xd0] sm:$0xff]
    %v211 = vld [vmem:[%s1 + $0xd8] sm:$0xff]
    %v212 = vld [vmem:[%s1 + $0xe0] sm:$0xff]
    %v213 = vld [vmem:[%s1 + $0xe8] sm:$0xff]
    %v214 = vld [vmem:[%s1 + $0xf0] sm:$0xff]
    %v215 = vld [vmem:[%s1 + $0xf8] sm:$0xff]
    %v216 = vld [vmem:[%s1 + $0x100] sm:$0xff]
    %v217 = vld [vmem:[%s1 + $0x108] sm:$0xff]
    %v218 = vld [vmem:[%s1 + $0x110] sm:$0xff]
    %v219 = vld [vmem:[%s1 + $0x118] sm:$0xff]
    %v220 = vld [vmem:[%s1 + $0x120] sm:$0xff]
    %v221 = vld [vmem:[%s1 + $0x128] sm:$0xff]
    %v222 = vld [vmem:[%s1 + $0x130] sm:$0xff]
    %v223 = vld [vmem:[%s1 + $0x138] sm:$0xff]
    %v224 = vld [vmem:[%s1 + $0x140] sm:$0xff]
    %v225 = vld [vmem:[%s1 + $0x148] sm:$0xff]
    %v226 = vld [vmem:[%s1 + $0x150] sm:$0xff]
    %v227 = vld [vmem:[%s1 + $0x158] sm:$0xff]
    %v228 = vld [vmem:[%s1 + $0x160] sm:$0xff]
    %v229 = vld [vmem:[%s1 + $0x168] sm:$0xff]
    %v230 = vld [vmem:[%s1 + $0x170] sm:$0xff]
    %v231 = vld [vmem:[%s1 + $0x178] sm:$0xff]
    %v232 = vld [vmem:[%s1 + $0x180] sm:$0xff]
    %v233 = vld [vmem:[%s1 + $0x188] sm:$0xff]
    %v234 = vld [vmem:[%s1 + $0x190] sm:$0xff]
    %v235 = vld [vmem:[%s1 + $0x198] sm:$0xff]
    %v236 = vld [vmem:[%s1 + $0x1a0] sm:$0xff]
    %v237 = vld [vmem:[%s1 + $0x1a8] sm:$0xff]
    %v238 = vld [vmem:[%s1 + $0x1b0] sm:$0xff]
    %v239 = vld [vmem:[%s1 + $0x1b8] sm:$0xff]
    %v240 = vld [vmem:[%s1 + $0x1c0] sm:$0xff]
    %v241 = vld [vmem:[%s1 + $0x1c8] sm:$0xff]
    %v242 = vld [vmem:[%s1 + $0x1d0] sm:$0xff]
    %v243 = vld [vmem:[%s1 + $0x1d8] sm:$0xff]
    %v244 = vld [vmem:[%s1 + $0x1e0] sm:$0xff]
    %v245 = vld [vmem:[%s1 + $0x1e8] sm:$0xff]
    %v246 = vld [vmem:[%s1 + $0x1f0] sm:$0xff]
    %v247 = vld [vmem:[%s1 + $0x1f8] sm:$0xff]
    %v248 = vld [vmem:[%s1 + $0x200] sm:$0xff]
    %v249 = vld [vmem:[%s1 + $0x208] sm:$0xff]
    %v250 = vld [vmem:[%s1 + $0x210] sm:$0xff]
    %v251 = vld [vmem:[%s1 + $0x218] sm:$0xff]
    %v252 = vld [vmem:[%s1 + $0x220] sm:$0xff]
    %v253 = vld [vmem:[%s1 + $0x228] sm:$0xff]
    %v254 = vld [vmem:[%s1 + $0x230] sm:$0xff]
    %v255 = vld [vmem:[%s1 + $0x238] sm:$0xff]
    %v256 = vld [vmem:[%s1 + $0x240] sm:$0xff]
    %v257 = vld [vmem:[%s1 + $0x248] sm:$0xff]
    %v258 = vld [vmem:[%s1 + $0x250] sm:$0xff]
    %v259 = vld [vmem:[%s1 + $0x258] sm:$0xff]
    %v260 = vld [vmem:[%s1 + $0x260] sm:$0xff]
    %v261 = vld [vmem:[%s1 + $0x268] sm:$0xff]
    %v262 = vld [vmem:[%s1 + $0x270] sm:$0xff]
    %v263 = vld [vmem:[%s1 + $0x278] sm:$0xff]
    %v264 = vld [vmem:[%s1 + $0x280] sm:$0xff]
    %v265 = vld [vmem:[%s1 + $0x288] sm:$0xff]
    %v266 = vld [vmem:[%s1 + $0x290] sm:$0xff]
    %v267 = vld [vmem:[%s1 + $0x298] sm:$0xff]
    %v268 = vld [vmem:[%s1 + $0x2a0] sm:$0xff]
    %v269 = vld [vmem:[%s1 + $0x2a8] sm:$0xff]
    %v270 = vld [vmem:[%s1 + $0x2b0] sm:$0xff]
    %v271 = vld [vmem:[%s1 + $0x2b8] sm:$0xff]
    %v272 = vld [vmem:[%s1 + $0x2c0] sm:$0xff]
    %v273 = vld [vmem:[%s1 + $0x2c8] sm:$0xff]
    %v274 = vld [vmem:[%s1 + $0x2d0] sm:$0xff]
    %v275 = vld [vmem:[%s1 + $0x2d8] sm:$0xff]
    %v276 = vld [vmem:[%s1 + $0x2e0] sm:$0xff]
    %v277 = vld [vmem:[%s1 + $0x2e8] sm:$0xff]
    %v278 = vld [vmem:[%s1 + $0x2f0] sm:$0xff]
    %v279 = vld [vmem:[%s1 + $0x2f8] sm:$0xff]
    %v280 = vld [vmem:[%s1 + $0x300] sm:$0xff]
    %v281 = vld [vmem:[%s1 + $0x308] sm:$0xff]
    %v282 = vld [vmem:[%s1 + $0x310] sm:$0xff]
    %v283 = vld [vmem:[%s1 + $0x318] sm:$0xff]
    %v284 = vld [vmem:[%s1 + $0x320] sm:$0xff]
    %v285 = vld [vmem:[%s1 + $0x328] sm:$0xff]
    %v286 = vld [vmem:[%s1 + $0x330] sm:$0xff]
    %v287 = vld [vmem:[%s1 + $0x338] sm:$0xff]
    %v288 = vld [vmem:[%s1 + $0x340] sm:$0xff]
    %v289 = vld [vmem:[%s1 + $0x348] sm:$0xff]
    %v290 = vld [vmem:[%s1 + $0x350] sm:$0xff]
    %v291 = vld [vmem:[%s1 + $0x358] sm:$0xff]
    %v292 = vld [vmem:[%s1 + $0x360] sm:$0xff]
    %v293 = vld [vmem:[%s1 + $0x368] sm:$0xff]
    %v294 = vld [vmem:[%s1 + $0x370] sm:$0xff]
    %v295 = vld [vmem:[%s1 + $0x378] sm:$0xff]
    %v296 = vld [vmem:[%s1 + $0x380] sm:$0xff]
    %v297 = vld [vmem:[%s1 + $0x388] sm:$0xff]
    %v298 = vld [vmem:[%s1 + $0x390] sm:$0xff]
    %v299 = vld [vmem:[%s1 + $0x398] sm:$0xff]
    %v300 = vld [vmem:[%s1 + $0x3a0] sm:$0xff]
    %v301 = vld [vmem:[%s1 + $0x3a8] sm:$0xff]
    %v302 = vld [vmem:[%s1 + $0x3b0] sm:$0xff]
    %v303 = vld [vmem:[%s1 + $0x3b8] sm:$0xff]
    %v304 = vld [vmem:[%s1 + $0x3c0] sm:$0xff]
    %v305 = vld [vmem:[%s1 + $0x3c8] sm:$0xff]
    %v306 = vld [vmem:[%s1 + $0x3d0] sm:$0xff]
    %v307 = vld [vmem:[%s1 + $0x3d8] sm:$0xff]
    %v308 = vld [vmem:[%s1 + $0x3e0] sm:$0xff]
    %v309 = vld [vmem:[%s1 + $0x3e8] sm:$0xff]
    %v310 = vld [vmem:[%s1 + $0x3f0] sm:$0xff]
    %v311 = vld [vmem:[%s1 + $0x3f8] sm:$0xff]
    %v312 = vld [vmem:[%s2] sm:$0xff]
    %v313 = vld [vmem:[%s2 + $0x8] sm:$0xff]
    %v314 = vld [vmem:[%s2 + $0x10] sm:$0xff]
    %v315 = vld [vmem:[%s2 + $0x18] sm:$0xff]
    %v316 = vld [vmem:[%s3] sm:$0xff]
    %v317 = vld [vmem:[%s3 + $0x8] sm:$0xff]
    %v318 = vld [vmem:[%s3 + $0x10] sm:$0xff]
    %v319 = vld [vmem:[%s3 + $0x18] sm:$0xff]
    %v320 = vld [vmem:[%s4] sm:$0xff]
    %v321 = vld [vmem:[%s4 + $0x8] sm:$0xff]
    %v322 = vld [vmem:[%s4 + $0x10] sm:$0xff]
    %v323 = vld [vmem:[%s4 + $0x18] sm:$0xff]
    %v324 = vld [vmem:[%s5] sm:$0xff]
    %v325 = vld [vmem:[%s5 + $0x8] sm:$0xff]
    %v326 = vld [vmem:[%s5 + $0x10] sm:$0xff]
    %v327 = vld [vmem:[%s5 + $0x18] sm:$0xff]
    %v328 = vld [vmem:[%s6] sm:$0xff]
    %v329 = vld [vmem:[%s6 + $0x8] sm:$0xff]
    %v330 = vld [vmem:[%s6 + $0x10] sm:$0xff]
    %v331 = vld [vmem:[%s6 + $0x18] sm:$0xff]
    %vm332 = vcmask 261120
    %v334 = vsel %vm332, %v56, 0
    %v337 = vsel %vm332, %v57, 0
    %v340 = vsel %vm332, %v58, 0
    %v343 = vsel %vm332, %v59, 0
    %v346 = vsel %vm332, %v60, 0
    %v349 = vsel %vm332, %v61, 0
    %v352 = vsel %vm332, %v62, 0
    %v355 = vsel %vm332, %v63, 0
    %v358 = vsel %vm332, %v64, 0
    %v361 = vsel %vm332, %v65, 0
    %v364 = vsel %vm332, %v66, 0
    %v367 = vsel %vm332, %v67, 0
    %v370 = vsel %vm332, %v68, 0
    %v373 = vsel %vm332, %v69, 0
    %v376 = vsel %vm332, %v70, 0
    %v379 = vsel %vm332, %v71, 0
    %v382 = vsel %vm332, %v72, 0
    %v385 = vsel %vm332, %v73, 0
    %v388 = vsel %vm332, %v74, 0
    %v391 = vsel %vm332, %v75, 0
    %v394 = vsel %vm332, %v76, 0
    %v397 = vsel %vm332, %v77, 0
    %v400 = vsel %vm332, %v78, 0
    %v403 = vsel %vm332, %v79, 0
    %v406 = vsel %vm332, %v80, 0
    %v409 = vsel %vm332, %v81, 0
    %v412 = vsel %vm332, %v82, 0
    %v415 = vsel %vm332, %v83, 0
    %v418 = vsel %vm332, %v84, 0
    %v421 = vsel %vm332, %v85, 0
    %v424 = vsel %vm332, %v86, 0
    %v427 = vsel %vm332, %v87, 0
    %v430 = vsel %vm332, %v88, 0
    %v433 = vsel %vm332, %v89, 0
    %v436 = vsel %vm332, %v90, 0
    %v439 = vsel %vm332, %v91, 0
    %v442 = vsel %vm332, %v92, 0
    %v445 = vsel %vm332, %v93, 0
    %v448 = vsel %vm332, %v94, 0
    %v451 = vsel %vm332, %v95, 0
    %v454 = vsel %vm332, %v96, 0
    %v457 = vsel %vm332, %v97, 0
    %v460 = vsel %vm332, %v98, 0
    %v463 = vsel %vm332, %v99, 0
    %v466 = vsel %vm332, %v100, 0
    %v469 = vsel %vm332, %v101, 0
    %v472 = vsel %vm332, %v102, 0
    %v475 = vsel %vm332, %v103, 0
    %v478 = vsel %vm332, %v104, 0
    %v481 = vsel %vm332, %v105, 0
    %v484 = vsel %vm332, %v106, 0
    %v487 = vsel %vm332, %v107, 0
    %v490 = vsel %vm332, %v108, 0
    %v493 = vsel %vm332, %v109, 0
    %v496 = vsel %vm332, %v110, 0
    %v499 = vsel %vm332, %v111, 0
    %v502 = vsel %vm332, %v112, 0
    %v505 = vsel %vm332, %v113, 0
    %v508 = vsel %vm332, %v114, 0
    %v511 = vsel %vm332, %v115, 0
    %v514 = vsel %vm332, %v116, 0
    %v517 = vsel %vm332, %v117, 0
    %v520 = vsel %vm332, %v118, 0
    %v523 = vsel %vm332, %v119, 0
    %v526 = vsel %vm332, %v120, 0
    %v529 = vsel %vm332, %v121, 0
    %v532 = vsel %vm332, %v122, 0
    %v535 = vsel %vm332, %v123, 0
    %v538 = vsel %vm332, %v124, 0
    %v541 = vsel %vm332, %v125, 0
    %v544 = vsel %vm332, %v126, 0
    %v547 = vsel %vm332, %v127, 0
    %v550 = vsel %vm332, %v128, 0
    %v553 = vsel %vm332, %v129, 0
    %v556 = vsel %vm332, %v130, 0
    %v559 = vsel %vm332, %v131, 0
    %v562 = vsel %vm332, %v132, 0
    %v565 = vsel %vm332, %v133, 0
    %v568 = vsel %vm332, %v134, 0
    %v571 = vsel %vm332, %v135, 0
    %v574 = vsel %vm332, %v136, 0
    %v577 = vsel %vm332, %v137, 0
    %v580 = vsel %vm332, %v138, 0
    %v583 = vsel %vm332, %v139, 0
    %v586 = vsel %vm332, %v140, 0
    %v589 = vsel %vm332, %v141, 0
    %v592 = vsel %vm332, %v142, 0
    %v595 = vsel %vm332, %v143, 0
    %v598 = vsel %vm332, %v144, 0
    %v601 = vsel %vm332, %v145, 0
    %v604 = vsel %vm332, %v146, 0
    %v607 = vsel %vm332, %v147, 0
    %v610 = vsel %vm332, %v148, 0
    %v613 = vsel %vm332, %v149, 0
    %v616 = vsel %vm332, %v150, 0
    %v619 = vsel %vm332, %v151, 0
    %v622 = vsel %vm332, %v152, 0
    %v625 = vsel %vm332, %v153, 0
    %v628 = vsel %vm332, %v154, 0
    %v631 = vsel %vm332, %v155, 0
    %v634 = vsel %vm332, %v156, 0
    %v637 = vsel %vm332, %v157, 0
    %v640 = vsel %vm332, %v158, 0
    %v643 = vsel %vm332, %v159, 0
    %v646 = vsel %vm332, %v160, 0
    %v649 = vsel %vm332, %v161, 0
    %v652 = vsel %vm332, %v162, 0
    %v655 = vsel %vm332, %v163, 0
    %v658 = vsel %vm332, %v164, 0
    %v661 = vsel %vm332, %v165, 0
    %v664 = vsel %vm332, %v166, 0
    %v667 = vsel %vm332, %v167, 0
    %v670 = vsel %vm332, %v168, 0
    %v673 = vsel %vm332, %v169, 0
    %v676 = vsel %vm332, %v170, 0
    %v679 = vsel %vm332, %v171, 0
    %v682 = vsel %vm332, %v172, 0
    %v685 = vsel %vm332, %v173, 0
    %v688 = vsel %vm332, %v174, 0
    %v691 = vsel %vm332, %v175, 0
    %v694 = vsel %vm332, %v176, 0
    %v697 = vsel %vm332, %v177, 0
    %v700 = vsel %vm332, %v178, 0
    %v703 = vsel %vm332, %v179, 0
    %v706 = vsel %vm332, %v180, 0
    %v709 = vsel %vm332, %v181, 0
    %v712 = vsel %vm332, %v182, 0
    %v715 = vsel %vm332, %v183, 0
    %717 = vmatprep.subr.mxu0 0.0
    %718 = vmatpush1.msra.mxu0 %v316
    %719 = vmatprep.subr.mxu0 0.0
    %720 = vmatpush1.msra.mxu0 %v317
    %721 = vmatprep.subr.mxu0 0.0
    %722 = vmatpush1.msra.mxu0 %v318
    %723 = vmatprep.subr.mxu0 0.0
    %724 = vmatpush1.msra.mxu0 %v319
    %725 = vmatprep.subr.mxu0 0.0
    %726 = vmatpush1.msra.mxu0 0.0
    %727 = vmatprep.subr.mxu0 0.0
    %728 = vmatpush1.msra.mxu0 0.0
    %729 = vmatprep.subr.mxu0 0.0
    %730 = vmatpush1.msra.mxu0 0.0
    %731 = vmatprep.subr.mxu0 0.0
    %732 = vmatpush1.msra.mxu0 0.0
    %733 = vmatprep.subr.mxu0 0.0
    %734 = vmatpush1.msra.mxu0 0.0
    %735 = vmatprep.subr.mxu0 0.0
    %736 = vmatpush1.msra.mxu0 0.0
    %737 = vmatprep.subr.mxu0 0.0
    %738 = vmatpush1.msra.mxu0 0.0
    %739 = vmatprep.subr.mxu0 0.0
    %740 = vmatpush1.msra.mxu0 0.0
    %741 = vmatprep.subr.mxu0 0.0
    %742 = vmatpush1.msra.mxu0 0.0
    %743 = vmatprep.subr.mxu0 0.0
    %744 = vmatpush1.msra.mxu0 0.0
    %745 = vmatprep.subr.mxu0 0.0
    %746 = vmatpush1.msra.mxu0 0.0
    %747 = vmatprep.subr.mxu0 0.0
    %748 = vmatpush1.msra.mxu0 0.0
    %749 = vmatprep.subr.mxu0 0.0
    %750 = vmatpush1.msra.mxu0 0.0
    %751 = vmatprep.subr.mxu0 0.0
    %752 = vmatpush1.msra.mxu0 0.0
    %753 = vmatprep.subr.mxu0 0.0
    %754 = vmatpush1.msra.mxu0 0.0
    %755 = vmatprep.subr.mxu0 0.0
    %756 = vmatpush1.msra.mxu0 0.0
    %757 = vmatprep.subr.mxu0 0.0
    %758 = vmatpush1.msra.mxu0 0.0
    %759 = vmatprep.subr.mxu0 0.0
    %760 = vmatpush1.msra.mxu0 0.0
    %761 = vmatprep.subr.mxu0 0.0
    %762 = vmatpush1.msra.mxu0 0.0
    %763 = vmatprep.subr.mxu0 0.0
    %764 = vmatpush1.msra.mxu0 0.0
    %765 = vmatprep.subr.mxu0 0.0
    %766 = vmatpush1.msra.mxu0 0.0
    %767 = vmatprep.subr.mxu0 0.0
    %768 = vmatpush1.msra.mxu0 0.0
    %769 = vmatprep.subr.mxu0 0.0
    %770 = vmatpush1.msra.mxu0 0.0
    %771 = vmatprep.subr.mxu0 0.0
    %772 = vmatpush1.msra.mxu0 0.0
    %773 = vmatprep.subr.mxu0 0.0
    %774 = vmatpush1.msra.mxu0 0.0
    %775 = vmatprep.subr.mxu0 0.0
    %776 = vmatpush1.msra.mxu0 0.0
    %777 = vmatprep.subr.mxu0 0.0
    %778 = vmatpush1.msra.mxu0 0.0
    %779 = vmatprep.subr.mxu0 0.0
    %780 = vmatpush1.msra.mxu0 0.0
    %781 = vmatprep.mubr.f32.mxu0 0.0
    %782 = vmatmul.mubr.f32.gmra.mrb[0].mxu0 %v334
    %v783 = vpop.f32.mrb[0].mxu0
    %v784 = vadd.f32 0.0, %v783
    %v785 = vpop.f32.mrb[0].mxu0
    %786 = vmatprep.mubr.f32.mxu0 0.0
    %787 = vmatmul.mubr.f32.gmra.mrb[0].mxu0 %v337
    %v788 = vpop.f32.mrb[0].mxu0
    %v789 = vadd.f32 0.0, %v788
    %v790 = vpop.f32.mrb[0].mxu0
    %791 = vmatprep.mubr.f32.mxu0 0.0
    %792 = vmatmul.mubr.f32.gmra.mrb[0].mxu0 %v340
    %v793 = vpop.f32.mrb[0].mxu0
    %v794 = vadd.f32 0.0, %v793
    %v795 = vpop.f32.mrb[0].mxu0
    %796 = vmatprep.mubr.f32.mxu0 0.0
    %797 = vmatmul.mubr.f32.gmra.mrb[0].mxu0 %v343
    %v798 = vpop.f32.mrb[0].mxu0
    %v799 = vadd.f32 0.0, %v798
    %v800 = vpop.f32.mrb[0].mxu0
    %801 = vmatprep.mubr.f32.mxu0 0.0
    %802 = vmatmul.mubr.f32.gmra.mrb[0].mxu0 %v346
    %v803 = vpop.f32.mrb[0].mxu0
    %v804 = vadd.f32 0.0, %v803
    %v805 = vpop.f32.mrb[0].mxu0
    %806 = vmatprep.mubr.f32.mxu0 0.0
    %807 = vmatmul.mubr.f32.gmra.mrb[0].mxu0 %v349
    %v808 = vpop.f32.mrb[0].mxu0
    %v809 = vadd.f32 0.0, %v808
    %v810 = vpop.f32.mrb[0].mxu0
    %811 = vmatprep.mubr.f32.mxu0 0.0
    %812 = vmatmul.mubr.f32.gmra.mrb[0].mxu0 %v352
    %v813 = vpop.f32.mrb[0].mxu0
    %v814 = vadd.f32 0.0, %v813
    %v815 = vpop.f32.mrb[0].mxu0
    %816 = vmatprep.mubr.f32.mxu0 0.0
    %817 = vmatmul.mubr.f32.gmra.mrb[0].mxu0 %v355
    %v818 = vpop.f32.mrb[0].mxu0
    %v819 = vadd.f32 0.0, %v818
    %v820 = vpop.f32.mrb[0].mxu0
    %821 = vmatprep.mubr.f32.mxu0 0.0
    %822 = vmatmul.mubr.f32.gmra.mrb[0].mxu0 %v358
    %v823 = vpop.f32.mrb[0].mxu0
    %v824 = vadd.f32 0.0, %v823
    %v825 = vpop.f32.mrb[0].mxu0
    %826 = vmatprep.mubr.f32.mxu0 0.0
    %827 = vmatmul.mubr.f32.gmra.mrb[0].mxu0 %v361
    %v828 = vpop.f32.mrb[0].mxu0
    %v829 = vadd.f32 0.0, %v828
    %v830 = vpop.f32.mrb[0].mxu0
    %831 = vmatprep.mubr.f32.mxu0 0.0
    %832 = vmatmul.mubr.f32.gmra.mrb[0].mxu0 %v364
    %v833 = vpop.f32.mrb[0].mxu0
    %v834 = vadd.f32 0.0, %v833
    %v835 = vpop.f32.mrb[0].mxu0
    %836 = vmatprep.mubr.f32.mxu0 0.0
    %837 = vmatmul.mubr.f32.gmra.mrb[0].mxu0 %v367
    %v838 = vpop.f32.mrb[0].mxu0
    %v839 = vadd.f32 0.0, %v838
    %v840 = vpop.f32.mrb[0].mxu0
    %841 = vmatprep.mubr.f32.mxu0 0.0
    %842 = vmatmul.mubr.f32.gmra.mrb[0].mxu0 %v370
    %v843 = vpop.f32.mrb[0].mxu0
    %v844 = vadd.f32 0.0, %v843
    %v845 = vpop.f32.mrb[0].mxu0
    %846 = vmatprep.mubr.f32.mxu0 0.0
    %847 = vmatmul.mubr.f32.gmra.mrb[0].mxu0 %v373
    %v848 = vpop.f32.mrb[0].mxu0
    %v849 = vadd.f32 0.0, %v848
    %v850 = vpop.f32.mrb[0].mxu0
    %851 = vmatprep.mubr.f32.mxu0 0.0
    %852 = vmatmul.mubr.f32.gmra.mrb[0].mxu0 %v376
    %v853 = vpop.f32.mrb[0].mxu0
    %v854 = vadd.f32 0.0, %v853
    %v855 = vpop.f32.mrb[0].mxu0
    %856 = vmatprep.mubr.f32.mxu0 0.0
    %857 = vmatmul.mubr.f32.gmra.mrb[0].mxu0 %v379
    %v858 = vpop.f32.mrb[0].mxu0
    %v859 = vadd.f32 0.0, %v858
    %v860 = vpop.f32.mrb[0].mxu0
    %861 = vmatprep.mubr.f32.mxu0 0.0
    %862 = vmatmul.mubr.f32.gmra.mrb[0].mxu0 %v382
    %v863 = vpop.f32.mrb[0].mxu0
    %v864 = vadd.f32 0.0, %v863
    %v865 = vpop.f32.mrb[0].mxu0
    %866 = vmatprep.mubr.f32.mxu0 0.0
    %867 = vmatmul.mubr.f32.gmra.mrb[0].mxu0 %v385
    %v868 = vpop.f32.mrb[0].mxu0
    %v869 = vadd.f32 0.0, %v868
    %v870 = vpop.f32.mrb[0].mxu0
    %871 = vmatprep.mubr.f32.mxu0 0.0
    %872 = vmatmul.mubr.f32.gmra.mrb[0].mxu0 %v388
    %v873 = vpop.f32.mrb[0].mxu0
    %v874 = vadd.f32 0.0, %v873
    %v875 = vpop.f32.mrb[0].mxu0
    %876 = vmatprep.mubr.f32.mxu0 0.0
    %877 = vmatmul.mubr.f32.gmra.mrb[0].mxu0 %v391
    %v878 = vpop.f32.mrb[0].mxu0
    %v879 = vadd.f32 0.0, %v878
    %v880 = vpop.f32.mrb[0].mxu0
    %881 = vmatprep.mubr.f32.mxu0 0.0
    %882 = vmatmul.mubr.f32.gmra.mrb[0].mxu0 %v394
    %v883 = vpop.f32.mrb[0].mxu0
    %v884 = vadd.f32 0.0, %v883
    %v885 = vpop.f32.mrb[0].mxu0
    %886 = vmatprep.mubr.f32.mxu0 0.0
    %887 = vmatmul.mubr.f32.gmra.mrb[0].mxu0 %v397
    %v888 = vpop.f32.mrb[0].mxu0
    %v889 = vadd.f32 0.0, %v888
    %v890 = vpop.f32.mrb[0].mxu0
    %891 = vmatprep.mubr.f32.mxu0 0.0
    %892 = vmatmul.mubr.f32.gmra.mrb[0].mxu0 %v400
    %v893 = vpop.f32.mrb[0].mxu0
    %v894 = vadd.f32 0.0, %v893
    %v895 = vpop.f32.mrb[0].mxu0
    %896 = vmatprep.mubr.f32.mxu0 0.0
    %897 = vmatmul.mubr.f32.gmra.mrb[0].mxu0 %v403
    %v898 = vpop.f32.mrb[0].mxu0
    %v899 = vadd.f32 0.0, %v898
    %v900 = vpop.f32.mrb[0].mxu0
    %901 = vmatprep.mubr.f32.mxu0 0.0
    %902 = vmatmul.mubr.f32.gmra.mrb[0].mxu0 %v406
    %v903 = vpop.f32.mrb[0].mxu0
    %v904 = vadd.f32 0.0, %v903
    %v905 = vpop.f32.mrb[0].mxu0
    %906 = vmatprep.mubr.f32.mxu0 0.0
    %907 = vmatmul.mubr.f32.gmra.mrb[0].mxu0 %v409
    %v908 = vpop.f32.mrb[0].mxu0
    %v909 = vadd.f32 0.0, %v908
    %v910 = vpop.f32.mrb[0].mxu0
    %911 = vmatprep.mubr.f32.mxu0 0.0
    %912 = vmatmul.mubr.f32.gmra.mrb[0].mxu0 %v412
    %v913 = vpop.f32.mrb[0].mxu0
    %v914 = vadd.f32 0.0, %v913
    %v915 = vpop.f32.mrb[0].mxu0
    %916 = vmatprep.mubr.f32.mxu0 0.0
    %917 = vmatmul.mubr.f32.gmra.mrb[0].mxu0 %v415
    %v918 = vpop.f32.mrb[0].mxu0
    %v919 = vadd.f32 0.0, %v918
    %v920 = vpop.f32.mrb[0].mxu0
    %921 = vmatprep.mubr.f32.mxu0 0.0
    %922 = vmatmul.mubr.f32.gmra.mrb[0].mxu0 %v418
    %v923 = vpop.f32.mrb[0].mxu0
    %v924 = vadd.f32 0.0, %v923
    %v925 = vpop.f32.mrb[0].mxu0
    %926 = vmatprep.mubr.f32.mxu0 0.0
    %927 = vmatmul.mubr.f32.gmra.mrb[0].mxu0 %v421
    %v928 = vpop.f32.mrb[0].mxu0
    %v929 = vadd.f32 0.0, %v928
    %v930 = vpop.f32.mrb[0].mxu0
    %931 = vmatprep.mubr.f32.mxu0 0.0
    %932 = vmatmul.mubr.f32.gmra.mrb[0].mxu0 %v424
    %v933 = vpop.f32.mrb[0].mxu0
    %v934 = vadd.f32 0.0, %v933
    %v935 = vpop.f32.mrb[0].mxu0
    %936 = vmatprep.mubr.f32.mxu0 0.0
    %937 = vmatmul.mubr.f32.gmra.mrb[0].mxu0 %v427
    %v938 = vpop.f32.mrb[0].mxu0
    %v939 = vadd.f32 0.0, %v938
    %v940 = vpop.f32.mrb[0].mxu0
    %941 = vmatprep.mubr.f32.mxu0 0.0
    %942 = vmatmul.mubr.f32.gmra.mrb[0].mxu0 %v430
    %v943 = vpop.f32.mrb[0].mxu0
    %v944 = vadd.f32 0.0, %v943
    %v945 = vpop.f32.mrb[0].mxu0
    %946 = vmatprep.mubr.f32.mxu0 0.0
    %947 = vmatmul.mubr.f32.gmra.mrb[0].mxu0 %v433
    %v948 = vpop.f32.mrb[0].mxu0
    %v949 = vadd.f32 0.0, %v948
    %v950 = vpop.f32.mrb[0].mxu0
    %951 = vmatprep.mubr.f32.mxu0 0.0
    %952 = vmatmul.mubr.f32.gmra.mrb[0].mxu0 %v436
    %v953 = vpop.f32.mrb[0].mxu0
    %v954 = vadd.f32 0.0, %v953
    %v955 = vpop.f32.mrb[0].mxu0
    %956 = vmatprep.mubr.f32.mxu0 0.0
    %957 = vmatmul.mubr.f32.gmra.mrb[0].mxu0 %v439
    %v958 = vpop.f32.mrb[0].mxu0
    %v959 = vadd.f32 0.0, %v958
    %v960 = vpop.f32.mrb[0].mxu0
    %961 = vmatprep.mubr.f32.mxu0 0.0
    %962 = vmatmul.mubr.f32.gmra.mrb[0].mxu0 %v442
    %v963 = vpop.f32.mrb[0].mxu0
    %v964 = vadd.f32 0.0, %v963
    %v965 = vpop.f32.mrb[0].mxu0
    %966 = vmatprep.mubr.f32.mxu0 0.0
    %967 = vmatmul.mubr.f32.gmra.mrb[0].mxu0 %v445
    %v968 = vpop.f32.mrb[0].mxu0
    %v969 = vadd.f32 0.0, %v968
    %v970 = vpop.f32.mrb[0].mxu0
    %971 = vmatprep.mubr.f32.mxu0 0.0
    %972 = vmatmul.mubr.f32.gmra.mrb[0].mxu0 %v448
    %v973 = vpop.f32.mrb[0].mxu0
    %v974 = vadd.f32 0.0, %v973
    %v975 = vpop.f32.mrb[0].mxu0
    %976 = vmatprep.mubr.f32.mxu0 0.0
    %977 = vmatmul.mubr.f32.gmra.mrb[0].mxu0 %v451
    %v978 = vpop.f32.mrb[0].mxu0
    %v979 = vadd.f32 0.0, %v978
    %v980 = vpop.f32.mrb[0].mxu0
    %981 = vmatprep.mubr.f32.mxu0 0.0
    %982 = vmatmul.mubr.f32.gmra.mrb[0].mxu0 %v454
    %v983 = vpop.f32.mrb[0].mxu0
    %v984 = vadd.f32 0.0, %v983
    %v985 = vpop.f32.mrb[0].mxu0
    %986 = vmatprep.mubr.f32.mxu0 0.0
    %987 = vmatmul.mubr.f32.gmra.mrb[0].mxu0 %v457
    %v988 = vpop.f32.mrb[0].mxu0
    %v989 = vadd.f32 0.0, %v988
    %v990 = vpop.f32.mrb[0].mxu0
    %991 = vmatprep.mubr.f32.mxu0 0.0
    %992 = vmatmul.mubr.f32.gmra.mrb[0].mxu0 %v460
    %v993 = vpop.f32.mrb[0].mxu0
    %v994 = vadd.f32 0.0, %v993
    %v995 = vpop.f32.mrb[0].mxu0
    %996 = vmatprep.mubr.f32.mxu0 0.0
    %997 = vmatmul.mubr.f32.gmra.mrb[0].mxu0 %v463
    %v998 = vpop.f32.mrb[0].mxu0
    %v999 = vadd.f32 0.0, %v998
    %v1000 = vpop.f32.mrb[0].mxu0
    %1001 = vmatprep.mubr.f32.mxu0 0.0
    %1002 = vmatmul.mubr.f32.gmra.mrb[0].mxu0 %v466
    %v1003 = vpop.f32.mrb[0].mxu0
    %v1004 = vadd.f32 0.0, %v1003
    %v1005 = vpop.f32.mrb[0].mxu0
    %1006 = vmatprep.mubr.f32.mxu0 0.0
    %1007 = vmatmul.mubr.f32.gmra.mrb[0].mxu0 %v469
    %v1008 = vpop.f32.mrb[0].mxu0
    %v1009 = vadd.f32 0.0, %v1008
    %v1010 = vpop.f32.mrb[0].mxu0
    %1011 = vmatprep.mubr.f32.mxu0 0.0
    %1012 = vmatmul.mubr.f32.gmra.mrb[0].mxu0 %v472
    %v1013 = vpop.f32.mrb[0].mxu0
    %v1014 = vadd.f32 0.0, %v1013
    %v1015 = vpop.f32.mrb[0].mxu0
    %1016 = vmatprep.mubr.f32.mxu0 0.0
    %1017 = vmatmul.mubr.f32.gmra.mrb[0].mxu0 %v475
    %v1018 = vpop.f32.mrb[0].mxu0
    %v1019 = vadd.f32 0.0, %v1018
    %v1020 = vpop.f32.mrb[0].mxu0
    %1021 = vmatprep.mubr.f32.mxu0 0.0
    %1022 = vmatmul.mubr.f32.gmra.mrb[0].mxu0 %v478
    %v1023 = vpop.f32.mrb[0].mxu0
    %v1024 = vadd.f32 0.0, %v1023
    %v1025 = vpop.f32.mrb[0].mxu0
    %1026 = vmatprep.mubr.f32.mxu0 0.0
    %1027 = vmatmul.mubr.f32.gmra.mrb[0].mxu0 %v481
    %v1028 = vpop.f32.mrb[0].mxu0
    %v1029 = vadd.f32 0.0, %v1028
    %v1030 = vpop.f32.mrb[0].mxu0
    %1031 = vmatprep.mubr.f32.mxu0 0.0
    %1032 = vmatmul.mubr.f32.gmra.mrb[0].mxu0 %v484
    %v1033 = vpop.f32.mrb[0].mxu0
    %v1034 = vadd.f32 0.0, %v1033
    %v1035 = vpop.f32.mrb[0].mxu0
    %1036 = vmatprep.mubr.f32.mxu0 0.0
    %1037 = vmatmul.mubr.f32.gmra.mrb[0].mxu0 %v487
    %v1038 = vpop.f32.mrb[0].mxu0
    %v1039 = vadd.f32 0.0, %v1038
    %v1040 = vpop.f32.mrb[0].mxu0
    %1041 = vmatprep.mubr.f32.mxu0 0.0
    %1042 = vmatmul.mubr.f32.gmra.mrb[0].mxu0 %v490
    %v1043 = vpop.f32.mrb[0].mxu0
    %v1044 = vadd.f32 0.0, %v1043
    %v1045 = vpop.f32.mrb[0].mxu0
    %1046 = vmatprep.mubr.f32.mxu0 0.0
    %1047 = vmatmul.mubr.f32.gmra.mrb[0].mxu0 %v493
    %v1048 = vpop.f32.mrb[0].mxu0
    %v1049 = vadd.f32 0.0, %v1048
    %v1050 = vpop.f32.mrb[0].mxu0
    %1051 = vmatprep.mubr.f32.mxu0 0.0
    %1052 = vmatmul.mubr.f32.gmra.mrb[0].mxu0 %v496
    %v1053 = vpop.f32.mrb[0].mxu0
    %v1054 = vadd.f32 0.0, %v1053
    %v1055 = vpop.f32.mrb[0].mxu0
    %1056 = vmatprep.mubr.f32.mxu0 0.0
    %1057 = vmatmul.mubr.f32.gmra.mrb[0].mxu0 %v499
    %v1058 = vpop.f32.mrb[0].mxu0
    %v1059 = vadd.f32 0.0, %v1058
    %v1060 = vpop.f32.mrb[0].mxu0
    %1061 = vmatprep.mubr.f32.mxu0 0.0
    %1062 = vmatmul.mubr.f32.gmra.mrb[0].mxu0 %v502
    %v1063 = vpop.f32.mrb[0].mxu0
    %v1064 = vadd.f32 0.0, %v1063
    %v1065 = vpop.f32.mrb[0].mxu0
    %1066 = vmatprep.mubr.f32.mxu0 0.0
    %1067 = vmatmul.mubr.f32.gmra.mrb[0].mxu0 %v505
    %v1068 = vpop.f32.mrb[0].mxu0
    %v1069 = vadd.f32 0.0, %v1068
    %v1070 = vpop.f32.mrb[0].mxu0
    %1071 = vmatprep.mubr.f32.mxu0 0.0
    %1072 = vmatmul.mubr.f32.gmra.mrb[0].mxu0 %v508
    %v1073 = vpop.f32.mrb[0].mxu0
    %v1074 = vadd.f32 0.0, %v1073
    %v1075 = vpop.f32.mrb[0].mxu0
    %1076 = vmatprep.mubr.f32.mxu0 0.0
    %1077 = vmatmul.mubr.f32.gmra.mrb[0].mxu0 %v511
    %v1078 = vpop.f32.mrb[0].mxu0
    %v1079 = vadd.f32 0.0, %v1078
    %v1080 = vpop.f32.mrb[0].mxu0
    %1081 = vmatprep.mubr.f32.mxu0 0.0
    %1082 = vmatmul.mubr.f32.gmra.mrb[0].mxu0 %v514
    %v1083 = vpop.f32.mrb[0].mxu0
    %v1084 = vadd.f32 0.0, %v1083
    %v1085 = vpop.f32.mrb[0].mxu0
    %1086 = vmatprep.mubr.f32.mxu0 0.0
    %1087 = vmatmul.mubr.f32.gmra.mrb[0].mxu0 %v517
    %v1088 = vpop.f32.mrb[0].mxu0
    %v1089 = vadd.f32 0.0, %v1088
    %v1090 = vpop.f32.mrb[0].mxu0
    %1091 = vmatprep.mubr.f32.mxu0 0.0
    %1092 = vmatmul.mubr.f32.gmra.mrb[0].mxu0 %v520
    %v1093 = vpop.f32.mrb[0].mxu0
    %v1094 = vadd.f32 0.0, %v1093
    %v1095 = vpop.f32.mrb[0].mxu0
    %1096 = vmatprep.mubr.f32.mxu0 0.0
    %1097 = vmatmul.mubr.f32.gmra.mrb[0].mxu0 %v523
    %v1098 = vpop.f32.mrb[0].mxu0
    %v1099 = vadd.f32 0.0, %v1098
    %v1100 = vpop.f32.mrb[0].mxu0
    %1101 = vmatprep.mubr.f32.mxu0 0.0
    %1102 = vmatmul.mubr.f32.gmra.mrb[0].mxu0 %v526
    %v1103 = vpop.f32.mrb[0].mxu0
    %v1104 = vadd.f32 0.0, %v1103
    %v1105 = vpop.f32.mrb[0].mxu0
    %1106 = vmatprep.mubr.f32.mxu0 0.0
    %1107 = vmatmul.mubr.f32.gmra.mrb[0].mxu0 %v529
    %v1108 = vpop.f32.mrb[0].mxu0
    %v1109 = vadd.f32 0.0, %v1108
    %v1110 = vpop.f32.mrb[0].mxu0
    %1111 = vmatprep.mubr.f32.mxu0 0.0
    %1112 = vmatmul.mubr.f32.gmra.mrb[0].mxu0 %v532
    %v1113 = vpop.f32.mrb[0].mxu0
    %v1114 = vadd.f32 0.0, %v1113
    %v1115 = vpop.f32.mrb[0].mxu0
    %1116 = vmatprep.mubr.f32.mxu0 0.0
    %1117 = vmatmul.mubr.f32.gmra.mrb[0].mxu0 %v535
    %v1118 = vpop.f32.mrb[0].mxu0
    %v1119 = vadd.f32 0.0, %v1118
    %v1120 = vpop.f32.mrb[0].mxu0
    %1121 = vmatprep.mubr.f32.mxu0 0.0
    %1122 = vmatmul.mubr.f32.gmra.mrb[0].mxu0 %v538
    %v1123 = vpop.f32.mrb[0].mxu0
    %v1124 = vadd.f32 0.0, %v1123
    %v1125 = vpop.f32.mrb[0].mxu0
    %1126 = vmatprep.mubr.f32.mxu0 0.0
    %1127 = vmatmul.mubr.f32.gmra.mrb[0].mxu0 %v541
    %v1128 = vpop.f32.mrb[0].mxu0
    %v1129 = vadd.f32 0.0, %v1128
    %v1130 = vpop.f32.mrb[0].mxu0
    %1131 = vmatprep.mubr.f32.mxu0 0.0
    %1132 = vmatmul.mubr.f32.gmra.mrb[0].mxu0 %v544
    %v1133 = vpop.f32.mrb[0].mxu0
    %v1134 = vadd.f32 0.0, %v1133
    %v1135 = vpop.f32.mrb[0].mxu0
    %1136 = vmatprep.mubr.f32.mxu0 0.0
    %1137 = vmatmul.mubr.f32.gmra.mrb[0].mxu0 %v547
    %v1138 = vpop.f32.mrb[0].mxu0
    %v1139 = vadd.f32 0.0, %v1138
    %v1140 = vpop.f32.mrb[0].mxu0
    %1141 = vmatprep.mubr.f32.mxu0 0.0
    %1142 = vmatmul.mubr.f32.gmra.mrb[0].mxu0 %v550
    %v1143 = vpop.f32.mrb[0].mxu0
    %v1144 = vadd.f32 0.0, %v1143
    %v1145 = vpop.f32.mrb[0].mxu0
    %1146 = vmatprep.mubr.f32.mxu0 0.0
    %1147 = vmatmul.mubr.f32.gmra.mrb[0].mxu0 %v553
    %v1148 = vpop.f32.mrb[0].mxu0
    %v1149 = vadd.f32 0.0, %v1148
    %v1150 = vpop.f32.mrb[0].mxu0
    %1151 = vmatprep.mubr.f32.mxu0 0.0
    %1152 = vmatmul.mubr.f32.gmra.mrb[0].mxu0 %v556
    %v1153 = vpop.f32.mrb[0].mxu0
    %v1154 = vadd.f32 0.0, %v1153
    %v1155 = vpop.f32.mrb[0].mxu0
    %1156 = vmatprep.mubr.f32.mxu0 0.0
    %1157 = vmatmul.mubr.f32.gmra.mrb[0].mxu0 %v559
    %v1158 = vpop.f32.mrb[0].mxu0
    %v1159 = vadd.f32 0.0, %v1158
    %v1160 = vpop.f32.mrb[0].mxu0
    %1161 = vmatprep.mubr.f32.mxu0 0.0
    %1162 = vmatmul.mubr.f32.gmra.mrb[0].mxu0 %v562
    %v1163 = vpop.f32.mrb[0].mxu0
    %v1164 = vadd.f32 0.0, %v1163
    %v1165 = vpop.f32.mrb[0].mxu0
    %1166 = vmatprep.mubr.f32.mxu0 0.0
    %1167 = vmatmul.mubr.f32.gmra.mrb[0].mxu0 %v565
    %v1168 = vpop.f32.mrb[0].mxu0
    %v1169 = vadd.f32 0.0, %v1168
    %v1170 = vpop.f32.mrb[0].mxu0
    %1171 = vmatprep.mubr.f32.mxu0 0.0
    %1172 = vmatmul.mubr.f32.gmra.mrb[0].mxu0 %v568
    %v1173 = vpop.f32.mrb[0].mxu0
    %v1174 = vadd.f32 0.0, %v1173
    %v1175 = vpop.f32.mrb[0].mxu0
    %1176 = vmatprep.mubr.f32.mxu0 0.0
    %1177 = vmatmul.mubr.f32.gmra.mrb[0].mxu0 %v571
    %v1178 = vpop.f32.mrb[0].mxu0
    %v1179 = vadd.f32 0.0, %v1178
    %v1180 = vpop.f32.mrb[0].mxu0
    %1181 = vmatprep.mubr.f32.mxu0 0.0
    %1182 = vmatmul.mubr.f32.gmra.mrb[0].mxu0 %v574
    %v1183 = vpop.f32.mrb[0].mxu0
    %v1184 = vadd.f32 0.0, %v1183
    %v1185 = vpop.f32.mrb[0].mxu0
    %1186 = vmatprep.mubr.f32.mxu0 0.0
    %1187 = vmatmul.mubr.f32.gmra.mrb[0].mxu0 %v577
    %v1188 = vpop.f32.mrb[0].mxu0
    %v1189 = vadd.f32 0.0, %v1188
    %v1190 = vpop.f32.mrb[0].mxu0
    %1191 = vmatprep.mubr.f32.mxu0 0.0
    %1192 = vmatmul.mubr.f32.gmra.mrb[0].mxu0 %v580
    %v1193 = vpop.f32.mrb[0].mxu0
    %v1194 = vadd.f32 0.0, %v1193
    %v1195 = vpop.f32.mrb[0].mxu0
    %1196 = vmatprep.mubr.f32.mxu0 0.0
    %1197 = vmatmul.mubr.f32.gmra.mrb[0].mxu0 %v583
    %v1198 = vpop.f32.mrb[0].mxu0
    %v1199 = vadd.f32 0.0, %v1198
    %v1200 = vpop.f32.mrb[0].mxu0
    %1201 = vmatprep.mubr.f32.mxu0 0.0
    %1202 = vmatmul.mubr.f32.gmra.mrb[0].mxu0 %v586
    %v1203 = vpop.f32.mrb[0].mxu0
    %v1204 = vadd.f32 0.0, %v1203
    %v1205 = vpop.f32.mrb[0].mxu0
    %1206 = vmatprep.mubr.f32.mxu0 0.0
    %1207 = vmatmul.mubr.f32.gmra.mrb[0].mxu0 %v589
    %v1208 = vpop.f32.mrb[0].mxu0
    %v1209 = vadd.f32 0.0, %v1208
    %v1210 = vpop.f32.mrb[0].mxu0
    %1211 = vmatprep.mubr.f32.mxu0 0.0
    %1212 = vmatmul.mubr.f32.gmra.mrb[0].mxu0 %v592
    %v1213 = vpop.f32.mrb[0].mxu0
    %v1214 = vadd.f32 0.0, %v1213
    %v1215 = vpop.f32.mrb[0].mxu0
    %1216 = vmatprep.mubr.f32.mxu0 0.0
    %1217 = vmatmul.mubr.f32.gmra.mrb[0].mxu0 %v595
    %v1218 = vpop.f32.mrb[0].mxu0
    %v1219 = vadd.f32 0.0, %v1218
    %v1220 = vpop.f32.mrb[0].mxu0
    %1221 = vmatprep.mubr.f32.mxu0 0.0
    %1222 = vmatmul.mubr.f32.gmra.mrb[0].mxu0 %v598
    %v1223 = vpop.f32.mrb[0].mxu0
    %v1224 = vadd.f32 0.0, %v1223
    %v1225 = vpop.f32.mrb[0].mxu0
    %1226 = vmatprep.mubr.f32.mxu0 0.0
    %1227 = vmatmul.mubr.f32.gmra.mrb[0].mxu0 %v601
    %v1228 = vpop.f32.mrb[0].mxu0
    %v1229 = vadd.f32 0.0, %v1228
    %v1230 = vpop.f32.mrb[0].mxu0
    %1231 = vmatprep.mubr.f32.mxu0 0.0
    %1232 = vmatmul.mubr.f32.gmra.mrb[0].mxu0 %v604
    %v1233 = vpop.f32.mrb[0].mxu0
    %v1234 = vadd.f32 0.0, %v1233
    %v1235 = vpop.f32.mrb[0].mxu0
    %1236 = vmatprep.mubr.f32.mxu0 0.0
    %1237 = vmatmul.mubr.f32.gmra.mrb[0].mxu0 %v607
    %v1238 = vpop.f32.mrb[0].mxu0
    %v1239 = vadd.f32 0.0, %v1238
    %v1240 = vpop.f32.mrb[0].mxu0
    %1241 = vmatprep.mubr.f32.mxu0 0.0
    %1242 = vmatmul.mubr.f32.gmra.mrb[0].mxu0 %v610
    %v1243 = vpop.f32.mrb[0].mxu0
    %v1244 = vadd.f32 0.0, %v1243
    %v1245 = vpop.f32.mrb[0].mxu0
    %1246 = vmatprep.mubr.f32.mxu0 0.0
    %1247 = vmatmul.mubr.f32.gmra.mrb[0].mxu0 %v613
    %v1248 = vpop.f32.mrb[0].mxu0
    %v1249 = vadd.f32 0.0, %v1248
    %v1250 = vpop.f32.mrb[0].mxu0
    %1251 = vmatprep.mubr.f32.mxu0 0.0
    %1252 = vmatmul.mubr.f32.gmra.mrb[0].mxu0 %v616
    %v1253 = vpop.f32.mrb[0].mxu0
    %v1254 = vadd.f32 0.0, %v1253
    %v1255 = vpop.f32.mrb[0].mxu0
    %1256 = vmatprep.mubr.f32.mxu0 0.0
    %1257 = vmatmul.mubr.f32.gmra.mrb[0].mxu0 %v619
    %v1258 = vpop.f32.mrb[0].mxu0
    %v1259 = vadd.f32 0.0, %v1258
    %v1260 = vpop.f32.mrb[0].mxu0
    %1261 = vmatprep.mubr.f32.mxu0 0.0
    %1262 = vmatmul.mubr.f32.gmra.mrb[0].mxu0 %v622
    %v1263 = vpop.f32.mrb[0].mxu0
    %v1264 = vadd.f32 0.0, %v1263
    %v1265 = vpop.f32.mrb[0].mxu0
    %1266 = vmatprep.mubr.f32.mxu0 0.0
    %1267 = vmatmul.mubr.f32.gmra.mrb[0].mxu0 %v625
    %v1268 = vpop.f32.mrb[0].mxu0
    %v1269 = vadd.f32 0.0, %v1268
    %v1270 = vpop.f32.mrb[0].mxu0
    %1271 = vmatprep.mubr.f32.mxu0 0.0
    %1272 = vmatmul.mubr.f32.gmra.mrb[0].mxu0 %v628
    %v1273 = vpop.f32.mrb[0].mxu0
    %v1274 = vadd.f32 0.0, %v1273
    %v1275 = vpop.f32.mrb[0].mxu0
    %1276 = vmatprep.mubr.f32.mxu0 0.0
    %1277 = vmatmul.mubr.f32.gmra.mrb[0].mxu0 %v631
    %v1278 = vpop.f32.mrb[0].mxu0
    %v1279 = vadd.f32 0.0, %v1278
    %v1280 = vpop.f32.mrb[0].mxu0
    %1281 = vmatprep.mubr.f32.mxu0 0.0
    %1282 = vmatmul.mubr.f32.gmra.mrb[0].mxu0 %v634
    %v1283 = vpop.f32.mrb[0].mxu0
    %v1284 = vadd.f32 0.0, %v1283
    %v1285 = vpop.f32.mrb[0].mxu0
    %1286 = vmatprep.mubr.f32.mxu0 0.0
    %1287 = vmatmul.mubr.f32.gmra.mrb[0].mxu0 %v637
    %v1288 = vpop.f32.mrb[0].mxu0
    %v1289 = vadd.f32 0.0, %v1288
    %v1290 = vpop.f32.mrb[0].mxu0
    %1291 = vmatprep.mubr.f32.mxu0 0.0
    %1292 = vmatmul.mubr.f32.gmra.mrb[0].mxu0 %v640
    %v1293 = vpop.f32.mrb[0].mxu0
    %v1294 = vadd.f32 0.0, %v1293
    %v1295 = vpop.f32.mrb[0].mxu0
    %1296 = vmatprep.mubr.f32.mxu0 0.0
    %1297 = vmatmul.mubr.f32.gmra.mrb[0].mxu0 %v643
    %v1298 = vpop.f32.mrb[0].mxu0
    %v1299 = vadd.f32 0.0, %v1298
    %v1300 = vpop.f32.mrb[0].mxu0
    %1301 = vmatprep.mubr.f32.mxu0 0.0
    %1302 = vmatmul.mubr.f32.gmra.mrb[0].mxu0 %v646
    %v1303 = vpop.f32.mrb[0].mxu0
    %v1304 = vadd.f32 0.0, %v1303
    %v1305 = vpop.f32.mrb[0].mxu0
    %1306 = vmatprep.mubr.f32.mxu0 0.0
    %1307 = vmatmul.mubr.f32.gmra.mrb[0].mxu0 %v649
    %v1308 = vpop.f32.mrb[0].mxu0
    %v1309 = vadd.f32 0.0, %v1308
    %v1310 = vpop.f32.mrb[0].mxu0
    %1311 = vmatprep.mubr.f32.mxu0 0.0
    %1312 = vmatmul.mubr.f32.gmra.mrb[0].mxu0 %v652
    %v1313 = vpop.f32.mrb[0].mxu0
    %v1314 = vadd.f32 0.0, %v1313
    %v1315 = vpop.f32.mrb[0].mxu0
    %1316 = vmatprep.mubr.f32.mxu0 0.0
    %1317 = vmatmul.mubr.f32.gmra.mrb[0].mxu0 %v655
    %v1318 = vpop.f32.mrb[0].mxu0
    %v1319 = vadd.f32 0.0, %v1318
    %v1320 = vpop.f32.mrb[0].mxu0
    %1321 = vmatprep.mubr.f32.mxu0 0.0
    %1322 = vmatmul.mubr.f32.gmra.mrb[0].mxu0 %v658
    %v1323 = vpop.f32.mrb[0].mxu0
    %v1324 = vadd.f32 0.0, %v1323
    %v1325 = vpop.f32.mrb[0].mxu0
    %1326 = vmatprep.mubr.f32.mxu0 0.0
    %1327 = vmatmul.mubr.f32.gmra.mrb[0].mxu0 %v661
    %v1328 = vpop.f32.mrb[0].mxu0
    %v1329 = vadd.f32 0.0, %v1328
    %v1330 = vpop.f32.mrb[0].mxu0
    %1331 = vmatprep.mubr.f32.mxu0 0.0
    %1332 = vmatmul.mubr.f32.gmra.mrb[0].mxu0 %v664
    %v1333 = vpop.f32.mrb[0].mxu0
    %v1334 = vadd.f32 0.0, %v1333
    %v1335 = vpop.f32.mrb[0].mxu0
    %1336 = vmatprep.mubr.f32.mxu0 0.0
    %1337 = vmatmul.mubr.f32.gmra.mrb[0].mxu0 %v667
    %v1338 = vpop.f32.mrb[0].mxu0
    %v1339 = vadd.f32 0.0, %v1338
    %v1340 = vpop.f32.mrb[0].mxu0
    %1341 = vmatprep.mubr.f32.mxu0 0.0
    %1342 = vmatmul.mubr.f32.gmra.mrb[0].mxu0 %v670
    %v1343 = vpop.f32.mrb[0].mxu0
    %v1344 = vadd.f32 0.0, %v1343
    %v1345 = vpop.f32.mrb[0].mxu0
    %1346 = vmatprep.mubr.f32.mxu0 0.0
    %1347 = vmatmul.mubr.f32.gmra.mrb[0].mxu0 %v673
    %v1348 = vpop.f32.mrb[0].mxu0
    %v1349 = vadd.f32 0.0, %v1348
    %v1350 = vpop.f32.mrb[0].mxu0
    %1351 = vmatprep.mubr.f32.mxu0 0.0
    %1352 = vmatmul.mubr.f32.gmra.mrb[0].mxu0 %v676
    %v1353 = vpop.f32.mrb[0].mxu0
    %v1354 = vadd.f32 0.0, %v1353
    %v1355 = vpop.f32.mrb[0].mxu0
    %1356 = vmatprep.mubr.f32.mxu0 0.0
    %1357 = vmatmul.mubr.f32.gmra.mrb[0].mxu0 %v679
    %v1358 = vpop.f32.mrb[0].mxu0
    %v1359 = vadd.f32 0.0, %v1358
    %v1360 = vpop.f32.mrb[0].mxu0
    %1361 = vmatprep.mubr.f32.mxu0 0.0
    %1362 = vmatmul.mubr.f32.gmra.mrb[0].mxu0 %v682
    %v1363 = vpop.f32.mrb[0].mxu0
    %v1364 = vadd.f32 0.0, %v1363
    %v1365 = vpop.f32.mrb[0].mxu0
    %1366 = vmatprep.mubr.f32.mxu0 0.0
    %1367 = vmatmul.mubr.f32.gmra.mrb[0].mxu0 %v685
    %v1368 = vpop.f32.mrb[0].mxu0
    %v1369 = vadd.f32 0.0, %v1368
    %v1370 = vpop.f32.mrb[0].mxu0
    %1371 = vmatprep.mubr.f32.mxu0 0.0
    %1372 = vmatmul.mubr.f32.gmra.mrb[0].mxu0 %v688
    %v1373 = vpop.f32.mrb[0].mxu0
    %v1374 = vadd.f32 0.0, %v1373
    %v1375 = vpop.f32.mrb[0].mxu0
    %1376 = vmatprep.mubr.f32.mxu0 0.0
    %1377 = vmatmul.mubr.f32.gmra.mrb[0].mxu0 %v691
    %v1378 = vpop.f32.mrb[0].mxu0
    %v1379 = vadd.f32 0.0, %v1378
    %v1380 = vpop.f32.mrb[0].mxu0
    %1381 = vmatprep.mubr.f32.mxu0 0.0
    %1382 = vmatmul.mubr.f32.gmra.mrb[0].mxu0 %v694
    %v1383 = vpop.f32.mrb[0].mxu0
    %v1384 = vadd.f32 0.0, %v1383
    %v1385 = vpop.f32.mrb[0].mxu0
    %1386 = vmatprep.mubr.f32.mxu0 0.0
    %1387 = vmatmul.mubr.f32.gmra.mrb[0].mxu0 %v697
    %v1388 = vpop.f32.mrb[0].mxu0
    %v1389 = vadd.f32 0.0, %v1388
    %v1390 = vpop.f32.mrb[0].mxu0
    %1391 = vmatprep.mubr.f32.mxu0 0.0
    %1392 = vmatmul.mubr.f32.gmra.mrb[0].mxu0 %v700
    %v1393 = vpop.f32.mrb[0].mxu0
    %v1394 = vadd.f32 0.0, %v1393
    %v1395 = vpop.f32.mrb[0].mxu0
    %1396 = vmatprep.mubr.f32.mxu0 0.0
    %1397 = vmatmul.mubr.f32.gmra.mrb[0].mxu0 %v703
    %v1398 = vpop.f32.mrb[0].mxu0
    %v1399 = vadd.f32 0.0, %v1398
    %v1400 = vpop.f32.mrb[0].mxu0
    %1401 = vmatprep.mubr.f32.mxu0 0.0
    %1402 = vmatmul.mubr.f32.gmra.mrb[0].mxu0 %v706
    %v1403 = vpop.f32.mrb[0].mxu0
    %v1404 = vadd.f32 0.0, %v1403
    %v1405 = vpop.f32.mrb[0].mxu0
    %1406 = vmatprep.mubr.f32.mxu0 0.0
    %1407 = vmatmul.mubr.f32.gmra.mrb[0].mxu0 %v709
    %v1408 = vpop.f32.mrb[0].mxu0
    %v1409 = vadd.f32 0.0, %v1408
    %v1410 = vpop.f32.mrb[0].mxu0
    %1411 = vmatprep.mubr.f32.mxu0 0.0
    %1412 = vmatmul.mubr.f32.gmra.mrb[0].mxu0 %v712
    %v1413 = vpop.f32.mrb[0].mxu0
    %v1414 = vadd.f32 0.0, %v1413
    %v1415 = vpop.f32.mrb[0].mxu0
    %1416 = vmatprep.mubr.f32.mxu0 0.0
    %1417 = vmatmul.mubr.f32.gmra.mrb[0].mxu0 %v715
    %v1418 = vpop.f32.mrb[0].mxu0
    %v1419 = vadd.f32 0.0, %v1418
    %v1420 = vpop.f32.mrb[0].mxu0
    %1421 = vdwg.mxu0
    %v1423 = vsel %vm332, %v184, 0
    %v1426 = vsel %vm332, %v185, 0
    %v1429 = vsel %vm332, %v186, 0
    %v1432 = vsel %vm332, %v187, 0
    %v1435 = vsel %vm332, %v188, 0
    %v1438 = vsel %vm332, %v189, 0
    %v1441 = vsel %vm332, %v190, 0
    %v1444 = vsel %vm332, %v191, 0
    %v1447 = vsel %vm332, %v192, 0
    %v1450 = vsel %vm332, %v193, 0
    %v1453 = vsel %vm332, %v194, 0
    %v1456 = vsel %vm332, %v195, 0
    %v1459 = vsel %vm332, %v196, 0
    %v1462 = vsel %vm332, %v197, 0
    %v1465 = vsel %vm332, %v198, 0
    %v1468 = vsel %vm332, %v199, 0
    %v1471 = vsel %vm332, %v200, 0
    %v1474 = vsel %vm332, %v201, 0
    %v1477 = vsel %vm332, %v202, 0
    %v1480 = vsel %vm332, %v203, 0
    %v1483 = vsel %vm332, %v204, 0
    %v1486 = vsel %vm332, %v205, 0
    %v1489 = vsel %vm332, %v206, 0
    %v1492 = vsel %vm332, %v207, 0
    %v1495 = vsel %vm332, %v208, 0
    %v1498 = vsel %vm332, %v209, 0
    %v1501 = vsel %vm332, %v210, 0
    %v1504 = vsel %vm332, %v211, 0
    %v1507 = vsel %vm332, %v212, 0
    %v1510 = vsel %vm332, %v213, 0
    %v1513 = vsel %vm332, %v214, 0
    %v1516 = vsel %vm332, %v215, 0
    %v1519 = vsel %vm332, %v216, 0
    %v1522 = vsel %vm332, %v217, 0
    %v1525 = vsel %vm332, %v218, 0
    %v1528 = vsel %vm332, %v219, 0
    %v1531 = vsel %vm332, %v220, 0
    %v1534 = vsel %vm332, %v221, 0
    %v1537 = vsel %vm332, %v222, 0
    %v1540 = vsel %vm332, %v223, 0
    %v1543 = vsel %vm332, %v224, 0
    %v1546 = vsel %vm332, %v225, 0
    %v1549 = vsel %vm332, %v226, 0
    %v1552 = vsel %vm332, %v227, 0
    %v1555 = vsel %vm332, %v228, 0
    %v1558 = vsel %vm332, %v229, 0
    %v1561 = vsel %vm332, %v230, 0
    %v1564 = vsel %vm332, %v231, 0
    %v1567 = vsel %vm332, %v232, 0
    %v1570 = vsel %vm332, %v233, 0
    %v1573 = vsel %vm332, %v234, 0
    %v1576 = vsel %vm332, %v235, 0
    %v1579 = vsel %vm332, %v236, 0
    %v1582 = vsel %vm332, %v237, 0
    %v1585 = vsel %vm332, %v238, 0
    %v1588 = vsel %vm332, %v239, 0
    %v1591 = vsel %vm332, %v240, 0
    %v1594 = vsel %vm332, %v241, 0
    %v1597 = vsel %vm332, %v242, 0
    %v1600 = vsel %vm332, %v243, 0
    %v1603 = vsel %vm332, %v244, 0
    %v1606 = vsel %vm332, %v245, 0
    %v1609 = vsel %vm332, %v246, 0
    %v1612 = vsel %vm332, %v247, 0
    %v1615 = vsel %vm332, %v248, 0
    %v1618 = vsel %vm332, %v249, 0
    %v1621 = vsel %vm332, %v250, 0
    %v1624 = vsel %vm332, %v251, 0
    %v1627 = vsel %vm332, %v252, 0
    %v1630 = vsel %vm332, %v253, 0
    %v1633 = vsel %vm332, %v254, 0
    %v1636 = vsel %vm332, %v255, 0
    %v1639 = vsel %vm332, %v256, 0
    %v1642 = vsel %vm332, %v257, 0
    %v1645 = vsel %vm332, %v258, 0
    %v1648 = vsel %vm332, %v259, 0
    %v1651 = vsel %vm332, %v260, 0
    %v1654 = vsel %vm332, %v261, 0
    %v1657 = vsel %vm332, %v262, 0
    %v1660 = vsel %vm332, %v263, 0
    %v1663 = vsel %vm332, %v264, 0
    %v1666 = vsel %vm332, %v265, 0
    %v1669 = vsel %vm332, %v266, 0
    %v1672 = vsel %vm332, %v267, 0
    %v1675 = vsel %vm332, %v268, 0
    %v1678 = vsel %vm332, %v269, 0
    %v1681 = vsel %vm332, %v270, 0
    %v1684 = vsel %vm332, %v271, 0
    %v1687 = vsel %vm332, %v272, 0
    %v1690 = vsel %vm332, %v273, 0
    %v1693 = vsel %vm332, %v274, 0
    %v1696 = vsel %vm332, %v275, 0
    %v1699 = vsel %vm332, %v276, 0
    %v1702 = vsel %vm332, %v277, 0
    %v1705 = vsel %vm332, %v278, 0
    %v1708 = vsel %vm332, %v279, 0
    %v1711 = vsel %vm332, %v280, 0
    %v1714 = vsel %vm332, %v281, 0
    %v1717 = vsel %vm332, %v282, 0
    %v1720 = vsel %vm332, %v283, 0
    %v1723 = vsel %vm332, %v284, 0
    %v1726 = vsel %vm332, %v285, 0
    %v1729 = vsel %vm332, %v286, 0
    %v1732 = vsel %vm332, %v287, 0
    %v1735 = vsel %vm332, %v288, 0
    %v1738 = vsel %vm332, %v289, 0
    %v1741 = vsel %vm332, %v290, 0
    %v1744 = vsel %vm332, %v291, 0
    %v1747 = vsel %vm332, %v292, 0
    %v1750 = vsel %vm332, %v293, 0
    %v1753 = vsel %vm332, %v294, 0
    %v1756 = vsel %vm332, %v295, 0
    %v1759 = vsel %vm332, %v296, 0
    %v1762 = vsel %vm332, %v297, 0
    %v1765 = vsel %vm332, %v298, 0
    %v1768 = vsel %vm332, %v299, 0
    %v1771 = vsel %vm332, %v300, 0
    %v1774 = vsel %vm332, %v301, 0
    %v1777 = vsel %vm332, %v302, 0
    %v1780 = vsel %vm332, %v303, 0
    %v1783 = vsel %vm332, %v304, 0
    %v1786 = vsel %vm332, %v305, 0
    %v1789 = vsel %vm332, %v306, 0
    %v1792 = vsel %vm332, %v307, 0
    %v1795 = vsel %vm332, %v308, 0
    %v1798 = vsel %vm332, %v309, 0
    %v1801 = vsel %vm332, %v310, 0
    %v1804 = vsel %vm332, %v311, 0
    %1806 = vmatprep.subr.mxu0 0.0
    %1807 = vmatpush1.msra.mxu0 %v324
    %1808 = vmatprep.subr.mxu0 0.0
    %1809 = vmatpush1.msra.mxu0 %v325
    %1810 = vmatprep.subr.mxu0 0.0
    %1811 = vmatpush1.msra.mxu0 %v326
    %1812 = vmatprep.subr.mxu0 0.0
    %1813 = vmatpush1.msra.mxu0 %v327
    %1814 = vmatprep.subr.mxu0 0.0
    %1815 = vmatpush1.msra.mxu0 0.0
    %1816 = vmatprep.subr.mxu0 0.0
    %1817 = vmatpush1.msra.mxu0 0.0
    %1818 = vmatprep.subr.mxu0 0.0
    %1819 = vmatpush1.msra.mxu0 0.0
    %1820 = vmatprep.subr.mxu0 0.0
    %1821 = vmatpush1.msra.mxu0 0.0
    %1822 = vmatprep.subr.mxu0 0.0
    %1823 = vmatpush1.msra.mxu0 0.0
    %1824 = vmatprep.subr.mxu0 0.0
    %1825 = vmatpush1.msra.mxu0 0.0
    %1826 = vmatprep.subr.mxu0 0.0
    %1827 = vmatpush1.msra.mxu0 0.0
    %1828 = vmatprep.subr.mxu0 0.0
    %1829 = vmatpush1.msra.mxu0 0.0
    %1830 = vmatprep.subr.mxu0 0.0
    %1831 = vmatpush1.msra.mxu0 0.0
    %1832 = vmatprep.subr.mxu0 0.0
    %1833 = vmatpush1.msra.mxu0 0.0
    %1834 = vmatprep.subr.mxu0 0.0
    %1835 = vmatpush1.msra.mxu0 0.0
    %1836 = vmatprep.subr.mxu0 0.0
    %1837 = vmatpush1.msra.mxu0 0.0
    %1838 = vmatprep.subr.mxu0 0.0
    %1839 = vmatpush1.msra.mxu0 0.0
    %1840 = vmatprep.subr.mxu0 0.0
    %1841 = vmatpush1.msra.mxu0 0.0
    %1842 = vmatprep.subr.mxu0 0.0
    %1843 = vmatpush1.msra.mxu0 0.0
    %1844 = vmatprep.subr.mxu0 0.0
    %1845 = vmatpush1.msra.mxu0 0.0
    %1846 = vmatprep.subr.mxu0 0.0
    %1847 = vmatpush1.msra.mxu0 0.0
    %1848 = vmatprep.subr.mxu0 0.0
    %1849 = vmatpush1.msra.mxu0 0.0
    %1850 = vmatprep.subr.mxu0 0.0
    %1851 = vmatpush1.msra.mxu0 0.0
    %1852 = vmatprep.subr.mxu0 0.0
    %1853 = vmatpush1.msra.mxu0 0.0
    %1854 = vmatprep.subr.mxu0 0.0
    %1855 = vmatpush1.msra.mxu0 0.0
    %1856 = vmatprep.subr.mxu0 0.0
    %1857 = vmatpush1.msra.mxu0 0.0
    %1858 = vmatprep.subr.mxu0 0.0
    %1859 = vmatpush1.msra.mxu0 0.0
    %1860 = vmatprep.subr.mxu0 0.0
    %1861 = vmatpush1.msra.mxu0 0.0
    %1862 = vmatprep.subr.mxu0 0.0
    %1863 = vmatpush1.msra.mxu0 0.0
    %1864 = vmatprep.subr.mxu0 0.0
    %1865 = vmatpush1.msra.mxu0 0.0
    %1866 = vmatprep.subr.mxu0 0.0
    %1867 = vmatpush1.msra.mxu0 0.0
    %1868 = vmatprep.subr.mxu0 0.0
    %1869 = vmatpush1.msra.mxu0 0.0
    %1870 = vmatprep.mubr.f32.mxu0 0.0
    %1871 = vmatmul.mubr.f32.gmra.mrb[0].mxu0 %v1423
    %v1872 = vpop.f32.mrb[0].mxu0
    %v1873 = vadd.f32 0.0, %v1872
    %v1874 = vpop.f32.mrb[0].mxu0
    %1875 = vmatprep.mubr.f32.mxu0 0.0
    %1876 = vmatmul.mubr.f32.gmra.mrb[0].mxu0 %v1426
    %v1877 = vpop.f32.mrb[0].mxu0
    %v1878 = vadd.f32 0.0, %v1877
    %v1879 = vpop.f32.mrb[0].mxu0
    %1880 = vmatprep.mubr.f32.mxu0 0.0
    %1881 = vmatmul.mubr.f32.gmra.mrb[0].mxu0 %v1429
    %v1882 = vpop.f32.mrb[0].mxu0
    %v1883 = vadd.f32 0.0, %v1882
    %v1884 = vpop.f32.mrb[0].mxu0
    %1885 = vmatprep.mubr.f32.mxu0 0.0
    %1886 = vmatmul.mubr.f32.gmra.mrb[0].mxu0 %v1432
    %v1887 = vpop.f32.mrb[0].mxu0
    %v1888 = vadd.f32 0.0, %v1887
    %v1889 = vpop.f32.mrb[0].mxu0
    %1890 = vmatprep.mubr.f32.mxu0 0.0
    %1891 = vmatmul.mubr.f32.gmra.mrb[0].mxu0 %v1435
    %v1892 = vpop.f32.mrb[0].mxu0
    %v1893 = vadd.f32 0.0, %v1892
    %v1894 = vpop.f32.mrb[0].mxu0
    %1895 = vmatprep.mubr.f32.mxu0 0.0
    %1896 = vmatmul.mubr.f32.gmra.mrb[0].mxu0 %v1438
    %v1897 = vpop.f32.mrb[0].mxu0
    %v1898 = vadd.f32 0.0, %v1897
    %v1899 = vpop.f32.mrb[0].mxu0
    %1900 = vmatprep.mubr.f32.mxu0 0.0
    %1901 = vmatmul.mubr.f32.gmra.mrb[0].mxu0 %v1441
    %v1902 = vpop.f32.mrb[0].mxu0
    %v1903 = vadd.f32 0.0, %v1902
    %v1904 = vpop.f32.mrb[0].mxu0
    %1905 = vmatprep.mubr.f32.mxu0 0.0
    %1906 = vmatmul.mubr.f32.gmra.mrb[0].mxu0 %v1444
    %v1907 = vpop.f32.mrb[0].mxu0
    %v1908 = vadd.f32 0.0, %v1907
    %v1909 = vpop.f32.mrb[0].mxu0
    %1910 = vmatprep.mubr.f32.mxu0 0.0
    %1911 = vmatmul.mubr.f32.gmra.mrb[0].mxu0 %v1447
    %v1912 = vpop.f32.mrb[0].mxu0
    %v1913 = vadd.f32 0.0, %v1912
    %v1914 = vpop.f32.mrb[0].mxu0
    %1915 = vmatprep.mubr.f32.mxu0 0.0
    %1916 = vmatmul.mubr.f32.gmra.mrb[0].mxu0 %v1450
    %v1917 = vpop.f32.mrb[0].mxu0
    %v1918 = vadd.f32 0.0, %v1917
    %v1919 = vpop.f32.mrb[0].mxu0
    %1920 = vmatprep.mubr.f32.mxu0 0.0
    %1921 = vmatmul.mubr.f32.gmra.mrb[0].mxu0 %v1453
    %v1922 = vpop.f32.mrb[0].mxu0
    %v1923 = vadd.f32 0.0, %v1922
    %v1924 = vpop.f32.mrb[0].mxu0
    %1925 = vmatprep.mubr.f32.mxu0 0.0
    %1926 = vmatmul.mubr.f32.gmra.mrb[0].mxu0 %v1456
    %v1927 = vpop.f32.mrb[0].mxu0
    %v1928 = vadd.f32 0.0, %v1927
    %v1929 = vpop.f32.mrb[0].mxu0
    %1930 = vmatprep.mubr.f32.mxu0 0.0
    %1931 = vmatmul.mubr.f32.gmra.mrb[0].mxu0 %v1459
    %v1932 = vpop.f32.mrb[0].mxu0
    %v1933 = vadd.f32 0.0, %v1932
    %v1934 = vpop.f32.mrb[0].mxu0
    %1935 = vmatprep.mubr.f32.mxu0 0.0
    %1936 = vmatmul.mubr.f32.gmra.mrb[0].mxu0 %v1462
    %v1937 = vpop.f32.mrb[0].mxu0
    %v1938 = vadd.f32 0.0, %v1937
    %v1939 = vpop.f32.mrb[0].mxu0
    %1940 = vmatprep.mubr.f32.mxu0 0.0
    %1941 = vmatmul.mubr.f32.gmra.mrb[0].mxu0 %v1465
    %v1942 = vpop.f32.mrb[0].mxu0
    %v1943 = vadd.f32 0.0, %v1942
    %v1944 = vpop.f32.mrb[0].mxu0
    %1945 = vmatprep.mubr.f32.mxu0 0.0
    %1946 = vmatmul.mubr.f32.gmra.mrb[0].mxu0 %v1468
    %v1947 = vpop.f32.mrb[0].mxu0
    %v1948 = vadd.f32 0.0, %v1947
    %v1949 = vpop.f32.mrb[0].mxu0
    %1950 = vmatprep.mubr.f32.mxu0 0.0
    %1951 = vmatmul.mubr.f32.gmra.mrb[0].mxu0 %v1471
    %v1952 = vpop.f32.mrb[0].mxu0
    %v1953 = vadd.f32 0.0, %v1952
    %v1954 = vpop.f32.mrb[0].mxu0
    %1955 = vmatprep.mubr.f32.mxu0 0.0
    %1956 = vmatmul.mubr.f32.gmra.mrb[0].mxu0 %v1474
    %v1957 = vpop.f32.mrb[0].mxu0
    %v1958 = vadd.f32 0.0, %v1957
    %v1959 = vpop.f32.mrb[0].mxu0
    %1960 = vmatprep.mubr.f32.mxu0 0.0
    %1961 = vmatmul.mubr.f32.gmra.mrb[0].mxu0 %v1477
    %v1962 = vpop.f32.mrb[0].mxu0
    %v1963 = vadd.f32 0.0, %v1962
    %v1964 = vpop.f32.mrb[0].mxu0
    %1965 = vmatprep.mubr.f32.mxu0 0.0
    %1966 = vmatmul.mubr.f32.gmra.mrb[0].mxu0 %v1480
    %v1967 = vpop.f32.mrb[0].mxu0
    %v1968 = vadd.f32 0.0, %v1967
    %v1969 = vpop.f32.mrb[0].mxu0
    %1970 = vmatprep.mubr.f32.mxu0 0.0
    %1971 = vmatmul.mubr.f32.gmra.mrb[0].mxu0 %v1483
    %v1972 = vpop.f32.mrb[0].mxu0
    %v1973 = vadd.f32 0.0, %v1972
    %v1974 = vpop.f32.mrb[0].mxu0
    %1975 = vmatprep.mubr.f32.mxu0 0.0
    %1976 = vmatmul.mubr.f32.gmra.mrb[0].mxu0 %v1486
    %v1977 = vpop.f32.mrb[0].mxu0
    %v1978 = vadd.f32 0.0, %v1977
    %v1979 = vpop.f32.mrb[0].mxu0
    %1980 = vmatprep.mubr.f32.mxu0 0.0
    %1981 = vmatmul.mubr.f32.gmra.mrb[0].mxu0 %v1489
    %v1982 = vpop.f32.mrb[0].mxu0
    %v1983 = vadd.f32 0.0, %v1982
    %v1984 = vpop.f32.mrb[0].mxu0
    %1985 = vmatprep.mubr.f32.mxu0 0.0
    %1986 = vmatmul.mubr.f32.gmra.mrb[0].mxu0 %v1492
    %v1987 = vpop.f32.mrb[0].mxu0
    %v1988 = vadd.f32 0.0, %v1987
    %v1989 = vpop.f32.mrb[0].mxu0
    %1990 = vmatprep.mubr.f32.mxu0 0.0
    %1991 = vmatmul.mubr.f32.gmra.mrb[0].mxu0 %v1495
    %v1992 = vpop.f32.mrb[0].mxu0
    %v1993 = vadd.f32 0.0, %v1992
    %v1994 = vpop.f32.mrb[0].mxu0
    %1995 = vmatprep.mubr.f32.mxu0 0.0
    %1996 = vmatmul.mubr.f32.gmra.mrb[0].mxu0 %v1498
    %v1997 = vpop.f32.mrb[0].mxu0
    %v1998 = vadd.f32 0.0, %v1997
    %v1999 = vpop.f32.mrb[0].mxu0
    %2000 = vmatprep.mubr.f32.mxu0 0.0
    %2001 = vmatmul.mubr.f32.gmra.mrb[0].mxu0 %v1501
    %v2002 = vpop.f32.mrb[0].mxu0
    %v2003 = vadd.f32 0.0, %v2002
    %v2004 = vpop.f32.mrb[0].mxu0
    %2005 = vmatprep.mubr.f32.mxu0 0.0
    %2006 = vmatmul.mubr.f32.gmra.mrb[0].mxu0 %v1504
    %v2007 = vpop.f32.mrb[0].mxu0
    %v2008 = vadd.f32 0.0, %v2007
    %v2009 = vpop.f32.mrb[0].mxu0
    %2010 = vmatprep.mubr.f32.mxu0 0.0
    %2011 = vmatmul.mubr.f32.gmra.mrb[0].mxu0 %v1507
    %v2012 = vpop.f32.mrb[0].mxu0
    %v2013 = vadd.f32 0.0, %v2012
    %v2014 = vpop.f32.mrb[0].mxu0
    %2015 = vmatprep.mubr.f32.mxu0 0.0
    %2016 = vmatmul.mubr.f32.gmra.mrb[0].mxu0 %v1510
    %v2017 = vpop.f32.mrb[0].mxu0
    %v2018 = vadd.f32 0.0, %v2017
    %v2019 = vpop.f32.mrb[0].mxu0
    %2020 = vmatprep.mubr.f32.mxu0 0.0
    %2021 = vmatmul.mubr.f32.gmra.mrb[0].mxu0 %v1513
    %v2022 = vpop.f32.mrb[0].mxu0
    %v2023 = vadd.f32 0.0, %v2022
    %v2024 = vpop.f32.mrb[0].mxu0
    %2025 = vmatprep.mubr.f32.mxu0 0.0
    %2026 = vmatmul.mubr.f32.gmra.mrb[0].mxu0 %v1516
    %v2027 = vpop.f32.mrb[0].mxu0
    %v2028 = vadd.f32 0.0, %v2027
    %v2029 = vpop.f32.mrb[0].mxu0
    %2030 = vmatprep.mubr.f32.mxu0 0.0
    %2031 = vmatmul.mubr.f32.gmra.mrb[0].mxu0 %v1519
    %v2032 = vpop.f32.mrb[0].mxu0
    %v2033 = vadd.f32 0.0, %v2032
    %v2034 = vpop.f32.mrb[0].mxu0
    %2035 = vmatprep.mubr.f32.mxu0 0.0
    %2036 = vmatmul.mubr.f32.gmra.mrb[0].mxu0 %v1522
    %v2037 = vpop.f32.mrb[0].mxu0
    %v2038 = vadd.f32 0.0, %v2037
    %v2039 = vpop.f32.mrb[0].mxu0
    %2040 = vmatprep.mubr.f32.mxu0 0.0
    %2041 = vmatmul.mubr.f32.gmra.mrb[0].mxu0 %v1525
    %v2042 = vpop.f32.mrb[0].mxu0
    %v2043 = vadd.f32 0.0, %v2042
    %v2044 = vpop.f32.mrb[0].mxu0
    %2045 = vmatprep.mubr.f32.mxu0 0.0
    %2046 = vmatmul.mubr.f32.gmra.mrb[0].mxu0 %v1528
    %v2047 = vpop.f32.mrb[0].mxu0
    %v2048 = vadd.f32 0.0, %v2047
    %v2049 = vpop.f32.mrb[0].mxu0
    %2050 = vmatprep.mubr.f32.mxu0 0.0
    %2051 = vmatmul.mubr.f32.gmra.mrb[0].mxu0 %v1531
    %v2052 = vpop.f32.mrb[0].mxu0
    %v2053 = vadd.f32 0.0, %v2052
    %v2054 = vpop.f32.mrb[0].mxu0
    %2055 = vmatprep.mubr.f32.mxu0 0.0
    %2056 = vmatmul.mubr.f32.gmra.mrb[0].mxu0 %v1534
    %v2057 = vpop.f32.mrb[0].mxu0
    %v2058 = vadd.f32 0.0, %v2057
    %v2059 = vpop.f32.mrb[0].mxu0
    %2060 = vmatprep.mubr.f32.mxu0 0.0
    %2061 = vmatmul.mubr.f32.gmra.mrb[0].mxu0 %v1537
    %v2062 = vpop.f32.mrb[0].mxu0
    %v2063 = vadd.f32 0.0, %v2062
    %v2064 = vpop.f32.mrb[0].mxu0
    %2065 = vmatprep.mubr.f32.mxu0 0.0
    %2066 = vmatmul.mubr.f32.gmra.mrb[0].mxu0 %v1540
    %v2067 = vpop.f32.mrb[0].mxu0
    %v2068 = vadd.f32 0.0, %v2067
    %v2069 = vpop.f32.mrb[0].mxu0
    %2070 = vmatprep.mubr.f32.mxu0 0.0
    %2071 = vmatmul.mubr.f32.gmra.mrb[0].mxu0 %v1543
    %v2072 = vpop.f32.mrb[0].mxu0
    %v2073 = vadd.f32 0.0, %v2072
    %v2074 = vpop.f32.mrb[0].mxu0
    %2075 = vmatprep.mubr.f32.mxu0 0.0
    %2076 = vmatmul.mubr.f32.gmra.mrb[0].mxu0 %v1546
    %v2077 = vpop.f32.mrb[0].mxu0
    %v2078 = vadd.f32 0.0, %v2077
    %v2079 = vpop.f32.mrb[0].mxu0
    %2080 = vmatprep.mubr.f32.mxu0 0.0
    %2081 = vmatmul.mubr.f32.gmra.mrb[0].mxu0 %v1549
    %v2082 = vpop.f32.mrb[0].mxu0
    %v2083 = vadd.f32 0.0, %v2082
    %v2084 = vpop.f32.mrb[0].mxu0
    %2085 = vmatprep.mubr.f32.mxu0 0.0
    %2086 = vmatmul.mubr.f32.gmra.mrb[0].mxu0 %v1552
    %v2087 = vpop.f32.mrb[0].mxu0
    %v2088 = vadd.f32 0.0, %v2087
    %v2089 = vpop.f32.mrb[0].mxu0
    %2090 = vmatprep.mubr.f32.mxu0 0.0
    %2091 = vmatmul.mubr.f32.gmra.mrb[0].mxu0 %v1555
    %v2092 = vpop.f32.mrb[0].mxu0
    %v2093 = vadd.f32 0.0, %v2092
    %v2094 = vpop.f32.mrb[0].mxu0
    %2095 = vmatprep.mubr.f32.mxu0 0.0
    %2096 = vmatmul.mubr.f32.gmra.mrb[0].mxu0 %v1558
    %v2097 = vpop.f32.mrb[0].mxu0
    %v2098 = vadd.f32 0.0, %v2097
    %v2099 = vpop.f32.mrb[0].mxu0
    %2100 = vmatprep.mubr.f32.mxu0 0.0
    %2101 = vmatmul.mubr.f32.gmra.mrb[0].mxu0 %v1561
    %v2102 = vpop.f32.mrb[0].mxu0
    %v2103 = vadd.f32 0.0, %v2102
    %v2104 = vpop.f32.mrb[0].mxu0
    %2105 = vmatprep.mubr.f32.mxu0 0.0
    %2106 = vmatmul.mubr.f32.gmra.mrb[0].mxu0 %v1564
    %v2107 = vpop.f32.mrb[0].mxu0
    %v2108 = vadd.f32 0.0, %v2107
    %v2109 = vpop.f32.mrb[0].mxu0
    %2110 = vmatprep.mubr.f32.mxu0 0.0
    %2111 = vmatmul.mubr.f32.gmra.mrb[0].mxu0 %v1567
    %v2112 = vpop.f32.mrb[0].mxu0
    %v2113 = vadd.f32 0.0, %v2112
    %v2114 = vpop.f32.mrb[0].mxu0
    %2115 = vmatprep.mubr.f32.mxu0 0.0
    %2116 = vmatmul.mubr.f32.gmra.mrb[0].mxu0 %v1570
    %v2117 = vpop.f32.mrb[0].mxu0
    %v2118 = vadd.f32 0.0, %v2117
    %v2119 = vpop.f32.mrb[0].mxu0
    %2120 = vmatprep.mubr.f32.mxu0 0.0
    %2121 = vmatmul.mubr.f32.gmra.mrb[0].mxu0 %v1573
    %v2122 = vpop.f32.mrb[0].mxu0
    %v2123 = vadd.f32 0.0, %v2122
    %v2124 = vpop.f32.mrb[0].mxu0
    %2125 = vmatprep.mubr.f32.mxu0 0.0
    %2126 = vmatmul.mubr.f32.gmra.mrb[0].mxu0 %v1576
    %v2127 = vpop.f32.mrb[0].mxu0
    %v2128 = vadd.f32 0.0, %v2127
    %v2129 = vpop.f32.mrb[0].mxu0
    %2130 = vmatprep.mubr.f32.mxu0 0.0
    %2131 = vmatmul.mubr.f32.gmra.mrb[0].mxu0 %v1579
    %v2132 = vpop.f32.mrb[0].mxu0
    %v2133 = vadd.f32 0.0, %v2132
    %v2134 = vpop.f32.mrb[0].mxu0
    %2135 = vmatprep.mubr.f32.mxu0 0.0
    %2136 = vmatmul.mubr.f32.gmra.mrb[0].mxu0 %v1582
    %v2137 = vpop.f32.mrb[0].mxu0
    %v2138 = vadd.f32 0.0, %v2137
    %v2139 = vpop.f32.mrb[0].mxu0
    %2140 = vmatprep.mubr.f32.mxu0 0.0
    %2141 = vmatmul.mubr.f32.gmra.mrb[0].mxu0 %v1585
    %v2142 = vpop.f32.mrb[0].mxu0
    %v2143 = vadd.f32 0.0, %v2142
    %v2144 = vpop.f32.mrb[0].mxu0
    %2145 = vmatprep.mubr.f32.mxu0 0.0
    %2146 = vmatmul.mubr.f32.gmra.mrb[0].mxu0 %v1588
    %v2147 = vpop.f32.mrb[0].mxu0
    %v2148 = vadd.f32 0.0, %v2147
    %v2149 = vpop.f32.mrb[0].mxu0
    %2150 = vmatprep.mubr.f32.mxu0 0.0
    %2151 = vmatmul.mubr.f32.gmra.mrb[0].mxu0 %v1591
    %v2152 = vpop.f32.mrb[0].mxu0
    %v2153 = vadd.f32 0.0, %v2152
    %v2154 = vpop.f32.mrb[0].mxu0
    %2155 = vmatprep.mubr.f32.mxu0 0.0
    %2156 = vmatmul.mubr.f32.gmra.mrb[0].mxu0 %v1594
    %v2157 = vpop.f32.mrb[0].mxu0
    %v2158 = vadd.f32 0.0, %v2157
    %v2159 = vpop.f32.mrb[0].mxu0
    %2160 = vmatprep.mubr.f32.mxu0 0.0
    %2161 = vmatmul.mubr.f32.gmra.mrb[0].mxu0 %v1597
    %v2162 = vpop.f32.mrb[0].mxu0
    %v2163 = vadd.f32 0.0, %v2162
    %v2164 = vpop.f32.mrb[0].mxu0
    %2165 = vmatprep.mubr.f32.mxu0 0.0
    %2166 = vmatmul.mubr.f32.gmra.mrb[0].mxu0 %v1600
    %v2167 = vpop.f32.mrb[0].mxu0
    %v2168 = vadd.f32 0.0, %v2167
    %v2169 = vpop.f32.mrb[0].mxu0
    %2170 = vmatprep.mubr.f32.mxu0 0.0
    %2171 = vmatmul.mubr.f32.gmra.mrb[0].mxu0 %v1603
    %v2172 = vpop.f32.mrb[0].mxu0
    %v2173 = vadd.f32 0.0, %v2172
    %v2174 = vpop.f32.mrb[0].mxu0
    %2175 = vmatprep.mubr.f32.mxu0 0.0
    %2176 = vmatmul.mubr.f32.gmra.mrb[0].mxu0 %v1606
    %v2177 = vpop.f32.mrb[0].mxu0
    %v2178 = vadd.f32 0.0, %v2177
    %v2179 = vpop.f32.mrb[0].mxu0
    %2180 = vmatprep.mubr.f32.mxu0 0.0
    %2181 = vmatmul.mubr.f32.gmra.mrb[0].mxu0 %v1609
    %v2182 = vpop.f32.mrb[0].mxu0
    %v2183 = vadd.f32 0.0, %v2182
    %v2184 = vpop.f32.mrb[0].mxu0
    %2185 = vmatprep.mubr.f32.mxu0 0.0
    %2186 = vmatmul.mubr.f32.gmra.mrb[0].mxu0 %v1612
    %v2187 = vpop.f32.mrb[0].mxu0
    %v2188 = vadd.f32 0.0, %v2187
    %v2189 = vpop.f32.mrb[0].mxu0
    %2190 = vmatprep.mubr.f32.mxu0 0.0
    %2191 = vmatmul.mubr.f32.gmra.mrb[0].mxu0 %v1615
    %v2192 = vpop.f32.mrb[0].mxu0
    %v2193 = vadd.f32 0.0, %v2192
    %v2194 = vpop.f32.mrb[0].mxu0
    %2195 = vmatprep.mubr.f32.mxu0 0.0
    %2196 = vmatmul.mubr.f32.gmra.mrb[0].mxu0 %v1618
    %v2197 = vpop.f32.mrb[0].mxu0
    %v2198 = vadd.f32 0.0, %v2197
    %v2199 = vpop.f32.mrb[0].mxu0
    %2200 = vmatprep.mubr.f32.mxu0 0.0
    %2201 = vmatmul.mubr.f32.gmra.mrb[0].mxu0 %v1621
    %v2202 = vpop.f32.mrb[0].mxu0
    %v2203 = vadd.f32 0.0, %v2202
    %v2204 = vpop.f32.mrb[0].mxu0
    %2205 = vmatprep.mubr.f32.mxu0 0.0
    %2206 = vmatmul.mubr.f32.gmra.mrb[0].mxu0 %v1624
    %v2207 = vpop.f32.mrb[0].mxu0
    %v2208 = vadd.f32 0.0, %v2207
    %v2209 = vpop.f32.mrb[0].mxu0
    %2210 = vmatprep.mubr.f32.mxu0 0.0
    %2211 = vmatmul.mubr.f32.gmra.mrb[0].mxu0 %v1627
    %v2212 = vpop.f32.mrb[0].mxu0
    %v2213 = vadd.f32 0.0, %v2212
    %v2214 = vpop.f32.mrb[0].mxu0
    %2215 = vmatprep.mubr.f32.mxu0 0.0
    %2216 = vmatmul.mubr.f32.gmra.mrb[0].mxu0 %v1630
    %v2217 = vpop.f32.mrb[0].mxu0
    %v2218 = vadd.f32 0.0, %v2217
    %v2219 = vpop.f32.mrb[0].mxu0
    %2220 = vmatprep.mubr.f32.mxu0 0.0
    %2221 = vmatmul.mubr.f32.gmra.mrb[0].mxu0 %v1633
    %v2222 = vpop.f32.mrb[0].mxu0
    %v2223 = vadd.f32 0.0, %v2222
    %v2224 = vpop.f32.mrb[0].mxu0
    %2225 = vmatprep.mubr.f32.mxu0 0.0
    %2226 = vmatmul.mubr.f32.gmra.mrb[0].mxu0 %v1636
    %v2227 = vpop.f32.mrb[0].mxu0
    %v2228 = vadd.f32 0.0, %v2227
    %v2229 = vpop.f32.mrb[0].mxu0
    %2230 = vmatprep.mubr.f32.mxu0 0.0
    %2231 = vmatmul.mubr.f32.gmra.mrb[0].mxu0 %v1639
    %v2232 = vpop.f32.mrb[0].mxu0
    %v2233 = vadd.f32 0.0, %v2232
    %v2234 = vpop.f32.mrb[0].mxu0
    %2235 = vmatprep.mubr.f32.mxu0 0.0
    %2236 = vmatmul.mubr.f32.gmra.mrb[0].mxu0 %v1642
    %v2237 = vpop.f32.mrb[0].mxu0
    %v2238 = vadd.f32 0.0, %v2237
    %v2239 = vpop.f32.mrb[0].mxu0
    %2240 = vmatprep.mubr.f32.mxu0 0.0
    %2241 = vmatmul.mubr.f32.gmra.mrb[0].mxu0 %v1645
    %v2242 = vpop.f32.mrb[0].mxu0
    %v2243 = vadd.f32 0.0, %v2242
    %v2244 = vpop.f32.mrb[0].mxu0
    %2245 = vmatprep.mubr.f32.mxu0 0.0
    %2246 = vmatmul.mubr.f32.gmra.mrb[0].mxu0 %v1648
    %v2247 = vpop.f32.mrb[0].mxu0
    %v2248 = vadd.f32 0.0, %v2247
    %v2249 = vpop.f32.mrb[0].mxu0
    %2250 = vmatprep.mubr.f32.mxu0 0.0
    %2251 = vmatmul.mubr.f32.gmra.mrb[0].mxu0 %v1651
    %v2252 = vpop.f32.mrb[0].mxu0
    %v2253 = vadd.f32 0.0, %v2252
    %v2254 = vpop.f32.mrb[0].mxu0
    %2255 = vmatprep.mubr.f32.mxu0 0.0
    %2256 = vmatmul.mubr.f32.gmra.mrb[0].mxu0 %v1654
    %v2257 = vpop.f32.mrb[0].mxu0
    %v2258 = vadd.f32 0.0, %v2257
    %v2259 = vpop.f32.mrb[0].mxu0
    %2260 = vmatprep.mubr.f32.mxu0 0.0
    %2261 = vmatmul.mubr.f32.gmra.mrb[0].mxu0 %v1657
    %v2262 = vpop.f32.mrb[0].mxu0
    %v2263 = vadd.f32 0.0, %v2262
    %v2264 = vpop.f32.mrb[0].mxu0
    %2265 = vmatprep.mubr.f32.mxu0 0.0
    %2266 = vmatmul.mubr.f32.gmra.mrb[0].mxu0 %v1660
    %v2267 = vpop.f32.mrb[0].mxu0
    %v2268 = vadd.f32 0.0, %v2267
    %v2269 = vpop.f32.mrb[0].mxu0
    %2270 = vmatprep.mubr.f32.mxu0 0.0
    %2271 = vmatmul.mubr.f32.gmra.mrb[0].mxu0 %v1663
    %v2272 = vpop.f32.mrb[0].mxu0
    %v2273 = vadd.f32 0.0, %v2272
    %v2274 = vpop.f32.mrb[0].mxu0
    %2275 = vmatprep.mubr.f32.mxu0 0.0
    %2276 = vmatmul.mubr.f32.gmra.mrb[0].mxu0 %v1666
    %v2277 = vpop.f32.mrb[0].mxu0
    %v2278 = vadd.f32 0.0, %v2277
    %v2279 = vpop.f32.mrb[0].mxu0
    %2280 = vmatprep.mubr.f32.mxu0 0.0
    %2281 = vmatmul.mubr.f32.gmra.mrb[0].mxu0 %v1669
    %v2282 = vpop.f32.mrb[0].mxu0
    %v2283 = vadd.f32 0.0, %v2282
    %v2284 = vpop.f32.mrb[0].mxu0
    %2285 = vmatprep.mubr.f32.mxu0 0.0
    %2286 = vmatmul.mubr.f32.gmra.mrb[0].mxu0 %v1672
    %v2287 = vpop.f32.mrb[0].mxu0
    %v2288 = vadd.f32 0.0, %v2287
    %v2289 = vpop.f32.mrb[0].mxu0
    %2290 = vmatprep.mubr.f32.mxu0 0.0
    %2291 = vmatmul.mubr.f32.gmra.mrb[0].mxu0 %v1675
    %v2292 = vpop.f32.mrb[0].mxu0
    %v2293 = vadd.f32 0.0, %v2292
    %v2294 = vpop.f32.mrb[0].mxu0
    %2295 = vmatprep.mubr.f32.mxu0 0.0
    %2296 = vmatmul.mubr.f32.gmra.mrb[0].mxu0 %v1678
    %v2297 = vpop.f32.mrb[0].mxu0
    %v2298 = vadd.f32 0.0, %v2297
    %v2299 = vpop.f32.mrb[0].mxu0
    %2300 = vmatprep.mubr.f32.mxu0 0.0
    %2301 = vmatmul.mubr.f32.gmra.mrb[0].mxu0 %v1681
    %v2302 = vpop.f32.mrb[0].mxu0
    %v2303 = vadd.f32 0.0, %v2302
    %v2304 = vpop.f32.mrb[0].mxu0
    %2305 = vmatprep.mubr.f32.mxu0 0.0
    %2306 = vmatmul.mubr.f32.gmra.mrb[0].mxu0 %v1684
    %v2307 = vpop.f32.mrb[0].mxu0
    %v2308 = vadd.f32 0.0, %v2307
    %v2309 = vpop.f32.mrb[0].mxu0
    %2310 = vmatprep.mubr.f32.mxu0 0.0
    %2311 = vmatmul.mubr.f32.gmra.mrb[0].mxu0 %v1687
    %v2312 = vpop.f32.mrb[0].mxu0
    %v2313 = vadd.f32 0.0, %v2312
    %v2314 = vpop.f32.mrb[0].mxu0
    %2315 = vmatprep.mubr.f32.mxu0 0.0
    %2316 = vmatmul.mubr.f32.gmra.mrb[0].mxu0 %v1690
    %v2317 = vpop.f32.mrb[0].mxu0
    %v2318 = vadd.f32 0.0, %v2317
    %v2319 = vpop.f32.mrb[0].mxu0
    %2320 = vmatprep.mubr.f32.mxu0 0.0
    %2321 = vmatmul.mubr.f32.gmra.mrb[0].mxu0 %v1693
    %v2322 = vpop.f32.mrb[0].mxu0
    %v2323 = vadd.f32 0.0, %v2322
    %v2324 = vpop.f32.mrb[0].mxu0
    %2325 = vmatprep.mubr.f32.mxu0 0.0
    %2326 = vmatmul.mubr.f32.gmra.mrb[0].mxu0 %v1696
    %v2327 = vpop.f32.mrb[0].mxu0
    %v2328 = vadd.f32 0.0, %v2327
    %v2329 = vpop.f32.mrb[0].mxu0
    %2330 = vmatprep.mubr.f32.mxu0 0.0
    %2331 = vmatmul.mubr.f32.gmra.mrb[0].mxu0 %v1699
    %v2332 = vpop.f32.mrb[0].mxu0
    %v2333 = vadd.f32 0.0, %v2332
    %v2334 = vpop.f32.mrb[0].mxu0
    %2335 = vmatprep.mubr.f32.mxu0 0.0
    %2336 = vmatmul.mubr.f32.gmra.mrb[0].mxu0 %v1702
    %v2337 = vpop.f32.mrb[0].mxu0
    %v2338 = vadd.f32 0.0, %v2337
    %v2339 = vpop.f32.mrb[0].mxu0
    %2340 = vmatprep.mubr.f32.mxu0 0.0
    %2341 = vmatmul.mubr.f32.gmra.mrb[0].mxu0 %v1705
    %v2342 = vpop.f32.mrb[0].mxu0
    %v2343 = vadd.f32 0.0, %v2342
    %v2344 = vpop.f32.mrb[0].mxu0
    %2345 = vmatprep.mubr.f32.mxu0 0.0
    %2346 = vmatmul.mubr.f32.gmra.mrb[0].mxu0 %v1708
    %v2347 = vpop.f32.mrb[0].mxu0
    %v2348 = vadd.f32 0.0, %v2347
    %v2349 = vpop.f32.mrb[0].mxu0
    %2350 = vmatprep.mubr.f32.mxu0 0.0
    %2351 = vmatmul.mubr.f32.gmra.mrb[0].mxu0 %v1711
    %v2352 = vpop.f32.mrb[0].mxu0
    %v2353 = vadd.f32 0.0, %v2352
    %v2354 = vpop.f32.mrb[0].mxu0
    %2355 = vmatprep.mubr.f32.mxu0 0.0
    %2356 = vmatmul.mubr.f32.gmra.mrb[0].mxu0 %v1714
    %v2357 = vpop.f32.mrb[0].mxu0
    %v2358 = vadd.f32 0.0, %v2357
    %v2359 = vpop.f32.mrb[0].mxu0
    %2360 = vmatprep.mubr.f32.mxu0 0.0
    %2361 = vmatmul.mubr.f32.gmra.mrb[0].mxu0 %v1717
    %v2362 = vpop.f32.mrb[0].mxu0
    %v2363 = vadd.f32 0.0, %v2362
    %v2364 = vpop.f32.mrb[0].mxu0
    %2365 = vmatprep.mubr.f32.mxu0 0.0
    %2366 = vmatmul.mubr.f32.gmra.mrb[0].mxu0 %v1720
    %v2367 = vpop.f32.mrb[0].mxu0
    %v2368 = vadd.f32 0.0, %v2367
    %v2369 = vpop.f32.mrb[0].mxu0
    %2370 = vmatprep.mubr.f32.mxu0 0.0
    %2371 = vmatmul.mubr.f32.gmra.mrb[0].mxu0 %v1723
    %v2372 = vpop.f32.mrb[0].mxu0
    %v2373 = vadd.f32 0.0, %v2372
    %v2374 = vpop.f32.mrb[0].mxu0
    %2375 = vmatprep.mubr.f32.mxu0 0.0
    %2376 = vmatmul.mubr.f32.gmra.mrb[0].mxu0 %v1726
    %v2377 = vpop.f32.mrb[0].mxu0
    %v2378 = vadd.f32 0.0, %v2377
    %v2379 = vpop.f32.mrb[0].mxu0
    %2380 = vmatprep.mubr.f32.mxu0 0.0
    %2381 = vmatmul.mubr.f32.gmra.mrb[0].mxu0 %v1729
    %v2382 = vpop.f32.mrb[0].mxu0
    %v2383 = vadd.f32 0.0, %v2382
    %v2384 = vpop.f32.mrb[0].mxu0
    %2385 = vmatprep.mubr.f32.mxu0 0.0
    %2386 = vmatmul.mubr.f32.gmra.mrb[0].mxu0 %v1732
    %v2387 = vpop.f32.mrb[0].mxu0
    %v2388 = vadd.f32 0.0, %v2387
    %v2389 = vpop.f32.mrb[0].mxu0
    %2390 = vmatprep.mubr.f32.mxu0 0.0
    %2391 = vmatmul.mubr.f32.gmra.mrb[0].mxu0 %v1735
    %v2392 = vpop.f32.mrb[0].mxu0
    %v2393 = vadd.f32 0.0, %v2392
    %v2394 = vpop.f32.mrb[0].mxu0
    %2395 = vmatprep.mubr.f32.mxu0 0.0
    %2396 = vmatmul.mubr.f32.gmra.mrb[0].mxu0 %v1738
    %v2397 = vpop.f32.mrb[0].mxu0
    %v2398 = vadd.f32 0.0, %v2397
    %v2399 = vpop.f32.mrb[0].mxu0
    %2400 = vmatprep.mubr.f32.mxu0 0.0
    %2401 = vmatmul.mubr.f32.gmra.mrb[0].mxu0 %v1741
    %v2402 = vpop.f32.mrb[0].mxu0
    %v2403 = vadd.f32 0.0, %v2402
    %v2404 = vpop.f32.mrb[0].mxu0
    %2405 = vmatprep.mubr.f32.mxu0 0.0
    %2406 = vmatmul.mubr.f32.gmra.mrb[0].mxu0 %v1744
    %v2407 = vpop.f32.mrb[0].mxu0
    %v2408 = vadd.f32 0.0, %v2407
    %v2409 = vpop.f32.mrb[0].mxu0
    %2410 = vmatprep.mubr.f32.mxu0 0.0
    %2411 = vmatmul.mubr.f32.gmra.mrb[0].mxu0 %v1747
    %v2412 = vpop.f32.mrb[0].mxu0
    %v2413 = vadd.f32 0.0, %v2412
    %v2414 = vpop.f32.mrb[0].mxu0
    %2415 = vmatprep.mubr.f32.mxu0 0.0
    %2416 = vmatmul.mubr.f32.gmra.mrb[0].mxu0 %v1750
    %v2417 = vpop.f32.mrb[0].mxu0
    %v2418 = vadd.f32 0.0, %v2417
    %v2419 = vpop.f32.mrb[0].mxu0
    %2420 = vmatprep.mubr.f32.mxu0 0.0
    %2421 = vmatmul.mubr.f32.gmra.mrb[0].mxu0 %v1753
    %v2422 = vpop.f32.mrb[0].mxu0
    %v2423 = vadd.f32 0.0, %v2422
    %v2424 = vpop.f32.mrb[0].mxu0
    %2425 = vmatprep.mubr.f32.mxu0 0.0
    %2426 = vmatmul.mubr.f32.gmra.mrb[0].mxu0 %v1756
    %v2427 = vpop.f32.mrb[0].mxu0
    %v2428 = vadd.f32 0.0, %v2427
    %v2429 = vpop.f32.mrb[0].mxu0
    %2430 = vmatprep.mubr.f32.mxu0 0.0
    %2431 = vmatmul.mubr.f32.gmra.mrb[0].mxu0 %v1759
    %v2432 = vpop.f32.mrb[0].mxu0
    %v2433 = vadd.f32 0.0, %v2432
    %v2434 = vpop.f32.mrb[0].mxu0
    %2435 = vmatprep.mubr.f32.mxu0 0.0
    %2436 = vmatmul.mubr.f32.gmra.mrb[0].mxu0 %v1762
    %v2437 = vpop.f32.mrb[0].mxu0
    %v2438 = vadd.f32 0.0, %v2437
    %v2439 = vpop.f32.mrb[0].mxu0
    %2440 = vmatprep.mubr.f32.mxu0 0.0
    %2441 = vmatmul.mubr.f32.gmra.mrb[0].mxu0 %v1765
    %v2442 = vpop.f32.mrb[0].mxu0
    %v2443 = vadd.f32 0.0, %v2442
    %v2444 = vpop.f32.mrb[0].mxu0
    %2445 = vmatprep.mubr.f32.mxu0 0.0
    %2446 = vmatmul.mubr.f32.gmra.mrb[0].mxu0 %v1768
    %v2447 = vpop.f32.mrb[0].mxu0
    %v2448 = vadd.f32 0.0, %v2447
    %v2449 = vpop.f32.mrb[0].mxu0
    %2450 = vmatprep.mubr.f32.mxu0 0.0
    %2451 = vmatmul.mubr.f32.gmra.mrb[0].mxu0 %v1771
    %v2452 = vpop.f32.mrb[0].mxu0
    %v2453 = vadd.f32 0.0, %v2452
    %v2454 = vpop.f32.mrb[0].mxu0
    %2455 = vmatprep.mubr.f32.mxu0 0.0
    %2456 = vmatmul.mubr.f32.gmra.mrb[0].mxu0 %v1774
    %v2457 = vpop.f32.mrb[0].mxu0
    %v2458 = vadd.f32 0.0, %v2457
    %v2459 = vpop.f32.mrb[0].mxu0
    %2460 = vmatprep.mubr.f32.mxu0 0.0
    %2461 = vmatmul.mubr.f32.gmra.mrb[0].mxu0 %v1777
    %v2462 = vpop.f32.mrb[0].mxu0
    %v2463 = vadd.f32 0.0, %v2462
    %v2464 = vpop.f32.mrb[0].mxu0
    %2465 = vmatprep.mubr.f32.mxu0 0.0
    %2466 = vmatmul.mubr.f32.gmra.mrb[0].mxu0 %v1780
    %v2467 = vpop.f32.mrb[0].mxu0
    %v2468 = vadd.f32 0.0, %v2467
    %v2469 = vpop.f32.mrb[0].mxu0
    %2470 = vmatprep.mubr.f32.mxu0 0.0
    %2471 = vmatmul.mubr.f32.gmra.mrb[0].mxu0 %v1783
    %v2472 = vpop.f32.mrb[0].mxu0
    %v2473 = vadd.f32 0.0, %v2472
    %v2474 = vpop.f32.mrb[0].mxu0
    %2475 = vmatprep.mubr.f32.mxu0 0.0
    %2476 = vmatmul.mubr.f32.gmra.mrb[0].mxu0 %v1786
    %v2477 = vpop.f32.mrb[0].mxu0
    %v2478 = vadd.f32 0.0, %v2477
    %v2479 = vpop.f32.mrb[0].mxu0
    %2480 = vmatprep.mubr.f32.mxu0 0.0
    %2481 = vmatmul.mubr.f32.gmra.mrb[0].mxu0 %v1789
    %v2482 = vpop.f32.mrb[0].mxu0
    %v2483 = vadd.f32 0.0, %v2482
    %v2484 = vpop.f32.mrb[0].mxu0
    %2485 = vmatprep.mubr.f32.mxu0 0.0
    %2486 = vmatmul.mubr.f32.gmra.mrb[0].mxu0 %v1792
    %v2487 = vpop.f32.mrb[0].mxu0
    %v2488 = vadd.f32 0.0, %v2487
    %v2489 = vpop.f32.mrb[0].mxu0
    %2490 = vmatprep.mubr.f32.mxu0 0.0
    %2491 = vmatmul.mubr.f32.gmra.mrb[0].mxu0 %v1795
    %v2492 = vpop.f32.mrb[0].mxu0
    %v2493 = vadd.f32 0.0, %v2492
    %v2494 = vpop.f32.mrb[0].mxu0
    %2495 = vmatprep.mubr.f32.mxu0 0.0
    %2496 = vmatmul.mubr.f32.gmra.mrb[0].mxu0 %v1798
    %v2497 = vpop.f32.mrb[0].mxu0
    %v2498 = vadd.f32 0.0, %v2497
    %v2499 = vpop.f32.mrb[0].mxu0
    %2500 = vmatprep.mubr.f32.mxu0 0.0
    %2501 = vmatmul.mubr.f32.gmra.mrb[0].mxu0 %v1801
    %v2502 = vpop.f32.mrb[0].mxu0
    %v2503 = vadd.f32 0.0, %v2502
    %v2504 = vpop.f32.mrb[0].mxu0
    %2505 = vmatprep.mubr.f32.mxu0 0.0
    %2506 = vmatmul.mubr.f32.gmra.mrb[0].mxu0 %v1804
    %v2507 = vpop.f32.mrb[0].mxu0
    %v2508 = vadd.f32 0.0, %v2507
    %v2509 = vpop.f32.mrb[0].mxu0
    %2510 = vdwg.mxu0
    %v2511 = vsub.f32 %v784, %v1873
    %v2512 = vsub.f32 %v789, %v1878
    %v2513 = vsub.f32 %v794, %v1883
    %v2514 = vsub.f32 %v799, %v1888
    %v2515 = vsub.f32 %v804, %v1893
    %v2516 = vsub.f32 %v809, %v1898
    %v2517 = vsub.f32 %v814, %v1903
    %v2518 = vsub.f32 %v819, %v1908
    %v2519 = vsub.f32 %v824, %v1913
    %v2520 = vsub.f32 %v829, %v1918
    %v2521 = vsub.f32 %v834, %v1923
    %v2522 = vsub.f32 %v839, %v1928
    %v2523 = vsub.f32 %v844, %v1933
    %v2524 = vsub.f32 %v849, %v1938
    %v2525 = vsub.f32 %v854, %v1943
    %v2526 = vsub.f32 %v859, %v1948
    %v2527 = vsub.f32 %v864, %v1953
    %v2528 = vsub.f32 %v869, %v1958
    %v2529 = vsub.f32 %v874, %v1963
    %v2530 = vsub.f32 %v879, %v1968
    %v2531 = vsub.f32 %v884, %v1973
    %v2532 = vsub.f32 %v889, %v1978
    %v2533 = vsub.f32 %v894, %v1983
    %v2534 = vsub.f32 %v899, %v1988
    %v2535 = vsub.f32 %v904, %v1993
    %v2536 = vsub.f32 %v909, %v1998
    %v2537 = vsub.f32 %v914, %v2003
    %v2538 = vsub.f32 %v919, %v2008
    %v2539 = vsub.f32 %v924, %v2013
    %v2540 = vsub.f32 %v929, %v2018
    %v2541 = vsub.f32 %v934, %v2023
    %v2542 = vsub.f32 %v939, %v2028
    %v2543 = vsub.f32 %v944, %v2033
    %v2544 = vsub.f32 %v949, %v2038
    %v2545 = vsub.f32 %v954, %v2043
    %v2546 = vsub.f32 %v959, %v2048
    %v2547 = vsub.f32 %v964, %v2053
    %v2548 = vsub.f32 %v969, %v2058
    %v2549 = vsub.f32 %v974, %v2063
    %v2550 = vsub.f32 %v979, %v2068
    %v2551 = vsub.f32 %v984, %v2073
    %v2552 = vsub.f32 %v989, %v2078
    %v2553 = vsub.f32 %v994, %v2083
    %v2554 = vsub.f32 %v999, %v2088
    %v2555 = vsub.f32 %v1004, %v2093
    %v2556 = vsub.f32 %v1009, %v2098
    %v2557 = vsub.f32 %v1014, %v2103
    %v2558 = vsub.f32 %v1019, %v2108
    %v2559 = vsub.f32 %v1024, %v2113
    %v2560 = vsub.f32 %v1029, %v2118
    %v2561 = vsub.f32 %v1034, %v2123
    %v2562 = vsub.f32 %v1039, %v2128
    %v2563 = vsub.f32 %v1044, %v2133
    %v2564 = vsub.f32 %v1049, %v2138
    %v2565 = vsub.f32 %v1054, %v2143
    %v2566 = vsub.f32 %v1059, %v2148
    %v2567 = vsub.f32 %v1064, %v2153
    %v2568 = vsub.f32 %v1069, %v2158
    %v2569 = vsub.f32 %v1074, %v2163
    %v2570 = vsub.f32 %v1079, %v2168
    %v2571 = vsub.f32 %v1084, %v2173
    %v2572 = vsub.f32 %v1089, %v2178
    %v2573 = vsub.f32 %v1094, %v2183
    %v2574 = vsub.f32 %v1099, %v2188
    %v2575 = vsub.f32 %v1104, %v2193
    %v2576 = vsub.f32 %v1109, %v2198
    %v2577 = vsub.f32 %v1114, %v2203
    %v2578 = vsub.f32 %v1119, %v2208
    %v2579 = vsub.f32 %v1124, %v2213
    %v2580 = vsub.f32 %v1129, %v2218
    %v2581 = vsub.f32 %v1134, %v2223
    %v2582 = vsub.f32 %v1139, %v2228
    %v2583 = vsub.f32 %v1144, %v2233
    %v2584 = vsub.f32 %v1149, %v2238
    %v2585 = vsub.f32 %v1154, %v2243
    %v2586 = vsub.f32 %v1159, %v2248
    %v2587 = vsub.f32 %v1164, %v2253
    %v2588 = vsub.f32 %v1169, %v2258
    %v2589 = vsub.f32 %v1174, %v2263
    %v2590 = vsub.f32 %v1179, %v2268
    %v2591 = vsub.f32 %v1184, %v2273
    %v2592 = vsub.f32 %v1189, %v2278
    %v2593 = vsub.f32 %v1194, %v2283
    %v2594 = vsub.f32 %v1199, %v2288
    %v2595 = vsub.f32 %v1204, %v2293
    %v2596 = vsub.f32 %v1209, %v2298
    %v2597 = vsub.f32 %v1214, %v2303
    %v2598 = vsub.f32 %v1219, %v2308
    %v2599 = vsub.f32 %v1224, %v2313
    %v2600 = vsub.f32 %v1229, %v2318
    %v2601 = vsub.f32 %v1234, %v2323
    %v2602 = vsub.f32 %v1239, %v2328
    %v2603 = vsub.f32 %v1244, %v2333
    %v2604 = vsub.f32 %v1249, %v2338
    %v2605 = vsub.f32 %v1254, %v2343
    %v2606 = vsub.f32 %v1259, %v2348
    %v2607 = vsub.f32 %v1264, %v2353
    %v2608 = vsub.f32 %v1269, %v2358
    %v2609 = vsub.f32 %v1274, %v2363
    %v2610 = vsub.f32 %v1279, %v2368
    %v2611 = vsub.f32 %v1284, %v2373
    %v2612 = vsub.f32 %v1289, %v2378
    %v2613 = vsub.f32 %v1294, %v2383
    %v2614 = vsub.f32 %v1299, %v2388
    %v2615 = vsub.f32 %v1304, %v2393
    %v2616 = vsub.f32 %v1309, %v2398
    %v2617 = vsub.f32 %v1314, %v2403
    %v2618 = vsub.f32 %v1319, %v2408
    %v2619 = vsub.f32 %v1324, %v2413
    %v2620 = vsub.f32 %v1329, %v2418
    %v2621 = vsub.f32 %v1334, %v2423
    %v2622 = vsub.f32 %v1339, %v2428
    %v2623 = vsub.f32 %v1344, %v2433
    %v2624 = vsub.f32 %v1349, %v2438
    %v2625 = vsub.f32 %v1354, %v2443
    %v2626 = vsub.f32 %v1359, %v2448
    %v2627 = vsub.f32 %v1364, %v2453
    %v2628 = vsub.f32 %v1369, %v2458
    %v2629 = vsub.f32 %v1374, %v2463
    %v2630 = vsub.f32 %v1379, %v2468
    %v2631 = vsub.f32 %v1384, %v2473
    %v2632 = vsub.f32 %v1389, %v2478
    %v2633 = vsub.f32 %v1394, %v2483
    %v2634 = vsub.f32 %v1399, %v2488
    %v2635 = vsub.f32 %v1404, %v2493
    %v2636 = vsub.f32 %v1409, %v2498
    %v2637 = vsub.f32 %v1414, %v2503
    %v2638 = vsub.f32 %v1419, %v2508
    %v2639 = vmul.f32 %v2511, %v2511
    %v2640 = vmul.f32 %v2512, %v2512
    %v2641 = vmul.f32 %v2513, %v2513
    %v2642 = vmul.f32 %v2514, %v2514
    %v2643 = vmul.f32 %v2515, %v2515
    %v2644 = vmul.f32 %v2516, %v2516
    %v2645 = vmul.f32 %v2517, %v2517
    %v2646 = vmul.f32 %v2518, %v2518
    %v2647 = vmul.f32 %v2519, %v2519
    %v2648 = vmul.f32 %v2520, %v2520
    %v2649 = vmul.f32 %v2521, %v2521
    %v2650 = vmul.f32 %v2522, %v2522
    %v2651 = vmul.f32 %v2523, %v2523
    %v2652 = vmul.f32 %v2524, %v2524
    %v2653 = vmul.f32 %v2525, %v2525
    %v2654 = vmul.f32 %v2526, %v2526
    %v2655 = vmul.f32 %v2527, %v2527
    %v2656 = vmul.f32 %v2528, %v2528
    %v2657 = vmul.f32 %v2529, %v2529
    %v2658 = vmul.f32 %v2530, %v2530
    %v2659 = vmul.f32 %v2531, %v2531
    %v2660 = vmul.f32 %v2532, %v2532
    %v2661 = vmul.f32 %v2533, %v2533
    %v2662 = vmul.f32 %v2534, %v2534
    %v2663 = vmul.f32 %v2535, %v2535
    %v2664 = vmul.f32 %v2536, %v2536
    %v2665 = vmul.f32 %v2537, %v2537
    %v2666 = vmul.f32 %v2538, %v2538
    %v2667 = vmul.f32 %v2539, %v2539
    %v2668 = vmul.f32 %v2540, %v2540
    %v2669 = vmul.f32 %v2541, %v2541
    %v2670 = vmul.f32 %v2542, %v2542
    %v2671 = vmul.f32 %v2543, %v2543
    %v2672 = vmul.f32 %v2544, %v2544
    %v2673 = vmul.f32 %v2545, %v2545
    %v2674 = vmul.f32 %v2546, %v2546
    %v2675 = vmul.f32 %v2547, %v2547
    %v2676 = vmul.f32 %v2548, %v2548
    %v2677 = vmul.f32 %v2549, %v2549
    %v2678 = vmul.f32 %v2550, %v2550
    %v2679 = vmul.f32 %v2551, %v2551
    %v2680 = vmul.f32 %v2552, %v2552
    %v2681 = vmul.f32 %v2553, %v2553
    %v2682 = vmul.f32 %v2554, %v2554
    %v2683 = vmul.f32 %v2555, %v2555
    %v2684 = vmul.f32 %v2556, %v2556
    %v2685 = vmul.f32 %v2557, %v2557
    %v2686 = vmul.f32 %v2558, %v2558
    %v2687 = vmul.f32 %v2559, %v2559
    %v2688 = vmul.f32 %v2560, %v2560
    %v2689 = vmul.f32 %v2561, %v2561
    %v2690 = vmul.f32 %v2562, %v2562
    %v2691 = vmul.f32 %v2563, %v2563
    %v2692 = vmul.f32 %v2564, %v2564
    %v2693 = vmul.f32 %v2565, %v2565
    %v2694 = vmul.f32 %v2566, %v2566
    %v2695 = vmul.f32 %v2567, %v2567
    %v2696 = vmul.f32 %v2568, %v2568
    %v2697 = vmul.f32 %v2569, %v2569
    %v2698 = vmul.f32 %v2570, %v2570
    %v2699 = vmul.f32 %v2571, %v2571
    %v2700 = vmul.f32 %v2572, %v2572
    %v2701 = vmul.f32 %v2573, %v2573
    %v2702 = vmul.f32 %v2574, %v2574
    %v2703 = vmul.f32 %v2575, %v2575
    %v2704 = vmul.f32 %v2576, %v2576
    %v2705 = vmul.f32 %v2577, %v2577
    %v2706 = vmul.f32 %v2578, %v2578
    %v2707 = vmul.f32 %v2579, %v2579
    %v2708 = vmul.f32 %v2580, %v2580
    %v2709 = vmul.f32 %v2581, %v2581
    %v2710 = vmul.f32 %v2582, %v2582
    %v2711 = vmul.f32 %v2583, %v2583
    %v2712 = vmul.f32 %v2584, %v2584
    %v2713 = vmul.f32 %v2585, %v2585
    %v2714 = vmul.f32 %v2586, %v2586
    %v2715 = vmul.f32 %v2587, %v2587
    %v2716 = vmul.f32 %v2588, %v2588
    %v2717 = vmul.f32 %v2589, %v2589
    %v2718 = vmul.f32 %v2590, %v2590
    %v2719 = vmul.f32 %v2591, %v2591
    %v2720 = vmul.f32 %v2592, %v2592
    %v2721 = vmul.f32 %v2593, %v2593
    %v2722 = vmul.f32 %v2594, %v2594
    %v2723 = vmul.f32 %v2595, %v2595
    %v2724 = vmul.f32 %v2596, %v2596
    %v2725 = vmul.f32 %v2597, %v2597
    %v2726 = vmul.f32 %v2598, %v2598
    %v2727 = vmul.f32 %v2599, %v2599
    %v2728 = vmul.f32 %v2600, %v2600
    %v2729 = vmul.f32 %v2601, %v2601
    %v2730 = vmul.f32 %v2602, %v2602
    %v2731 = vmul.f32 %v2603, %v2603
    %v2732 = vmul.f32 %v2604, %v2604
    %v2733 = vmul.f32 %v2605, %v2605
    %v2734 = vmul.f32 %v2606, %v2606
    %v2735 = vmul.f32 %v2607, %v2607
    %v2736 = vmul.f32 %v2608, %v2608
    %v2737 = vmul.f32 %v2609, %v2609
    %v2738 = vmul.f32 %v2610, %v2610
    %v2739 = vmul.f32 %v2611, %v2611
    %v2740 = vmul.f32 %v2612, %v2612
    %v2741 = vmul.f32 %v2613, %v2613
    %v2742 = vmul.f32 %v2614, %v2614
    %v2743 = vmul.f32 %v2615, %v2615
    %v2744 = vmul.f32 %v2616, %v2616
    %v2745 = vmul.f32 %v2617, %v2617
    %v2746 = vmul.f32 %v2618, %v2618
    %v2747 = vmul.f32 %v2619, %v2619
    %v2748 = vmul.f32 %v2620, %v2620
    %v2749 = vmul.f32 %v2621, %v2621
    %v2750 = vmul.f32 %v2622, %v2622
    %v2751 = vmul.f32 %v2623, %v2623
    %v2752 = vmul.f32 %v2624, %v2624
    %v2753 = vmul.f32 %v2625, %v2625
    %v2754 = vmul.f32 %v2626, %v2626
    %v2755 = vmul.f32 %v2627, %v2627
    %v2756 = vmul.f32 %v2628, %v2628
    %v2757 = vmul.f32 %v2629, %v2629
    %v2758 = vmul.f32 %v2630, %v2630
    %v2759 = vmul.f32 %v2631, %v2631
    %v2760 = vmul.f32 %v2632, %v2632
    %v2761 = vmul.f32 %v2633, %v2633
    %v2762 = vmul.f32 %v2634, %v2634
    %v2763 = vmul.f32 %v2635, %v2635
    %v2764 = vmul.f32 %v2636, %v2636
    %v2765 = vmul.f32 %v2637, %v2637
    %v2766 = vmul.f32 %v2638, %v2638
    %vm2767 = vcmask 15360
    %v2768 = vsel %vm2767, %v2639, 0.0
    %2769 = vadd.xlane.f32.xlu0 %v2768
    %v2770 = vpop.xlane.xlu0 %2769
    %v2771 = vsel %vm2767, %v2640, 0.0
    %2772 = vadd.xlane.f32.xlu0 %v2771
    %v2773 = vpop.xlane.xlu0 %2772
    %v2774 = vsel %vm2767, %v2641, 0.0
    %2775 = vadd.xlane.f32.xlu0 %v2774
    %v2776 = vpop.xlane.xlu0 %2775
    %v2777 = vsel %vm2767, %v2642, 0.0
    %2778 = vadd.xlane.f32.xlu0 %v2777
    %v2779 = vpop.xlane.xlu0 %2778
    %v2780 = vsel %vm2767, %v2643, 0.0
    %2781 = vadd.xlane.f32.xlu0 %v2780
    %v2782 = vpop.xlane.xlu0 %2781
    %v2783 = vsel %vm2767, %v2644, 0.0
    %2784 = vadd.xlane.f32.xlu0 %v2783
    %v2785 = vpop.xlane.xlu0 %2784
    %v2786 = vsel %vm2767, %v2645, 0.0
    %2787 = vadd.xlane.f32.xlu0 %v2786
    %v2788 = vpop.xlane.xlu0 %2787
    %v2789 = vsel %vm2767, %v2646, 0.0
    %2790 = vadd.xlane.f32.xlu0 %v2789
    %v2791 = vpop.xlane.xlu0 %2790
    %v2792 = vsel %vm2767, %v2647, 0.0
    %2793 = vadd.xlane.f32.xlu0 %v2792
    %v2794 = vpop.xlane.xlu0 %2793
    %v2795 = vsel %vm2767, %v2648, 0.0
    %2796 = vadd.xlane.f32.xlu0 %v2795
    %v2797 = vpop.xlane.xlu0 %2796
    %v2798 = vsel %vm2767, %v2649, 0.0
    %2799 = vadd.xlane.f32.xlu0 %v2798
    %v2800 = vpop.xlane.xlu0 %2799
    %v2801 = vsel %vm2767, %v2650, 0.0
    %2802 = vadd.xlane.f32.xlu0 %v2801
    %v2803 = vpop.xlane.xlu0 %2802
    %v2804 = vsel %vm2767, %v2651, 0.0
    %2805 = vadd.xlane.f32.xlu0 %v2804
    %v2806 = vpop.xlane.xlu0 %2805
    %v2807 = vsel %vm2767, %v2652, 0.0
    %2808 = vadd.xlane.f32.xlu0 %v2807
    %v2809 = vpop.xlane.xlu0 %2808
    %v2810 = vsel %vm2767, %v2653, 0.0
    %2811 = vadd.xlane.f32.xlu0 %v2810
    %v2812 = vpop.xlane.xlu0 %2811
    %v2813 = vsel %vm2767, %v2654, 0.0
    %2814 = vadd.xlane.f32.xlu0 %v2813
    %v2815 = vpop.xlane.xlu0 %2814
    %v2816 = vsel %vm2767, %v2655, 0.0
    %2817 = vadd.xlane.f32.xlu0 %v2816
    %v2818 = vpop.xlane.xlu0 %2817
    %v2819 = vsel %vm2767, %v2656, 0.0
    %2820 = vadd.xlane.f32.xlu0 %v2819
    %v2821 = vpop.xlane.xlu0 %2820
    %v2822 = vsel %vm2767, %v2657, 0.0
    %2823 = vadd.xlane.f32.xlu0 %v2822
    %v2824 = vpop.xlane.xlu0 %2823
    %v2825 = vsel %vm2767, %v2658, 0.0
    %2826 = vadd.xlane.f32.xlu0 %v2825
    %v2827 = vpop.xlane.xlu0 %2826
    %v2828 = vsel %vm2767, %v2659, 0.0
    %2829 = vadd.xlane.f32.xlu0 %v2828
    %v2830 = vpop.xlane.xlu0 %2829
    %v2831 = vsel %vm2767, %v2660, 0.0
    %2832 = vadd.xlane.f32.xlu0 %v2831
    %v2833 = vpop.xlane.xlu0 %2832
    %v2834 = vsel %vm2767, %v2661, 0.0
    %2835 = vadd.xlane.f32.xlu0 %v2834
    %v2836 = vpop.xlane.xlu0 %2835
    %v2837 = vsel %vm2767, %v2662, 0.0
    %2838 = vadd.xlane.f32.xlu0 %v2837
    %v2839 = vpop.xlane.xlu0 %2838
    %v2840 = vsel %vm2767, %v2663, 0.0
    %2841 = vadd.xlane.f32.xlu0 %v2840
    %v2842 = vpop.xlane.xlu0 %2841
    %v2843 = vsel %vm2767, %v2664, 0.0
    %2844 = vadd.xlane.f32.xlu0 %v2843
    %v2845 = vpop.xlane.xlu0 %2844
    %v2846 = vsel %vm2767, %v2665, 0.0
    %2847 = vadd.xlane.f32.xlu0 %v2846
    %v2848 = vpop.xlane.xlu0 %2847
    %v2849 = vsel %vm2767, %v2666, 0.0
    %2850 = vadd.xlane.f32.xlu0 %v2849
    %v2851 = vpop.xlane.xlu0 %2850
    %v2852 = vsel %vm2767, %v2667, 0.0
    %2853 = vadd.xlane.f32.xlu0 %v2852
    %v2854 = vpop.xlane.xlu0 %2853
    %v2855 = vsel %vm2767, %v2668, 0.0
    %2856 = vadd.xlane.f32.xlu0 %v2855
    %v2857 = vpop.xlane.xlu0 %2856
    %v2858 = vsel %vm2767, %v2669, 0.0
    %2859 = vadd.xlane.f32.xlu0 %v2858
    %v2860 = vpop.xlane.xlu0 %2859
    %v2861 = vsel %vm2767, %v2670, 0.0
    %2862 = vadd.xlane.f32.xlu0 %v2861
    %v2863 = vpop.xlane.xlu0 %2862
    %v2864 = vsel %vm2767, %v2671, 0.0
    %2865 = vadd.xlane.f32.xlu0 %v2864
    %v2866 = vpop.xlane.xlu0 %2865
    %v2867 = vsel %vm2767, %v2672, 0.0
    %2868 = vadd.xlane.f32.xlu0 %v2867
    %v2869 = vpop.xlane.xlu0 %2868
    %v2870 = vsel %vm2767, %v2673, 0.0
    %2871 = vadd.xlane.f32.xlu0 %v2870
    %v2872 = vpop.xlane.xlu0 %2871
    %v2873 = vsel %vm2767, %v2674, 0.0
    %2874 = vadd.xlane.f32.xlu0 %v2873
    %v2875 = vpop.xlane.xlu0 %2874
    %v2876 = vsel %vm2767, %v2675, 0.0
    %2877 = vadd.xlane.f32.xlu0 %v2876
    %v2878 = vpop.xlane.xlu0 %2877
    %v2879 = vsel %vm2767, %v2676, 0.0
    %2880 = vadd.xlane.f32.xlu0 %v2879
    %v2881 = vpop.xlane.xlu0 %2880
    %v2882 = vsel %vm2767, %v2677, 0.0
    %2883 = vadd.xlane.f32.xlu0 %v2882
    %v2884 = vpop.xlane.xlu0 %2883
    %v2885 = vsel %vm2767, %v2678, 0.0
    %2886 = vadd.xlane.f32.xlu0 %v2885
    %v2887 = vpop.xlane.xlu0 %2886
    %v2888 = vsel %vm2767, %v2679, 0.0
    %2889 = vadd.xlane.f32.xlu0 %v2888
    %v2890 = vpop.xlane.xlu0 %2889
    %v2891 = vsel %vm2767, %v2680, 0.0
    %2892 = vadd.xlane.f32.xlu0 %v2891
    %v2893 = vpop.xlane.xlu0 %2892
    %v2894 = vsel %vm2767, %v2681, 0.0
    %2895 = vadd.xlane.f32.xlu0 %v2894
    %v2896 = vpop.xlane.xlu0 %2895
    %v2897 = vsel %vm2767, %v2682, 0.0
    %2898 = vadd.xlane.f32.xlu0 %v2897
    %v2899 = vpop.xlane.xlu0 %2898
    %v2900 = vsel %vm2767, %v2683, 0.0
    %2901 = vadd.xlane.f32.xlu0 %v2900
    %v2902 = vpop.xlane.xlu0 %2901
    %v2903 = vsel %vm2767, %v2684, 0.0
    %2904 = vadd.xlane.f32.xlu0 %v2903
    %v2905 = vpop.xlane.xlu0 %2904
    %v2906 = vsel %vm2767, %v2685, 0.0
    %2907 = vadd.xlane.f32.xlu0 %v2906
    %v2908 = vpop.xlane.xlu0 %2907
    %v2909 = vsel %vm2767, %v2686, 0.0
    %2910 = vadd.xlane.f32.xlu0 %v2909
    %v2911 = vpop.xlane.xlu0 %2910
    %v2912 = vsel %vm2767, %v2687, 0.0
    %2913 = vadd.xlane.f32.xlu0 %v2912
    %v2914 = vpop.xlane.xlu0 %2913
    %v2915 = vsel %vm2767, %v2688, 0.0
    %2916 = vadd.xlane.f32.xlu0 %v2915
    %v2917 = vpop.xlane.xlu0 %2916
    %v2918 = vsel %vm2767, %v2689, 0.0
    %2919 = vadd.xlane.f32.xlu0 %v2918
    %v2920 = vpop.xlane.xlu0 %2919
    %v2921 = vsel %vm2767, %v2690, 0.0
    %2922 = vadd.xlane.f32.xlu0 %v2921
    %v2923 = vpop.xlane.xlu0 %2922
    %v2924 = vsel %vm2767, %v2691, 0.0
    %2925 = vadd.xlane.f32.xlu0 %v2924
    %v2926 = vpop.xlane.xlu0 %2925
    %v2927 = vsel %vm2767, %v2692, 0.0
    %2928 = vadd.xlane.f32.xlu0 %v2927
    %v2929 = vpop.xlane.xlu0 %2928
    %v2930 = vsel %vm2767, %v2693, 0.0
    %2931 = vadd.xlane.f32.xlu0 %v2930
    %v2932 = vpop.xlane.xlu0 %2931
    %v2933 = vsel %vm2767, %v2694, 0.0
    %2934 = vadd.xlane.f32.xlu0 %v2933
    %v2935 = vpop.xlane.xlu0 %2934
    %v2936 = vsel %vm2767, %v2695, 0.0
    %2937 = vadd.xlane.f32.xlu0 %v2936
    %v2938 = vpop.xlane.xlu0 %2937
    %v2939 = vsel %vm2767, %v2696, 0.0
    %2940 = vadd.xlane.f32.xlu0 %v2939
    %v2941 = vpop.xlane.xlu0 %2940
    %v2942 = vsel %vm2767, %v2697, 0.0
    %2943 = vadd.xlane.f32.xlu0 %v2942
    %v2944 = vpop.xlane.xlu0 %2943
    %v2945 = vsel %vm2767, %v2698, 0.0
    %2946 = vadd.xlane.f32.xlu0 %v2945
    %v2947 = vpop.xlane.xlu0 %2946
    %v2948 = vsel %vm2767, %v2699, 0.0
    %2949 = vadd.xlane.f32.xlu0 %v2948
    %v2950 = vpop.xlane.xlu0 %2949
    %v2951 = vsel %vm2767, %v2700, 0.0
    %2952 = vadd.xlane.f32.xlu0 %v2951
    %v2953 = vpop.xlane.xlu0 %2952
    %v2954 = vsel %vm2767, %v2701, 0.0
    %2955 = vadd.xlane.f32.xlu0 %v2954
    %v2956 = vpop.xlane.xlu0 %2955
    %v2957 = vsel %vm2767, %v2702, 0.0
    %2958 = vadd.xlane.f32.xlu0 %v2957
    %v2959 = vpop.xlane.xlu0 %2958
    %v2960 = vsel %vm2767, %v2703, 0.0
    %2961 = vadd.xlane.f32.xlu0 %v2960
    %v2962 = vpop.xlane.xlu0 %2961
    %v2963 = vsel %vm2767, %v2704, 0.0
    %2964 = vadd.xlane.f32.xlu0 %v2963
    %v2965 = vpop.xlane.xlu0 %2964
    %v2966 = vsel %vm2767, %v2705, 0.0
    %2967 = vadd.xlane.f32.xlu0 %v2966
    %v2968 = vpop.xlane.xlu0 %2967
    %v2969 = vsel %vm2767, %v2706, 0.0
    %2970 = vadd.xlane.f32.xlu0 %v2969
    %v2971 = vpop.xlane.xlu0 %2970
    %v2972 = vsel %vm2767, %v2707, 0.0
    %2973 = vadd.xlane.f32.xlu0 %v2972
    %v2974 = vpop.xlane.xlu0 %2973
    %v2975 = vsel %vm2767, %v2708, 0.0
    %2976 = vadd.xlane.f32.xlu0 %v2975
    %v2977 = vpop.xlane.xlu0 %2976
    %v2978 = vsel %vm2767, %v2709, 0.0
    %2979 = vadd.xlane.f32.xlu0 %v2978
    %v2980 = vpop.xlane.xlu0 %2979
    %v2981 = vsel %vm2767, %v2710, 0.0
    %2982 = vadd.xlane.f32.xlu0 %v2981
    %v2983 = vpop.xlane.xlu0 %2982
    %v2984 = vsel %vm2767, %v2711, 0.0
    %2985 = vadd.xlane.f32.xlu0 %v2984
    %v2986 = vpop.xlane.xlu0 %2985
    %v2987 = vsel %vm2767, %v2712, 0.0
    %2988 = vadd.xlane.f32.xlu0 %v2987
    %v2989 = vpop.xlane.xlu0 %2988
    %v2990 = vsel %vm2767, %v2713, 0.0
    %2991 = vadd.xlane.f32.xlu0 %v2990
    %v2992 = vpop.xlane.xlu0 %2991
    %v2993 = vsel %vm2767, %v2714, 0.0
    %2994 = vadd.xlane.f32.xlu0 %v2993
    %v2995 = vpop.xlane.xlu0 %2994
    %v2996 = vsel %vm2767, %v2715, 0.0
    %2997 = vadd.xlane.f32.xlu0 %v2996
    %v2998 = vpop.xlane.xlu0 %2997
    %v2999 = vsel %vm2767, %v2716, 0.0
    %3000 = vadd.xlane.f32.xlu0 %v2999
    %v3001 = vpop.xlane.xlu0 %3000
    %v3002 = vsel %vm2767, %v2717, 0.0
    %3003 = vadd.xlane.f32.xlu0 %v3002
    %v3004 = vpop.xlane.xlu0 %3003
    %v3005 = vsel %vm2767, %v2718, 0.0
    %3006 = vadd.xlane.f32.xlu0 %v3005
    %v3007 = vpop.xlane.xlu0 %3006
    %v3008 = vsel %vm2767, %v2719, 0.0
    %3009 = vadd.xlane.f32.xlu0 %v3008
    %v3010 = vpop.xlane.xlu0 %3009
    %v3011 = vsel %vm2767, %v2720, 0.0
    %3012 = vadd.xlane.f32.xlu0 %v3011
    %v3013 = vpop.xlane.xlu0 %3012
    %v3014 = vsel %vm2767, %v2721, 0.0
    %3015 = vadd.xlane.f32.xlu0 %v3014
    %v3016 = vpop.xlane.xlu0 %3015
    %v3017 = vsel %vm2767, %v2722, 0.0
    %3018 = vadd.xlane.f32.xlu0 %v3017
    %v3019 = vpop.xlane.xlu0 %3018
    %v3020 = vsel %vm2767, %v2723, 0.0
    %3021 = vadd.xlane.f32.xlu0 %v3020
    %v3022 = vpop.xlane.xlu0 %3021
    %v3023 = vsel %vm2767, %v2724, 0.0
    %3024 = vadd.xlane.f32.xlu0 %v3023
    %v3025 = vpop.xlane.xlu0 %3024
    %v3026 = vsel %vm2767, %v2725, 0.0
    %3027 = vadd.xlane.f32.xlu0 %v3026
    %v3028 = vpop.xlane.xlu0 %3027
    %v3029 = vsel %vm2767, %v2726, 0.0
    %3030 = vadd.xlane.f32.xlu0 %v3029
    %v3031 = vpop.xlane.xlu0 %3030
    %v3032 = vsel %vm2767, %v2727, 0.0
    %3033 = vadd.xlane.f32.xlu0 %v3032
    %v3034 = vpop.xlane.xlu0 %3033
    %v3035 = vsel %vm2767, %v2728, 0.0
    %3036 = vadd.xlane.f32.xlu0 %v3035
    %v3037 = vpop.xlane.xlu0 %3036
    %v3038 = vsel %vm2767, %v2729, 0.0
    %3039 = vadd.xlane.f32.xlu0 %v3038
    %v3040 = vpop.xlane.xlu0 %3039
    %v3041 = vsel %vm2767, %v2730, 0.0
    %3042 = vadd.xlane.f32.xlu0 %v3041
    %v3043 = vpop.xlane.xlu0 %3042
    %v3044 = vsel %vm2767, %v2731, 0.0
    %3045 = vadd.xlane.f32.xlu0 %v3044
    %v3046 = vpop.xlane.xlu0 %3045
    %v3047 = vsel %vm2767, %v2732, 0.0
    %3048 = vadd.xlane.f32.xlu0 %v3047
    %v3049 = vpop.xlane.xlu0 %3048
    %v3050 = vsel %vm2767, %v2733, 0.0
    %3051 = vadd.xlane.f32.xlu0 %v3050
    %v3052 = vpop.xlane.xlu0 %3051
    %v3053 = vsel %vm2767, %v2734, 0.0
    %3054 = vadd.xlane.f32.xlu0 %v3053
    %v3055 = vpop.xlane.xlu0 %3054
    %v3056 = vsel %vm2767, %v2735, 0.0
    %3057 = vadd.xlane.f32.xlu0 %v3056
    %v3058 = vpop.xlane.xlu0 %3057
    %v3059 = vsel %vm2767, %v2736, 0.0
    %3060 = vadd.xlane.f32.xlu0 %v3059
    %v3061 = vpop.xlane.xlu0 %3060
    %v3062 = vsel %vm2767, %v2737, 0.0
    %3063 = vadd.xlane.f32.xlu0 %v3062
    %v3064 = vpop.xlane.xlu0 %3063
    %v3065 = vsel %vm2767, %v2738, 0.0
    %3066 = vadd.xlane.f32.xlu0 %v3065
    %v3067 = vpop.xlane.xlu0 %3066
    %v3068 = vsel %vm2767, %v2739, 0.0
    %3069 = vadd.xlane.f32.xlu0 %v3068
    %v3070 = vpop.xlane.xlu0 %3069
    %v3071 = vsel %vm2767, %v2740, 0.0
    %3072 = vadd.xlane.f32.xlu0 %v3071
    %v3073 = vpop.xlane.xlu0 %3072
    %v3074 = vsel %vm2767, %v2741, 0.0
    %3075 = vadd.xlane.f32.xlu0 %v3074
    %v3076 = vpop.xlane.xlu0 %3075
    %v3077 = vsel %vm2767, %v2742, 0.0
    %3078 = vadd.xlane.f32.xlu0 %v3077
    %v3079 = vpop.xlane.xlu0 %3078
    %v3080 = vsel %vm2767, %v2743, 0.0
    %3081 = vadd.xlane.f32.xlu0 %v3080
    %v3082 = vpop.xlane.xlu0 %3081
    %v3083 = vsel %vm2767, %v2744, 0.0
    %3084 = vadd.xlane.f32.xlu0 %v3083
    %v3085 = vpop.xlane.xlu0 %3084
    %v3086 = vsel %vm2767, %v2745, 0.0
    %3087 = vadd.xlane.f32.xlu0 %v3086
    %v3088 = vpop.xlane.xlu0 %3087
    %v3089 = vsel %vm2767, %v2746, 0.0
    %3090 = vadd.xlane.f32.xlu0 %v3089
    %v3091 = vpop.xlane.xlu0 %3090
    %v3092 = vsel %vm2767, %v2747, 0.0
    %3093 = vadd.xlane.f32.xlu0 %v3092
    %v3094 = vpop.xlane.xlu0 %3093
    %v3095 = vsel %vm2767, %v2748, 0.0
    %3096 = vadd.xlane.f32.xlu0 %v3095
    %v3097 = vpop.xlane.xlu0 %3096
    %v3098 = vsel %vm2767, %v2749, 0.0
    %3099 = vadd.xlane.f32.xlu0 %v3098
    %v3100 = vpop.xlane.xlu0 %3099
    %v3101 = vsel %vm2767, %v2750, 0.0
    %3102 = vadd.xlane.f32.xlu0 %v3101
    %v3103 = vpop.xlane.xlu0 %3102
    %v3104 = vsel %vm2767, %v2751, 0.0
    %3105 = vadd.xlane.f32.xlu0 %v3104
    %v3106 = vpop.xlane.xlu0 %3105
    %v3107 = vsel %vm2767, %v2752, 0.0
    %3108 = vadd.xlane.f32.xlu0 %v3107
    %v3109 = vpop.xlane.xlu0 %3108
    %v3110 = vsel %vm2767, %v2753, 0.0
    %3111 = vadd.xlane.f32.xlu0 %v3110
    %v3112 = vpop.xlane.xlu0 %3111
    %v3113 = vsel %vm2767, %v2754, 0.0
    %3114 = vadd.xlane.f32.xlu0 %v3113
    %v3115 = vpop.xlane.xlu0 %3114
    %v3116 = vsel %vm2767, %v2755, 0.0
    %3117 = vadd.xlane.f32.xlu0 %v3116
    %v3118 = vpop.xlane.xlu0 %3117
    %v3119 = vsel %vm2767, %v2756, 0.0
    %3120 = vadd.xlane.f32.xlu0 %v3119
    %v3121 = vpop.xlane.xlu0 %3120
    %v3122 = vsel %vm2767, %v2757, 0.0
    %3123 = vadd.xlane.f32.xlu0 %v3122
    %v3124 = vpop.xlane.xlu0 %3123
    %v3125 = vsel %vm2767, %v2758, 0.0
    %3126 = vadd.xlane.f32.xlu0 %v3125
    %v3127 = vpop.xlane.xlu0 %3126
    %v3128 = vsel %vm2767, %v2759, 0.0
    %3129 = vadd.xlane.f32.xlu0 %v3128
    %v3130 = vpop.xlane.xlu0 %3129
    %v3131 = vsel %vm2767, %v2760, 0.0
    %3132 = vadd.xlane.f32.xlu0 %v3131
    %v3133 = vpop.xlane.xlu0 %3132
    %v3134 = vsel %vm2767, %v2761, 0.0
    %3135 = vadd.xlane.f32.xlu0 %v3134
    %v3136 = vpop.xlane.xlu0 %3135
    %v3137 = vsel %vm2767, %v2762, 0.0
    %3138 = vadd.xlane.f32.xlu0 %v3137
    %v3139 = vpop.xlane.xlu0 %3138
    %v3140 = vsel %vm2767, %v2763, 0.0
    %3141 = vadd.xlane.f32.xlu0 %v3140
    %v3142 = vpop.xlane.xlu0 %3141
    %v3143 = vsel %vm2767, %v2764, 0.0
    %3144 = vadd.xlane.f32.xlu0 %v3143
    %v3145 = vpop.xlane.xlu0 %3144
    %v3146 = vsel %vm2767, %v2765, 0.0
    %3147 = vadd.xlane.f32.xlu0 %v3146
    %v3148 = vpop.xlane.xlu0 %3147
    %v3149 = vsel %vm2767, %v2766, 0.0
    %3150 = vadd.xlane.f32.xlu0 %v3149
    %v3151 = vpop.xlane.xlu0 %3150
    %3152 = vmatprep.subr.mxu0 0.0
    %3153 = vmatpush1.msra.mxu0 %v320
    %3154 = vmatprep.subr.mxu0 0.0
    %3155 = vmatpush1.msra.mxu0 %v321
    %3156 = vmatprep.subr.mxu0 0.0
    %3157 = vmatpush1.msra.mxu0 %v322
    %3158 = vmatprep.subr.mxu0 0.0
    %3159 = vmatpush1.msra.mxu0 %v323
    %3160 = vmatprep.subr.mxu0 0.0
    %3161 = vmatpush1.msra.mxu0 0.0
    %3162 = vmatprep.subr.mxu0 0.0
    %3163 = vmatpush1.msra.mxu0 0.0
    %3164 = vmatprep.subr.mxu0 0.0
    %3165 = vmatpush1.msra.mxu0 0.0
    %3166 = vmatprep.subr.mxu0 0.0
    %3167 = vmatpush1.msra.mxu0 0.0
    %3168 = vmatprep.subr.mxu0 0.0
    %3169 = vmatpush1.msra.mxu0 0.0
    %3170 = vmatprep.subr.mxu0 0.0
    %3171 = vmatpush1.msra.mxu0 0.0
    %3172 = vmatprep.subr.mxu0 0.0
    %3173 = vmatpush1.msra.mxu0 0.0
    %3174 = vmatprep.subr.mxu0 0.0
    %3175 = vmatpush1.msra.mxu0 0.0
    %3176 = vmatprep.subr.mxu0 0.0
    %3177 = vmatpush1.msra.mxu0 0.0
    %3178 = vmatprep.subr.mxu0 0.0
    %3179 = vmatpush1.msra.mxu0 0.0
    %3180 = vmatprep.subr.mxu0 0.0
    %3181 = vmatpush1.msra.mxu0 0.0
    %3182 = vmatprep.subr.mxu0 0.0
    %3183 = vmatpush1.msra.mxu0 0.0
    %3184 = vmatprep.subr.mxu0 0.0
    %3185 = vmatpush1.msra.mxu0 0.0
    %3186 = vmatprep.subr.mxu0 0.0
    %3187 = vmatpush1.msra.mxu0 0.0
    %3188 = vmatprep.subr.mxu0 0.0
    %3189 = vmatpush1.msra.mxu0 0.0
    %3190 = vmatprep.subr.mxu0 0.0
    %3191 = vmatpush1.msra.mxu0 0.0
    %3192 = vmatprep.subr.mxu0 0.0
    %3193 = vmatpush1.msra.mxu0 0.0
    %3194 = vmatprep.subr.mxu0 0.0
    %3195 = vmatpush1.msra.mxu0 0.0
    %3196 = vmatprep.subr.mxu0 0.0
    %3197 = vmatpush1.msra.mxu0 0.0
    %3198 = vmatprep.subr.mxu0 0.0
    %3199 = vmatpush1.msra.mxu0 0.0
    %3200 = vmatprep.subr.mxu0 0.0
    %3201 = vmatpush1.msra.mxu0 0.0
    %3202 = vmatprep.subr.mxu0 0.0
    %3203 = vmatpush1.msra.mxu0 0.0
    %3204 = vmatprep.subr.mxu0 0.0
    %3205 = vmatpush1.msra.mxu0 0.0
    %3206 = vmatprep.subr.mxu0 0.0
    %3207 = vmatpush1.msra.mxu0 0.0
    %3208 = vmatprep.subr.mxu0 0.0
    %3209 = vmatpush1.msra.mxu0 0.0
    %3210 = vmatprep.subr.mxu0 0.0
    %3211 = vmatpush1.msra.mxu0 0.0
    %3212 = vmatprep.subr.mxu0 0.0
    %3213 = vmatpush1.msra.mxu0 0.0
    %3214 = vmatprep.subr.mxu0 0.0
    %3215 = vmatpush1.msra.mxu0 0.0
    %3216 = vmatprep.mubr.f32.mxu0 0.0
    %3217 = vmatmul.mubr.f32.gmra.mrb[0].mxu0 %v334
    %v3218 = vpop.f32.mrb[0].mxu0
    %v3219 = vadd.f32 0.0, %v3218
    %v3220 = vpop.f32.mrb[0].mxu0
    %3221 = vmatprep.mubr.f32.mxu0 0.0
    %3222 = vmatmul.mubr.f32.gmra.mrb[0].mxu0 %v337
    %v3223 = vpop.f32.mrb[0].mxu0
    %v3224 = vadd.f32 0.0, %v3223
    %v3225 = vpop.f32.mrb[0].mxu0
    %3226 = vmatprep.mubr.f32.mxu0 0.0
    %3227 = vmatmul.mubr.f32.gmra.mrb[0].mxu0 %v340
    %v3228 = vpop.f32.mrb[0].mxu0
    %v3229 = vadd.f32 0.0, %v3228
    %v3230 = vpop.f32.mrb[0].mxu0
    %3231 = vmatprep.mubr.f32.mxu0 0.0
    %3232 = vmatmul.mubr.f32.gmra.mrb[0].mxu0 %v343
    %v3233 = vpop.f32.mrb[0].mxu0
    %v3234 = vadd.f32 0.0, %v3233
    %v3235 = vpop.f32.mrb[0].mxu0
    %3236 = vmatprep.mubr.f32.mxu0 0.0
    %3237 = vmatmul.mubr.f32.gmra.mrb[0].mxu0 %v346
    %v3238 = vpop.f32.mrb[0].mxu0
    %v3239 = vadd.f32 0.0, %v3238
    %v3240 = vpop.f32.mrb[0].mxu0
    %3241 = vmatprep.mubr.f32.mxu0 0.0
    %3242 = vmatmul.mubr.f32.gmra.mrb[0].mxu0 %v349
    %v3243 = vpop.f32.mrb[0].mxu0
    %v3244 = vadd.f32 0.0, %v3243
    %v3245 = vpop.f32.mrb[0].mxu0
    %3246 = vmatprep.mubr.f32.mxu0 0.0
    %3247 = vmatmul.mubr.f32.gmra.mrb[0].mxu0 %v352
    %v3248 = vpop.f32.mrb[0].mxu0
    %v3249 = vadd.f32 0.0, %v3248
    %v3250 = vpop.f32.mrb[0].mxu0
    %3251 = vmatprep.mubr.f32.mxu0 0.0
    %3252 = vmatmul.mubr.f32.gmra.mrb[0].mxu0 %v355
    %v3253 = vpop.f32.mrb[0].mxu0
    %v3254 = vadd.f32 0.0, %v3253
    %v3255 = vpop.f32.mrb[0].mxu0
    %3256 = vmatprep.mubr.f32.mxu0 0.0
    %3257 = vmatmul.mubr.f32.gmra.mrb[0].mxu0 %v358
    %v3258 = vpop.f32.mrb[0].mxu0
    %v3259 = vadd.f32 0.0, %v3258
    %v3260 = vpop.f32.mrb[0].mxu0
    %3261 = vmatprep.mubr.f32.mxu0 0.0
    %3262 = vmatmul.mubr.f32.gmra.mrb[0].mxu0 %v361
    %v3263 = vpop.f32.mrb[0].mxu0
    %v3264 = vadd.f32 0.0, %v3263
    %v3265 = vpop.f32.mrb[0].mxu0
    %3266 = vmatprep.mubr.f32.mxu0 0.0
    %3267 = vmatmul.mubr.f32.gmra.mrb[0].mxu0 %v364
    %v3268 = vpop.f32.mrb[0].mxu0
    %v3269 = vadd.f32 0.0, %v3268
    %v3270 = vpop.f32.mrb[0].mxu0
    %3271 = vmatprep.mubr.f32.mxu0 0.0
    %3272 = vmatmul.mubr.f32.gmra.mrb[0].mxu0 %v367
    %v3273 = vpop.f32.mrb[0].mxu0
    %v3274 = vadd.f32 0.0, %v3273
    %v3275 = vpop.f32.mrb[0].mxu0
    %3276 = vmatprep.mubr.f32.mxu0 0.0
    %3277 = vmatmul.mubr.f32.gmra.mrb[0].mxu0 %v370
    %v3278 = vpop.f32.mrb[0].mxu0
    %v3279 = vadd.f32 0.0, %v3278
    %v3280 = vpop.f32.mrb[0].mxu0
    %3281 = vmatprep.mubr.f32.mxu0 0.0
    %3282 = vmatmul.mubr.f32.gmra.mrb[0].mxu0 %v373
    %v3283 = vpop.f32.mrb[0].mxu0
    %v3284 = vadd.f32 0.0, %v3283
    %v3285 = vpop.f32.mrb[0].mxu0
    %3286 = vmatprep.mubr.f32.mxu0 0.0
    %3287 = vmatmul.mubr.f32.gmra.mrb[0].mxu0 %v376
    %v3288 = vpop.f32.mrb[0].mxu0
    %v3289 = vadd.f32 0.0, %v3288
    %v3290 = vpop.f32.mrb[0].mxu0
    %3291 = vmatprep.mubr.f32.mxu0 0.0
    %3292 = vmatmul.mubr.f32.gmra.mrb[0].mxu0 %v379
    %v3293 = vpop.f32.mrb[0].mxu0
    %v3294 = vadd.f32 0.0, %v3293
    %v3295 = vpop.f32.mrb[0].mxu0
    %3296 = vmatprep.mubr.f32.mxu0 0.0
    %3297 = vmatmul.mubr.f32.gmra.mrb[0].mxu0 %v382
    %v3298 = vpop.f32.mrb[0].mxu0
    %v3299 = vadd.f32 0.0, %v3298
    %v3300 = vpop.f32.mrb[0].mxu0
    %3301 = vmatprep.mubr.f32.mxu0 0.0
    %3302 = vmatmul.mubr.f32.gmra.mrb[0].mxu0 %v385
    %v3303 = vpop.f32.mrb[0].mxu0
    %v3304 = vadd.f32 0.0, %v3303
    %v3305 = vpop.f32.mrb[0].mxu0
    %3306 = vmatprep.mubr.f32.mxu0 0.0
    %3307 = vmatmul.mubr.f32.gmra.mrb[0].mxu0 %v388
    %v3308 = vpop.f32.mrb[0].mxu0
    %v3309 = vadd.f32 0.0, %v3308
    %v3310 = vpop.f32.mrb[0].mxu0
    %3311 = vmatprep.mubr.f32.mxu0 0.0
    %3312 = vmatmul.mubr.f32.gmra.mrb[0].mxu0 %v391
    %v3313 = vpop.f32.mrb[0].mxu0
    %v3314 = vadd.f32 0.0, %v3313
    %v3315 = vpop.f32.mrb[0].mxu0
    %3316 = vmatprep.mubr.f32.mxu0 0.0
    %3317 = vmatmul.mubr.f32.gmra.mrb[0].mxu0 %v394
    %v3318 = vpop.f32.mrb[0].mxu0
    %v3319 = vadd.f32 0.0, %v3318
    %v3320 = vpop.f32.mrb[0].mxu0
    %3321 = vmatprep.mubr.f32.mxu0 0.0
    %3322 = vmatmul.mubr.f32.gmra.mrb[0].mxu0 %v397
    %v3323 = vpop.f32.mrb[0].mxu0
    %v3324 = vadd.f32 0.0, %v3323
    %v3325 = vpop.f32.mrb[0].mxu0
    %3326 = vmatprep.mubr.f32.mxu0 0.0
    %3327 = vmatmul.mubr.f32.gmra.mrb[0].mxu0 %v400
    %v3328 = vpop.f32.mrb[0].mxu0
    %v3329 = vadd.f32 0.0, %v3328
    %v3330 = vpop.f32.mrb[0].mxu0
    %3331 = vmatprep.mubr.f32.mxu0 0.0
    %3332 = vmatmul.mubr.f32.gmra.mrb[0].mxu0 %v403
    %v3333 = vpop.f32.mrb[0].mxu0
    %v3334 = vadd.f32 0.0, %v3333
    %v3335 = vpop.f32.mrb[0].mxu0
    %3336 = vmatprep.mubr.f32.mxu0 0.0
    %3337 = vmatmul.mubr.f32.gmra.mrb[0].mxu0 %v406
    %v3338 = vpop.f32.mrb[0].mxu0
    %v3339 = vadd.f32 0.0, %v3338
    %v3340 = vpop.f32.mrb[0].mxu0
    %3341 = vmatprep.mubr.f32.mxu0 0.0
    %3342 = vmatmul.mubr.f32.gmra.mrb[0].mxu0 %v409
    %v3343 = vpop.f32.mrb[0].mxu0
    %v3344 = vadd.f32 0.0, %v3343
    %v3345 = vpop.f32.mrb[0].mxu0
    %3346 = vmatprep.mubr.f32.mxu0 0.0
    %3347 = vmatmul.mubr.f32.gmra.mrb[0].mxu0 %v412
    %v3348 = vpop.f32.mrb[0].mxu0
    %v3349 = vadd.f32 0.0, %v3348
    %v3350 = vpop.f32.mrb[0].mxu0
    %3351 = vmatprep.mubr.f32.mxu0 0.0
    %3352 = vmatmul.mubr.f32.gmra.mrb[0].mxu0 %v415
    %v3353 = vpop.f32.mrb[0].mxu0
    %v3354 = vadd.f32 0.0, %v3353
    %v3355 = vpop.f32.mrb[0].mxu0
    %3356 = vmatprep.mubr.f32.mxu0 0.0
    %3357 = vmatmul.mubr.f32.gmra.mrb[0].mxu0 %v418
    %v3358 = vpop.f32.mrb[0].mxu0
    %v3359 = vadd.f32 0.0, %v3358
    %v3360 = vpop.f32.mrb[0].mxu0
    %3361 = vmatprep.mubr.f32.mxu0 0.0
    %3362 = vmatmul.mubr.f32.gmra.mrb[0].mxu0 %v421
    %v3363 = vpop.f32.mrb[0].mxu0
    %v3364 = vadd.f32 0.0, %v3363
    %v3365 = vpop.f32.mrb[0].mxu0
    %3366 = vmatprep.mubr.f32.mxu0 0.0
    %3367 = vmatmul.mubr.f32.gmra.mrb[0].mxu0 %v424
    %v3368 = vpop.f32.mrb[0].mxu0
    %v3369 = vadd.f32 0.0, %v3368
    %v3370 = vpop.f32.mrb[0].mxu0
    %3371 = vmatprep.mubr.f32.mxu0 0.0
    %3372 = vmatmul.mubr.f32.gmra.mrb[0].mxu0 %v427
    %v3373 = vpop.f32.mrb[0].mxu0
    %v3374 = vadd.f32 0.0, %v3373
    %v3375 = vpop.f32.mrb[0].mxu0
    %3376 = vmatprep.mubr.f32.mxu0 0.0
    %3377 = vmatmul.mubr.f32.gmra.mrb[0].mxu0 %v430
    %v3378 = vpop.f32.mrb[0].mxu0
    %v3379 = vadd.f32 0.0, %v3378
    %v3380 = vpop.f32.mrb[0].mxu0
    %3381 = vmatprep.mubr.f32.mxu0 0.0
    %3382 = vmatmul.mubr.f32.gmra.mrb[0].mxu0 %v433
    %v3383 = vpop.f32.mrb[0].mxu0
    %v3384 = vadd.f32 0.0, %v3383
    %v3385 = vpop.f32.mrb[0].mxu0
    %3386 = vmatprep.mubr.f32.mxu0 0.0
    %3387 = vmatmul.mubr.f32.gmra.mrb[0].mxu0 %v436
    %v3388 = vpop.f32.mrb[0].mxu0
    %v3389 = vadd.f32 0.0, %v3388
    %v3390 = vpop.f32.mrb[0].mxu0
    %3391 = vmatprep.mubr.f32.mxu0 0.0
    %3392 = vmatmul.mubr.f32.gmra.mrb[0].mxu0 %v439
    %v3393 = vpop.f32.mrb[0].mxu0
    %v3394 = vadd.f32 0.0, %v3393
    %v3395 = vpop.f32.mrb[0].mxu0
    %3396 = vmatprep.mubr.f32.mxu0 0.0
    %3397 = vmatmul.mubr.f32.gmra.mrb[0].mxu0 %v442
    %v3398 = vpop.f32.mrb[0].mxu0
    %v3399 = vadd.f32 0.0, %v3398
    %v3400 = vpop.f32.mrb[0].mxu0
    %3401 = vmatprep.mubr.f32.mxu0 0.0
    %3402 = vmatmul.mubr.f32.gmra.mrb[0].mxu0 %v445
    %v3403 = vpop.f32.mrb[0].mxu0
    %v3404 = vadd.f32 0.0, %v3403
    %v3405 = vpop.f32.mrb[0].mxu0
    %3406 = vmatprep.mubr.f32.mxu0 0.0
    %3407 = vmatmul.mubr.f32.gmra.mrb[0].mxu0 %v448
    %v3408 = vpop.f32.mrb[0].mxu0
    %v3409 = vadd.f32 0.0, %v3408
    %v3410 = vpop.f32.mrb[0].mxu0
    %3411 = vmatprep.mubr.f32.mxu0 0.0
    %3412 = vmatmul.mubr.f32.gmra.mrb[0].mxu0 %v451
    %v3413 = vpop.f32.mrb[0].mxu0
    %v3414 = vadd.f32 0.0, %v3413
    %v3415 = vpop.f32.mrb[0].mxu0
    %3416 = vmatprep.mubr.f32.mxu0 0.0
    %3417 = vmatmul.mubr.f32.gmra.mrb[0].mxu0 %v454
    %v3418 = vpop.f32.mrb[0].mxu0
    %v3419 = vadd.f32 0.0, %v3418
    %v3420 = vpop.f32.mrb[0].mxu0
    %3421 = vmatprep.mubr.f32.mxu0 0.0
    %3422 = vmatmul.mubr.f32.gmra.mrb[0].mxu0 %v457
    %v3423 = vpop.f32.mrb[0].mxu0
    %v3424 = vadd.f32 0.0, %v3423
    %v3425 = vpop.f32.mrb[0].mxu0
    %3426 = vmatprep.mubr.f32.mxu0 0.0
    %3427 = vmatmul.mubr.f32.gmra.mrb[0].mxu0 %v460
    %v3428 = vpop.f32.mrb[0].mxu0
    %v3429 = vadd.f32 0.0, %v3428
    %v3430 = vpop.f32.mrb[0].mxu0
    %3431 = vmatprep.mubr.f32.mxu0 0.0
    %3432 = vmatmul.mubr.f32.gmra.mrb[0].mxu0 %v463
    %v3433 = vpop.f32.mrb[0].mxu0
    %v3434 = vadd.f32 0.0, %v3433
    %v3435 = vpop.f32.mrb[0].mxu0
    %3436 = vmatprep.mubr.f32.mxu0 0.0
    %3437 = vmatmul.mubr.f32.gmra.mrb[0].mxu0 %v466
    %v3438 = vpop.f32.mrb[0].mxu0
    %v3439 = vadd.f32 0.0, %v3438
    %v3440 = vpop.f32.mrb[0].mxu0
    %3441 = vmatprep.mubr.f32.mxu0 0.0
    %3442 = vmatmul.mubr.f32.gmra.mrb[0].mxu0 %v469
    %v3443 = vpop.f32.mrb[0].mxu0
    %v3444 = vadd.f32 0.0, %v3443
    %v3445 = vpop.f32.mrb[0].mxu0
    %3446 = vmatprep.mubr.f32.mxu0 0.0
    %3447 = vmatmul.mubr.f32.gmra.mrb[0].mxu0 %v472
    %v3448 = vpop.f32.mrb[0].mxu0
    %v3449 = vadd.f32 0.0, %v3448
    %v3450 = vpop.f32.mrb[0].mxu0
    %3451 = vmatprep.mubr.f32.mxu0 0.0
    %3452 = vmatmul.mubr.f32.gmra.mrb[0].mxu0 %v475
    %v3453 = vpop.f32.mrb[0].mxu0
    %v3454 = vadd.f32 0.0, %v3453
    %v3455 = vpop.f32.mrb[0].mxu0
    %3456 = vmatprep.mubr.f32.mxu0 0.0
    %3457 = vmatmul.mubr.f32.gmra.mrb[0].mxu0 %v478
    %v3458 = vpop.f32.mrb[0].mxu0
    %v3459 = vadd.f32 0.0, %v3458
    %v3460 = vpop.f32.mrb[0].mxu0
    %3461 = vmatprep.mubr.f32.mxu0 0.0
    %3462 = vmatmul.mubr.f32.gmra.mrb[0].mxu0 %v481
    %v3463 = vpop.f32.mrb[0].mxu0
    %v3464 = vadd.f32 0.0, %v3463
    %v3465 = vpop.f32.mrb[0].mxu0
    %3466 = vmatprep.mubr.f32.mxu0 0.0
    %3467 = vmatmul.mubr.f32.gmra.mrb[0].mxu0 %v484
    %v3468 = vpop.f32.mrb[0].mxu0
    %v3469 = vadd.f32 0.0, %v3468
    %v3470 = vpop.f32.mrb[0].mxu0
    %3471 = vmatprep.mubr.f32.mxu0 0.0
    %3472 = vmatmul.mubr.f32.gmra.mrb[0].mxu0 %v487
    %v3473 = vpop.f32.mrb[0].mxu0
    %v3474 = vadd.f32 0.0, %v3473
    %v3475 = vpop.f32.mrb[0].mxu0
    %3476 = vmatprep.mubr.f32.mxu0 0.0
    %3477 = vmatmul.mubr.f32.gmra.mrb[0].mxu0 %v490
    %v3478 = vpop.f32.mrb[0].mxu0
    %v3479 = vadd.f32 0.0, %v3478
    %v3480 = vpop.f32.mrb[0].mxu0
    %3481 = vmatprep.mubr.f32.mxu0 0.0
    %3482 = vmatmul.mubr.f32.gmra.mrb[0].mxu0 %v493
    %v3483 = vpop.f32.mrb[0].mxu0
    %v3484 = vadd.f32 0.0, %v3483
    %v3485 = vpop.f32.mrb[0].mxu0
    %3486 = vmatprep.mubr.f32.mxu0 0.0
    %3487 = vmatmul.mubr.f32.gmra.mrb[0].mxu0 %v496
    %v3488 = vpop.f32.mrb[0].mxu0
    %v3489 = vadd.f32 0.0, %v3488
    %v3490 = vpop.f32.mrb[0].mxu0
    %3491 = vmatprep.mubr.f32.mxu0 0.0
    %3492 = vmatmul.mubr.f32.gmra.mrb[0].mxu0 %v499
    %v3493 = vpop.f32.mrb[0].mxu0
    %v3494 = vadd.f32 0.0, %v3493
    %v3495 = vpop.f32.mrb[0].mxu0
    %3496 = vmatprep.mubr.f32.mxu0 0.0
    %3497 = vmatmul.mubr.f32.gmra.mrb[0].mxu0 %v502
    %v3498 = vpop.f32.mrb[0].mxu0
    %v3499 = vadd.f32 0.0, %v3498
    %v3500 = vpop.f32.mrb[0].mxu0
    %3501 = vmatprep.mubr.f32.mxu0 0.0
    %3502 = vmatmul.mubr.f32.gmra.mrb[0].mxu0 %v505
    %v3503 = vpop.f32.mrb[0].mxu0
    %v3504 = vadd.f32 0.0, %v3503
    %v3505 = vpop.f32.mrb[0].mxu0
    %3506 = vmatprep.mubr.f32.mxu0 0.0
    %3507 = vmatmul.mubr.f32.gmra.mrb[0].mxu0 %v508
    %v3508 = vpop.f32.mrb[0].mxu0
    %v3509 = vadd.f32 0.0, %v3508
    %v3510 = vpop.f32.mrb[0].mxu0
    %3511 = vmatprep.mubr.f32.mxu0 0.0
    %3512 = vmatmul.mubr.f32.gmra.mrb[0].mxu0 %v511
    %v3513 = vpop.f32.mrb[0].mxu0
    %v3514 = vadd.f32 0.0, %v3513
    %v3515 = vpop.f32.mrb[0].mxu0
    %3516 = vmatprep.mubr.f32.mxu0 0.0
    %3517 = vmatmul.mubr.f32.gmra.mrb[0].mxu0 %v514
    %v3518 = vpop.f32.mrb[0].mxu0
    %v3519 = vadd.f32 0.0, %v3518
    %v3520 = vpop.f32.mrb[0].mxu0
    %3521 = vmatprep.mubr.f32.mxu0 0.0
    %3522 = vmatmul.mubr.f32.gmra.mrb[0].mxu0 %v517
    %v3523 = vpop.f32.mrb[0].mxu0
    %v3524 = vadd.f32 0.0, %v3523
    %v3525 = vpop.f32.mrb[0].mxu0
    %3526 = vmatprep.mubr.f32.mxu0 0.0
    %3527 = vmatmul.mubr.f32.gmra.mrb[0].mxu0 %v520
    %v3528 = vpop.f32.mrb[0].mxu0
    %v3529 = vadd.f32 0.0, %v3528
    %v3530 = vpop.f32.mrb[0].mxu0
    %3531 = vmatprep.mubr.f32.mxu0 0.0
    %3532 = vmatmul.mubr.f32.gmra.mrb[0].mxu0 %v523
    %v3533 = vpop.f32.mrb[0].mxu0
    %v3534 = vadd.f32 0.0, %v3533
    %v3535 = vpop.f32.mrb[0].mxu0
    %3536 = vmatprep.mubr.f32.mxu0 0.0
    %3537 = vmatmul.mubr.f32.gmra.mrb[0].mxu0 %v526
    %v3538 = vpop.f32.mrb[0].mxu0
    %v3539 = vadd.f32 0.0, %v3538
    %v3540 = vpop.f32.mrb[0].mxu0
    %3541 = vmatprep.mubr.f32.mxu0 0.0
    %3542 = vmatmul.mubr.f32.gmra.mrb[0].mxu0 %v529
    %v3543 = vpop.f32.mrb[0].mxu0
    %v3544 = vadd.f32 0.0, %v3543
    %v3545 = vpop.f32.mrb[0].mxu0
    %3546 = vmatprep.mubr.f32.mxu0 0.0
    %3547 = vmatmul.mubr.f32.gmra.mrb[0].mxu0 %v532
    %v3548 = vpop.f32.mrb[0].mxu0
    %v3549 = vadd.f32 0.0, %v3548
    %v3550 = vpop.f32.mrb[0].mxu0
    %3551 = vmatprep.mubr.f32.mxu0 0.0
    %3552 = vmatmul.mubr.f32.gmra.mrb[0].mxu0 %v535
    %v3553 = vpop.f32.mrb[0].mxu0
    %v3554 = vadd.f32 0.0, %v3553
    %v3555 = vpop.f32.mrb[0].mxu0
    %3556 = vmatprep.mubr.f32.mxu0 0.0
    %3557 = vmatmul.mubr.f32.gmra.mrb[0].mxu0 %v538
    %v3558 = vpop.f32.mrb[0].mxu0
    %v3559 = vadd.f32 0.0, %v3558
    %v3560 = vpop.f32.mrb[0].mxu0
    %3561 = vmatprep.mubr.f32.mxu0 0.0
    %3562 = vmatmul.mubr.f32.gmra.mrb[0].mxu0 %v541
    %v3563 = vpop.f32.mrb[0].mxu0
    %v3564 = vadd.f32 0.0, %v3563
    %v3565 = vpop.f32.mrb[0].mxu0
    %3566 = vmatprep.mubr.f32.mxu0 0.0
    %3567 = vmatmul.mubr.f32.gmra.mrb[0].mxu0 %v544
    %v3568 = vpop.f32.mrb[0].mxu0
    %v3569 = vadd.f32 0.0, %v3568
    %v3570 = vpop.f32.mrb[0].mxu0
    %3571 = vmatprep.mubr.f32.mxu0 0.0
    %3572 = vmatmul.mubr.f32.gmra.mrb[0].mxu0 %v547
    %v3573 = vpop.f32.mrb[0].mxu0
    %v3574 = vadd.f32 0.0, %v3573
    %v3575 = vpop.f32.mrb[0].mxu0
    %3576 = vmatprep.mubr.f32.mxu0 0.0
    %3577 = vmatmul.mubr.f32.gmra.mrb[0].mxu0 %v550
    %v3578 = vpop.f32.mrb[0].mxu0
    %v3579 = vadd.f32 0.0, %v3578
    %v3580 = vpop.f32.mrb[0].mxu0
    %3581 = vmatprep.mubr.f32.mxu0 0.0
    %3582 = vmatmul.mubr.f32.gmra.mrb[0].mxu0 %v553
    %v3583 = vpop.f32.mrb[0].mxu0
    %v3584 = vadd.f32 0.0, %v3583
    %v3585 = vpop.f32.mrb[0].mxu0
    %3586 = vmatprep.mubr.f32.mxu0 0.0
    %3587 = vmatmul.mubr.f32.gmra.mrb[0].mxu0 %v556
    %v3588 = vpop.f32.mrb[0].mxu0
    %v3589 = vadd.f32 0.0, %v3588
    %v3590 = vpop.f32.mrb[0].mxu0
    %3591 = vmatprep.mubr.f32.mxu0 0.0
    %3592 = vmatmul.mubr.f32.gmra.mrb[0].mxu0 %v559
    %v3593 = vpop.f32.mrb[0].mxu0
    %v3594 = vadd.f32 0.0, %v3593
    %v3595 = vpop.f32.mrb[0].mxu0
    %3596 = vmatprep.mubr.f32.mxu0 0.0
    %3597 = vmatmul.mubr.f32.gmra.mrb[0].mxu0 %v562
    %v3598 = vpop.f32.mrb[0].mxu0
    %v3599 = vadd.f32 0.0, %v3598
    %v3600 = vpop.f32.mrb[0].mxu0
    %3601 = vmatprep.mubr.f32.mxu0 0.0
    %3602 = vmatmul.mubr.f32.gmra.mrb[0].mxu0 %v565
    %v3603 = vpop.f32.mrb[0].mxu0
    %v3604 = vadd.f32 0.0, %v3603
    %v3605 = vpop.f32.mrb[0].mxu0
    %3606 = vmatprep.mubr.f32.mxu0 0.0
    %3607 = vmatmul.mubr.f32.gmra.mrb[0].mxu0 %v568
    %v3608 = vpop.f32.mrb[0].mxu0
    %v3609 = vadd.f32 0.0, %v3608
    %v3610 = vpop.f32.mrb[0].mxu0
    %3611 = vmatprep.mubr.f32.mxu0 0.0
    %3612 = vmatmul.mubr.f32.gmra.mrb[0].mxu0 %v571
    %v3613 = vpop.f32.mrb[0].mxu0
    %v3614 = vadd.f32 0.0, %v3613
    %v3615 = vpop.f32.mrb[0].mxu0
    %3616 = vmatprep.mubr.f32.mxu0 0.0
    %3617 = vmatmul.mubr.f32.gmra.mrb[0].mxu0 %v574
    %v3618 = vpop.f32.mrb[0].mxu0
    %v3619 = vadd.f32 0.0, %v3618
    %v3620 = vpop.f32.mrb[0].mxu0
    %3621 = vmatprep.mubr.f32.mxu0 0.0
    %3622 = vmatmul.mubr.f32.gmra.mrb[0].mxu0 %v577
    %v3623 = vpop.f32.mrb[0].mxu0
    %v3624 = vadd.f32 0.0, %v3623
    %v3625 = vpop.f32.mrb[0].mxu0
    %3626 = vmatprep.mubr.f32.mxu0 0.0
    %3627 = vmatmul.mubr.f32.gmra.mrb[0].mxu0 %v580
    %v3628 = vpop.f32.mrb[0].mxu0
    %v3629 = vadd.f32 0.0, %v3628
    %v3630 = vpop.f32.mrb[0].mxu0
    %3631 = vmatprep.mubr.f32.mxu0 0.0
    %3632 = vmatmul.mubr.f32.gmra.mrb[0].mxu0 %v583
    %v3633 = vpop.f32.mrb[0].mxu0
    %v3634 = vadd.f32 0.0, %v3633
    %v3635 = vpop.f32.mrb[0].mxu0
    %3636 = vmatprep.mubr.f32.mxu0 0.0
    %3637 = vmatmul.mubr.f32.gmra.mrb[0].mxu0 %v586
    %v3638 = vpop.f32.mrb[0].mxu0
    %v3639 = vadd.f32 0.0, %v3638
    %v3640 = vpop.f32.mrb[0].mxu0
    %3641 = vmatprep.mubr.f32.mxu0 0.0
    %3642 = vmatmul.mubr.f32.gmra.mrb[0].mxu0 %v589
    %v3643 = vpop.f32.mrb[0].mxu0
    %v3644 = vadd.f32 0.0, %v3643
    %v3645 = vpop.f32.mrb[0].mxu0
    %3646 = vmatprep.mubr.f32.mxu0 0.0
    %3647 = vmatmul.mubr.f32.gmra.mrb[0].mxu0 %v592
    %v3648 = vpop.f32.mrb[0].mxu0
    %v3649 = vadd.f32 0.0, %v3648
    %v3650 = vpop.f32.mrb[0].mxu0
    %3651 = vmatprep.mubr.f32.mxu0 0.0
    %3652 = vmatmul.mubr.f32.gmra.mrb[0].mxu0 %v595
    %v3653 = vpop.f32.mrb[0].mxu0
    %v3654 = vadd.f32 0.0, %v3653
    %v3655 = vpop.f32.mrb[0].mxu0
    %3656 = vmatprep.mubr.f32.mxu0 0.0
    %3657 = vmatmul.mubr.f32.gmra.mrb[0].mxu0 %v598
    %v3658 = vpop.f32.mrb[0].mxu0
    %v3659 = vadd.f32 0.0, %v3658
    %v3660 = vpop.f32.mrb[0].mxu0
    %3661 = vmatprep.mubr.f32.mxu0 0.0
    %3662 = vmatmul.mubr.f32.gmra.mrb[0].mxu0 %v601
    %v3663 = vpop.f32.mrb[0].mxu0
    %v3664 = vadd.f32 0.0, %v3663
    %v3665 = vpop.f32.mrb[0].mxu0
    %3666 = vmatprep.mubr.f32.mxu0 0.0
    %3667 = vmatmul.mubr.f32.gmra.mrb[0].mxu0 %v604
    %v3668 = vpop.f32.mrb[0].mxu0
    %v3669 = vadd.f32 0.0, %v3668
    %v3670 = vpop.f32.mrb[0].mxu0
    %3671 = vmatprep.mubr.f32.mxu0 0.0
    %3672 = vmatmul.mubr.f32.gmra.mrb[0].mxu0 %v607
    %v3673 = vpop.f32.mrb[0].mxu0
    %v3674 = vadd.f32 0.0, %v3673
    %v3675 = vpop.f32.mrb[0].mxu0
    %3676 = vmatprep.mubr.f32.mxu0 0.0
    %3677 = vmatmul.mubr.f32.gmra.mrb[0].mxu0 %v610
    %v3678 = vpop.f32.mrb[0].mxu0
    %v3679 = vadd.f32 0.0, %v3678
    %v3680 = vpop.f32.mrb[0].mxu0
    %3681 = vmatprep.mubr.f32.mxu0 0.0
    %3682 = vmatmul.mubr.f32.gmra.mrb[0].mxu0 %v613
    %v3683 = vpop.f32.mrb[0].mxu0
    %v3684 = vadd.f32 0.0, %v3683
    %v3685 = vpop.f32.mrb[0].mxu0
    %3686 = vmatprep.mubr.f32.mxu0 0.0
    %3687 = vmatmul.mubr.f32.gmra.mrb[0].mxu0 %v616
    %v3688 = vpop.f32.mrb[0].mxu0
    %v3689 = vadd.f32 0.0, %v3688
    %v3690 = vpop.f32.mrb[0].mxu0
    %3691 = vmatprep.mubr.f32.mxu0 0.0
    %3692 = vmatmul.mubr.f32.gmra.mrb[0].mxu0 %v619
    %v3693 = vpop.f32.mrb[0].mxu0
    %v3694 = vadd.f32 0.0, %v3693
    %v3695 = vpop.f32.mrb[0].mxu0
    %3696 = vmatprep.mubr.f32.mxu0 0.0
    %3697 = vmatmul.mubr.f32.gmra.mrb[0].mxu0 %v622
    %v3698 = vpop.f32.mrb[0].mxu0
    %v3699 = vadd.f32 0.0, %v3698
    %v3700 = vpop.f32.mrb[0].mxu0
    %3701 = vmatprep.mubr.f32.mxu0 0.0
    %3702 = vmatmul.mubr.f32.gmra.mrb[0].mxu0 %v625
    %v3703 = vpop.f32.mrb[0].mxu0
    %v3704 = vadd.f32 0.0, %v3703
    %v3705 = vpop.f32.mrb[0].mxu0
    %3706 = vmatprep.mubr.f32.mxu0 0.0
    %3707 = vmatmul.mubr.f32.gmra.mrb[0].mxu0 %v628
    %v3708 = vpop.f32.mrb[0].mxu0
    %v3709 = vadd.f32 0.0, %v3708
    %v3710 = vpop.f32.mrb[0].mxu0
    %3711 = vmatprep.mubr.f32.mxu0 0.0
    %3712 = vmatmul.mubr.f32.gmra.mrb[0].mxu0 %v631
    %v3713 = vpop.f32.mrb[0].mxu0
    %v3714 = vadd.f32 0.0, %v3713
    %v3715 = vpop.f32.mrb[0].mxu0
    %3716 = vmatprep.mubr.f32.mxu0 0.0
    %3717 = vmatmul.mubr.f32.gmra.mrb[0].mxu0 %v634
    %v3718 = vpop.f32.mrb[0].mxu0
    %v3719 = vadd.f32 0.0, %v3718
    %v3720 = vpop.f32.mrb[0].mxu0
    %3721 = vmatprep.mubr.f32.mxu0 0.0
    %3722 = vmatmul.mubr.f32.gmra.mrb[0].mxu0 %v637
    %v3723 = vpop.f32.mrb[0].mxu0
    %v3724 = vadd.f32 0.0, %v3723
    %v3725 = vpop.f32.mrb[0].mxu0
    %3726 = vmatprep.mubr.f32.mxu0 0.0
    %3727 = vmatmul.mubr.f32.gmra.mrb[0].mxu0 %v640
    %v3728 = vpop.f32.mrb[0].mxu0
    %v3729 = vadd.f32 0.0, %v3728
    %v3730 = vpop.f32.mrb[0].mxu0
    %3731 = vmatprep.mubr.f32.mxu0 0.0
    %3732 = vmatmul.mubr.f32.gmra.mrb[0].mxu0 %v643
    %v3733 = vpop.f32.mrb[0].mxu0
    %v3734 = vadd.f32 0.0, %v3733
    %v3735 = vpop.f32.mrb[0].mxu0
    %3736 = vmatprep.mubr.f32.mxu0 0.0
    %3737 = vmatmul.mubr.f32.gmra.mrb[0].mxu0 %v646
    %v3738 = vpop.f32.mrb[0].mxu0
    %v3739 = vadd.f32 0.0, %v3738
    %v3740 = vpop.f32.mrb[0].mxu0
    %3741 = vmatprep.mubr.f32.mxu0 0.0
    %3742 = vmatmul.mubr.f32.gmra.mrb[0].mxu0 %v649
    %v3743 = vpop.f32.mrb[0].mxu0
    %v3744 = vadd.f32 0.0, %v3743
    %v3745 = vpop.f32.mrb[0].mxu0
    %3746 = vmatprep.mubr.f32.mxu0 0.0
    %3747 = vmatmul.mubr.f32.gmra.mrb[0].mxu0 %v652
    %v3748 = vpop.f32.mrb[0].mxu0
    %v3749 = vadd.f32 0.0, %v3748
    %v3750 = vpop.f32.mrb[0].mxu0
    %3751 = vmatprep.mubr.f32.mxu0 0.0
    %3752 = vmatmul.mubr.f32.gmra.mrb[0].mxu0 %v655
    %v3753 = vpop.f32.mrb[0].mxu0
    %v3754 = vadd.f32 0.0, %v3753
    %v3755 = vpop.f32.mrb[0].mxu0
    %3756 = vmatprep.mubr.f32.mxu0 0.0
    %3757 = vmatmul.mubr.f32.gmra.mrb[0].mxu0 %v658
    %v3758 = vpop.f32.mrb[0].mxu0
    %v3759 = vadd.f32 0.0, %v3758
    %v3760 = vpop.f32.mrb[0].mxu0
    %3761 = vmatprep.mubr.f32.mxu0 0.0
    %3762 = vmatmul.mubr.f32.gmra.mrb[0].mxu0 %v661
    %v3763 = vpop.f32.mrb[0].mxu0
    %v3764 = vadd.f32 0.0, %v3763
    %v3765 = vpop.f32.mrb[0].mxu0
    %3766 = vmatprep.mubr.f32.mxu0 0.0
    %3767 = vmatmul.mubr.f32.gmra.mrb[0].mxu0 %v664
    %v3768 = vpop.f32.mrb[0].mxu0
    %v3769 = vadd.f32 0.0, %v3768
    %v3770 = vpop.f32.mrb[0].mxu0
    %3771 = vmatprep.mubr.f32.mxu0 0.0
    %3772 = vmatmul.mubr.f32.gmra.mrb[0].mxu0 %v667
    %v3773 = vpop.f32.mrb[0].mxu0
    %v3774 = vadd.f32 0.0, %v3773
    %v3775 = vpop.f32.mrb[0].mxu0
    %3776 = vmatprep.mubr.f32.mxu0 0.0
    %3777 = vmatmul.mubr.f32.gmra.mrb[0].mxu0 %v670
    %v3778 = vpop.f32.mrb[0].mxu0
    %v3779 = vadd.f32 0.0, %v3778
    %v3780 = vpop.f32.mrb[0].mxu0
    %3781 = vmatprep.mubr.f32.mxu0 0.0
    %3782 = vmatmul.mubr.f32.gmra.mrb[0].mxu0 %v673
    %v3783 = vpop.f32.mrb[0].mxu0
    %v3784 = vadd.f32 0.0, %v3783
    %v3785 = vpop.f32.mrb[0].mxu0
    %3786 = vmatprep.mubr.f32.mxu0 0.0
    %3787 = vmatmul.mubr.f32.gmra.mrb[0].mxu0 %v676
    %v3788 = vpop.f32.mrb[0].mxu0
    %v3789 = vadd.f32 0.0, %v3788
    %v3790 = vpop.f32.mrb[0].mxu0
    %3791 = vmatprep.mubr.f32.mxu0 0.0
    %3792 = vmatmul.mubr.f32.gmra.mrb[0].mxu0 %v679
    %v3793 = vpop.f32.mrb[0].mxu0
    %v3794 = vadd.f32 0.0, %v3793
    %v3795 = vpop.f32.mrb[0].mxu0
    %3796 = vmatprep.mubr.f32.mxu0 0.0
    %3797 = vmatmul.mubr.f32.gmra.mrb[0].mxu0 %v682
    %v3798 = vpop.f32.mrb[0].mxu0
    %v3799 = vadd.f32 0.0, %v3798
    %v3800 = vpop.f32.mrb[0].mxu0
    %3801 = vmatprep.mubr.f32.mxu0 0.0
    %3802 = vmatmul.mubr.f32.gmra.mrb[0].mxu0 %v685
    %v3803 = vpop.f32.mrb[0].mxu0
    %v3804 = vadd.f32 0.0, %v3803
    %v3805 = vpop.f32.mrb[0].mxu0
    %3806 = vmatprep.mubr.f32.mxu0 0.0
    %3807 = vmatmul.mubr.f32.gmra.mrb[0].mxu0 %v688
    %v3808 = vpop.f32.mrb[0].mxu0
    %v3809 = vadd.f32 0.0, %v3808
    %v3810 = vpop.f32.mrb[0].mxu0
    %3811 = vmatprep.mubr.f32.mxu0 0.0
    %3812 = vmatmul.mubr.f32.gmra.mrb[0].mxu0 %v691
    %v3813 = vpop.f32.mrb[0].mxu0
    %v3814 = vadd.f32 0.0, %v3813
    %v3815 = vpop.f32.mrb[0].mxu0
    %3816 = vmatprep.mubr.f32.mxu0 0.0
    %3817 = vmatmul.mubr.f32.gmra.mrb[0].mxu0 %v694
    %v3818 = vpop.f32.mrb[0].mxu0
    %v3819 = vadd.f32 0.0, %v3818
    %v3820 = vpop.f32.mrb[0].mxu0
    %3821 = vmatprep.mubr.f32.mxu0 0.0
    %3822 = vmatmul.mubr.f32.gmra.mrb[0].mxu0 %v697
    %v3823 = vpop.f32.mrb[0].mxu0
    %v3824 = vadd.f32 0.0, %v3823
    %v3825 = vpop.f32.mrb[0].mxu0
    %3826 = vmatprep.mubr.f32.mxu0 0.0
    %3827 = vmatmul.mubr.f32.gmra.mrb[0].mxu0 %v700
    %v3828 = vpop.f32.mrb[0].mxu0
    %v3829 = vadd.f32 0.0, %v3828
    %v3830 = vpop.f32.mrb[0].mxu0
    %3831 = vmatprep.mubr.f32.mxu0 0.0
    %3832 = vmatmul.mubr.f32.gmra.mrb[0].mxu0 %v703
    %v3833 = vpop.f32.mrb[0].mxu0
    %v3834 = vadd.f32 0.0, %v3833
    %v3835 = vpop.f32.mrb[0].mxu0
    %3836 = vmatprep.mubr.f32.mxu0 0.0
    %3837 = vmatmul.mubr.f32.gmra.mrb[0].mxu0 %v706
    %v3838 = vpop.f32.mrb[0].mxu0
    %v3839 = vadd.f32 0.0, %v3838
    %v3840 = vpop.f32.mrb[0].mxu0
    %3841 = vmatprep.mubr.f32.mxu0 0.0
    %3842 = vmatmul.mubr.f32.gmra.mrb[0].mxu0 %v709
    %v3843 = vpop.f32.mrb[0].mxu0
    %v3844 = vadd.f32 0.0, %v3843
    %v3845 = vpop.f32.mrb[0].mxu0
    %3846 = vmatprep.mubr.f32.mxu0 0.0
    %3847 = vmatmul.mubr.f32.gmra.mrb[0].mxu0 %v712
    %v3848 = vpop.f32.mrb[0].mxu0
    %v3849 = vadd.f32 0.0, %v3848
    %v3850 = vpop.f32.mrb[0].mxu0
    %3851 = vmatprep.mubr.f32.mxu0 0.0
    %3852 = vmatmul.mubr.f32.gmra.mrb[0].mxu0 %v715
    %v3853 = vpop.f32.mrb[0].mxu0
    %v3854 = vadd.f32 0.0, %v3853
    %v3855 = vpop.f32.mrb[0].mxu0
    %3856 = vdwg.mxu0
    %3857 = vmatprep.subr.mxu0 0.0
    %3858 = vmatpush1.msra.mxu0 %v328
    %3859 = vmatprep.subr.mxu0 0.0
    %3860 = vmatpush1.msra.mxu0 %v329
    %3861 = vmatprep.subr.mxu0 0.0
    %3862 = vmatpush1.msra.mxu0 %v330
    %3863 = vmatprep.subr.mxu0 0.0
    %3864 = vmatpush1.msra.mxu0 %v331
    %3865 = vmatprep.subr.mxu0 0.0
    %3866 = vmatpush1.msra.mxu0 0.0
    %3867 = vmatprep.subr.mxu0 0.0
    %3868 = vmatpush1.msra.mxu0 0.0
    %3869 = vmatprep.subr.mxu0 0.0
    %3870 = vmatpush1.msra.mxu0 0.0
    %3871 = vmatprep.subr.mxu0 0.0
    %3872 = vmatpush1.msra.mxu0 0.0
    %3873 = vmatprep.subr.mxu0 0.0
    %3874 = vmatpush1.msra.mxu0 0.0
    %3875 = vmatprep.subr.mxu0 0.0
    %3876 = vmatpush1.msra.mxu0 0.0
    %3877 = vmatprep.subr.mxu0 0.0
    %3878 = vmatpush1.msra.mxu0 0.0
    %3879 = vmatprep.subr.mxu0 0.0
    %3880 = vmatpush1.msra.mxu0 0.0
    %3881 = vmatprep.subr.mxu0 0.0
    %3882 = vmatpush1.msra.mxu0 0.0
    %3883 = vmatprep.subr.mxu0 0.0
    %3884 = vmatpush1.msra.mxu0 0.0
    %3885 = vmatprep.subr.mxu0 0.0
    %3886 = vmatpush1.msra.mxu0 0.0
    %3887 = vmatprep.subr.mxu0 0.0
    %3888 = vmatpush1.msra.mxu0 0.0
    %3889 = vmatprep.subr.mxu0 0.0
    %3890 = vmatpush1.msra.mxu0 0.0
    %3891 = vmatprep.subr.mxu0 0.0
    %3892 = vmatpush1.msra.mxu0 0.0
    %3893 = vmatprep.subr.mxu0 0.0
    %3894 = vmatpush1.msra.mxu0 0.0
    %3895 = vmatprep.subr.mxu0 0.0
    %3896 = vmatpush1.msra.mxu0 0.0
    %3897 = vmatprep.subr.mxu0 0.0
    %3898 = vmatpush1.msra.mxu0 0.0
    %3899 = vmatprep.subr.mxu0 0.0
    %3900 = vmatpush1.msra.mxu0 0.0
    %3901 = vmatprep.subr.mxu0 0.0
    %3902 = vmatpush1.msra.mxu0 0.0
    %3903 = vmatprep.subr.mxu0 0.0
    %3904 = vmatpush1.msra.mxu0 0.0
    %3905 = vmatprep.subr.mxu0 0.0
    %3906 = vmatpush1.msra.mxu0 0.0
    %3907 = vmatprep.subr.mxu0 0.0
    %3908 = vmatpush1.msra.mxu0 0.0
    %3909 = vmatprep.subr.mxu0 0.0
    %3910 = vmatpush1.msra.mxu0 0.0
    %3911 = vmatprep.subr.mxu0 0.0
    %3912 = vmatpush1.msra.mxu0 0.0
    %3913 = vmatprep.subr.mxu0 0.0
    %3914 = vmatpush1.msra.mxu0 0.0
    %3915 = vmatprep.subr.mxu0 0.0
    %3916 = vmatpush1.msra.mxu0 0.0
    %3917 = vmatprep.subr.mxu0 0.0
    %3918 = vmatpush1.msra.mxu0 0.0
    %3919 = vmatprep.subr.mxu0 0.0
    %3920 = vmatpush1.msra.mxu0 0.0
    %3921 = vmatprep.mubr.f32.mxu0 0.0
    %3922 = vmatmul.mubr.f32.gmra.mrb[0].mxu0 %v1423
    %v3923 = vpop.f32.mrb[0].mxu0
    %v3924 = vadd.f32 0.0, %v3923
    %v3925 = vpop.f32.mrb[0].mxu0
    %3926 = vmatprep.mubr.f32.mxu0 0.0
    %3927 = vmatmul.mubr.f32.gmra.mrb[0].mxu0 %v1426
    %v3928 = vpop.f32.mrb[0].mxu0
    %v3929 = vadd.f32 0.0, %v3928
    %v3930 = vpop.f32.mrb[0].mxu0
    %3931 = vmatprep.mubr.f32.mxu0 0.0
    %3932 = vmatmul.mubr.f32.gmra.mrb[0].mxu0 %v1429
    %v3933 = vpop.f32.mrb[0].mxu0
    %v3934 = vadd.f32 0.0, %v3933
    %v3935 = vpop.f32.mrb[0].mxu0
    %3936 = vmatprep.mubr.f32.mxu0 0.0
    %3937 = vmatmul.mubr.f32.gmra.mrb[0].mxu0 %v1432
    %v3938 = vpop.f32.mrb[0].mxu0
    %v3939 = vadd.f32 0.0, %v3938
    %v3940 = vpop.f32.mrb[0].mxu0
    %3941 = vmatprep.mubr.f32.mxu0 0.0
    %3942 = vmatmul.mubr.f32.gmra.mrb[0].mxu0 %v1435
    %v3943 = vpop.f32.mrb[0].mxu0
    %v3944 = vadd.f32 0.0, %v3943
    %v3945 = vpop.f32.mrb[0].mxu0
    %3946 = vmatprep.mubr.f32.mxu0 0.0
    %3947 = vmatmul.mubr.f32.gmra.mrb[0].mxu0 %v1438
    %v3948 = vpop.f32.mrb[0].mxu0
    %v3949 = vadd.f32 0.0, %v3948
    %v3950 = vpop.f32.mrb[0].mxu0
    %3951 = vmatprep.mubr.f32.mxu0 0.0
    %3952 = vmatmul.mubr.f32.gmra.mrb[0].mxu0 %v1441
    %v3953 = vpop.f32.mrb[0].mxu0
    %v3954 = vadd.f32 0.0, %v3953
    %v3955 = vpop.f32.mrb[0].mxu0
    %3956 = vmatprep.mubr.f32.mxu0 0.0
    %3957 = vmatmul.mubr.f32.gmra.mrb[0].mxu0 %v1444
    %v3958 = vpop.f32.mrb[0].mxu0
    %v3959 = vadd.f32 0.0, %v3958
    %v3960 = vpop.f32.mrb[0].mxu0
    %3961 = vmatprep.mubr.f32.mxu0 0.0
    %3962 = vmatmul.mubr.f32.gmra.mrb[0].mxu0 %v1447
    %v3963 = vpop.f32.mrb[0].mxu0
    %v3964 = vadd.f32 0.0, %v3963
    %v3965 = vpop.f32.mrb[0].mxu0
    %3966 = vmatprep.mubr.f32.mxu0 0.0
    %3967 = vmatmul.mubr.f32.gmra.mrb[0].mxu0 %v1450
    %v3968 = vpop.f32.mrb[0].mxu0
    %v3969 = vadd.f32 0.0, %v3968
    %v3970 = vpop.f32.mrb[0].mxu0
    %3971 = vmatprep.mubr.f32.mxu0 0.0
    %3972 = vmatmul.mubr.f32.gmra.mrb[0].mxu0 %v1453
    %v3973 = vpop.f32.mrb[0].mxu0
    %v3974 = vadd.f32 0.0, %v3973
    %v3975 = vpop.f32.mrb[0].mxu0
    %3976 = vmatprep.mubr.f32.mxu0 0.0
    %3977 = vmatmul.mubr.f32.gmra.mrb[0].mxu0 %v1456
    %v3978 = vpop.f32.mrb[0].mxu0
    %v3979 = vadd.f32 0.0, %v3978
    %v3980 = vpop.f32.mrb[0].mxu0
    %3981 = vmatprep.mubr.f32.mxu0 0.0
    %3982 = vmatmul.mubr.f32.gmra.mrb[0].mxu0 %v1459
    %v3983 = vpop.f32.mrb[0].mxu0
    %v3984 = vadd.f32 0.0, %v3983
    %v3985 = vpop.f32.mrb[0].mxu0
    %3986 = vmatprep.mubr.f32.mxu0 0.0
    %3987 = vmatmul.mubr.f32.gmra.mrb[0].mxu0 %v1462
    %v3988 = vpop.f32.mrb[0].mxu0
    %v3989 = vadd.f32 0.0, %v3988
    %v3990 = vpop.f32.mrb[0].mxu0
    %3991 = vmatprep.mubr.f32.mxu0 0.0
    %3992 = vmatmul.mubr.f32.gmra.mrb[0].mxu0 %v1465
    %v3993 = vpop.f32.mrb[0].mxu0
    %v3994 = vadd.f32 0.0, %v3993
    %v3995 = vpop.f32.mrb[0].mxu0
    %3996 = vmatprep.mubr.f32.mxu0 0.0
    %3997 = vmatmul.mubr.f32.gmra.mrb[0].mxu0 %v1468
    %v3998 = vpop.f32.mrb[0].mxu0
    %v3999 = vadd.f32 0.0, %v3998
    %v4000 = vpop.f32.mrb[0].mxu0
    %4001 = vmatprep.mubr.f32.mxu0 0.0
    %4002 = vmatmul.mubr.f32.gmra.mrb[0].mxu0 %v1471
    %v4003 = vpop.f32.mrb[0].mxu0
    %v4004 = vadd.f32 0.0, %v4003
    %v4005 = vpop.f32.mrb[0].mxu0
    %4006 = vmatprep.mubr.f32.mxu0 0.0
    %4007 = vmatmul.mubr.f32.gmra.mrb[0].mxu0 %v1474
    %v4008 = vpop.f32.mrb[0].mxu0
    %v4009 = vadd.f32 0.0, %v4008
    %v4010 = vpop.f32.mrb[0].mxu0
    %4011 = vmatprep.mubr.f32.mxu0 0.0
    %4012 = vmatmul.mubr.f32.gmra.mrb[0].mxu0 %v1477
    %v4013 = vpop.f32.mrb[0].mxu0
    %v4014 = vadd.f32 0.0, %v4013
    %v4015 = vpop.f32.mrb[0].mxu0
    %4016 = vmatprep.mubr.f32.mxu0 0.0
    %4017 = vmatmul.mubr.f32.gmra.mrb[0].mxu0 %v1480
    %v4018 = vpop.f32.mrb[0].mxu0
    %v4019 = vadd.f32 0.0, %v4018
    %v4020 = vpop.f32.mrb[0].mxu0
    %4021 = vmatprep.mubr.f32.mxu0 0.0
    %4022 = vmatmul.mubr.f32.gmra.mrb[0].mxu0 %v1483
    %v4023 = vpop.f32.mrb[0].mxu0
    %v4024 = vadd.f32 0.0, %v4023
    %v4025 = vpop.f32.mrb[0].mxu0
    %4026 = vmatprep.mubr.f32.mxu0 0.0
    %4027 = vmatmul.mubr.f32.gmra.mrb[0].mxu0 %v1486
    %v4028 = vpop.f32.mrb[0].mxu0
    %v4029 = vadd.f32 0.0, %v4028
    %v4030 = vpop.f32.mrb[0].mxu0
    %4031 = vmatprep.mubr.f32.mxu0 0.0
    %4032 = vmatmul.mubr.f32.gmra.mrb[0].mxu0 %v1489
    %v4033 = vpop.f32.mrb[0].mxu0
    %v4034 = vadd.f32 0.0, %v4033
    %v4035 = vpop.f32.mrb[0].mxu0
    %4036 = vmatprep.mubr.f32.mxu0 0.0
    %4037 = vmatmul.mubr.f32.gmra.mrb[0].mxu0 %v1492
    %v4038 = vpop.f32.mrb[0].mxu0
    %v4039 = vadd.f32 0.0, %v4038
    %v4040 = vpop.f32.mrb[0].mxu0
    %4041 = vmatprep.mubr.f32.mxu0 0.0
    %4042 = vmatmul.mubr.f32.gmra.mrb[0].mxu0 %v1495
    %v4043 = vpop.f32.mrb[0].mxu0
    %v4044 = vadd.f32 0.0, %v4043
    %v4045 = vpop.f32.mrb[0].mxu0
    %4046 = vmatprep.mubr.f32.mxu0 0.0
    %4047 = vmatmul.mubr.f32.gmra.mrb[0].mxu0 %v1498
    %v4048 = vpop.f32.mrb[0].mxu0
    %v4049 = vadd.f32 0.0, %v4048
    %v4050 = vpop.f32.mrb[0].mxu0
    %4051 = vmatprep.mubr.f32.mxu0 0.0
    %4052 = vmatmul.mubr.f32.gmra.mrb[0].mxu0 %v1501
    %v4053 = vpop.f32.mrb[0].mxu0
    %v4054 = vadd.f32 0.0, %v4053
    %v4055 = vpop.f32.mrb[0].mxu0
    %4056 = vmatprep.mubr.f32.mxu0 0.0
    %4057 = vmatmul.mubr.f32.gmra.mrb[0].mxu0 %v1504
    %v4058 = vpop.f32.mrb[0].mxu0
    %v4059 = vadd.f32 0.0, %v4058
    %v4060 = vpop.f32.mrb[0].mxu0
    %4061 = vmatprep.mubr.f32.mxu0 0.0
    %4062 = vmatmul.mubr.f32.gmra.mrb[0].mxu0 %v1507
    %v4063 = vpop.f32.mrb[0].mxu0
    %v4064 = vadd.f32 0.0, %v4063
    %v4065 = vpop.f32.mrb[0].mxu0
    %4066 = vmatprep.mubr.f32.mxu0 0.0
    %4067 = vmatmul.mubr.f32.gmra.mrb[0].mxu0 %v1510
    %v4068 = vpop.f32.mrb[0].mxu0
    %v4069 = vadd.f32 0.0, %v4068
    %v4070 = vpop.f32.mrb[0].mxu0
    %4071 = vmatprep.mubr.f32.mxu0 0.0
    %4072 = vmatmul.mubr.f32.gmra.mrb[0].mxu0 %v1513
    %v4073 = vpop.f32.mrb[0].mxu0
    %v4074 = vadd.f32 0.0, %v4073
    %v4075 = vpop.f32.mrb[0].mxu0
    %4076 = vmatprep.mubr.f32.mxu0 0.0
    %4077 = vmatmul.mubr.f32.gmra.mrb[0].mxu0 %v1516
    %v4078 = vpop.f32.mrb[0].mxu0
    %v4079 = vadd.f32 0.0, %v4078
    %v4080 = vpop.f32.mrb[0].mxu0
    %4081 = vmatprep.mubr.f32.mxu0 0.0
    %4082 = vmatmul.mubr.f32.gmra.mrb[0].mxu0 %v1519
    %v4083 = vpop.f32.mrb[0].mxu0
    %v4084 = vadd.f32 0.0, %v4083
    %v4085 = vpop.f32.mrb[0].mxu0
    %4086 = vmatprep.mubr.f32.mxu0 0.0
    %4087 = vmatmul.mubr.f32.gmra.mrb[0].mxu0 %v1522
    %v4088 = vpop.f32.mrb[0].mxu0
    %v4089 = vadd.f32 0.0, %v4088
    %v4090 = vpop.f32.mrb[0].mxu0
    %4091 = vmatprep.mubr.f32.mxu0 0.0
    %4092 = vmatmul.mubr.f32.gmra.mrb[0].mxu0 %v1525
    %v4093 = vpop.f32.mrb[0].mxu0
    %v4094 = vadd.f32 0.0, %v4093
    %v4095 = vpop.f32.mrb[0].mxu0
    %4096 = vmatprep.mubr.f32.mxu0 0.0
    %4097 = vmatmul.mubr.f32.gmra.mrb[0].mxu0 %v1528
    %v4098 = vpop.f32.mrb[0].mxu0
    %v4099 = vadd.f32 0.0, %v4098
    %v4100 = vpop.f32.mrb[0].mxu0
    %4101 = vmatprep.mubr.f32.mxu0 0.0
    %4102 = vmatmul.mubr.f32.gmra.mrb[0].mxu0 %v1531
    %v4103 = vpop.f32.mrb[0].mxu0
    %v4104 = vadd.f32 0.0, %v4103
    %v4105 = vpop.f32.mrb[0].mxu0
    %4106 = vmatprep.mubr.f32.mxu0 0.0
    %4107 = vmatmul.mubr.f32.gmra.mrb[0].mxu0 %v1534
    %v4108 = vpop.f32.mrb[0].mxu0
    %v4109 = vadd.f32 0.0, %v4108
    %v4110 = vpop.f32.mrb[0].mxu0
    %4111 = vmatprep.mubr.f32.mxu0 0.0
    %4112 = vmatmul.mubr.f32.gmra.mrb[0].mxu0 %v1537
    %v4113 = vpop.f32.mrb[0].mxu0
    %v4114 = vadd.f32 0.0, %v4113
    %v4115 = vpop.f32.mrb[0].mxu0
    %4116 = vmatprep.mubr.f32.mxu0 0.0
    %4117 = vmatmul.mubr.f32.gmra.mrb[0].mxu0 %v1540
    %v4118 = vpop.f32.mrb[0].mxu0
    %v4119 = vadd.f32 0.0, %v4118
    %v4120 = vpop.f32.mrb[0].mxu0
    %4121 = vmatprep.mubr.f32.mxu0 0.0
    %4122 = vmatmul.mubr.f32.gmra.mrb[0].mxu0 %v1543
    %v4123 = vpop.f32.mrb[0].mxu0
    %v4124 = vadd.f32 0.0, %v4123
    %v4125 = vpop.f32.mrb[0].mxu0
    %4126 = vmatprep.mubr.f32.mxu0 0.0
    %4127 = vmatmul.mubr.f32.gmra.mrb[0].mxu0 %v1546
    %v4128 = vpop.f32.mrb[0].mxu0
    %v4129 = vadd.f32 0.0, %v4128
    %v4130 = vpop.f32.mrb[0].mxu0
    %4131 = vmatprep.mubr.f32.mxu0 0.0
    %4132 = vmatmul.mubr.f32.gmra.mrb[0].mxu0 %v1549
    %v4133 = vpop.f32.mrb[0].mxu0
    %v4134 = vadd.f32 0.0, %v4133
    %v4135 = vpop.f32.mrb[0].mxu0
    %4136 = vmatprep.mubr.f32.mxu0 0.0
    %4137 = vmatmul.mubr.f32.gmra.mrb[0].mxu0 %v1552
    %v4138 = vpop.f32.mrb[0].mxu0
    %v4139 = vadd.f32 0.0, %v4138
    %v4140 = vpop.f32.mrb[0].mxu0
    %4141 = vmatprep.mubr.f32.mxu0 0.0
    %4142 = vmatmul.mubr.f32.gmra.mrb[0].mxu0 %v1555
    %v4143 = vpop.f32.mrb[0].mxu0
    %v4144 = vadd.f32 0.0, %v4143
    %v4145 = vpop.f32.mrb[0].mxu0
    %4146 = vmatprep.mubr.f32.mxu0 0.0
    %4147 = vmatmul.mubr.f32.gmra.mrb[0].mxu0 %v1558
    %v4148 = vpop.f32.mrb[0].mxu0
    %v4149 = vadd.f32 0.0, %v4148
    %v4150 = vpop.f32.mrb[0].mxu0
    %4151 = vmatprep.mubr.f32.mxu0 0.0
    %4152 = vmatmul.mubr.f32.gmra.mrb[0].mxu0 %v1561
    %v4153 = vpop.f32.mrb[0].mxu0
    %v4154 = vadd.f32 0.0, %v4153
    %v4155 = vpop.f32.mrb[0].mxu0
    %4156 = vmatprep.mubr.f32.mxu0 0.0
    %4157 = vmatmul.mubr.f32.gmra.mrb[0].mxu0 %v1564
    %v4158 = vpop.f32.mrb[0].mxu0
    %v4159 = vadd.f32 0.0, %v4158
    %v4160 = vpop.f32.mrb[0].mxu0
    %4161 = vmatprep.mubr.f32.mxu0 0.0
    %4162 = vmatmul.mubr.f32.gmra.mrb[0].mxu0 %v1567
    %v4163 = vpop.f32.mrb[0].mxu0
    %v4164 = vadd.f32 0.0, %v4163
    %v4165 = vpop.f32.mrb[0].mxu0
    %4166 = vmatprep.mubr.f32.mxu0 0.0
    %4167 = vmatmul.mubr.f32.gmra.mrb[0].mxu0 %v1570
    %v4168 = vpop.f32.mrb[0].mxu0
    %v4169 = vadd.f32 0.0, %v4168
    %v4170 = vpop.f32.mrb[0].mxu0
    %4171 = vmatprep.mubr.f32.mxu0 0.0
    %4172 = vmatmul.mubr.f32.gmra.mrb[0].mxu0 %v1573
    %v4173 = vpop.f32.mrb[0].mxu0
    %v4174 = vadd.f32 0.0, %v4173
    %v4175 = vpop.f32.mrb[0].mxu0
    %4176 = vmatprep.mubr.f32.mxu0 0.0
    %4177 = vmatmul.mubr.f32.gmra.mrb[0].mxu0 %v1576
    %v4178 = vpop.f32.mrb[0].mxu0
    %v4179 = vadd.f32 0.0, %v4178
    %v4180 = vpop.f32.mrb[0].mxu0
    %4181 = vmatprep.mubr.f32.mxu0 0.0
    %4182 = vmatmul.mubr.f32.gmra.mrb[0].mxu0 %v1579
    %v4183 = vpop.f32.mrb[0].mxu0
    %v4184 = vadd.f32 0.0, %v4183
    %v4185 = vpop.f32.mrb[0].mxu0
    %4186 = vmatprep.mubr.f32.mxu0 0.0
    %4187 = vmatmul.mubr.f32.gmra.mrb[0].mxu0 %v1582
    %v4188 = vpop.f32.mrb[0].mxu0
    %v4189 = vadd.f32 0.0, %v4188
    %v4190 = vpop.f32.mrb[0].mxu0
    %4191 = vmatprep.mubr.f32.mxu0 0.0
    %4192 = vmatmul.mubr.f32.gmra.mrb[0].mxu0 %v1585
    %v4193 = vpop.f32.mrb[0].mxu0
    %v4194 = vadd.f32 0.0, %v4193
    %v4195 = vpop.f32.mrb[0].mxu0
    %4196 = vmatprep.mubr.f32.mxu0 0.0
    %4197 = vmatmul.mubr.f32.gmra.mrb[0].mxu0 %v1588
    %v4198 = vpop.f32.mrb[0].mxu0
    %v4199 = vadd.f32 0.0, %v4198
    %v4200 = vpop.f32.mrb[0].mxu0
    %4201 = vmatprep.mubr.f32.mxu0 0.0
    %4202 = vmatmul.mubr.f32.gmra.mrb[0].mxu0 %v1591
    %v4203 = vpop.f32.mrb[0].mxu0
    %v4204 = vadd.f32 0.0, %v4203
    %v4205 = vpop.f32.mrb[0].mxu0
    %4206 = vmatprep.mubr.f32.mxu0 0.0
    %4207 = vmatmul.mubr.f32.gmra.mrb[0].mxu0 %v1594
    %v4208 = vpop.f32.mrb[0].mxu0
    %v4209 = vadd.f32 0.0, %v4208
    %v4210 = vpop.f32.mrb[0].mxu0
    %4211 = vmatprep.mubr.f32.mxu0 0.0
    %4212 = vmatmul.mubr.f32.gmra.mrb[0].mxu0 %v1597
    %v4213 = vpop.f32.mrb[0].mxu0
    %v4214 = vadd.f32 0.0, %v4213
    %v4215 = vpop.f32.mrb[0].mxu0
    %4216 = vmatprep.mubr.f32.mxu0 0.0
    %4217 = vmatmul.mubr.f32.gmra.mrb[0].mxu0 %v1600
    %v4218 = vpop.f32.mrb[0].mxu0
    %v4219 = vadd.f32 0.0, %v4218
    %v4220 = vpop.f32.mrb[0].mxu0
    %4221 = vmatprep.mubr.f32.mxu0 0.0
    %4222 = vmatmul.mubr.f32.gmra.mrb[0].mxu0 %v1603
    %v4223 = vpop.f32.mrb[0].mxu0
    %v4224 = vadd.f32 0.0, %v4223
    %v4225 = vpop.f32.mrb[0].mxu0
    %4226 = vmatprep.mubr.f32.mxu0 0.0
    %4227 = vmatmul.mubr.f32.gmra.mrb[0].mxu0 %v1606
    %v4228 = vpop.f32.mrb[0].mxu0
    %v4229 = vadd.f32 0.0, %v4228
    %v4230 = vpop.f32.mrb[0].mxu0
    %4231 = vmatprep.mubr.f32.mxu0 0.0
    %4232 = vmatmul.mubr.f32.gmra.mrb[0].mxu0 %v1609
    %v4233 = vpop.f32.mrb[0].mxu0
    %v4234 = vadd.f32 0.0, %v4233
    %v4235 = vpop.f32.mrb[0].mxu0
    %4236 = vmatprep.mubr.f32.mxu0 0.0
    %4237 = vmatmul.mubr.f32.gmra.mrb[0].mxu0 %v1612
    %v4238 = vpop.f32.mrb[0].mxu0
    %v4239 = vadd.f32 0.0, %v4238
    %v4240 = vpop.f32.mrb[0].mxu0
    %4241 = vmatprep.mubr.f32.mxu0 0.0
    %4242 = vmatmul.mubr.f32.gmra.mrb[0].mxu0 %v1615
    %v4243 = vpop.f32.mrb[0].mxu0
    %v4244 = vadd.f32 0.0, %v4243
    %v4245 = vpop.f32.mrb[0].mxu0
    %4246 = vmatprep.mubr.f32.mxu0 0.0
    %4247 = vmatmul.mubr.f32.gmra.mrb[0].mxu0 %v1618
    %v4248 = vpop.f32.mrb[0].mxu0
    %v4249 = vadd.f32 0.0, %v4248
    %v4250 = vpop.f32.mrb[0].mxu0
    %4251 = vmatprep.mubr.f32.mxu0 0.0
    %4252 = vmatmul.mubr.f32.gmra.mrb[0].mxu0 %v1621
    %v4253 = vpop.f32.mrb[0].mxu0
    %v4254 = vadd.f32 0.0, %v4253
    %v4255 = vpop.f32.mrb[0].mxu0
    %4256 = vmatprep.mubr.f32.mxu0 0.0
    %4257 = vmatmul.mubr.f32.gmra.mrb[0].mxu0 %v1624
    %v4258 = vpop.f32.mrb[0].mxu0
    %v4259 = vadd.f32 0.0, %v4258
    %v4260 = vpop.f32.mrb[0].mxu0
    %4261 = vmatprep.mubr.f32.mxu0 0.0
    %4262 = vmatmul.mubr.f32.gmra.mrb[0].mxu0 %v1627
    %v4263 = vpop.f32.mrb[0].mxu0
    %v4264 = vadd.f32 0.0, %v4263
    %v4265 = vpop.f32.mrb[0].mxu0
    %4266 = vmatprep.mubr.f32.mxu0 0.0
    %4267 = vmatmul.mubr.f32.gmra.mrb[0].mxu0 %v1630
    %v4268 = vpop.f32.mrb[0].mxu0
    %v4269 = vadd.f32 0.0, %v4268
    %v4270 = vpop.f32.mrb[0].mxu0
    %4271 = vmatprep.mubr.f32.mxu0 0.0
    %4272 = vmatmul.mubr.f32.gmra.mrb[0].mxu0 %v1633
    %v4273 = vpop.f32.mrb[0].mxu0
    %v4274 = vadd.f32 0.0, %v4273
    %v4275 = vpop.f32.mrb[0].mxu0
    %4276 = vmatprep.mubr.f32.mxu0 0.0
    %4277 = vmatmul.mubr.f32.gmra.mrb[0].mxu0 %v1636
    %v4278 = vpop.f32.mrb[0].mxu0
    %v4279 = vadd.f32 0.0, %v4278
    %v4280 = vpop.f32.mrb[0].mxu0
    %4281 = vmatprep.mubr.f32.mxu0 0.0
    %4282 = vmatmul.mubr.f32.gmra.mrb[0].mxu0 %v1639
    %v4283 = vpop.f32.mrb[0].mxu0
    %v4284 = vadd.f32 0.0, %v4283
    %v4285 = vpop.f32.mrb[0].mxu0
    %4286 = vmatprep.mubr.f32.mxu0 0.0
    %4287 = vmatmul.mubr.f32.gmra.mrb[0].mxu0 %v1642
    %v4288 = vpop.f32.mrb[0].mxu0
    %v4289 = vadd.f32 0.0, %v4288
    %v4290 = vpop.f32.mrb[0].mxu0
    %4291 = vmatprep.mubr.f32.mxu0 0.0
    %4292 = vmatmul.mubr.f32.gmra.mrb[0].mxu0 %v1645
    %v4293 = vpop.f32.mrb[0].mxu0
    %v4294 = vadd.f32 0.0, %v4293
    %v4295 = vpop.f32.mrb[0].mxu0
    %4296 = vmatprep.mubr.f32.mxu0 0.0
    %4297 = vmatmul.mubr.f32.gmra.mrb[0].mxu0 %v1648
    %v4298 = vpop.f32.mrb[0].mxu0
    %v4299 = vadd.f32 0.0, %v4298
    %v4300 = vpop.f32.mrb[0].mxu0
    %4301 = vmatprep.mubr.f32.mxu0 0.0
    %4302 = vmatmul.mubr.f32.gmra.mrb[0].mxu0 %v1651
    %v4303 = vpop.f32.mrb[0].mxu0
    %v4304 = vadd.f32 0.0, %v4303
    %v4305 = vpop.f32.mrb[0].mxu0
    %4306 = vmatprep.mubr.f32.mxu0 0.0
    %4307 = vmatmul.mubr.f32.gmra.mrb[0].mxu0 %v1654
    %v4308 = vpop.f32.mrb[0].mxu0
    %v4309 = vadd.f32 0.0, %v4308
    %v4310 = vpop.f32.mrb[0].mxu0
    %4311 = vmatprep.mubr.f32.mxu0 0.0
    %4312 = vmatmul.mubr.f32.gmra.mrb[0].mxu0 %v1657
    %v4313 = vpop.f32.mrb[0].mxu0
    %v4314 = vadd.f32 0.0, %v4313
    %v4315 = vpop.f32.mrb[0].mxu0
    %4316 = vmatprep.mubr.f32.mxu0 0.0
    %4317 = vmatmul.mubr.f32.gmra.mrb[0].mxu0 %v1660
    %v4318 = vpop.f32.mrb[0].mxu0
    %v4319 = vadd.f32 0.0, %v4318
    %v4320 = vpop.f32.mrb[0].mxu0
    %4321 = vmatprep.mubr.f32.mxu0 0.0
    %4322 = vmatmul.mubr.f32.gmra.mrb[0].mxu0 %v1663
    %v4323 = vpop.f32.mrb[0].mxu0
    %v4324 = vadd.f32 0.0, %v4323
    %v4325 = vpop.f32.mrb[0].mxu0
    %4326 = vmatprep.mubr.f32.mxu0 0.0
    %4327 = vmatmul.mubr.f32.gmra.mrb[0].mxu0 %v1666
    %v4328 = vpop.f32.mrb[0].mxu0
    %v4329 = vadd.f32 0.0, %v4328
    %v4330 = vpop.f32.mrb[0].mxu0
    %4331 = vmatprep.mubr.f32.mxu0 0.0
    %4332 = vmatmul.mubr.f32.gmra.mrb[0].mxu0 %v1669
    %v4333 = vpop.f32.mrb[0].mxu0
    %v4334 = vadd.f32 0.0, %v4333
    %v4335 = vpop.f32.mrb[0].mxu0
    %4336 = vmatprep.mubr.f32.mxu0 0.0
    %4337 = vmatmul.mubr.f32.gmra.mrb[0].mxu0 %v1672
    %v4338 = vpop.f32.mrb[0].mxu0
    %v4339 = vadd.f32 0.0, %v4338
    %v4340 = vpop.f32.mrb[0].mxu0
    %4341 = vmatprep.mubr.f32.mxu0 0.0
    %4342 = vmatmul.mubr.f32.gmra.mrb[0].mxu0 %v1675
    %v4343 = vpop.f32.mrb[0].mxu0
    %v4344 = vadd.f32 0.0, %v4343
    %v4345 = vpop.f32.mrb[0].mxu0
    %4346 = vmatprep.mubr.f32.mxu0 0.0
    %4347 = vmatmul.mubr.f32.gmra.mrb[0].mxu0 %v1678
    %v4348 = vpop.f32.mrb[0].mxu0
    %v4349 = vadd.f32 0.0, %v4348
    %v4350 = vpop.f32.mrb[0].mxu0
    %4351 = vmatprep.mubr.f32.mxu0 0.0
    %4352 = vmatmul.mubr.f32.gmra.mrb[0].mxu0 %v1681
    %v4353 = vpop.f32.mrb[0].mxu0
    %v4354 = vadd.f32 0.0, %v4353
    %v4355 = vpop.f32.mrb[0].mxu0
    %4356 = vmatprep.mubr.f32.mxu0 0.0
    %4357 = vmatmul.mubr.f32.gmra.mrb[0].mxu0 %v1684
    %v4358 = vpop.f32.mrb[0].mxu0
    %v4359 = vadd.f32 0.0, %v4358
    %v4360 = vpop.f32.mrb[0].mxu0
    %4361 = vmatprep.mubr.f32.mxu0 0.0
    %4362 = vmatmul.mubr.f32.gmra.mrb[0].mxu0 %v1687
    %v4363 = vpop.f32.mrb[0].mxu0
    %v4364 = vadd.f32 0.0, %v4363
    %v4365 = vpop.f32.mrb[0].mxu0
    %4366 = vmatprep.mubr.f32.mxu0 0.0
    %4367 = vmatmul.mubr.f32.gmra.mrb[0].mxu0 %v1690
    %v4368 = vpop.f32.mrb[0].mxu0
    %v4369 = vadd.f32 0.0, %v4368
    %v4370 = vpop.f32.mrb[0].mxu0
    %4371 = vmatprep.mubr.f32.mxu0 0.0
    %4372 = vmatmul.mubr.f32.gmra.mrb[0].mxu0 %v1693
    %v4373 = vpop.f32.mrb[0].mxu0
    %v4374 = vadd.f32 0.0, %v4373
    %v4375 = vpop.f32.mrb[0].mxu0
    %4376 = vmatprep.mubr.f32.mxu0 0.0
    %4377 = vmatmul.mubr.f32.gmra.mrb[0].mxu0 %v1696
    %v4378 = vpop.f32.mrb[0].mxu0
    %v4379 = vadd.f32 0.0, %v4378
    %v4380 = vpop.f32.mrb[0].mxu0
    %4381 = vmatprep.mubr.f32.mxu0 0.0
    %4382 = vmatmul.mubr.f32.gmra.mrb[0].mxu0 %v1699
    %v4383 = vpop.f32.mrb[0].mxu0
    %v4384 = vadd.f32 0.0, %v4383
    %v4385 = vpop.f32.mrb[0].mxu0
    %4386 = vmatprep.mubr.f32.mxu0 0.0
    %4387 = vmatmul.mubr.f32.gmra.mrb[0].mxu0 %v1702
    %v4388 = vpop.f32.mrb[0].mxu0
    %v4389 = vadd.f32 0.0, %v4388
    %v4390 = vpop.f32.mrb[0].mxu0
    %4391 = vmatprep.mubr.f32.mxu0 0.0
    %4392 = vmatmul.mubr.f32.gmra.mrb[0].mxu0 %v1705
    %v4393 = vpop.f32.mrb[0].mxu0
    %v4394 = vadd.f32 0.0, %v4393
    %v4395 = vpop.f32.mrb[0].mxu0
    %4396 = vmatprep.mubr.f32.mxu0 0.0
    %4397 = vmatmul.mubr.f32.gmra.mrb[0].mxu0 %v1708
    %v4398 = vpop.f32.mrb[0].mxu0
    %v4399 = vadd.f32 0.0, %v4398
    %v4400 = vpop.f32.mrb[0].mxu0
    %4401 = vmatprep.mubr.f32.mxu0 0.0
    %4402 = vmatmul.mubr.f32.gmra.mrb[0].mxu0 %v1711
    %v4403 = vpop.f32.mrb[0].mxu0
    %v4404 = vadd.f32 0.0, %v4403
    %v4405 = vpop.f32.mrb[0].mxu0
    %4406 = vmatprep.mubr.f32.mxu0 0.0
    %4407 = vmatmul.mubr.f32.gmra.mrb[0].mxu0 %v1714
    %v4408 = vpop.f32.mrb[0].mxu0
    %v4409 = vadd.f32 0.0, %v4408
    %v4410 = vpop.f32.mrb[0].mxu0
    %4411 = vmatprep.mubr.f32.mxu0 0.0
    %4412 = vmatmul.mubr.f32.gmra.mrb[0].mxu0 %v1717
    %v4413 = vpop.f32.mrb[0].mxu0
    %v4414 = vadd.f32 0.0, %v4413
    %v4415 = vpop.f32.mrb[0].mxu0
    %4416 = vmatprep.mubr.f32.mxu0 0.0
    %4417 = vmatmul.mubr.f32.gmra.mrb[0].mxu0 %v1720
    %v4418 = vpop.f32.mrb[0].mxu0
    %v4419 = vadd.f32 0.0, %v4418
    %v4420 = vpop.f32.mrb[0].mxu0
    %4421 = vmatprep.mubr.f32.mxu0 0.0
    %4422 = vmatmul.mubr.f32.gmra.mrb[0].mxu0 %v1723
    %v4423 = vpop.f32.mrb[0].mxu0
    %v4424 = vadd.f32 0.0, %v4423
    %v4425 = vpop.f32.mrb[0].mxu0
    %4426 = vmatprep.mubr.f32.mxu0 0.0
    %4427 = vmatmul.mubr.f32.gmra.mrb[0].mxu0 %v1726
    %v4428 = vpop.f32.mrb[0].mxu0
    %v4429 = vadd.f32 0.0, %v4428
    %v4430 = vpop.f32.mrb[0].mxu0
    %4431 = vmatprep.mubr.f32.mxu0 0.0
    %4432 = vmatmul.mubr.f32.gmra.mrb[0].mxu0 %v1729
    %v4433 = vpop.f32.mrb[0].mxu0
    %v4434 = vadd.f32 0.0, %v4433
    %v4435 = vpop.f32.mrb[0].mxu0
    %4436 = vmatprep.mubr.f32.mxu0 0.0
    %4437 = vmatmul.mubr.f32.gmra.mrb[0].mxu0 %v1732
    %v4438 = vpop.f32.mrb[0].mxu0
    %v4439 = vadd.f32 0.0, %v4438
    %v4440 = vpop.f32.mrb[0].mxu0
    %4441 = vmatprep.mubr.f32.mxu0 0.0
    %4442 = vmatmul.mubr.f32.gmra.mrb[0].mxu0 %v1735
    %v4443 = vpop.f32.mrb[0].mxu0
    %v4444 = vadd.f32 0.0, %v4443
    %v4445 = vpop.f32.mrb[0].mxu0
    %4446 = vmatprep.mubr.f32.mxu0 0.0
    %4447 = vmatmul.mubr.f32.gmra.mrb[0].mxu0 %v1738
    %v4448 = vpop.f32.mrb[0].mxu0
    %v4449 = vadd.f32 0.0, %v4448
    %v4450 = vpop.f32.mrb[0].mxu0
    %4451 = vmatprep.mubr.f32.mxu0 0.0
    %4452 = vmatmul.mubr.f32.gmra.mrb[0].mxu0 %v1741
    %v4453 = vpop.f32.mrb[0].mxu0
    %v4454 = vadd.f32 0.0, %v4453
    %v4455 = vpop.f32.mrb[0].mxu0
    %4456 = vmatprep.mubr.f32.mxu0 0.0
    %4457 = vmatmul.mubr.f32.gmra.mrb[0].mxu0 %v1744
    %v4458 = vpop.f32.mrb[0].mxu0
    %v4459 = vadd.f32 0.0, %v4458
    %v4460 = vpop.f32.mrb[0].mxu0
    %4461 = vmatprep.mubr.f32.mxu0 0.0
    %4462 = vmatmul.mubr.f32.gmra.mrb[0].mxu0 %v1747
    %v4463 = vpop.f32.mrb[0].mxu0
    %v4464 = vadd.f32 0.0, %v4463
    %v4465 = vpop.f32.mrb[0].mxu0
    %4466 = vmatprep.mubr.f32.mxu0 0.0
    %4467 = vmatmul.mubr.f32.gmra.mrb[0].mxu0 %v1750
    %v4468 = vpop.f32.mrb[0].mxu0
    %v4469 = vadd.f32 0.0, %v4468
    %v4470 = vpop.f32.mrb[0].mxu0
    %4471 = vmatprep.mubr.f32.mxu0 0.0
    %4472 = vmatmul.mubr.f32.gmra.mrb[0].mxu0 %v1753
    %v4473 = vpop.f32.mrb[0].mxu0
    %v4474 = vadd.f32 0.0, %v4473
    %v4475 = vpop.f32.mrb[0].mxu0
    %4476 = vmatprep.mubr.f32.mxu0 0.0
    %4477 = vmatmul.mubr.f32.gmra.mrb[0].mxu0 %v1756
    %v4478 = vpop.f32.mrb[0].mxu0
    %v4479 = vadd.f32 0.0, %v4478
    %v4480 = vpop.f32.mrb[0].mxu0
    %4481 = vmatprep.mubr.f32.mxu0 0.0
    %4482 = vmatmul.mubr.f32.gmra.mrb[0].mxu0 %v1759
    %v4483 = vpop.f32.mrb[0].mxu0
    %v4484 = vadd.f32 0.0, %v4483
    %v4485 = vpop.f32.mrb[0].mxu0
    %4486 = vmatprep.mubr.f32.mxu0 0.0
    %4487 = vmatmul.mubr.f32.gmra.mrb[0].mxu0 %v1762
    %v4488 = vpop.f32.mrb[0].mxu0
    %v4489 = vadd.f32 0.0, %v4488
    %v4490 = vpop.f32.mrb[0].mxu0
    %4491 = vmatprep.mubr.f32.mxu0 0.0
    %4492 = vmatmul.mubr.f32.gmra.mrb[0].mxu0 %v1765
    %v4493 = vpop.f32.mrb[0].mxu0
    %v4494 = vadd.f32 0.0, %v4493
    %v4495 = vpop.f32.mrb[0].mxu0
    %4496 = vmatprep.mubr.f32.mxu0 0.0
    %4497 = vmatmul.mubr.f32.gmra.mrb[0].mxu0 %v1768
    %v4498 = vpop.f32.mrb[0].mxu0
    %v4499 = vadd.f32 0.0, %v4498
    %v4500 = vpop.f32.mrb[0].mxu0
    %4501 = vmatprep.mubr.f32.mxu0 0.0
    %4502 = vmatmul.mubr.f32.gmra.mrb[0].mxu0 %v1771
    %v4503 = vpop.f32.mrb[0].mxu0
    %v4504 = vadd.f32 0.0, %v4503
    %v4505 = vpop.f32.mrb[0].mxu0
    %4506 = vmatprep.mubr.f32.mxu0 0.0
    %4507 = vmatmul.mubr.f32.gmra.mrb[0].mxu0 %v1774
    %v4508 = vpop.f32.mrb[0].mxu0
    %v4509 = vadd.f32 0.0, %v4508
    %v4510 = vpop.f32.mrb[0].mxu0
    %4511 = vmatprep.mubr.f32.mxu0 0.0
    %4512 = vmatmul.mubr.f32.gmra.mrb[0].mxu0 %v1777
    %v4513 = vpop.f32.mrb[0].mxu0
    %v4514 = vadd.f32 0.0, %v4513
    %v4515 = vpop.f32.mrb[0].mxu0
    %4516 = vmatprep.mubr.f32.mxu0 0.0
    %4517 = vmatmul.mubr.f32.gmra.mrb[0].mxu0 %v1780
    %v4518 = vpop.f32.mrb[0].mxu0
    %v4519 = vadd.f32 0.0, %v4518
    %v4520 = vpop.f32.mrb[0].mxu0
    %4521 = vmatprep.mubr.f32.mxu0 0.0
    %4522 = vmatmul.mubr.f32.gmra.mrb[0].mxu0 %v1783
    %v4523 = vpop.f32.mrb[0].mxu0
    %v4524 = vadd.f32 0.0, %v4523
    %v4525 = vpop.f32.mrb[0].mxu0
    %4526 = vmatprep.mubr.f32.mxu0 0.0
    %4527 = vmatmul.mubr.f32.gmra.mrb[0].mxu0 %v1786
    %v4528 = vpop.f32.mrb[0].mxu0
    %v4529 = vadd.f32 0.0, %v4528
    %v4530 = vpop.f32.mrb[0].mxu0
    %4531 = vmatprep.mubr.f32.mxu0 0.0
    %4532 = vmatmul.mubr.f32.gmra.mrb[0].mxu0 %v1789
    %v4533 = vpop.f32.mrb[0].mxu0
    %v4534 = vadd.f32 0.0, %v4533
    %v4535 = vpop.f32.mrb[0].mxu0
    %4536 = vmatprep.mubr.f32.mxu0 0.0
    %4537 = vmatmul.mubr.f32.gmra.mrb[0].mxu0 %v1792
    %v4538 = vpop.f32.mrb[0].mxu0
    %v4539 = vadd.f32 0.0, %v4538
    %v4540 = vpop.f32.mrb[0].mxu0
    %4541 = vmatprep.mubr.f32.mxu0 0.0
    %4542 = vmatmul.mubr.f32.gmra.mrb[0].mxu0 %v1795
    %v4543 = vpop.f32.mrb[0].mxu0
    %v4544 = vadd.f32 0.0, %v4543
    %v4545 = vpop.f32.mrb[0].mxu0
    %4546 = vmatprep.mubr.f32.mxu0 0.0
    %4547 = vmatmul.mubr.f32.gmra.mrb[0].mxu0 %v1798
    %v4548 = vpop.f32.mrb[0].mxu0
    %v4549 = vadd.f32 0.0, %v4548
    %v4550 = vpop.f32.mrb[0].mxu0
    %4551 = vmatprep.mubr.f32.mxu0 0.0
    %4552 = vmatmul.mubr.f32.gmra.mrb[0].mxu0 %v1801
    %v4553 = vpop.f32.mrb[0].mxu0
    %v4554 = vadd.f32 0.0, %v4553
    %v4555 = vpop.f32.mrb[0].mxu0
    %4556 = vmatprep.mubr.f32.mxu0 0.0
    %4557 = vmatmul.mubr.f32.gmra.mrb[0].mxu0 %v1804
    %v4558 = vpop.f32.mrb[0].mxu0
    %v4559 = vadd.f32 0.0, %v4558
    %v4560 = vpop.f32.mrb[0].mxu0
    %4561 = vdwg.mxu0
    %v4562 = vsub.f32 %v3219, %v3924
    %v4563 = vsub.f32 %v3224, %v3929
    %v4564 = vsub.f32 %v3229, %v3934
    %v4565 = vsub.f32 %v3234, %v3939
    %v4566 = vsub.f32 %v3239, %v3944
    %v4567 = vsub.f32 %v3244, %v3949
    %v4568 = vsub.f32 %v3249, %v3954
    %v4569 = vsub.f32 %v3254, %v3959
    %v4570 = vsub.f32 %v3259, %v3964
    %v4571 = vsub.f32 %v3264, %v3969
    %v4572 = vsub.f32 %v3269, %v3974
    %v4573 = vsub.f32 %v3274, %v3979
    %v4574 = vsub.f32 %v3279, %v3984
    %v4575 = vsub.f32 %v3284, %v3989
    %v4576 = vsub.f32 %v3289, %v3994
    %v4577 = vsub.f32 %v3294, %v3999
    %v4578 = vsub.f32 %v3299, %v4004
    %v4579 = vsub.f32 %v3304, %v4009
    %v4580 = vsub.f32 %v3309, %v4014
    %v4581 = vsub.f32 %v3314, %v4019
    %v4582 = vsub.f32 %v3319, %v4024
    %v4583 = vsub.f32 %v3324, %v4029
    %v4584 = vsub.f32 %v3329, %v4034
    %v4585 = vsub.f32 %v3334, %v4039
    %v4586 = vsub.f32 %v3339, %v4044
    %v4587 = vsub.f32 %v3344, %v4049
    %v4588 = vsub.f32 %v3349, %v4054
    %v4589 = vsub.f32 %v3354, %v4059
    %v4590 = vsub.f32 %v3359, %v4064
    %v4591 = vsub.f32 %v3364, %v4069
    %v4592 = vsub.f32 %v3369, %v4074
    %v4593 = vsub.f32 %v3374, %v4079
    %v4594 = vsub.f32 %v3379, %v4084
    %v4595 = vsub.f32 %v3384, %v4089
    %v4596 = vsub.f32 %v3389, %v4094
    %v4597 = vsub.f32 %v3394, %v4099
    %v4598 = vsub.f32 %v3399, %v4104
    %v4599 = vsub.f32 %v3404, %v4109
    %v4600 = vsub.f32 %v3409, %v4114
    %v4601 = vsub.f32 %v3414, %v4119
    %v4602 = vsub.f32 %v3419, %v4124
    %v4603 = vsub.f32 %v3424, %v4129
    %v4604 = vsub.f32 %v3429, %v4134
    %v4605 = vsub.f32 %v3434, %v4139
    %v4606 = vsub.f32 %v3439, %v4144
    %v4607 = vsub.f32 %v3444, %v4149
    %v4608 = vsub.f32 %v3449, %v4154
    %v4609 = vsub.f32 %v3454, %v4159
    %v4610 = vsub.f32 %v3459, %v4164
    %v4611 = vsub.f32 %v3464, %v4169
    %v4612 = vsub.f32 %v3469, %v4174
    %v4613 = vsub.f32 %v3474, %v4179
    %v4614 = vsub.f32 %v3479, %v4184
    %v4615 = vsub.f32 %v3484, %v4189
    %v4616 = vsub.f32 %v3489, %v4194
    %v4617 = vsub.f32 %v3494, %v4199
    %v4618 = vsub.f32 %v3499, %v4204
    %v4619 = vsub.f32 %v3504, %v4209
    %v4620 = vsub.f32 %v3509, %v4214
    %v4621 = vsub.f32 %v3514, %v4219
    %v4622 = vsub.f32 %v3519, %v4224
    %v4623 = vsub.f32 %v3524, %v4229
    %v4624 = vsub.f32 %v3529, %v4234
    %v4625 = vsub.f32 %v3534, %v4239
    %v4626 = vsub.f32 %v3539, %v4244
    %v4627 = vsub.f32 %v3544, %v4249
    %v4628 = vsub.f32 %v3549, %v4254
    %v4629 = vsub.f32 %v3554, %v4259
    %v4630 = vsub.f32 %v3559, %v4264
    %v4631 = vsub.f32 %v3564, %v4269
    %v4632 = vsub.f32 %v3569, %v4274
    %v4633 = vsub.f32 %v3574, %v4279
    %v4634 = vsub.f32 %v3579, %v4284
    %v4635 = vsub.f32 %v3584, %v4289
    %v4636 = vsub.f32 %v3589, %v4294
    %v4637 = vsub.f32 %v3594, %v4299
    %v4638 = vsub.f32 %v3599, %v4304
    %v4639 = vsub.f32 %v3604, %v4309
    %v4640 = vsub.f32 %v3609, %v4314
    %v4641 = vsub.f32 %v3614, %v4319
    %v4642 = vsub.f32 %v3619, %v4324
    %v4643 = vsub.f32 %v3624, %v4329
    %v4644 = vsub.f32 %v3629, %v4334
    %v4645 = vsub.f32 %v3634, %v4339
    %v4646 = vsub.f32 %v3639, %v4344
    %v4647 = vsub.f32 %v3644, %v4349
    %v4648 = vsub.f32 %v3649, %v4354
    %v4649 = vsub.f32 %v3654, %v4359
    %v4650 = vsub.f32 %v3659, %v4364
    %v4651 = vsub.f32 %v3664, %v4369
    %v4652 = vsub.f32 %v3669, %v4374
    %v4653 = vsub.f32 %v3674, %v4379
    %v4654 = vsub.f32 %v3679, %v4384
    %v4655 = vsub.f32 %v3684, %v4389
    %v4656 = vsub.f32 %v3689, %v4394
    %v4657 = vsub.f32 %v3694, %v4399
    %v4658 = vsub.f32 %v3699, %v4404
    %v4659 = vsub.f32 %v3704, %v4409
    %v4660 = vsub.f32 %v3709, %v4414
    %v4661 = vsub.f32 %v3714, %v4419
    %v4662 = vsub.f32 %v3719, %v4424
    %v4663 = vsub.f32 %v3724, %v4429
    %v4664 = vsub.f32 %v3729, %v4434
    %v4665 = vsub.f32 %v3734, %v4439
    %v4666 = vsub.f32 %v3739, %v4444
    %v4667 = vsub.f32 %v3744, %v4449
    %v4668 = vsub.f32 %v3749, %v4454
    %v4669 = vsub.f32 %v3754, %v4459
    %v4670 = vsub.f32 %v3759, %v4464
    %v4671 = vsub.f32 %v3764, %v4469
    %v4672 = vsub.f32 %v3769, %v4474
    %v4673 = vsub.f32 %v3774, %v4479
    %v4674 = vsub.f32 %v3779, %v4484
    %v4675 = vsub.f32 %v3784, %v4489
    %v4676 = vsub.f32 %v3789, %v4494
    %v4677 = vsub.f32 %v3794, %v4499
    %v4678 = vsub.f32 %v3799, %v4504
    %v4679 = vsub.f32 %v3804, %v4509
    %v4680 = vsub.f32 %v3809, %v4514
    %v4681 = vsub.f32 %v3814, %v4519
    %v4682 = vsub.f32 %v3819, %v4524
    %v4683 = vsub.f32 %v3824, %v4529
    %v4684 = vsub.f32 %v3829, %v4534
    %v4685 = vsub.f32 %v3834, %v4539
    %v4686 = vsub.f32 %v3839, %v4544
    %v4687 = vsub.f32 %v3844, %v4549
    %v4688 = vsub.f32 %v3849, %v4554
    %v4689 = vsub.f32 %v3854, %v4559
    %v4690 = vand.u32 2147483647, %v4562
    %v4691 = vand.u32 2147483647, %v4563
    %v4692 = vand.u32 2147483647, %v4564
    %v4693 = vand.u32 2147483647, %v4565
    %v4694 = vand.u32 2147483647, %v4566
    %v4695 = vand.u32 2147483647, %v4567
    %v4696 = vand.u32 2147483647, %v4568
    %v4697 = vand.u32 2147483647, %v4569
    %v4698 = vand.u32 2147483647, %v4570
    %v4699 = vand.u32 2147483647, %v4571
    %v4700 = vand.u32 2147483647, %v4572
    %v4701 = vand.u32 2147483647, %v4573
    %v4702 = vand.u32 2147483647, %v4574
    %v4703 = vand.u32 2147483647, %v4575
    %v4704 = vand.u32 2147483647, %v4576
    %v4705 = vand.u32 2147483647, %v4577
    %v4706 = vand.u32 2147483647, %v4578
    %v4707 = vand.u32 2147483647, %v4579
    %v4708 = vand.u32 2147483647, %v4580
    %v4709 = vand.u32 2147483647, %v4581
    %v4710 = vand.u32 2147483647, %v4582
    %v4711 = vand.u32 2147483647, %v4583
    %v4712 = vand.u32 2147483647, %v4584
    %v4713 = vand.u32 2147483647, %v4585
    %v4714 = vand.u32 2147483647, %v4586
    %v4715 = vand.u32 2147483647, %v4587
    %v4716 = vand.u32 2147483647, %v4588
    %v4717 = vand.u32 2147483647, %v4589
    %v4718 = vand.u32 2147483647, %v4590
    %v4719 = vand.u32 2147483647, %v4591
    %v4720 = vand.u32 2147483647, %v4592
    %v4721 = vand.u32 2147483647, %v4593
    %v4722 = vand.u32 2147483647, %v4594
    %v4723 = vand.u32 2147483647, %v4595
    %v4724 = vand.u32 2147483647, %v4596
    %v4725 = vand.u32 2147483647, %v4597
    %v4726 = vand.u32 2147483647, %v4598
    %v4727 = vand.u32 2147483647, %v4599
    %v4728 = vand.u32 2147483647, %v4600
    %v4729 = vand.u32 2147483647, %v4601
    %v4730 = vand.u32 2147483647, %v4602
    %v4731 = vand.u32 2147483647, %v4603
    %v4732 = vand.u32 2147483647, %v4604
    %v4733 = vand.u32 2147483647, %v4605
    %v4734 = vand.u32 2147483647, %v4606
    %v4735 = vand.u32 2147483647, %v4607
    %v4736 = vand.u32 2147483647, %v4608
    %v4737 = vand.u32 2147483647, %v4609
    %v4738 = vand.u32 2147483647, %v4610
    %v4739 = vand.u32 2147483647, %v4611
    %v4740 = vand.u32 2147483647, %v4612
    %v4741 = vand.u32 2147483647, %v4613
    %v4742 = vand.u32 2147483647, %v4614
    %v4743 = vand.u32 2147483647, %v4615
    %v4744 = vand.u32 2147483647, %v4616
    %v4745 = vand.u32 2147483647, %v4617
    %v4746 = vand.u32 2147483647, %v4618
    %v4747 = vand.u32 2147483647, %v4619
    %v4748 = vand.u32 2147483647, %v4620
    %v4749 = vand.u32 2147483647, %v4621
    %v4750 = vand.u32 2147483647, %v4622
    %v4751 = vand.u32 2147483647, %v4623
    %v4752 = vand.u32 2147483647, %v4624
    %v4753 = vand.u32 2147483647, %v4625
    %v4754 = vand.u32 2147483647, %v4626
    %v4755 = vand.u32 2147483647, %v4627
    %v4756 = vand.u32 2147483647, %v4628
    %v4757 = vand.u32 2147483647, %v4629
    %v4758 = vand.u32 2147483647, %v4630
    %v4759 = vand.u32 2147483647, %v4631
    %v4760 = vand.u32 2147483647, %v4632
    %v4761 = vand.u32 2147483647, %v4633
    %v4762 = vand.u32 2147483647, %v4634
    %v4763 = vand.u32 2147483647, %v4635
    %v4764 = vand.u32 2147483647, %v4636
    %v4765 = vand.u32 2147483647, %v4637
    %v4766 = vand.u32 2147483647, %v4638
    %v4767 = vand.u32 2147483647, %v4639
    %v4768 = vand.u32 2147483647, %v4640
    %v4769 = vand.u32 2147483647, %v4641
    %v4770 = vand.u32 2147483647, %v4642
    %v4771 = vand.u32 2147483647, %v4643
    %v4772 = vand.u32 2147483647, %v4644
    %v4773 = vand.u32 2147483647, %v4645
    %v4774 = vand.u32 2147483647, %v4646
    %v4775 = vand.u32 2147483647, %v4647
    %v4776 = vand.u32 2147483647, %v4648
    %v4777 = vand.u32 2147483647, %v4649
    %v4778 = vand.u32 2147483647, %v4650
    %v4779 = vand.u32 2147483647, %v4651
    %v4780 = vand.u32 2147483647, %v4652
    %v4781 = vand.u32 2147483647, %v4653
    %v4782 = vand.u32 2147483647, %v4654
    %v4783 = vand.u32 2147483647, %v4655
    %v4784 = vand.u32 2147483647, %v4656
    %v4785 = vand.u32 2147483647, %v4657
    %v4786 = vand.u32 2147483647, %v4658
    %v4787 = vand.u32 2147483647, %v4659
    %v4788 = vand.u32 2147483647, %v4660
    %v4789 = vand.u32 2147483647, %v4661
    %v4790 = vand.u32 2147483647, %v4662
    %v4791 = vand.u32 2147483647, %v4663
    %v4792 = vand.u32 2147483647, %v4664
    %v4793 = vand.u32 2147483647, %v4665
    %v4794 = vand.u32 2147483647, %v4666
    %v4795 = vand.u32 2147483647, %v4667
    %v4796 = vand.u32 2147483647, %v4668
    %v4797 = vand.u32 2147483647, %v4669
    %v4798 = vand.u32 2147483647, %v4670
    %v4799 = vand.u32 2147483647, %v4671
    %v4800 = vand.u32 2147483647, %v4672
    %v4801 = vand.u32 2147483647, %v4673
    %v4802 = vand.u32 2147483647, %v4674
    %v4803 = vand.u32 2147483647, %v4675
    %v4804 = vand.u32 2147483647, %v4676
    %v4805 = vand.u32 2147483647, %v4677
    %v4806 = vand.u32 2147483647, %v4678
    %v4807 = vand.u32 2147483647, %v4679
    %v4808 = vand.u32 2147483647, %v4680
    %v4809 = vand.u32 2147483647, %v4681
    %v4810 = vand.u32 2147483647, %v4682
    %v4811 = vand.u32 2147483647, %v4683
    %v4812 = vand.u32 2147483647, %v4684
    %v4813 = vand.u32 2147483647, %v4685
    %v4814 = vand.u32 2147483647, %v4686
    %v4815 = vand.u32 2147483647, %v4687
    %v4816 = vand.u32 2147483647, %v4688
    %v4817 = vand.u32 2147483647, %v4689
    %vm4818 = vcmp.lt.f32.partialorder %v4690, 0.5
    %vm4819 = vcmp.lt.f32.partialorder %v4691, 0.5
    %vm4820 = vcmp.lt.f32.partialorder %v4692, 0.5
    %vm4821 = vcmp.lt.f32.partialorder %v4693, 0.5
    %vm4822 = vcmp.lt.f32.partialorder %v4694, 0.5
    %vm4823 = vcmp.lt.f32.partialorder %v4695, 0.5
    %vm4824 = vcmp.lt.f32.partialorder %v4696, 0.5
    %vm4825 = vcmp.lt.f32.partialorder %v4697, 0.5
    %vm4826 = vcmp.lt.f32.partialorder %v4698, 0.5
    %vm4827 = vcmp.lt.f32.partialorder %v4699, 0.5
    %vm4828 = vcmp.lt.f32.partialorder %v4700, 0.5
    %vm4829 = vcmp.lt.f32.partialorder %v4701, 0.5
    %vm4830 = vcmp.lt.f32.partialorder %v4702, 0.5
    %vm4831 = vcmp.lt.f32.partialorder %v4703, 0.5
    %vm4832 = vcmp.lt.f32.partialorder %v4704, 0.5
    %vm4833 = vcmp.lt.f32.partialorder %v4705, 0.5
    %vm4834 = vcmp.lt.f32.partialorder %v4706, 0.5
    %vm4835 = vcmp.lt.f32.partialorder %v4707, 0.5
    %vm4836 = vcmp.lt.f32.partialorder %v4708, 0.5
    %vm4837 = vcmp.lt.f32.partialorder %v4709, 0.5
    %vm4838 = vcmp.lt.f32.partialorder %v4710, 0.5
    %vm4839 = vcmp.lt.f32.partialorder %v4711, 0.5
    %vm4840 = vcmp.lt.f32.partialorder %v4712, 0.5
    %vm4841 = vcmp.lt.f32.partialorder %v4713, 0.5
    %vm4842 = vcmp.lt.f32.partialorder %v4714, 0.5
    %vm4843 = vcmp.lt.f32.partialorder %v4715, 0.5
    %vm4844 = vcmp.lt.f32.partialorder %v4716, 0.5
    %vm4845 = vcmp.lt.f32.partialorder %v4717, 0.5
    %vm4846 = vcmp.lt.f32.partialorder %v4718, 0.5
    %vm4847 = vcmp.lt.f32.partialorder %v4719, 0.5
    %vm4848 = vcmp.lt.f32.partialorder %v4720, 0.5
    %vm4849 = vcmp.lt.f32.partialorder %v4721, 0.5
    %vm4850 = vcmp.lt.f32.partialorder %v4722, 0.5
    %vm4851 = vcmp.lt.f32.partialorder %v4723, 0.5
    %vm4852 = vcmp.lt.f32.partialorder %v4724, 0.5
    %vm4853 = vcmp.lt.f32.partialorder %v4725, 0.5
    %vm4854 = vcmp.lt.f32.partialorder %v4726, 0.5
    %vm4855 = vcmp.lt.f32.partialorder %v4727, 0.5
    %vm4856 = vcmp.lt.f32.partialorder %v4728, 0.5
    %vm4857 = vcmp.lt.f32.partialorder %v4729, 0.5
    %vm4858 = vcmp.lt.f32.partialorder %v4730, 0.5
    %vm4859 = vcmp.lt.f32.partialorder %v4731, 0.5
    %vm4860 = vcmp.lt.f32.partialorder %v4732, 0.5
    %vm4861 = vcmp.lt.f32.partialorder %v4733, 0.5
    %vm4862 = vcmp.lt.f32.partialorder %v4734, 0.5
    %vm4863 = vcmp.lt.f32.partialorder %v4735, 0.5
    %vm4864 = vcmp.lt.f32.partialorder %v4736, 0.5
    %vm4865 = vcmp.lt.f32.partialorder %v4737, 0.5
    %vm4866 = vcmp.lt.f32.partialorder %v4738, 0.5
    %vm4867 = vcmp.lt.f32.partialorder %v4739, 0.5
    %vm4868 = vcmp.lt.f32.partialorder %v4740, 0.5
    %vm4869 = vcmp.lt.f32.partialorder %v4741, 0.5
    %vm4870 = vcmp.lt.f32.partialorder %v4742, 0.5
    %vm4871 = vcmp.lt.f32.partialorder %v4743, 0.5
    %vm4872 = vcmp.lt.f32.partialorder %v4744, 0.5
    %vm4873 = vcmp.lt.f32.partialorder %v4745, 0.5
    %vm4874 = vcmp.lt.f32.partialorder %v4746, 0.5
    %vm4875 = vcmp.lt.f32.partialorder %v4747, 0.5
    %vm4876 = vcmp.lt.f32.partialorder %v4748, 0.5
    %vm4877 = vcmp.lt.f32.partialorder %v4749, 0.5
    %vm4878 = vcmp.lt.f32.partialorder %v4750, 0.5
    %vm4879 = vcmp.lt.f32.partialorder %v4751, 0.5
    %vm4880 = vcmp.lt.f32.partialorder %v4752, 0.5
    %vm4881 = vcmp.lt.f32.partialorder %v4753, 0.5
    %vm4882 = vcmp.lt.f32.partialorder %v4754, 0.5
    %vm4883 = vcmp.lt.f32.partialorder %v4755, 0.5
    %vm4884 = vcmp.lt.f32.partialorder %v4756, 0.5
    %vm4885 = vcmp.lt.f32.partialorder %v4757, 0.5
    %vm4886 = vcmp.lt.f32.partialorder %v4758, 0.5
    %vm4887 = vcmp.lt.f32.partialorder %v4759, 0.5
    %vm4888 = vcmp.lt.f32.partialorder %v4760, 0.5
    %vm4889 = vcmp.lt.f32.partialorder %v4761, 0.5
    %vm4890 = vcmp.lt.f32.partialorder %v4762, 0.5
    %vm4891 = vcmp.lt.f32.partialorder %v4763, 0.5
    %vm4892 = vcmp.lt.f32.partialorder %v4764, 0.5
    %vm4893 = vcmp.lt.f32.partialorder %v4765, 0.5
    %vm4894 = vcmp.lt.f32.partialorder %v4766, 0.5
    %vm4895 = vcmp.lt.f32.partialorder %v4767, 0.5
    %vm4896 = vcmp.lt.f32.partialorder %v4768, 0.5
    %vm4897 = vcmp.lt.f32.partialorder %v4769, 0.5
    %vm4898 = vcmp.lt.f32.partialorder %v4770, 0.5
    %vm4899 = vcmp.lt.f32.partialorder %v4771, 0.5
    %vm4900 = vcmp.lt.f32.partialorder %v4772, 0.5
    %vm4901 = vcmp.lt.f32.partialorder %v4773, 0.5
    %vm4902 = vcmp.lt.f32.partialorder %v4774, 0.5
    %vm4903 = vcmp.lt.f32.partialorder %v4775, 0.5
    %vm4904 = vcmp.lt.f32.partialorder %v4776, 0.5
    %vm4905 = vcmp.lt.f32.partialorder %v4777, 0.5
    %vm4906 = vcmp.lt.f32.partialorder %v4778, 0.5
    %vm4907 = vcmp.lt.f32.partialorder %v4779, 0.5
    %vm4908 = vcmp.lt.f32.partialorder %v4780, 0.5
    %vm4909 = vcmp.lt.f32.partialorder %v4781, 0.5
    %vm4910 = vcmp.lt.f32.partialorder %v4782, 0.5
    %vm4911 = vcmp.lt.f32.partialorder %v4783, 0.5
    %vm4912 = vcmp.lt.f32.partialorder %v4784, 0.5
    %vm4913 = vcmp.lt.f32.partialorder %v4785, 0.5
    %vm4914 = vcmp.lt.f32.partialorder %v4786, 0.5
    %vm4915 = vcmp.lt.f32.partialorder %v4787, 0.5
    %vm4916 = vcmp.lt.f32.partialorder %v4788, 0.5
    %vm4917 = vcmp.lt.f32.partialorder %v4789, 0.5
    %vm4918 = vcmp.lt.f32.partialorder %v4790, 0.5
    %vm4919 = vcmp.lt.f32.partialorder %v4791, 0.5
    %vm4920 = vcmp.lt.f32.partialorder %v4792, 0.5
    %vm4921 = vcmp.lt.f32.partialorder %v4793, 0.5
    %vm4922 = vcmp.lt.f32.partialorder %v4794, 0.5
    %vm4923 = vcmp.lt.f32.partialorder %v4795, 0.5
    %vm4924 = vcmp.lt.f32.partialorder %v4796, 0.5
    %vm4925 = vcmp.lt.f32.partialorder %v4797, 0.5
    %vm4926 = vcmp.lt.f32.partialorder %v4798, 0.5
    %vm4927 = vcmp.lt.f32.partialorder %v4799, 0.5
    %vm4928 = vcmp.lt.f32.partialorder %v4800, 0.5
    %vm4929 = vcmp.lt.f32.partialorder %v4801, 0.5
    %vm4930 = vcmp.lt.f32.partialorder %v4802, 0.5
    %vm4931 = vcmp.lt.f32.partialorder %v4803, 0.5
    %vm4932 = vcmp.lt.f32.partialorder %v4804, 0.5
    %vm4933 = vcmp.lt.f32.partialorder %v4805, 0.5
    %vm4934 = vcmp.lt.f32.partialorder %v4806, 0.5
    %vm4935 = vcmp.lt.f32.partialorder %v4807, 0.5
    %vm4936 = vcmp.lt.f32.partialorder %v4808, 0.5
    %vm4937 = vcmp.lt.f32.partialorder %v4809, 0.5
    %vm4938 = vcmp.lt.f32.partialorder %v4810, 0.5
    %vm4939 = vcmp.lt.f32.partialorder %v4811, 0.5
    %vm4940 = vcmp.lt.f32.partialorder %v4812, 0.5
    %vm4941 = vcmp.lt.f32.partialorder %v4813, 0.5
    %vm4942 = vcmp.lt.f32.partialorder %v4814, 0.5
    %vm4943 = vcmp.lt.f32.partialorder %v4815, 0.5
    %vm4944 = vcmp.lt.f32.partialorder %v4816, 0.5
    %vm4945 = vcmp.lt.f32.partialorder %v4817, 0.5
    %vm4946 = vcmp.le.f32.partialorder %v2770, 0.25
    %vm4947 = vcmp.le.f32.partialorder %v2773, 0.25
    %vm4948 = vcmp.le.f32.partialorder %v2776, 0.25
    %vm4949 = vcmp.le.f32.partialorder %v2779, 0.25
    %vm4950 = vcmp.le.f32.partialorder %v2782, 0.25
    %vm4951 = vcmp.le.f32.partialorder %v2785, 0.25
    %vm4952 = vcmp.le.f32.partialorder %v2788, 0.25
    %vm4953 = vcmp.le.f32.partialorder %v2791, 0.25
    %vm4954 = vcmp.le.f32.partialorder %v2794, 0.25
    %vm4955 = vcmp.le.f32.partialorder %v2797, 0.25
    %vm4956 = vcmp.le.f32.partialorder %v2800, 0.25
    %vm4957 = vcmp.le.f32.partialorder %v2803, 0.25
    %vm4958 = vcmp.le.f32.partialorder %v2806, 0.25
    %vm4959 = vcmp.le.f32.partialorder %v2809, 0.25
    %vm4960 = vcmp.le.f32.partialorder %v2812, 0.25
    %vm4961 = vcmp.le.f32.partialorder %v2815, 0.25
    %vm4962 = vcmp.le.f32.partialorder %v2818, 0.25
    %vm4963 = vcmp.le.f32.partialorder %v2821, 0.25
    %vm4964 = vcmp.le.f32.partialorder %v2824, 0.25
    %vm4965 = vcmp.le.f32.partialorder %v2827, 0.25
    %vm4966 = vcmp.le.f32.partialorder %v2830, 0.25
    %vm4967 = vcmp.le.f32.partialorder %v2833, 0.25
    %vm4968 = vcmp.le.f32.partialorder %v2836, 0.25
    %vm4969 = vcmp.le.f32.partialorder %v2839, 0.25
    %vm4970 = vcmp.le.f32.partialorder %v2842, 0.25
    %vm4971 = vcmp.le.f32.partialorder %v2845, 0.25
    %vm4972 = vcmp.le.f32.partialorder %v2848, 0.25
    %vm4973 = vcmp.le.f32.partialorder %v2851, 0.25
    %vm4974 = vcmp.le.f32.partialorder %v2854, 0.25
    %vm4975 = vcmp.le.f32.partialorder %v2857, 0.25
    %vm4976 = vcmp.le.f32.partialorder %v2860, 0.25
    %vm4977 = vcmp.le.f32.partialorder %v2863, 0.25
    %vm4978 = vcmp.le.f32.partialorder %v2866, 0.25
    %vm4979 = vcmp.le.f32.partialorder %v2869, 0.25
    %vm4980 = vcmp.le.f32.partialorder %v2872, 0.25
    %vm4981 = vcmp.le.f32.partialorder %v2875, 0.25
    %vm4982 = vcmp.le.f32.partialorder %v2878, 0.25
    %vm4983 = vcmp.le.f32.partialorder %v2881, 0.25
    %vm4984 = vcmp.le.f32.partialorder %v2884, 0.25
    %vm4985 = vcmp.le.f32.partialorder %v2887, 0.25
    %vm4986 = vcmp.le.f32.partialorder %v2890, 0.25
    %vm4987 = vcmp.le.f32.partialorder %v2893, 0.25
    %vm4988 = vcmp.le.f32.partialorder %v2896, 0.25
    %vm4989 = vcmp.le.f32.partialorder %v2899, 0.25
    %vm4990 = vcmp.le.f32.partialorder %v2902, 0.25
    %vm4991 = vcmp.le.f32.partialorder %v2905, 0.25
    %vm4992 = vcmp.le.f32.partialorder %v2908, 0.25
    %vm4993 = vcmp.le.f32.partialorder %v2911, 0.25
    %vm4994 = vcmp.le.f32.partialorder %v2914, 0.25
    %vm4995 = vcmp.le.f32.partialorder %v2917, 0.25
    %vm4996 = vcmp.le.f32.partialorder %v2920, 0.25
    %vm4997 = vcmp.le.f32.partialorder %v2923, 0.25
    %vm4998 = vcmp.le.f32.partialorder %v2926, 0.25
    %vm4999 = vcmp.le.f32.partialorder %v2929, 0.25
    %vm5000 = vcmp.le.f32.partialorder %v2932, 0.25
    %vm5001 = vcmp.le.f32.partialorder %v2935, 0.25
    %vm5002 = vcmp.le.f32.partialorder %v2938, 0.25
    %vm5003 = vcmp.le.f32.partialorder %v2941, 0.25
    %vm5004 = vcmp.le.f32.partialorder %v2944, 0.25
    %vm5005 = vcmp.le.f32.partialorder %v2947, 0.25
    %vm5006 = vcmp.le.f32.partialorder %v2950, 0.25
    %vm5007 = vcmp.le.f32.partialorder %v2953, 0.25
    %vm5008 = vcmp.le.f32.partialorder %v2956, 0.25
    %vm5009 = vcmp.le.f32.partialorder %v2959, 0.25
    %vm5010 = vcmp.le.f32.partialorder %v2962, 0.25
    %vm5011 = vcmp.le.f32.partialorder %v2965, 0.25
    %vm5012 = vcmp.le.f32.partialorder %v2968, 0.25
    %vm5013 = vcmp.le.f32.partialorder %v2971, 0.25
    %vm5014 = vcmp.le.f32.partialorder %v2974, 0.25
    %vm5015 = vcmp.le.f32.partialorder %v2977, 0.25
    %vm5016 = vcmp.le.f32.partialorder %v2980, 0.25
    %vm5017 = vcmp.le.f32.partialorder %v2983, 0.25
    %vm5018 = vcmp.le.f32.partialorder %v2986, 0.25
    %vm5019 = vcmp.le.f32.partialorder %v2989, 0.25
    %vm5020 = vcmp.le.f32.partialorder %v2992, 0.25
    %vm5021 = vcmp.le.f32.partialorder %v2995, 0.25
    %vm5022 = vcmp.le.f32.partialorder %v2998, 0.25
    %vm5023 = vcmp.le.f32.partialorder %v3001, 0.25
    %vm5024 = vcmp.le.f32.partialorder %v3004, 0.25
    %vm5025 = vcmp.le.f32.partialorder %v3007, 0.25
    %vm5026 = vcmp.le.f32.partialorder %v3010, 0.25
    %vm5027 = vcmp.le.f32.partialorder %v3013, 0.25
    %vm5028 = vcmp.le.f32.partialorder %v3016, 0.25
    %vm5029 = vcmp.le.f32.partialorder %v3019, 0.25
    %vm5030 = vcmp.le.f32.partialorder %v3022, 0.25
    %vm5031 = vcmp.le.f32.partialorder %v3025, 0.25
    %vm5032 = vcmp.le.f32.partialorder %v3028, 0.25
    %vm5033 = vcmp.le.f32.partialorder %v3031, 0.25
    %vm5034 = vcmp.le.f32.partialorder %v3034, 0.25
    %vm5035 = vcmp.le.f32.partialorder %v3037, 0.25
    %vm5036 = vcmp.le.f32.partialorder %v3040, 0.25
    %vm5037 = vcmp.le.f32.partialorder %v3043, 0.25
    %vm5038 = vcmp.le.f32.partialorder %v3046, 0.25
    %vm5039 = vcmp.le.f32.partialorder %v3049, 0.25
    %vm5040 = vcmp.le.f32.partialorder %v3052, 0.25
    %vm5041 = vcmp.le.f32.partialorder %v3055, 0.25
    %vm5042 = vcmp.le.f32.partialorder %v3058, 0.25
    %vm5043 = vcmp.le.f32.partialorder %v3061, 0.25
    %vm5044 = vcmp.le.f32.partialorder %v3064, 0.25
    %vm5045 = vcmp.le.f32.partialorder %v3067, 0.25
    %vm5046 = vcmp.le.f32.partialorder %v3070, 0.25
    %vm5047 = vcmp.le.f32.partialorder %v3073, 0.25
    %vm5048 = vcmp.le.f32.partialorder %v3076, 0.25
    %vm5049 = vcmp.le.f32.partialorder %v3079, 0.25
    %vm5050 = vcmp.le.f32.partialorder %v3082, 0.25
    %vm5051 = vcmp.le.f32.partialorder %v3085, 0.25
    %vm5052 = vcmp.le.f32.partialorder %v3088, 0.25
    %vm5053 = vcmp.le.f32.partialorder %v3091, 0.25
    %vm5054 = vcmp.le.f32.partialorder %v3094, 0.25
    %vm5055 = vcmp.le.f32.partialorder %v3097, 0.25
    %vm5056 = vcmp.le.f32.partialorder %v3100, 0.25
    %vm5057 = vcmp.le.f32.partialorder %v3103, 0.25
    %vm5058 = vcmp.le.f32.partialorder %v3106, 0.25
    %vm5059 = vcmp.le.f32.partialorder %v3109, 0.25
    %vm5060 = vcmp.le.f32.partialorder %v3112, 0.25
    %vm5061 = vcmp.le.f32.partialorder %v3115, 0.25
    %vm5062 = vcmp.le.f32.partialorder %v3118, 0.25
    %vm5063 = vcmp.le.f32.partialorder %v3121, 0.25
    %vm5064 = vcmp.le.f32.partialorder %v3124, 0.25
    %vm5065 = vcmp.le.f32.partialorder %v3127, 0.25
    %vm5066 = vcmp.le.f32.partialorder %v3130, 0.25
    %vm5067 = vcmp.le.f32.partialorder %v3133, 0.25
    %vm5068 = vcmp.le.f32.partialorder %v3136, 0.25
    %vm5069 = vcmp.le.f32.partialorder %v3139, 0.25
    %vm5070 = vcmp.le.f32.partialorder %v3142, 0.25
    %vm5071 = vcmp.le.f32.partialorder %v3145, 0.25
    %vm5072 = vcmp.le.f32.partialorder %v3148, 0.25
    %vm5073 = vcmp.le.f32.partialorder %v3151, 0.25
    %vm5074 = vmand %vm4818, %vm4946
    %vm5075 = vmand %vm4819, %vm4947
    %vm5076 = vmand %vm4820, %vm4948
    %vm5077 = vmand %vm4821, %vm4949
    %vm5078 = vmand %vm4822, %vm4950
    %vm5079 = vmand %vm4823, %vm4951
    %vm5080 = vmand %vm4824, %vm4952
    %vm5081 = vmand %vm4825, %vm4953
    %vm5082 = vmand %vm4826, %vm4954
    %vm5083 = vmand %vm4827, %vm4955
    %vm5084 = vmand %vm4828, %vm4956
    %vm5085 = vmand %vm4829, %vm4957
    %vm5086 = vmand %vm4830, %vm4958
    %vm5087 = vmand %vm4831, %vm4959
    %vm5088 = vmand %vm4832, %vm4960
    %vm5089 = vmand %vm4833, %vm4961
    %vm5090 = vmand %vm4834, %vm4962
    %vm5091 = vmand %vm4835, %vm4963
    %vm5092 = vmand %vm4836, %vm4964
    %vm5093 = vmand %vm4837, %vm4965
    %vm5094 = vmand %vm4838, %vm4966
    %vm5095 = vmand %vm4839, %vm4967
    %vm5096 = vmand %vm4840, %vm4968
    %vm5097 = vmand %vm4841, %vm4969
    %vm5098 = vmand %vm4842, %vm4970
    %vm5099 = vmand %vm4843, %vm4971
    %vm5100 = vmand %vm4844, %vm4972
    %vm5101 = vmand %vm4845, %vm4973
    %vm5102 = vmand %vm4846, %vm4974
    %vm5103 = vmand %vm4847, %vm4975
    %vm5104 = vmand %vm4848, %vm4976
    %vm5105 = vmand %vm4849, %vm4977
    %vm5106 = vmand %vm4850, %vm4978
    %vm5107 = vmand %vm4851, %vm4979
    %vm5108 = vmand %vm4852, %vm4980
    %vm5109 = vmand %vm4853, %vm4981
    %vm5110 = vmand %vm4854, %vm4982
    %vm5111 = vmand %vm4855, %vm4983
    %vm5112 = vmand %vm4856, %vm4984
    %vm5113 = vmand %vm4857, %vm4985
    %vm5114 = vmand %vm4858, %vm4986
    %vm5115 = vmand %vm4859, %vm4987
    %vm5116 = vmand %vm4860, %vm4988
    %vm5117 = vmand %vm4861, %vm4989
    %vm5118 = vmand %vm4862, %vm4990
    %vm5119 = vmand %vm4863, %vm4991
    %vm5120 = vmand %vm4864, %vm4992
    %vm5121 = vmand %vm4865, %vm4993
    %vm5122 = vmand %vm4866, %vm4994
    %vm5123 = vmand %vm4867, %vm4995
    %vm5124 = vmand %vm4868, %vm4996
    %vm5125 = vmand %vm4869, %vm4997
    %vm5126 = vmand %vm4870, %vm4998
    %vm5127 = vmand %vm4871, %vm4999
    %vm5128 = vmand %vm4872, %vm5000
    %vm5129 = vmand %vm4873, %vm5001
    %vm5130 = vmand %vm4874, %vm5002
    %vm5131 = vmand %vm4875, %vm5003
    %vm5132 = vmand %vm4876, %vm5004
    %vm5133 = vmand %vm4877, %vm5005
    %vm5134 = vmand %vm4878, %vm5006
    %vm5135 = vmand %vm4879, %vm5007
    %vm5136 = vmand %vm4880, %vm5008
    %vm5137 = vmand %vm4881, %vm5009
    %vm5138 = vmand %vm4882, %vm5010
    %vm5139 = vmand %vm4883, %vm5011
    %vm5140 = vmand %vm4884, %vm5012
    %vm5141 = vmand %vm4885, %vm5013
    %vm5142 = vmand %vm4886, %vm5014
    %vm5143 = vmand %vm4887, %vm5015
    %vm5144 = vmand %vm4888, %vm5016
    %vm5145 = vmand %vm4889, %vm5017
    %vm5146 = vmand %vm4890, %vm5018
    %vm5147 = vmand %vm4891, %vm5019
    %vm5148 = vmand %vm4892, %vm5020
    %vm5149 = vmand %vm4893, %vm5021
    %vm5150 = vmand %vm4894, %vm5022
    %vm5151 = vmand %vm4895, %vm5023
    %vm5152 = vmand %vm4896, %vm5024
    %vm5153 = vmand %vm4897, %vm5025
    %vm5154 = vmand %vm4898, %vm5026
    %vm5155 = vmand %vm4899, %vm5027
    %vm5156 = vmand %vm4900, %vm5028
    %vm5157 = vmand %vm4901, %vm5029
    %vm5158 = vmand %vm4902, %vm5030
    %vm5159 = vmand %vm4903, %vm5031
    %vm5160 = vmand %vm4904, %vm5032
    %vm5161 = vmand %vm4905, %vm5033
    %vm5162 = vmand %vm4906, %vm5034
    %vm5163 = vmand %vm4907, %vm5035
    %vm5164 = vmand %vm4908, %vm5036
    %vm5165 = vmand %vm4909, %vm5037
    %vm5166 = vmand %vm4910, %vm5038
    %vm5167 = vmand %vm4911, %vm5039
    %vm5168 = vmand %vm4912, %vm5040
    %vm5169 = vmand %vm4913, %vm5041
    %vm5170 = vmand %vm4914, %vm5042
    %vm5171 = vmand %vm4915, %vm5043
    %vm5172 = vmand %vm4916, %vm5044
    %vm5173 = vmand %vm4917, %vm5045
    %vm5174 = vmand %vm4918, %vm5046
    %vm5175 = vmand %vm4919, %vm5047
    %vm5176 = vmand %vm4920, %vm5048
    %vm5177 = vmand %vm4921, %vm5049
    %vm5178 = vmand %vm4922, %vm5050
    %vm5179 = vmand %vm4923, %vm5051
    %vm5180 = vmand %vm4924, %vm5052
    %vm5181 = vmand %vm4925, %vm5053
    %vm5182 = vmand %vm4926, %vm5054
    %vm5183 = vmand %vm4927, %vm5055
    %vm5184 = vmand %vm4928, %vm5056
    %vm5185 = vmand %vm4929, %vm5057
    %vm5186 = vmand %vm4930, %vm5058
    %vm5187 = vmand %vm4931, %vm5059
    %vm5188 = vmand %vm4932, %vm5060
    %vm5189 = vmand %vm4933, %vm5061
    %vm5190 = vmand %vm4934, %vm5062
    %vm5191 = vmand %vm4935, %vm5063
    %vm5192 = vmand %vm4936, %vm5064
    %vm5193 = vmand %vm4937, %vm5065
    %vm5194 = vmand %vm4938, %vm5066
    %vm5195 = vmand %vm4939, %vm5067
    %vm5196 = vmand %vm4940, %vm5068
    %vm5197 = vmand %vm4941, %vm5069
    %vm5198 = vmand %vm4942, %vm5070
    %vm5199 = vmand %vm4943, %vm5071
    %vm5200 = vmand %vm4944, %vm5072
    %vm5201 = vmand %vm4945, %vm5073
    %v5202 = vld [vmem:[%s7] sm:$0x7]
    %v5203 = vld [vmem:[%s8] sm:$0x3]
    %v5205 = vsel %vm2767, %v316, 0
    %v5208 = vsel %vm2767, %v317, 0
    %v5211 = vsel %vm2767, %v318, 0
    %v5214 = vsel %vm2767, %v319, 0
    %vm5216 = vcmask 1041408
    %v5218 = vsel %vm5216, %v5203, 0
    %5220 = vmatprep.subr.mxu0 0.0
    %5221 = vmatpush1.msra.mxu0 %v5218
    %5222 = vmatprep.subr.mxu0 0.0
    %5223 = vmatpush1.msra.mxu0 0.0
    %5224 = vmatprep.subr.mxu0 0.0
    %5225 = vmatpush1.msra.mxu0 0.0
    %5226 = vmatprep.subr.mxu0 0.0
    %5227 = vmatpush1.msra.mxu0 0.0
    %5228 = vmatprep.subr.mxu0 0.0
    %5229 = vmatpush1.msra.mxu0 0.0
    %5230 = vmatprep.subr.mxu0 0.0
    %5231 = vmatpush1.msra.mxu0 0.0
    %5232 = vmatprep.subr.mxu0 0.0
    %5233 = vmatpush1.msra.mxu0 0.0
    %5234 = vmatprep.subr.mxu0 0.0
    %5235 = vmatpush1.msra.mxu0 0.0
    %5236 = vmatprep.subr.mxu0 0.0
    %5237 = vmatpush1.msra.mxu0 0.0
    %5238 = vmatprep.subr.mxu0 0.0
    %5239 = vmatpush1.msra.mxu0 0.0
    %5240 = vmatprep.subr.mxu0 0.0
    %5241 = vmatpush1.msra.mxu0 0.0
    %5242 = vmatprep.subr.mxu0 0.0
    %5243 = vmatpush1.msra.mxu0 0.0
    %5244 = vmatprep.subr.mxu0 0.0
    %5245 = vmatpush1.msra.mxu0 0.0
    %5246 = vmatprep.subr.mxu0 0.0
    %5247 = vmatpush1.msra.mxu0 0.0
    %5248 = vmatprep.subr.mxu0 0.0
    %5249 = vmatpush1.msra.mxu0 0.0
    %5250 = vmatprep.subr.mxu0 0.0
    %5251 = vmatpush1.msra.mxu0 0.0
    %5252 = vmatprep.subr.mxu0 0.0
    %5253 = vmatpush1.msra.mxu0 0.0
    %5254 = vmatprep.subr.mxu0 0.0
    %5255 = vmatpush1.msra.mxu0 0.0
    %5256 = vmatprep.subr.mxu0 0.0
    %5257 = vmatpush1.msra.mxu0 0.0
    %5258 = vmatprep.subr.mxu0 0.0
    %5259 = vmatpush1.msra.mxu0 0.0
    %5260 = vmatprep.subr.mxu0 0.0
    %5261 = vmatpush1.msra.mxu0 0.0
    %5262 = vmatprep.subr.mxu0 0.0
    %5263 = vmatpush1.msra.mxu0 0.0
    %5264 = vmatprep.subr.mxu0 0.0
    %5265 = vmatpush1.msra.mxu0 0.0
    %5266 = vmatprep.subr.mxu0 0.0
    %5267 = vmatpush1.msra.mxu0 0.0
    %5268 = vmatprep.subr.mxu0 0.0
    %5269 = vmatpush1.msra.mxu0 0.0
    %5270 = vmatprep.subr.mxu0 0.0
    %5271 = vmatpush1.msra.mxu0 0.0
    %5272 = vmatprep.subr.mxu0 0.0
    %5273 = vmatpush1.msra.mxu0 0.0
    %5274 = vmatprep.subr.mxu0 0.0
    %5275 = vmatpush1.msra.mxu0 0.0
    %5276 = vmatprep.subr.mxu0 0.0
    %5277 = vmatpush1.msra.mxu0 0.0
    %5278 = vmatprep.subr.mxu0 0.0
    %5279 = vmatpush1.msra.mxu0 0.0
    %5280 = vmatprep.subr.mxu0 0.0
    %5281 = vmatpush1.msra.mxu0 0.0
    %5282 = vmatprep.subr.mxu0 0.0
    %5283 = vmatpush1.msra.mxu0 0.0
    %5284 = vmatprep.mubr.f32.mxu0 0.0
    %5285 = vmatmul.mubr.f32.gmra.mrb[0].mxu0 %v5205
    %v5286 = vpop.f32.mrb[0].mxu0
    %v5287 = vadd.f32 0.0, %v5286
    %v5288 = vpop.f32.mrb[0].mxu0
    %5289 = vmatprep.mubr.f32.mxu0 0.0
    %5290 = vmatmul.mubr.f32.gmra.mrb[0].mxu0 %v5208
    %v5291 = vpop.f32.mrb[0].mxu0
    %v5292 = vadd.f32 0.0, %v5291
    %v5293 = vpop.f32.mrb[0].mxu0
    %5294 = vmatprep.mubr.f32.mxu0 0.0
    %5295 = vmatmul.mubr.f32.gmra.mrb[0].mxu0 %v5211
    %v5296 = vpop.f32.mrb[0].mxu0
    %v5297 = vadd.f32 0.0, %v5296
    %v5298 = vpop.f32.mrb[0].mxu0
    %5299 = vmatprep.mubr.f32.mxu0 0.0
    %5300 = vmatmul.mubr.f32.gmra.mrb[0].mxu0 %v5214
    %v5301 = vpop.f32.mrb[0].mxu0
    %v5302 = vadd.f32 0.0, %v5301
    %v5303 = vpop.f32.mrb[0].mxu0
    %5304 = vdwg.mxu0
    %vm5305 = vcmask 23552
    %v5307 = vsel %vm5305, %v312, 0
    %v5310 = vsel %vm5305, %v313, 0
    %v5313 = vsel %vm5305, %v314, 0
    %v5316 = vsel %vm5305, %v315, 0
    %vm5318 = vcmask 1042432
    %v5320 = vsel %vm5318, %v5202, 0
    %5322 = vmatprep.subr.mxu0 0.0
    %5323 = vmatpush1.msra.mxu0 %v5320
    %5324 = vmatprep.subr.mxu0 0.0
    %5325 = vmatpush1.msra.mxu0 0.0
    %5326 = vmatprep.subr.mxu0 0.0
    %5327 = vmatpush1.msra.mxu0 0.0
    %5328 = vmatprep.subr.mxu0 0.0
    %5329 = vmatpush1.msra.mxu0 0.0
    %5330 = vmatprep.subr.mxu0 0.0
    %5331 = vmatpush1.msra.mxu0 0.0
    %5332 = vmatprep.subr.mxu0 0.0
    %5333 = vmatpush1.msra.mxu0 0.0
    %5334 = vmatprep.subr.mxu0 0.0
    %5335 = vmatpush1.msra.mxu0 0.0
    %5336 = vmatprep.subr.mxu0 0.0
    %5337 = vmatpush1.msra.mxu0 0.0
    %5338 = vmatprep.subr.mxu0 0.0
    %5339 = vmatpush1.msra.mxu0 0.0
    %5340 = vmatprep.subr.mxu0 0.0
    %5341 = vmatpush1.msra.mxu0 0.0
    %5342 = vmatprep.subr.mxu0 0.0
    %5343 = vmatpush1.msra.mxu0 0.0
    %5344 = vmatprep.subr.mxu0 0.0
    %5345 = vmatpush1.msra.mxu0 0.0
    %5346 = vmatprep.subr.mxu0 0.0
    %5347 = vmatpush1.msra.mxu0 0.0
    %5348 = vmatprep.subr.mxu0 0.0
    %5349 = vmatpush1.msra.mxu0 0.0
    %5350 = vmatprep.subr.mxu0 0.0
    %5351 = vmatpush1.msra.mxu0 0.0
    %5352 = vmatprep.subr.mxu0 0.0
    %5353 = vmatpush1.msra.mxu0 0.0
    %5354 = vmatprep.subr.mxu0 0.0
    %5355 = vmatpush1.msra.mxu0 0.0
    %5356 = vmatprep.subr.mxu0 0.0
    %5357 = vmatpush1.msra.mxu0 0.0
    %5358 = vmatprep.subr.mxu0 0.0
    %5359 = vmatpush1.msra.mxu0 0.0
    %5360 = vmatprep.subr.mxu0 0.0
    %5361 = vmatpush1.msra.mxu0 0.0
    %5362 = vmatprep.subr.mxu0 0.0
    %5363 = vmatpush1.msra.mxu0 0.0
    %5364 = vmatprep.subr.mxu0 0.0
    %5365 = vmatpush1.msra.mxu0 0.0
    %5366 = vmatprep.subr.mxu0 0.0
    %5367 = vmatpush1.msra.mxu0 0.0
    %5368 = vmatprep.subr.mxu0 0.0
    %5369 = vmatpush1.msra.mxu0 0.0
    %5370 = vmatprep.subr.mxu0 0.0
    %5371 = vmatpush1.msra.mxu0 0.0
    %5372 = vmatprep.subr.mxu0 0.0
    %5373 = vmatpush1.msra.mxu0 0.0
    %5374 = vmatprep.subr.mxu0 0.0
    %5375 = vmatpush1.msra.mxu0 0.0
    %5376 = vmatprep.subr.mxu0 0.0
    %5377 = vmatpush1.msra.mxu0 0.0
    %5378 = vmatprep.subr.mxu0 0.0
    %5379 = vmatpush1.msra.mxu0 0.0
    %5380 = vmatprep.subr.mxu0 0.0
    %5381 = vmatpush1.msra.mxu0 0.0
    %5382 = vmatprep.subr.mxu0 0.0
    %5383 = vmatpush1.msra.mxu0 0.0
    %5384 = vmatprep.subr.mxu0 0.0
    %5385 = vmatpush1.msra.mxu0 0.0
    %5386 = vmatprep.mubr.f32.mxu0 0.0
    %5387 = vmatmul.mubr.f32.gmra.mrb[0].mxu0 %v5307
    %v5388 = vpop.f32.mrb[0].mxu0
    %v5389 = vadd.f32 %v5287, %v5388
    %v5390 = vpop.f32.mrb[0].mxu0
    %5391 = vmatprep.mubr.f32.mxu0 0.0
    %5392 = vmatmul.mubr.f32.gmra.mrb[0].mxu0 %v5310
    %v5393 = vpop.f32.mrb[0].mxu0
    %v5394 = vadd.f32 %v5292, %v5393
    %v5395 = vpop.f32.mrb[0].mxu0
    %5396 = vmatprep.mubr.f32.mxu0 0.0
    %5397 = vmatmul.mubr.f32.gmra.mrb[0].mxu0 %v5313
    %v5398 = vpop.f32.mrb[0].mxu0
    %v5399 = vadd.f32 %v5297, %v5398
    %v5400 = vpop.f32.mrb[0].mxu0
    %5401 = vmatprep.mubr.f32.mxu0 0.0
    %5402 = vmatmul.mubr.f32.gmra.mrb[0].mxu0 %v5316
    %v5403 = vpop.f32.mrb[0].mxu0
    %v5404 = vadd.f32 %v5302, %v5403
    %v5405 = vpop.f32.mrb[0].mxu0
    %5406 = vdwg.mxu0
    %v5408 = vsel %vm2767, %v324, 0
    %v5411 = vsel %vm2767, %v325, 0
    %v5414 = vsel %vm2767, %v326, 0
    %v5417 = vsel %vm2767, %v327, 0
    %5419 = vmatprep.subr.mxu0 0.0
    %5420 = vmatpush1.msra.mxu0 %v5218
    %5421 = vmatprep.subr.mxu0 0.0
    %5422 = vmatpush1.msra.mxu0 0.0
    %5423 = vmatprep.subr.mxu0 0.0
    %5424 = vmatpush1.msra.mxu0 0.0
    %5425 = vmatprep.subr.mxu0 0.0
    %5426 = vmatpush1.msra.mxu0 0.0
    %5427 = vmatprep.subr.mxu0 0.0
    %5428 = vmatpush1.msra.mxu0 0.0
    %5429 = vmatprep.subr.mxu0 0.0
    %5430 = vmatpush1.msra.mxu0 0.0
    %5431 = vmatprep.subr.mxu0 0.0
    %5432 = vmatpush1.msra.mxu0 0.0
    %5433 = vmatprep.subr.mxu0 0.0
    %5434 = vmatpush1.msra.mxu0 0.0
    %5435 = vmatprep.subr.mxu0 0.0
    %5436 = vmatpush1.msra.mxu0 0.0
    %5437 = vmatprep.subr.mxu0 0.0
    %5438 = vmatpush1.msra.mxu0 0.0
    %5439 = vmatprep.subr.mxu0 0.0
    %5440 = vmatpush1.msra.mxu0 0.0
    %5441 = vmatprep.subr.mxu0 0.0
    %5442 = vmatpush1.msra.mxu0 0.0
    %5443 = vmatprep.subr.mxu0 0.0
    %5444 = vmatpush1.msra.mxu0 0.0
    %5445 = vmatprep.subr.mxu0 0.0
    %5446 = vmatpush1.msra.mxu0 0.0
    %5447 = vmatprep.subr.mxu0 0.0
    %5448 = vmatpush1.msra.mxu0 0.0
    %5449 = vmatprep.subr.mxu0 0.0
    %5450 = vmatpush1.msra.mxu0 0.0
    %5451 = vmatprep.subr.mxu0 0.0
    %5452 = vmatpush1.msra.mxu0 0.0
    %5453 = vmatprep.subr.mxu0 0.0
    %5454 = vmatpush1.msra.mxu0 0.0
    %5455 = vmatprep.subr.mxu0 0.0
    %5456 = vmatpush1.msra.mxu0 0.0
    %5457 = vmatprep.subr.mxu0 0.0
    %5458 = vmatpush1.msra.mxu0 0.0
    %5459 = vmatprep.subr.mxu0 0.0
    %5460 = vmatpush1.msra.mxu0 0.0
    %5461 = vmatprep.subr.mxu0 0.0
    %5462 = vmatpush1.msra.mxu0 0.0
    %5463 = vmatprep.subr.mxu0 0.0
    %5464 = vmatpush1.msra.mxu0 0.0
    %5465 = vmatprep.subr.mxu0 0.0
    %5466 = vmatpush1.msra.mxu0 0.0
    %5467 = vmatprep.subr.mxu0 0.0
    %5468 = vmatpush1.msra.mxu0 0.0
    %5469 = vmatprep.subr.mxu0 0.0
    %5470 = vmatpush1.msra.mxu0 0.0
    %5471 = vmatprep.subr.mxu0 0.0
    %5472 = vmatpush1.msra.mxu0 0.0
    %5473 = vmatprep.subr.mxu0 0.0
    %5474 = vmatpush1.msra.mxu0 0.0
    %5475 = vmatprep.subr.mxu0 0.0
    %5476 = vmatpush1.msra.mxu0 0.0
    %5477 = vmatprep.subr.mxu0 0.0
    %5478 = vmatpush1.msra.mxu0 0.0
    %5479 = vmatprep.subr.mxu0 0.0
    %5480 = vmatpush1.msra.mxu0 0.0
    %5481 = vmatprep.subr.mxu0 0.0
    %5482 = vmatpush1.msra.mxu0 0.0
    %5483 = vmatprep.mubr.f32.mxu0 0.0
    %5484 = vmatmul.mubr.f32.gmra.mrb[0].mxu0 %v5408
    %v5485 = vpop.f32.mrb[0].mxu0
    %v5486 = vadd.f32 0.0, %v5485
    %v5487 = vpop.f32.mrb[0].mxu0
    %5488 = vmatprep.mubr.f32.mxu0 0.0
    %5489 = vmatmul.mubr.f32.gmra.mrb[0].mxu0 %v5411
    %v5490 = vpop.f32.mrb[0].mxu0
    %v5491 = vadd.f32 0.0, %v5490
    %v5492 = vpop.f32.mrb[0].mxu0
    %5493 = vmatprep.mubr.f32.mxu0 0.0
    %5494 = vmatmul.mubr.f32.gmra.mrb[0].mxu0 %v5414
    %v5495 = vpop.f32.mrb[0].mxu0
    %v5496 = vadd.f32 0.0, %v5495
    %v5497 = vpop.f32.mrb[0].mxu0
    %5498 = vmatprep.mubr.f32.mxu0 0.0
    %5499 = vmatmul.mubr.f32.gmra.mrb[0].mxu0 %v5417
    %v5500 = vpop.f32.mrb[0].mxu0
    %v5501 = vadd.f32 0.0, %v5500
    %v5502 = vpop.f32.mrb[0].mxu0
    %5503 = vdwg.mxu0
    %5504 = vmatprep.subr.mxu0 0.0
    %5505 = vmatpush1.msra.mxu0 %v5389
    %5506 = vmatprep.subr.mxu0 0.0
    %5507 = vmatpush1.msra.mxu0 %v5394
    %5508 = vmatprep.subr.mxu0 0.0
    %5509 = vmatpush1.msra.mxu0 %v5399
    %5510 = vmatprep.subr.mxu0 0.0
    %5511 = vmatpush1.msra.mxu0 %v5404
    %5512 = vmatprep.subr.mxu0 0.0
    %5513 = vmatpush1.msra.mxu0 0.0
    %5514 = vmatprep.subr.mxu0 0.0
    %5515 = vmatpush1.msra.mxu0 0.0
    %5516 = vmatprep.subr.mxu0 0.0
    %5517 = vmatpush1.msra.mxu0 0.0
    %5518 = vmatprep.subr.mxu0 0.0
    %5519 = vmatpush1.msra.mxu0 0.0
    %5520 = vmatprep.subr.mxu0 0.0
    %5521 = vmatpush1.msra.mxu0 0.0
    %5522 = vmatprep.subr.mxu0 0.0
    %5523 = vmatpush1.msra.mxu0 0.0
    %5524 = vmatprep.subr.mxu0 0.0
    %5525 = vmatpush1.msra.mxu0 0.0
    %5526 = vmatprep.subr.mxu0 0.0
    %5527 = vmatpush1.msra.mxu0 0.0
    %5528 = vmatprep.subr.mxu0 0.0
    %5529 = vmatpush1.msra.mxu0 0.0
    %5530 = vmatprep.subr.mxu0 0.0
    %5531 = vmatpush1.msra.mxu0 0.0
    %5532 = vmatprep.subr.mxu0 0.0
    %5533 = vmatpush1.msra.mxu0 0.0
    %5534 = vmatprep.subr.mxu0 0.0
    %5535 = vmatpush1.msra.mxu0 0.0
    %5536 = vmatprep.subr.mxu0 0.0
    %5537 = vmatpush1.msra.mxu0 0.0
    %5538 = vmatprep.subr.mxu0 0.0
    %5539 = vmatpush1.msra.mxu0 0.0
    %5540 = vmatprep.subr.mxu0 0.0
    %5541 = vmatpush1.msra.mxu0 0.0
    %5542 = vmatprep.subr.mxu0 0.0
    %5543 = vmatpush1.msra.mxu0 0.0
    %5544 = vmatprep.subr.mxu0 0.0
    %5545 = vmatpush1.msra.mxu0 0.0
    %5546 = vmatprep.subr.mxu0 0.0
    %5547 = vmatpush1.msra.mxu0 0.0
    %5548 = vmatprep.subr.mxu0 0.0
    %5549 = vmatpush1.msra.mxu0 0.0
    %5550 = vmatprep.subr.mxu0 0.0
    %5551 = vmatpush1.msra.mxu0 0.0
    %5552 = vmatprep.subr.mxu0 0.0
    %5553 = vmatpush1.msra.mxu0 0.0
    %5554 = vmatprep.subr.mxu0 0.0
    %5555 = vmatpush1.msra.mxu0 0.0
    %5556 = vmatprep.subr.mxu0 0.0
    %5557 = vmatpush1.msra.mxu0 0.0
    %5558 = vmatprep.subr.mxu0 0.0
    %5559 = vmatpush1.msra.mxu0 0.0
    %5560 = vmatprep.subr.mxu0 0.0
    %5561 = vmatpush1.msra.mxu0 0.0
    %5562 = vmatprep.subr.mxu0 0.0
    %5563 = vmatpush1.msra.mxu0 0.0
    %5564 = vmatprep.subr.mxu0 0.0
    %5565 = vmatpush1.msra.mxu0 0.0
    %5566 = vmatprep.subr.mxu0 0.0
    %5567 = vmatpush1.msra.mxu0 0.0
    %5568 = vmatprep.mubr.f32.mxu0 0.0
    %5569 = vmatmul.mubr.f32.gmra.mrb[0].mxu0 %v334
    %v5570 = vpop.f32.mrb[0].mxu0
    %v5571 = vadd.f32 0.0, %v5570
    %v5572 = vpop.f32.mrb[0].mxu0
    %5573 = vmatprep.mubr.f32.mxu0 0.0
    %5574 = vmatmul.mubr.f32.gmra.mrb[0].mxu0 %v337
    %v5575 = vpop.f32.mrb[0].mxu0
    %v5576 = vadd.f32 0.0, %v5575
    %v5577 = vpop.f32.mrb[0].mxu0
    %5578 = vmatprep.mubr.f32.mxu0 0.0
    %5579 = vmatmul.mubr.f32.gmra.mrb[0].mxu0 %v340
    %v5580 = vpop.f32.mrb[0].mxu0
    %v5581 = vadd.f32 0.0, %v5580
    %v5582 = vpop.f32.mrb[0].mxu0
    %5583 = vmatprep.mubr.f32.mxu0 0.0
    %5584 = vmatmul.mubr.f32.gmra.mrb[0].mxu0 %v343
    %v5585 = vpop.f32.mrb[0].mxu0
    %v5586 = vadd.f32 0.0, %v5585
    %v5587 = vpop.f32.mrb[0].mxu0
    %5588 = vmatprep.mubr.f32.mxu0 0.0
    %5589 = vmatmul.mubr.f32.gmra.mrb[0].mxu0 %v346
    %v5590 = vpop.f32.mrb[0].mxu0
    %v5591 = vadd.f32 0.0, %v5590
    %v5592 = vpop.f32.mrb[0].mxu0
    %5593 = vmatprep.mubr.f32.mxu0 0.0
    %5594 = vmatmul.mubr.f32.gmra.mrb[0].mxu0 %v349
    %v5595 = vpop.f32.mrb[0].mxu0
    %v5596 = vadd.f32 0.0, %v5595
    %v5597 = vpop.f32.mrb[0].mxu0
    %5598 = vmatprep.mubr.f32.mxu0 0.0
    %5599 = vmatmul.mubr.f32.gmra.mrb[0].mxu0 %v352
    %v5600 = vpop.f32.mrb[0].mxu0
    %v5601 = vadd.f32 0.0, %v5600
    %v5602 = vpop.f32.mrb[0].mxu0
    %5603 = vmatprep.mubr.f32.mxu0 0.0
    %5604 = vmatmul.mubr.f32.gmra.mrb[0].mxu0 %v355
    %v5605 = vpop.f32.mrb[0].mxu0
    %v5606 = vadd.f32 0.0, %v5605
    %v5607 = vpop.f32.mrb[0].mxu0
    %5608 = vmatprep.mubr.f32.mxu0 0.0
    %5609 = vmatmul.mubr.f32.gmra.mrb[0].mxu0 %v358
    %v5610 = vpop.f32.mrb[0].mxu0
    %v5611 = vadd.f32 0.0, %v5610
    %v5612 = vpop.f32.mrb[0].mxu0
    %5613 = vmatprep.mubr.f32.mxu0 0.0
    %5614 = vmatmul.mubr.f32.gmra.mrb[0].mxu0 %v361
    %v5615 = vpop.f32.mrb[0].mxu0
    %v5616 = vadd.f32 0.0, %v5615
    %v5617 = vpop.f32.mrb[0].mxu0
    %5618 = vmatprep.mubr.f32.mxu0 0.0
    %5619 = vmatmul.mubr.f32.gmra.mrb[0].mxu0 %v364
    %v5620 = vpop.f32.mrb[0].mxu0
    %v5621 = vadd.f32 0.0, %v5620
    %v5622 = vpop.f32.mrb[0].mxu0
    %5623 = vmatprep.mubr.f32.mxu0 0.0
    %5624 = vmatmul.mubr.f32.gmra.mrb[0].mxu0 %v367
    %v5625 = vpop.f32.mrb[0].mxu0
    %v5626 = vadd.f32 0.0, %v5625
    %v5627 = vpop.f32.mrb[0].mxu0
    %5628 = vmatprep.mubr.f32.mxu0 0.0
    %5629 = vmatmul.mubr.f32.gmra.mrb[0].mxu0 %v370
    %v5630 = vpop.f32.mrb[0].mxu0
    %v5631 = vadd.f32 0.0, %v5630
    %v5632 = vpop.f32.mrb[0].mxu0
    %5633 = vmatprep.mubr.f32.mxu0 0.0
    %5634 = vmatmul.mubr.f32.gmra.mrb[0].mxu0 %v373
    %v5635 = vpop.f32.mrb[0].mxu0
    %v5636 = vadd.f32 0.0, %v5635
    %v5637 = vpop.f32.mrb[0].mxu0
    %5638 = vmatprep.mubr.f32.mxu0 0.0
    %5639 = vmatmul.mubr.f32.gmra.mrb[0].mxu0 %v376
    %v5640 = vpop.f32.mrb[0].mxu0
    %v5641 = vadd.f32 0.0, %v5640
    %v5642 = vpop.f32.mrb[0].mxu0
    %5643 = vmatprep.mubr.f32.mxu0 0.0
    %5644 = vmatmul.mubr.f32.gmra.mrb[0].mxu0 %v379
    %v5645 = vpop.f32.mrb[0].mxu0
    %v5646 = vadd.f32 0.0, %v5645
    %v5647 = vpop.f32.mrb[0].mxu0
    %5648 = vmatprep.mubr.f32.mxu0 0.0
    %5649 = vmatmul.mubr.f32.gmra.mrb[0].mxu0 %v382
    %v5650 = vpop.f32.mrb[0].mxu0
    %v5651 = vadd.f32 0.0, %v5650
    %v5652 = vpop.f32.mrb[0].mxu0
    %5653 = vmatprep.mubr.f32.mxu0 0.0
    %5654 = vmatmul.mubr.f32.gmra.mrb[0].mxu0 %v385
    %v5655 = vpop.f32.mrb[0].mxu0
    %v5656 = vadd.f32 0.0, %v5655
    %v5657 = vpop.f32.mrb[0].mxu0
    %5658 = vmatprep.mubr.f32.mxu0 0.0
    %5659 = vmatmul.mubr.f32.gmra.mrb[0].mxu0 %v388
    %v5660 = vpop.f32.mrb[0].mxu0
    %v5661 = vadd.f32 0.0, %v5660
    %v5662 = vpop.f32.mrb[0].mxu0
    %5663 = vmatprep.mubr.f32.mxu0 0.0
    %5664 = vmatmul.mubr.f32.gmra.mrb[0].mxu0 %v391
    %v5665 = vpop.f32.mrb[0].mxu0
    %v5666 = vadd.f32 0.0, %v5665
    %v5667 = vpop.f32.mrb[0].mxu0
    %5668 = vmatprep.mubr.f32.mxu0 0.0
    %5669 = vmatmul.mubr.f32.gmra.mrb[0].mxu0 %v394
    %v5670 = vpop.f32.mrb[0].mxu0
    %v5671 = vadd.f32 0.0, %v5670
    %v5672 = vpop.f32.mrb[0].mxu0
    %5673 = vmatprep.mubr.f32.mxu0 0.0
    %5674 = vmatmul.mubr.f32.gmra.mrb[0].mxu0 %v397
    %v5675 = vpop.f32.mrb[0].mxu0
    %v5676 = vadd.f32 0.0, %v5675
    %v5677 = vpop.f32.mrb[0].mxu0
    %5678 = vmatprep.mubr.f32.mxu0 0.0
    %5679 = vmatmul.mubr.f32.gmra.mrb[0].mxu0 %v400
    %v5680 = vpop.f32.mrb[0].mxu0
    %v5681 = vadd.f32 0.0, %v5680
    %v5682 = vpop.f32.mrb[0].mxu0
    %5683 = vmatprep.mubr.f32.mxu0 0.0
    %5684 = vmatmul.mubr.f32.gmra.mrb[0].mxu0 %v403
    %v5685 = vpop.f32.mrb[0].mxu0
    %v5686 = vadd.f32 0.0, %v5685
    %v5687 = vpop.f32.mrb[0].mxu0
    %5688 = vmatprep.mubr.f32.mxu0 0.0
    %5689 = vmatmul.mubr.f32.gmra.mrb[0].mxu0 %v406
    %v5690 = vpop.f32.mrb[0].mxu0
    %v5691 = vadd.f32 0.0, %v5690
    %v5692 = vpop.f32.mrb[0].mxu0
    %5693 = vmatprep.mubr.f32.mxu0 0.0
    %5694 = vmatmul.mubr.f32.gmra.mrb[0].mxu0 %v409
    %v5695 = vpop.f32.mrb[0].mxu0
    %v5696 = vadd.f32 0.0, %v5695
    %v5697 = vpop.f32.mrb[0].mxu0
    %5698 = vmatprep.mubr.f32.mxu0 0.0
    %5699 = vmatmul.mubr.f32.gmra.mrb[0].mxu0 %v412
    %v5700 = vpop.f32.mrb[0].mxu0
    %v5701 = vadd.f32 0.0, %v5700
    %v5702 = vpop.f32.mrb[0].mxu0
    %5703 = vmatprep.mubr.f32.mxu0 0.0
    %5704 = vmatmul.mubr.f32.gmra.mrb[0].mxu0 %v415
    %v5705 = vpop.f32.mrb[0].mxu0
    %v5706 = vadd.f32 0.0, %v5705
    %v5707 = vpop.f32.mrb[0].mxu0
    %5708 = vmatprep.mubr.f32.mxu0 0.0
    %5709 = vmatmul.mubr.f32.gmra.mrb[0].mxu0 %v418
    %v5710 = vpop.f32.mrb[0].mxu0
    %v5711 = vadd.f32 0.0, %v5710
    %v5712 = vpop.f32.mrb[0].mxu0
    %5713 = vmatprep.mubr.f32.mxu0 0.0
    %5714 = vmatmul.mubr.f32.gmra.mrb[0].mxu0 %v421
    %v5715 = vpop.f32.mrb[0].mxu0
    %v5716 = vadd.f32 0.0, %v5715
    %v5717 = vpop.f32.mrb[0].mxu0
    %5718 = vmatprep.mubr.f32.mxu0 0.0
    %5719 = vmatmul.mubr.f32.gmra.mrb[0].mxu0 %v424
    %v5720 = vpop.f32.mrb[0].mxu0
    %v5721 = vadd.f32 0.0, %v5720
    %v5722 = vpop.f32.mrb[0].mxu0
    %5723 = vmatprep.mubr.f32.mxu0 0.0
    %5724 = vmatmul.mubr.f32.gmra.mrb[0].mxu0 %v427
    %v5725 = vpop.f32.mrb[0].mxu0
    %v5726 = vadd.f32 0.0, %v5725
    %v5727 = vpop.f32.mrb[0].mxu0
    %5728 = vmatprep.mubr.f32.mxu0 0.0
    %5729 = vmatmul.mubr.f32.gmra.mrb[0].mxu0 %v430
    %v5730 = vpop.f32.mrb[0].mxu0
    %v5731 = vadd.f32 0.0, %v5730
    %v5732 = vpop.f32.mrb[0].mxu0
    %5733 = vmatprep.mubr.f32.mxu0 0.0
    %5734 = vmatmul.mubr.f32.gmra.mrb[0].mxu0 %v433
    %v5735 = vpop.f32.mrb[0].mxu0
    %v5736 = vadd.f32 0.0, %v5735
    %v5737 = vpop.f32.mrb[0].mxu0
    %5738 = vmatprep.mubr.f32.mxu0 0.0
    %5739 = vmatmul.mubr.f32.gmra.mrb[0].mxu0 %v436
    %v5740 = vpop.f32.mrb[0].mxu0
    %v5741 = vadd.f32 0.0, %v5740
    %v5742 = vpop.f32.mrb[0].mxu0
    %5743 = vmatprep.mubr.f32.mxu0 0.0
    %5744 = vmatmul.mubr.f32.gmra.mrb[0].mxu0 %v439
    %v5745 = vpop.f32.mrb[0].mxu0
    %v5746 = vadd.f32 0.0, %v5745
    %v5747 = vpop.f32.mrb[0].mxu0
    %5748 = vmatprep.mubr.f32.mxu0 0.0
    %5749 = vmatmul.mubr.f32.gmra.mrb[0].mxu0 %v442
    %v5750 = vpop.f32.mrb[0].mxu0
    %v5751 = vadd.f32 0.0, %v5750
    %v5752 = vpop.f32.mrb[0].mxu0
    %5753 = vmatprep.mubr.f32.mxu0 0.0
    %5754 = vmatmul.mubr.f32.gmra.mrb[0].mxu0 %v445
    %v5755 = vpop.f32.mrb[0].mxu0
    %v5756 = vadd.f32 0.0, %v5755
    %v5757 = vpop.f32.mrb[0].mxu0
    %5758 = vmatprep.mubr.f32.mxu0 0.0
    %5759 = vmatmul.mubr.f32.gmra.mrb[0].mxu0 %v448
    %v5760 = vpop.f32.mrb[0].mxu0
    %v5761 = vadd.f32 0.0, %v5760
    %v5762 = vpop.f32.mrb[0].mxu0
    %5763 = vmatprep.mubr.f32.mxu0 0.0
    %5764 = vmatmul.mubr.f32.gmra.mrb[0].mxu0 %v451
    %v5765 = vpop.f32.mrb[0].mxu0
    %v5766 = vadd.f32 0.0, %v5765
    %v5767 = vpop.f32.mrb[0].mxu0
    %5768 = vmatprep.mubr.f32.mxu0 0.0
    %5769 = vmatmul.mubr.f32.gmra.mrb[0].mxu0 %v454
    %v5770 = vpop.f32.mrb[0].mxu0
    %v5771 = vadd.f32 0.0, %v5770
    %v5772 = vpop.f32.mrb[0].mxu0
    %5773 = vmatprep.mubr.f32.mxu0 0.0
    %5774 = vmatmul.mubr.f32.gmra.mrb[0].mxu0 %v457
    %v5775 = vpop.f32.mrb[0].mxu0
    %v5776 = vadd.f32 0.0, %v5775
    %v5777 = vpop.f32.mrb[0].mxu0
    %5778 = vmatprep.mubr.f32.mxu0 0.0
    %5779 = vmatmul.mubr.f32.gmra.mrb[0].mxu0 %v460
    %v5780 = vpop.f32.mrb[0].mxu0
    %v5781 = vadd.f32 0.0, %v5780
    %v5782 = vpop.f32.mrb[0].mxu0
    %5783 = vmatprep.mubr.f32.mxu0 0.0
    %5784 = vmatmul.mubr.f32.gmra.mrb[0].mxu0 %v463
    %v5785 = vpop.f32.mrb[0].mxu0
    %v5786 = vadd.f32 0.0, %v5785
    %v5787 = vpop.f32.mrb[0].mxu0
    %5788 = vmatprep.mubr.f32.mxu0 0.0
    %5789 = vmatmul.mubr.f32.gmra.mrb[0].mxu0 %v466
    %v5790 = vpop.f32.mrb[0].mxu0
    %v5791 = vadd.f32 0.0, %v5790
    %v5792 = vpop.f32.mrb[0].mxu0
    %5793 = vmatprep.mubr.f32.mxu0 0.0
    %5794 = vmatmul.mubr.f32.gmra.mrb[0].mxu0 %v469
    %v5795 = vpop.f32.mrb[0].mxu0
    %v5796 = vadd.f32 0.0, %v5795
    %v5797 = vpop.f32.mrb[0].mxu0
    %5798 = vmatprep.mubr.f32.mxu0 0.0
    %5799 = vmatmul.mubr.f32.gmra.mrb[0].mxu0 %v472
    %v5800 = vpop.f32.mrb[0].mxu0
    %v5801 = vadd.f32 0.0, %v5800
    %v5802 = vpop.f32.mrb[0].mxu0
    %5803 = vmatprep.mubr.f32.mxu0 0.0
    %5804 = vmatmul.mubr.f32.gmra.mrb[0].mxu0 %v475
    %v5805 = vpop.f32.mrb[0].mxu0
    %v5806 = vadd.f32 0.0, %v5805
    %v5807 = vpop.f32.mrb[0].mxu0
    %5808 = vmatprep.mubr.f32.mxu0 0.0
    %5809 = vmatmul.mubr.f32.gmra.mrb[0].mxu0 %v478
    %v5810 = vpop.f32.mrb[0].mxu0
    %v5811 = vadd.f32 0.0, %v5810
    %v5812 = vpop.f32.mrb[0].mxu0
    %5813 = vmatprep.mubr.f32.mxu0 0.0
    %5814 = vmatmul.mubr.f32.gmra.mrb[0].mxu0 %v481
    %v5815 = vpop.f32.mrb[0].mxu0
    %v5816 = vadd.f32 0.0, %v5815
    %v5817 = vpop.f32.mrb[0].mxu0
    %5818 = vmatprep.mubr.f32.mxu0 0.0
    %5819 = vmatmul.mubr.f32.gmra.mrb[0].mxu0 %v484
    %v5820 = vpop.f32.mrb[0].mxu0
    %v5821 = vadd.f32 0.0, %v5820
    %v5822 = vpop.f32.mrb[0].mxu0
    %5823 = vmatprep.mubr.f32.mxu0 0.0
    %5824 = vmatmul.mubr.f32.gmra.mrb[0].mxu0 %v487
    %v5825 = vpop.f32.mrb[0].mxu0
    %v5826 = vadd.f32 0.0, %v5825
    %v5827 = vpop.f32.mrb[0].mxu0
    %5828 = vmatprep.mubr.f32.mxu0 0.0
    %5829 = vmatmul.mubr.f32.gmra.mrb[0].mxu0 %v490
    %v5830 = vpop.f32.mrb[0].mxu0
    %v5831 = vadd.f32 0.0, %v5830
    %v5832 = vpop.f32.mrb[0].mxu0
    %5833 = vmatprep.mubr.f32.mxu0 0.0
    %5834 = vmatmul.mubr.f32.gmra.mrb[0].mxu0 %v493
    %v5835 = vpop.f32.mrb[0].mxu0
    %v5836 = vadd.f32 0.0, %v5835
    %v5837 = vpop.f32.mrb[0].mxu0
    %5838 = vmatprep.mubr.f32.mxu0 0.0
    %5839 = vmatmul.mubr.f32.gmra.mrb[0].mxu0 %v496
    %v5840 = vpop.f32.mrb[0].mxu0
    %v5841 = vadd.f32 0.0, %v5840
    %v5842 = vpop.f32.mrb[0].mxu0
    %5843 = vmatprep.mubr.f32.mxu0 0.0
    %5844 = vmatmul.mubr.f32.gmra.mrb[0].mxu0 %v499
    %v5845 = vpop.f32.mrb[0].mxu0
    %v5846 = vadd.f32 0.0, %v5845
    %v5847 = vpop.f32.mrb[0].mxu0
    %5848 = vmatprep.mubr.f32.mxu0 0.0
    %5849 = vmatmul.mubr.f32.gmra.mrb[0].mxu0 %v502
    %v5850 = vpop.f32.mrb[0].mxu0
    %v5851 = vadd.f32 0.0, %v5850
    %v5852 = vpop.f32.mrb[0].mxu0
    %5853 = vmatprep.mubr.f32.mxu0 0.0
    %5854 = vmatmul.mubr.f32.gmra.mrb[0].mxu0 %v505
    %v5855 = vpop.f32.mrb[0].mxu0
    %v5856 = vadd.f32 0.0, %v5855
    %v5857 = vpop.f32.mrb[0].mxu0
    %5858 = vmatprep.mubr.f32.mxu0 0.0
    %5859 = vmatmul.mubr.f32.gmra.mrb[0].mxu0 %v508
    %v5860 = vpop.f32.mrb[0].mxu0
    %v5861 = vadd.f32 0.0, %v5860
    %v5862 = vpop.f32.mrb[0].mxu0
    %5863 = vmatprep.mubr.f32.mxu0 0.0
    %5864 = vmatmul.mubr.f32.gmra.mrb[0].mxu0 %v511
    %v5865 = vpop.f32.mrb[0].mxu0
    %v5866 = vadd.f32 0.0, %v5865
    %v5867 = vpop.f32.mrb[0].mxu0
    %5868 = vmatprep.mubr.f32.mxu0 0.0
    %5869 = vmatmul.mubr.f32.gmra.mrb[0].mxu0 %v514
    %v5870 = vpop.f32.mrb[0].mxu0
    %v5871 = vadd.f32 0.0, %v5870
    %v5872 = vpop.f32.mrb[0].mxu0
    %5873 = vmatprep.mubr.f32.mxu0 0.0
    %5874 = vmatmul.mubr.f32.gmra.mrb[0].mxu0 %v517
    %v5875 = vpop.f32.mrb[0].mxu0
    %v5876 = vadd.f32 0.0, %v5875
    %v5877 = vpop.f32.mrb[0].mxu0
    %5878 = vmatprep.mubr.f32.mxu0 0.0
    %5879 = vmatmul.mubr.f32.gmra.mrb[0].mxu0 %v520
    %v5880 = vpop.f32.mrb[0].mxu0
    %v5881 = vadd.f32 0.0, %v5880
    %v5882 = vpop.f32.mrb[0].mxu0
    %5883 = vmatprep.mubr.f32.mxu0 0.0
    %5884 = vmatmul.mubr.f32.gmra.mrb[0].mxu0 %v523
    %v5885 = vpop.f32.mrb[0].mxu0
    %v5886 = vadd.f32 0.0, %v5885
    %v5887 = vpop.f32.mrb[0].mxu0
    %5888 = vmatprep.mubr.f32.mxu0 0.0
    %5889 = vmatmul.mubr.f32.gmra.mrb[0].mxu0 %v526
    %v5890 = vpop.f32.mrb[0].mxu0
    %v5891 = vadd.f32 0.0, %v5890
    %v5892 = vpop.f32.mrb[0].mxu0
    %5893 = vmatprep.mubr.f32.mxu0 0.0
    %5894 = vmatmul.mubr.f32.gmra.mrb[0].mxu0 %v529
    %v5895 = vpop.f32.mrb[0].mxu0
    %v5896 = vadd.f32 0.0, %v5895
    %v5897 = vpop.f32.mrb[0].mxu0
    %5898 = vmatprep.mubr.f32.mxu0 0.0
    %5899 = vmatmul.mubr.f32.gmra.mrb[0].mxu0 %v532
    %v5900 = vpop.f32.mrb[0].mxu0
    %v5901 = vadd.f32 0.0, %v5900
    %v5902 = vpop.f32.mrb[0].mxu0
    %5903 = vmatprep.mubr.f32.mxu0 0.0
    %5904 = vmatmul.mubr.f32.gmra.mrb[0].mxu0 %v535
    %v5905 = vpop.f32.mrb[0].mxu0
    %v5906 = vadd.f32 0.0, %v5905
    %v5907 = vpop.f32.mrb[0].mxu0
    %5908 = vmatprep.mubr.f32.mxu0 0.0
    %5909 = vmatmul.mubr.f32.gmra.mrb[0].mxu0 %v538
    %v5910 = vpop.f32.mrb[0].mxu0
    %v5911 = vadd.f32 0.0, %v5910
    %v5912 = vpop.f32.mrb[0].mxu0
    %5913 = vmatprep.mubr.f32.mxu0 0.0
    %5914 = vmatmul.mubr.f32.gmra.mrb[0].mxu0 %v541
    %v5915 = vpop.f32.mrb[0].mxu0
    %v5916 = vadd.f32 0.0, %v5915
    %v5917 = vpop.f32.mrb[0].mxu0
    %5918 = vmatprep.mubr.f32.mxu0 0.0
    %5919 = vmatmul.mubr.f32.gmra.mrb[0].mxu0 %v544
    %v5920 = vpop.f32.mrb[0].mxu0
    %v5921 = vadd.f32 0.0, %v5920
    %v5922 = vpop.f32.mrb[0].mxu0
    %5923 = vmatprep.mubr.f32.mxu0 0.0
    %5924 = vmatmul.mubr.f32.gmra.mrb[0].mxu0 %v547
    %v5925 = vpop.f32.mrb[0].mxu0
    %v5926 = vadd.f32 0.0, %v5925
    %v5927 = vpop.f32.mrb[0].mxu0
    %5928 = vmatprep.mubr.f32.mxu0 0.0
    %5929 = vmatmul.mubr.f32.gmra.mrb[0].mxu0 %v550
    %v5930 = vpop.f32.mrb[0].mxu0
    %v5931 = vadd.f32 0.0, %v5930
    %v5932 = vpop.f32.mrb[0].mxu0
    %5933 = vmatprep.mubr.f32.mxu0 0.0
    %5934 = vmatmul.mubr.f32.gmra.mrb[0].mxu0 %v553
    %v5935 = vpop.f32.mrb[0].mxu0
    %v5936 = vadd.f32 0.0, %v5935
    %v5937 = vpop.f32.mrb[0].mxu0
    %5938 = vmatprep.mubr.f32.mxu0 0.0
    %5939 = vmatmul.mubr.f32.gmra.mrb[0].mxu0 %v556
    %v5940 = vpop.f32.mrb[0].mxu0
    %v5941 = vadd.f32 0.0, %v5940
    %v5942 = vpop.f32.mrb[0].mxu0
    %5943 = vmatprep.mubr.f32.mxu0 0.0
    %5944 = vmatmul.mubr.f32.gmra.mrb[0].mxu0 %v559
    %v5945 = vpop.f32.mrb[0].mxu0
    %v5946 = vadd.f32 0.0, %v5945
    %v5947 = vpop.f32.mrb[0].mxu0
    %5948 = vmatprep.mubr.f32.mxu0 0.0
    %5949 = vmatmul.mubr.f32.gmra.mrb[0].mxu0 %v562
    %v5950 = vpop.f32.mrb[0].mxu0
    %v5951 = vadd.f32 0.0, %v5950
    %v5952 = vpop.f32.mrb[0].mxu0
    %5953 = vmatprep.mubr.f32.mxu0 0.0
    %5954 = vmatmul.mubr.f32.gmra.mrb[0].mxu0 %v565
    %v5955 = vpop.f32.mrb[0].mxu0
    %v5956 = vadd.f32 0.0, %v5955
    %v5957 = vpop.f32.mrb[0].mxu0
    %5958 = vmatprep.mubr.f32.mxu0 0.0
    %5959 = vmatmul.mubr.f32.gmra.mrb[0].mxu0 %v568
    %v5960 = vpop.f32.mrb[0].mxu0
    %v5961 = vadd.f32 0.0, %v5960
    %v5962 = vpop.f32.mrb[0].mxu0
    %5963 = vmatprep.mubr.f32.mxu0 0.0
    %5964 = vmatmul.mubr.f32.gmra.mrb[0].mxu0 %v571
    %v5965 = vpop.f32.mrb[0].mxu0
    %v5966 = vadd.f32 0.0, %v5965
    %v5967 = vpop.f32.mrb[0].mxu0
    %5968 = vmatprep.mubr.f32.mxu0 0.0
    %5969 = vmatmul.mubr.f32.gmra.mrb[0].mxu0 %v574
    %v5970 = vpop.f32.mrb[0].mxu0
    %v5971 = vadd.f32 0.0, %v5970
    %v5972 = vpop.f32.mrb[0].mxu0
    %5973 = vmatprep.mubr.f32.mxu0 0.0
    %5974 = vmatmul.mubr.f32.gmra.mrb[0].mxu0 %v577
    %v5975 = vpop.f32.mrb[0].mxu0
    %v5976 = vadd.f32 0.0, %v5975
    %v5977 = vpop.f32.mrb[0].mxu0
    %5978 = vmatprep.mubr.f32.mxu0 0.0
    %5979 = vmatmul.mubr.f32.gmra.mrb[0].mxu0 %v580
    %v5980 = vpop.f32.mrb[0].mxu0
    %v5981 = vadd.f32 0.0, %v5980
    %v5982 = vpop.f32.mrb[0].mxu0
    %5983 = vmatprep.mubr.f32.mxu0 0.0
    %5984 = vmatmul.mubr.f32.gmra.mrb[0].mxu0 %v583
    %v5985 = vpop.f32.mrb[0].mxu0
    %v5986 = vadd.f32 0.0, %v5985
    %v5987 = vpop.f32.mrb[0].mxu0
    %5988 = vmatprep.mubr.f32.mxu0 0.0
    %5989 = vmatmul.mubr.f32.gmra.mrb[0].mxu0 %v586
    %v5990 = vpop.f32.mrb[0].mxu0
    %v5991 = vadd.f32 0.0, %v5990
    %v5992 = vpop.f32.mrb[0].mxu0
    %5993 = vmatprep.mubr.f32.mxu0 0.0
    %5994 = vmatmul.mubr.f32.gmra.mrb[0].mxu0 %v589
    %v5995 = vpop.f32.mrb[0].mxu0
    %v5996 = vadd.f32 0.0, %v5995
    %v5997 = vpop.f32.mrb[0].mxu0
    %5998 = vmatprep.mubr.f32.mxu0 0.0
    %5999 = vmatmul.mubr.f32.gmra.mrb[0].mxu0 %v592
    %v6000 = vpop.f32.mrb[0].mxu0
    %v6001 = vadd.f32 0.0, %v6000
    %v6002 = vpop.f32.mrb[0].mxu0
    %6003 = vmatprep.mubr.f32.mxu0 0.0
    %6004 = vmatmul.mubr.f32.gmra.mrb[0].mxu0 %v595
    %v6005 = vpop.f32.mrb[0].mxu0
    %v6006 = vadd.f32 0.0, %v6005
    %v6007 = vpop.f32.mrb[0].mxu0
    %6008 = vmatprep.mubr.f32.mxu0 0.0
    %6009 = vmatmul.mubr.f32.gmra.mrb[0].mxu0 %v598
    %v6010 = vpop.f32.mrb[0].mxu0
    %v6011 = vadd.f32 0.0, %v6010
    %v6012 = vpop.f32.mrb[0].mxu0
    %6013 = vmatprep.mubr.f32.mxu0 0.0
    %6014 = vmatmul.mubr.f32.gmra.mrb[0].mxu0 %v601
    %v6015 = vpop.f32.mrb[0].mxu0
    %v6016 = vadd.f32 0.0, %v6015
    %v6017 = vpop.f32.mrb[0].mxu0
    %6018 = vmatprep.mubr.f32.mxu0 0.0
    %6019 = vmatmul.mubr.f32.gmra.mrb[0].mxu0 %v604
    %v6020 = vpop.f32.mrb[0].mxu0
    %v6021 = vadd.f32 0.0, %v6020
    %v6022 = vpop.f32.mrb[0].mxu0
    %6023 = vmatprep.mubr.f32.mxu0 0.0
    %6024 = vmatmul.mubr.f32.gmra.mrb[0].mxu0 %v607
    %v6025 = vpop.f32.mrb[0].mxu0
    %v6026 = vadd.f32 0.0, %v6025
    %v6027 = vpop.f32.mrb[0].mxu0
    %6028 = vmatprep.mubr.f32.mxu0 0.0
    %6029 = vmatmul.mubr.f32.gmra.mrb[0].mxu0 %v610
    %v6030 = vpop.f32.mrb[0].mxu0
    %v6031 = vadd.f32 0.0, %v6030
    %v6032 = vpop.f32.mrb[0].mxu0
    %6033 = vmatprep.mubr.f32.mxu0 0.0
    %6034 = vmatmul.mubr.f32.gmra.mrb[0].mxu0 %v613
    %v6035 = vpop.f32.mrb[0].mxu0
    %v6036 = vadd.f32 0.0, %v6035
    %v6037 = vpop.f32.mrb[0].mxu0
    %6038 = vmatprep.mubr.f32.mxu0 0.0
    %6039 = vmatmul.mubr.f32.gmra.mrb[0].mxu0 %v616
    %v6040 = vpop.f32.mrb[0].mxu0
    %v6041 = vadd.f32 0.0, %v6040
    %v6042 = vpop.f32.mrb[0].mxu0
    %6043 = vmatprep.mubr.f32.mxu0 0.0
    %6044 = vmatmul.mubr.f32.gmra.mrb[0].mxu0 %v619
    %v6045 = vpop.f32.mrb[0].mxu0
    %v6046 = vadd.f32 0.0, %v6045
    %v6047 = vpop.f32.mrb[0].mxu0
    %6048 = vmatprep.mubr.f32.mxu0 0.0
    %6049 = vmatmul.mubr.f32.gmra.mrb[0].mxu0 %v622
    %v6050 = vpop.f32.mrb[0].mxu0
    %v6051 = vadd.f32 0.0, %v6050
    %v6052 = vpop.f32.mrb[0].mxu0
    %6053 = vmatprep.mubr.f32.mxu0 0.0
    %6054 = vmatmul.mubr.f32.gmra.mrb[0].mxu0 %v625
    %v6055 = vpop.f32.mrb[0].mxu0
    %v6056 = vadd.f32 0.0, %v6055
    %v6057 = vpop.f32.mrb[0].mxu0
    %6058 = vmatprep.mubr.f32.mxu0 0.0
    %6059 = vmatmul.mubr.f32.gmra.mrb[0].mxu0 %v628
    %v6060 = vpop.f32.mrb[0].mxu0
    %v6061 = vadd.f32 0.0, %v6060
    %v6062 = vpop.f32.mrb[0].mxu0
    %6063 = vmatprep.mubr.f32.mxu0 0.0
    %6064 = vmatmul.mubr.f32.gmra.mrb[0].mxu0 %v631
    %v6065 = vpop.f32.mrb[0].mxu0
    %v6066 = vadd.f32 0.0, %v6065
    %v6067 = vpop.f32.mrb[0].mxu0
    %6068 = vmatprep.mubr.f32.mxu0 0.0
    %6069 = vmatmul.mubr.f32.gmra.mrb[0].mxu0 %v634
    %v6070 = vpop.f32.mrb[0].mxu0
    %v6071 = vadd.f32 0.0, %v6070
    %v6072 = vpop.f32.mrb[0].mxu0
    %6073 = vmatprep.mubr.f32.mxu0 0.0
    %6074 = vmatmul.mubr.f32.gmra.mrb[0].mxu0 %v637
    %v6075 = vpop.f32.mrb[0].mxu0
    %v6076 = vadd.f32 0.0, %v6075
    %v6077 = vpop.f32.mrb[0].mxu0
    %6078 = vmatprep.mubr.f32.mxu0 0.0
    %6079 = vmatmul.mubr.f32.gmra.mrb[0].mxu0 %v640
    %v6080 = vpop.f32.mrb[0].mxu0
    %v6081 = vadd.f32 0.0, %v6080
    %v6082 = vpop.f32.mrb[0].mxu0
    %6083 = vmatprep.mubr.f32.mxu0 0.0
    %6084 = vmatmul.mubr.f32.gmra.mrb[0].mxu0 %v643
    %v6085 = vpop.f32.mrb[0].mxu0
    %v6086 = vadd.f32 0.0, %v6085
    %v6087 = vpop.f32.mrb[0].mxu0
    %6088 = vmatprep.mubr.f32.mxu0 0.0
    %6089 = vmatmul.mubr.f32.gmra.mrb[0].mxu0 %v646
    %v6090 = vpop.f32.mrb[0].mxu0
    %v6091 = vadd.f32 0.0, %v6090
    %v6092 = vpop.f32.mrb[0].mxu0
    %6093 = vmatprep.mubr.f32.mxu0 0.0
    %6094 = vmatmul.mubr.f32.gmra.mrb[0].mxu0 %v649
    %v6095 = vpop.f32.mrb[0].mxu0
    %v6096 = vadd.f32 0.0, %v6095
    %v6097 = vpop.f32.mrb[0].mxu0
    %6098 = vmatprep.mubr.f32.mxu0 0.0
    %6099 = vmatmul.mubr.f32.gmra.mrb[0].mxu0 %v652
    %v6100 = vpop.f32.mrb[0].mxu0
    %v6101 = vadd.f32 0.0, %v6100
    %v6102 = vpop.f32.mrb[0].mxu0
    %6103 = vmatprep.mubr.f32.mxu0 0.0
    %6104 = vmatmul.mubr.f32.gmra.mrb[0].mxu0 %v655
    %v6105 = vpop.f32.mrb[0].mxu0
    %v6106 = vadd.f32 0.0, %v6105
    %v6107 = vpop.f32.mrb[0].mxu0
    %6108 = vmatprep.mubr.f32.mxu0 0.0
    %6109 = vmatmul.mubr.f32.gmra.mrb[0].mxu0 %v658
    %v6110 = vpop.f32.mrb[0].mxu0
    %v6111 = vadd.f32 0.0, %v6110
    %v6112 = vpop.f32.mrb[0].mxu0
    %6113 = vmatprep.mubr.f32.mxu0 0.0
    %6114 = vmatmul.mubr.f32.gmra.mrb[0].mxu0 %v661
    %v6115 = vpop.f32.mrb[0].mxu0
    %v6116 = vadd.f32 0.0, %v6115
    %v6117 = vpop.f32.mrb[0].mxu0
    %6118 = vmatprep.mubr.f32.mxu0 0.0
    %6119 = vmatmul.mubr.f32.gmra.mrb[0].mxu0 %v664
    %v6120 = vpop.f32.mrb[0].mxu0
    %v6121 = vadd.f32 0.0, %v6120
    %v6122 = vpop.f32.mrb[0].mxu0
    %6123 = vmatprep.mubr.f32.mxu0 0.0
    %6124 = vmatmul.mubr.f32.gmra.mrb[0].mxu0 %v667
    %v6125 = vpop.f32.mrb[0].mxu0
    %v6126 = vadd.f32 0.0, %v6125
    %v6127 = vpop.f32.mrb[0].mxu0
    %6128 = vmatprep.mubr.f32.mxu0 0.0
    %6129 = vmatmul.mubr.f32.gmra.mrb[0].mxu0 %v670
    %v6130 = vpop.f32.mrb[0].mxu0
    %v6131 = vadd.f32 0.0, %v6130
    %v6132 = vpop.f32.mrb[0].mxu0
    %6133 = vmatprep.mubr.f32.mxu0 0.0
    %6134 = vmatmul.mubr.f32.gmra.mrb[0].mxu0 %v673
    %v6135 = vpop.f32.mrb[0].mxu0
    %v6136 = vadd.f32 0.0, %v6135
    %v6137 = vpop.f32.mrb[0].mxu0
    %6138 = vmatprep.mubr.f32.mxu0 0.0
    %6139 = vmatmul.mubr.f32.gmra.mrb[0].mxu0 %v676
    %v6140 = vpop.f32.mrb[0].mxu0
    %v6141 = vadd.f32 0.0, %v6140
    %v6142 = vpop.f32.mrb[0].mxu0
    %6143 = vmatprep.mubr.f32.mxu0 0.0
    %6144 = vmatmul.mubr.f32.gmra.mrb[0].mxu0 %v679
    %v6145 = vpop.f32.mrb[0].mxu0
    %v6146 = vadd.f32 0.0, %v6145
    %v6147 = vpop.f32.mrb[0].mxu0
    %6148 = vmatprep.mubr.f32.mxu0 0.0
    %6149 = vmatmul.mubr.f32.gmra.mrb[0].mxu0 %v682
    %v6150 = vpop.f32.mrb[0].mxu0
    %v6151 = vadd.f32 0.0, %v6150
    %v6152 = vpop.f32.mrb[0].mxu0
    %6153 = vmatprep.mubr.f32.mxu0 0.0
    %6154 = vmatmul.mubr.f32.gmra.mrb[0].mxu0 %v685
    %v6155 = vpop.f32.mrb[0].mxu0
    %v6156 = vadd.f32 0.0, %v6155
    %v6157 = vpop.f32.mrb[0].mxu0
    %6158 = vmatprep.mubr.f32.mxu0 0.0
    %6159 = vmatmul.mubr.f32.gmra.mrb[0].mxu0 %v688
    %v6160 = vpop.f32.mrb[0].mxu0
    %v6161 = vadd.f32 0.0, %v6160
    %v6162 = vpop.f32.mrb[0].mxu0
    %6163 = vmatprep.mubr.f32.mxu0 0.0
    %6164 = vmatmul.mubr.f32.gmra.mrb[0].mxu0 %v691
    %v6165 = vpop.f32.mrb[0].mxu0
    %v6166 = vadd.f32 0.0, %v6165
    %v6167 = vpop.f32.mrb[0].mxu0
    %6168 = vmatprep.mubr.f32.mxu0 0.0
    %6169 = vmatmul.mubr.f32.gmra.mrb[0].mxu0 %v694
    %v6170 = vpop.f32.mrb[0].mxu0
    %v6171 = vadd.f32 0.0, %v6170
    %v6172 = vpop.f32.mrb[0].mxu0
    %6173 = vmatprep.mubr.f32.mxu0 0.0
    %6174 = vmatmul.mubr.f32.gmra.mrb[0].mxu0 %v697
    %v6175 = vpop.f32.mrb[0].mxu0
    %v6176 = vadd.f32 0.0, %v6175
    %v6177 = vpop.f32.mrb[0].mxu0
    %6178 = vmatprep.mubr.f32.mxu0 0.0
    %6179 = vmatmul.mubr.f32.gmra.mrb[0].mxu0 %v700
    %v6180 = vpop.f32.mrb[0].mxu0
    %v6181 = vadd.f32 0.0, %v6180
    %v6182 = vpop.f32.mrb[0].mxu0
    %6183 = vmatprep.mubr.f32.mxu0 0.0
    %6184 = vmatmul.mubr.f32.gmra.mrb[0].mxu0 %v703
    %v6185 = vpop.f32.mrb[0].mxu0
    %v6186 = vadd.f32 0.0, %v6185
    %v6187 = vpop.f32.mrb[0].mxu0
    %6188 = vmatprep.mubr.f32.mxu0 0.0
    %6189 = vmatmul.mubr.f32.gmra.mrb[0].mxu0 %v706
    %v6190 = vpop.f32.mrb[0].mxu0
    %v6191 = vadd.f32 0.0, %v6190
    %v6192 = vpop.f32.mrb[0].mxu0
    %6193 = vmatprep.mubr.f32.mxu0 0.0
    %6194 = vmatmul.mubr.f32.gmra.mrb[0].mxu0 %v709
    %v6195 = vpop.f32.mrb[0].mxu0
    %v6196 = vadd.f32 0.0, %v6195
    %v6197 = vpop.f32.mrb[0].mxu0
    %6198 = vmatprep.mubr.f32.mxu0 0.0
    %6199 = vmatmul.mubr.f32.gmra.mrb[0].mxu0 %v712
    %v6200 = vpop.f32.mrb[0].mxu0
    %v6201 = vadd.f32 0.0, %v6200
    %v6202 = vpop.f32.mrb[0].mxu0
    %6203 = vmatprep.mubr.f32.mxu0 0.0
    %6204 = vmatmul.mubr.f32.gmra.mrb[0].mxu0 %v715
    %v6205 = vpop.f32.mrb[0].mxu0
    %v6206 = vadd.f32 0.0, %v6205
    %v6207 = vpop.f32.mrb[0].mxu0
    %6208 = vdwg.mxu0
    %6209 = vmatprep.subr.mxu0 0.0
    %6210 = vmatpush1.msra.mxu0 %v5486
    %6211 = vmatprep.subr.mxu0 0.0
    %6212 = vmatpush1.msra.mxu0 %v5491
    %6213 = vmatprep.subr.mxu0 0.0
    %6214 = vmatpush1.msra.mxu0 %v5496
    %6215 = vmatprep.subr.mxu0 0.0
    %6216 = vmatpush1.msra.mxu0 %v5501
    %6217 = vmatprep.subr.mxu0 0.0
    %6218 = vmatpush1.msra.mxu0 0.0
    %6219 = vmatprep.subr.mxu0 0.0
    %6220 = vmatpush1.msra.mxu0 0.0
    %6221 = vmatprep.subr.mxu0 0.0
    %6222 = vmatpush1.msra.mxu0 0.0
    %6223 = vmatprep.subr.mxu0 0.0
    %6224 = vmatpush1.msra.mxu0 0.0
    %6225 = vmatprep.subr.mxu0 0.0
    %6226 = vmatpush1.msra.mxu0 0.0
    %6227 = vmatprep.subr.mxu0 0.0
    %6228 = vmatpush1.msra.mxu0 0.0
    %6229 = vmatprep.subr.mxu0 0.0
    %6230 = vmatpush1.msra.mxu0 0.0
    %6231 = vmatprep.subr.mxu0 0.0
    %6232 = vmatpush1.msra.mxu0 0.0
    %6233 = vmatprep.subr.mxu0 0.0
    %6234 = vmatpush1.msra.mxu0 0.0
    %6235 = vmatprep.subr.mxu0 0.0
    %6236 = vmatpush1.msra.mxu0 0.0
    %6237 = vmatprep.subr.mxu0 0.0
    %6238 = vmatpush1.msra.mxu0 0.0
    %6239 = vmatprep.subr.mxu0 0.0
    %6240 = vmatpush1.msra.mxu0 0.0
    %6241 = vmatprep.subr.mxu0 0.0
    %6242 = vmatpush1.msra.mxu0 0.0
    %6243 = vmatprep.subr.mxu0 0.0
    %6244 = vmatpush1.msra.mxu0 0.0
    %6245 = vmatprep.subr.mxu0 0.0
    %6246 = vmatpush1.msra.mxu0 0.0
    %6247 = vmatprep.subr.mxu0 0.0
    %6248 = vmatpush1.msra.mxu0 0.0
    %6249 = vmatprep.subr.mxu0 0.0
    %6250 = vmatpush1.msra.mxu0 0.0
    %6251 = vmatprep.subr.mxu0 0.0
    %6252 = vmatpush1.msra.mxu0 0.0
    %6253 = vmatprep.subr.mxu0 0.0
    %6254 = vmatpush1.msra.mxu0 0.0
    %6255 = vmatprep.subr.mxu0 0.0
    %6256 = vmatpush1.msra.mxu0 0.0
    %6257 = vmatprep.subr.mxu0 0.0
    %6258 = vmatpush1.msra.mxu0 0.0
    %6259 = vmatprep.subr.mxu0 0.0
    %6260 = vmatpush1.msra.mxu0 0.0
    %6261 = vmatprep.subr.mxu0 0.0
    %6262 = vmatpush1.msra.mxu0 0.0
    %6263 = vmatprep.subr.mxu0 0.0
    %6264 = vmatpush1.msra.mxu0 0.0
    %6265 = vmatprep.subr.mxu0 0.0
    %6266 = vmatpush1.msra.mxu0 0.0
    %6267 = vmatprep.subr.mxu0 0.0
    %6268 = vmatpush1.msra.mxu0 0.0
    %6269 = vmatprep.subr.mxu0 0.0
    %6270 = vmatpush1.msra.mxu0 0.0
    %6271 = vmatprep.subr.mxu0 0.0
    %6272 = vmatpush1.msra.mxu0 0.0
    %6273 = vmatprep.mubr.f32.mxu0 0.0
    %6274 = vmatmul.mubr.f32.gmra.mrb[0].mxu0 %v1423
    %v6275 = vpop.f32.mrb[0].mxu0
    %v6276 = vadd.f32 0.0, %v6275
    %v6277 = vpop.f32.mrb[0].mxu0
    %6278 = vmatprep.mubr.f32.mxu0 0.0
    %6279 = vmatmul.mubr.f32.gmra.mrb[0].mxu0 %v1426
    %v6280 = vpop.f32.mrb[0].mxu0
    %v6281 = vadd.f32 0.0, %v6280
    %v6282 = vpop.f32.mrb[0].mxu0
    %6283 = vmatprep.mubr.f32.mxu0 0.0
    %6284 = vmatmul.mubr.f32.gmra.mrb[0].mxu0 %v1429
    %v6285 = vpop.f32.mrb[0].mxu0
    %v6286 = vadd.f32 0.0, %v6285
    %v6287 = vpop.f32.mrb[0].mxu0
    %6288 = vmatprep.mubr.f32.mxu0 0.0
    %6289 = vmatmul.mubr.f32.gmra.mrb[0].mxu0 %v1432
    %v6290 = vpop.f32.mrb[0].mxu0
    %v6291 = vadd.f32 0.0, %v6290
    %v6292 = vpop.f32.mrb[0].mxu0
    %6293 = vmatprep.mubr.f32.mxu0 0.0
    %6294 = vmatmul.mubr.f32.gmra.mrb[0].mxu0 %v1435
    %v6295 = vpop.f32.mrb[0].mxu0
    %v6296 = vadd.f32 0.0, %v6295
    %v6297 = vpop.f32.mrb[0].mxu0
    %6298 = vmatprep.mubr.f32.mxu0 0.0
    %6299 = vmatmul.mubr.f32.gmra.mrb[0].mxu0 %v1438
    %v6300 = vpop.f32.mrb[0].mxu0
    %v6301 = vadd.f32 0.0, %v6300
    %v6302 = vpop.f32.mrb[0].mxu0
    %6303 = vmatprep.mubr.f32.mxu0 0.0
    %6304 = vmatmul.mubr.f32.gmra.mrb[0].mxu0 %v1441
    %v6305 = vpop.f32.mrb[0].mxu0
    %v6306 = vadd.f32 0.0, %v6305
    %v6307 = vpop.f32.mrb[0].mxu0
    %6308 = vmatprep.mubr.f32.mxu0 0.0
    %6309 = vmatmul.mubr.f32.gmra.mrb[0].mxu0 %v1444
    %v6310 = vpop.f32.mrb[0].mxu0
    %v6311 = vadd.f32 0.0, %v6310
    %v6312 = vpop.f32.mrb[0].mxu0
    %6313 = vmatprep.mubr.f32.mxu0 0.0
    %6314 = vmatmul.mubr.f32.gmra.mrb[0].mxu0 %v1447
    %v6315 = vpop.f32.mrb[0].mxu0
    %v6316 = vadd.f32 0.0, %v6315
    %v6317 = vpop.f32.mrb[0].mxu0
    %6318 = vmatprep.mubr.f32.mxu0 0.0
    %6319 = vmatmul.mubr.f32.gmra.mrb[0].mxu0 %v1450
    %v6320 = vpop.f32.mrb[0].mxu0
    %v6321 = vadd.f32 0.0, %v6320
    %v6322 = vpop.f32.mrb[0].mxu0
    %6323 = vmatprep.mubr.f32.mxu0 0.0
    %6324 = vmatmul.mubr.f32.gmra.mrb[0].mxu0 %v1453
    %v6325 = vpop.f32.mrb[0].mxu0
    %v6326 = vadd.f32 0.0, %v6325
    %v6327 = vpop.f32.mrb[0].mxu0
    %6328 = vmatprep.mubr.f32.mxu0 0.0
    %6329 = vmatmul.mubr.f32.gmra.mrb[0].mxu0 %v1456
    %v6330 = vpop.f32.mrb[0].mxu0
    %v6331 = vadd.f32 0.0, %v6330
    %v6332 = vpop.f32.mrb[0].mxu0
    %6333 = vmatprep.mubr.f32.mxu0 0.0
    %6334 = vmatmul.mubr.f32.gmra.mrb[0].mxu0 %v1459
    %v6335 = vpop.f32.mrb[0].mxu0
    %v6336 = vadd.f32 0.0, %v6335
    %v6337 = vpop.f32.mrb[0].mxu0
    %6338 = vmatprep.mubr.f32.mxu0 0.0
    %6339 = vmatmul.mubr.f32.gmra.mrb[0].mxu0 %v1462
    %v6340 = vpop.f32.mrb[0].mxu0
    %v6341 = vadd.f32 0.0, %v6340
    %v6342 = vpop.f32.mrb[0].mxu0
    %6343 = vmatprep.mubr.f32.mxu0 0.0
    %6344 = vmatmul.mubr.f32.gmra.mrb[0].mxu0 %v1465
    %v6345 = vpop.f32.mrb[0].mxu0
    %v6346 = vadd.f32 0.0, %v6345
    %v6347 = vpop.f32.mrb[0].mxu0
    %6348 = vmatprep.mubr.f32.mxu0 0.0
    %6349 = vmatmul.mubr.f32.gmra.mrb[0].mxu0 %v1468
    %v6350 = vpop.f32.mrb[0].mxu0
    %v6351 = vadd.f32 0.0, %v6350
    %v6352 = vpop.f32.mrb[0].mxu0
    %6353 = vmatprep.mubr.f32.mxu0 0.0
    %6354 = vmatmul.mubr.f32.gmra.mrb[0].mxu0 %v1471
    %v6355 = vpop.f32.mrb[0].mxu0
    %v6356 = vadd.f32 0.0, %v6355
    %v6357 = vpop.f32.mrb[0].mxu0
    %6358 = vmatprep.mubr.f32.mxu0 0.0
    %6359 = vmatmul.mubr.f32.gmra.mrb[0].mxu0 %v1474
    %v6360 = vpop.f32.mrb[0].mxu0
    %v6361 = vadd.f32 0.0, %v6360
    %v6362 = vpop.f32.mrb[0].mxu0
    %6363 = vmatprep.mubr.f32.mxu0 0.0
    %6364 = vmatmul.mubr.f32.gmra.mrb[0].mxu0 %v1477
    %v6365 = vpop.f32.mrb[0].mxu0
    %v6366 = vadd.f32 0.0, %v6365
    %v6367 = vpop.f32.mrb[0].mxu0
    %6368 = vmatprep.mubr.f32.mxu0 0.0
    %6369 = vmatmul.mubr.f32.gmra.mrb[0].mxu0 %v1480
    %v6370 = vpop.f32.mrb[0].mxu0
    %v6371 = vadd.f32 0.0, %v6370
    %v6372 = vpop.f32.mrb[0].mxu0
    %6373 = vmatprep.mubr.f32.mxu0 0.0
    %6374 = vmatmul.mubr.f32.gmra.mrb[0].mxu0 %v1483
    %v6375 = vpop.f32.mrb[0].mxu0
    %v6376 = vadd.f32 0.0, %v6375
    %v6377 = vpop.f32.mrb[0].mxu0
    %6378 = vmatprep.mubr.f32.mxu0 0.0
    %6379 = vmatmul.mubr.f32.gmra.mrb[0].mxu0 %v1486
    %v6380 = vpop.f32.mrb[0].mxu0
    %v6381 = vadd.f32 0.0, %v6380
    %v6382 = vpop.f32.mrb[0].mxu0
    %6383 = vmatprep.mubr.f32.mxu0 0.0
    %6384 = vmatmul.mubr.f32.gmra.mrb[0].mxu0 %v1489
    %v6385 = vpop.f32.mrb[0].mxu0
    %v6386 = vadd.f32 0.0, %v6385
    %v6387 = vpop.f32.mrb[0].mxu0
    %6388 = vmatprep.mubr.f32.mxu0 0.0
    %6389 = vmatmul.mubr.f32.gmra.mrb[0].mxu0 %v1492
    %v6390 = vpop.f32.mrb[0].mxu0
    %v6391 = vadd.f32 0.0, %v6390
    %v6392 = vpop.f32.mrb[0].mxu0
    %6393 = vmatprep.mubr.f32.mxu0 0.0
    %6394 = vmatmul.mubr.f32.gmra.mrb[0].mxu0 %v1495
    %v6395 = vpop.f32.mrb[0].mxu0
    %v6396 = vadd.f32 0.0, %v6395
    %v6397 = vpop.f32.mrb[0].mxu0
    %6398 = vmatprep.mubr.f32.mxu0 0.0
    %6399 = vmatmul.mubr.f32.gmra.mrb[0].mxu0 %v1498
    %v6400 = vpop.f32.mrb[0].mxu0
    %v6401 = vadd.f32 0.0, %v6400
    %v6402 = vpop.f32.mrb[0].mxu0
    %6403 = vmatprep.mubr.f32.mxu0 0.0
    %6404 = vmatmul.mubr.f32.gmra.mrb[0].mxu0 %v1501
    %v6405 = vpop.f32.mrb[0].mxu0
    %v6406 = vadd.f32 0.0, %v6405
    %v6407 = vpop.f32.mrb[0].mxu0
    %6408 = vmatprep.mubr.f32.mxu0 0.0
    %6409 = vmatmul.mubr.f32.gmra.mrb[0].mxu0 %v1504
    %v6410 = vpop.f32.mrb[0].mxu0
    %v6411 = vadd.f32 0.0, %v6410
    %v6412 = vpop.f32.mrb[0].mxu0
    %6413 = vmatprep.mubr.f32.mxu0 0.0
    %6414 = vmatmul.mubr.f32.gmra.mrb[0].mxu0 %v1507
    %v6415 = vpop.f32.mrb[0].mxu0
    %v6416 = vadd.f32 0.0, %v6415
    %v6417 = vpop.f32.mrb[0].mxu0
    %6418 = vmatprep.mubr.f32.mxu0 0.0
    %6419 = vmatmul.mubr.f32.gmra.mrb[0].mxu0 %v1510
    %v6420 = vpop.f32.mrb[0].mxu0
    %v6421 = vadd.f32 0.0, %v6420
    %v6422 = vpop.f32.mrb[0].mxu0
    %6423 = vmatprep.mubr.f32.mxu0 0.0
    %6424 = vmatmul.mubr.f32.gmra.mrb[0].mxu0 %v1513
    %v6425 = vpop.f32.mrb[0].mxu0
    %v6426 = vadd.f32 0.0, %v6425
    %v6427 = vpop.f32.mrb[0].mxu0
    %6428 = vmatprep.mubr.f32.mxu0 0.0
    %6429 = vmatmul.mubr.f32.gmra.mrb[0].mxu0 %v1516
    %v6430 = vpop.f32.mrb[0].mxu0
    %v6431 = vadd.f32 0.0, %v6430
    %v6432 = vpop.f32.mrb[0].mxu0
    %6433 = vmatprep.mubr.f32.mxu0 0.0
    %6434 = vmatmul.mubr.f32.gmra.mrb[0].mxu0 %v1519
    %v6435 = vpop.f32.mrb[0].mxu0
    %v6436 = vadd.f32 0.0, %v6435
    %v6437 = vpop.f32.mrb[0].mxu0
    %6438 = vmatprep.mubr.f32.mxu0 0.0
    %6439 = vmatmul.mubr.f32.gmra.mrb[0].mxu0 %v1522
    %v6440 = vpop.f32.mrb[0].mxu0
    %v6441 = vadd.f32 0.0, %v6440
    %v6442 = vpop.f32.mrb[0].mxu0
    %6443 = vmatprep.mubr.f32.mxu0 0.0
    %6444 = vmatmul.mubr.f32.gmra.mrb[0].mxu0 %v1525
    %v6445 = vpop.f32.mrb[0].mxu0
    %v6446 = vadd.f32 0.0, %v6445
    %v6447 = vpop.f32.mrb[0].mxu0
    %6448 = vmatprep.mubr.f32.mxu0 0.0
    %6449 = vmatmul.mubr.f32.gmra.mrb[0].mxu0 %v1528
    %v6450 = vpop.f32.mrb[0].mxu0
    %v6451 = vadd.f32 0.0, %v6450
    %v6452 = vpop.f32.mrb[0].mxu0
    %6453 = vmatprep.mubr.f32.mxu0 0.0
    %6454 = vmatmul.mubr.f32.gmra.mrb[0].mxu0 %v1531
    %v6455 = vpop.f32.mrb[0].mxu0
    %v6456 = vadd.f32 0.0, %v6455
    %v6457 = vpop.f32.mrb[0].mxu0
    %6458 = vmatprep.mubr.f32.mxu0 0.0
    %6459 = vmatmul.mubr.f32.gmra.mrb[0].mxu0 %v1534
    %v6460 = vpop.f32.mrb[0].mxu0
    %v6461 = vadd.f32 0.0, %v6460
    %v6462 = vpop.f32.mrb[0].mxu0
    %6463 = vmatprep.mubr.f32.mxu0 0.0
    %6464 = vmatmul.mubr.f32.gmra.mrb[0].mxu0 %v1537
    %v6465 = vpop.f32.mrb[0].mxu0
    %v6466 = vadd.f32 0.0, %v6465
    %v6467 = vpop.f32.mrb[0].mxu0
    %6468 = vmatprep.mubr.f32.mxu0 0.0
    %6469 = vmatmul.mubr.f32.gmra.mrb[0].mxu0 %v1540
    %v6470 = vpop.f32.mrb[0].mxu0
    %v6471 = vadd.f32 0.0, %v6470
    %v6472 = vpop.f32.mrb[0].mxu0
    %6473 = vmatprep.mubr.f32.mxu0 0.0
    %6474 = vmatmul.mubr.f32.gmra.mrb[0].mxu0 %v1543
    %v6475 = vpop.f32.mrb[0].mxu0
    %v6476 = vadd.f32 0.0, %v6475
    %v6477 = vpop.f32.mrb[0].mxu0
    %6478 = vmatprep.mubr.f32.mxu0 0.0
    %6479 = vmatmul.mubr.f32.gmra.mrb[0].mxu0 %v1546
    %v6480 = vpop.f32.mrb[0].mxu0
    %v6481 = vadd.f32 0.0, %v6480
    %v6482 = vpop.f32.mrb[0].mxu0
    %6483 = vmatprep.mubr.f32.mxu0 0.0
    %6484 = vmatmul.mubr.f32.gmra.mrb[0].mxu0 %v1549
    %v6485 = vpop.f32.mrb[0].mxu0
    %v6486 = vadd.f32 0.0, %v6485
    %v6487 = vpop.f32.mrb[0].mxu0
    %6488 = vmatprep.mubr.f32.mxu0 0.0
    %6489 = vmatmul.mubr.f32.gmra.mrb[0].mxu0 %v1552
    %v6490 = vpop.f32.mrb[0].mxu0
    %v6491 = vadd.f32 0.0, %v6490
    %v6492 = vpop.f32.mrb[0].mxu0
    %6493 = vmatprep.mubr.f32.mxu0 0.0
    %6494 = vmatmul.mubr.f32.gmra.mrb[0].mxu0 %v1555
    %v6495 = vpop.f32.mrb[0].mxu0
    %v6496 = vadd.f32 0.0, %v6495
    %v6497 = vpop.f32.mrb[0].mxu0
    %6498 = vmatprep.mubr.f32.mxu0 0.0
    %6499 = vmatmul.mubr.f32.gmra.mrb[0].mxu0 %v1558
    %v6500 = vpop.f32.mrb[0].mxu0
    %v6501 = vadd.f32 0.0, %v6500
    %v6502 = vpop.f32.mrb[0].mxu0
    %6503 = vmatprep.mubr.f32.mxu0 0.0
    %6504 = vmatmul.mubr.f32.gmra.mrb[0].mxu0 %v1561
    %v6505 = vpop.f32.mrb[0].mxu0
    %v6506 = vadd.f32 0.0, %v6505
    %v6507 = vpop.f32.mrb[0].mxu0
    %6508 = vmatprep.mubr.f32.mxu0 0.0
    %6509 = vmatmul.mubr.f32.gmra.mrb[0].mxu0 %v1564
    %v6510 = vpop.f32.mrb[0].mxu0
    %v6511 = vadd.f32 0.0, %v6510
    %v6512 = vpop.f32.mrb[0].mxu0
    %6513 = vmatprep.mubr.f32.mxu0 0.0
    %6514 = vmatmul.mubr.f32.gmra.mrb[0].mxu0 %v1567
    %v6515 = vpop.f32.mrb[0].mxu0
    %v6516 = vadd.f32 0.0, %v6515
    %v6517 = vpop.f32.mrb[0].mxu0
    %6518 = vmatprep.mubr.f32.mxu0 0.0
    %6519 = vmatmul.mubr.f32.gmra.mrb[0].mxu0 %v1570
    %v6520 = vpop.f32.mrb[0].mxu0
    %v6521 = vadd.f32 0.0, %v6520
    %v6522 = vpop.f32.mrb[0].mxu0
    %6523 = vmatprep.mubr.f32.mxu0 0.0
    %6524 = vmatmul.mubr.f32.gmra.mrb[0].mxu0 %v1573
    %v6525 = vpop.f32.mrb[0].mxu0
    %v6526 = vadd.f32 0.0, %v6525
    %v6527 = vpop.f32.mrb[0].mxu0
    %6528 = vmatprep.mubr.f32.mxu0 0.0
    %6529 = vmatmul.mubr.f32.gmra.mrb[0].mxu0 %v1576
    %v6530 = vpop.f32.mrb[0].mxu0
    %v6531 = vadd.f32 0.0, %v6530
    %v6532 = vpop.f32.mrb[0].mxu0
    %6533 = vmatprep.mubr.f32.mxu0 0.0
    %6534 = vmatmul.mubr.f32.gmra.mrb[0].mxu0 %v1579
    %v6535 = vpop.f32.mrb[0].mxu0
    %v6536 = vadd.f32 0.0, %v6535
    %v6537 = vpop.f32.mrb[0].mxu0
    %6538 = vmatprep.mubr.f32.mxu0 0.0
    %6539 = vmatmul.mubr.f32.gmra.mrb[0].mxu0 %v1582
    %v6540 = vpop.f32.mrb[0].mxu0
    %v6541 = vadd.f32 0.0, %v6540
    %v6542 = vpop.f32.mrb[0].mxu0
    %6543 = vmatprep.mubr.f32.mxu0 0.0
    %6544 = vmatmul.mubr.f32.gmra.mrb[0].mxu0 %v1585
    %v6545 = vpop.f32.mrb[0].mxu0
    %v6546 = vadd.f32 0.0, %v6545
    %v6547 = vpop.f32.mrb[0].mxu0
    %6548 = vmatprep.mubr.f32.mxu0 0.0
    %6549 = vmatmul.mubr.f32.gmra.mrb[0].mxu0 %v1588
    %v6550 = vpop.f32.mrb[0].mxu0
    %v6551 = vadd.f32 0.0, %v6550
    %v6552 = vpop.f32.mrb[0].mxu0
    %6553 = vmatprep.mubr.f32.mxu0 0.0
    %6554 = vmatmul.mubr.f32.gmra.mrb[0].mxu0 %v1591
    %v6555 = vpop.f32.mrb[0].mxu0
    %v6556 = vadd.f32 0.0, %v6555
    %v6557 = vpop.f32.mrb[0].mxu0
    %6558 = vmatprep.mubr.f32.mxu0 0.0
    %6559 = vmatmul.mubr.f32.gmra.mrb[0].mxu0 %v1594
    %v6560 = vpop.f32.mrb[0].mxu0
    %v6561 = vadd.f32 0.0, %v6560
    %v6562 = vpop.f32.mrb[0].mxu0
    %6563 = vmatprep.mubr.f32.mxu0 0.0
    %6564 = vmatmul.mubr.f32.gmra.mrb[0].mxu0 %v1597
    %v6565 = vpop.f32.mrb[0].mxu0
    %v6566 = vadd.f32 0.0, %v6565
    %v6567 = vpop.f32.mrb[0].mxu0
    %6568 = vmatprep.mubr.f32.mxu0 0.0
    %6569 = vmatmul.mubr.f32.gmra.mrb[0].mxu0 %v1600
    %v6570 = vpop.f32.mrb[0].mxu0
    %v6571 = vadd.f32 0.0, %v6570
    %v6572 = vpop.f32.mrb[0].mxu0
    %6573 = vmatprep.mubr.f32.mxu0 0.0
    %6574 = vmatmul.mubr.f32.gmra.mrb[0].mxu0 %v1603
    %v6575 = vpop.f32.mrb[0].mxu0
    %v6576 = vadd.f32 0.0, %v6575
    %v6577 = vpop.f32.mrb[0].mxu0
    %6578 = vmatprep.mubr.f32.mxu0 0.0
    %6579 = vmatmul.mubr.f32.gmra.mrb[0].mxu0 %v1606
    %v6580 = vpop.f32.mrb[0].mxu0
    %v6581 = vadd.f32 0.0, %v6580
    %v6582 = vpop.f32.mrb[0].mxu0
    %6583 = vmatprep.mubr.f32.mxu0 0.0
    %6584 = vmatmul.mubr.f32.gmra.mrb[0].mxu0 %v1609
    %v6585 = vpop.f32.mrb[0].mxu0
    %v6586 = vadd.f32 0.0, %v6585
    %v6587 = vpop.f32.mrb[0].mxu0
    %6588 = vmatprep.mubr.f32.mxu0 0.0
    %6589 = vmatmul.mubr.f32.gmra.mrb[0].mxu0 %v1612
    %v6590 = vpop.f32.mrb[0].mxu0
    %v6591 = vadd.f32 0.0, %v6590
    %v6592 = vpop.f32.mrb[0].mxu0
    %6593 = vmatprep.mubr.f32.mxu0 0.0
    %6594 = vmatmul.mubr.f32.gmra.mrb[0].mxu0 %v1615
    %v6595 = vpop.f32.mrb[0].mxu0
    %v6596 = vadd.f32 0.0, %v6595
    %v6597 = vpop.f32.mrb[0].mxu0
    %6598 = vmatprep.mubr.f32.mxu0 0.0
    %6599 = vmatmul.mubr.f32.gmra.mrb[0].mxu0 %v1618
    %v6600 = vpop.f32.mrb[0].mxu0
    %v6601 = vadd.f32 0.0, %v6600
    %v6602 = vpop.f32.mrb[0].mxu0
    %6603 = vmatprep.mubr.f32.mxu0 0.0
    %6604 = vmatmul.mubr.f32.gmra.mrb[0].mxu0 %v1621
    %v6605 = vpop.f32.mrb[0].mxu0
    %v6606 = vadd.f32 0.0, %v6605
    %v6607 = vpop.f32.mrb[0].mxu0
    %6608 = vmatprep.mubr.f32.mxu0 0.0
    %6609 = vmatmul.mubr.f32.gmra.mrb[0].mxu0 %v1624
    %v6610 = vpop.f32.mrb[0].mxu0
    %v6611 = vadd.f32 0.0, %v6610
    %v6612 = vpop.f32.mrb[0].mxu0
    %6613 = vmatprep.mubr.f32.mxu0 0.0
    %6614 = vmatmul.mubr.f32.gmra.mrb[0].mxu0 %v1627
    %v6615 = vpop.f32.mrb[0].mxu0
    %v6616 = vadd.f32 0.0, %v6615
    %v6617 = vpop.f32.mrb[0].mxu0
    %6618 = vmatprep.mubr.f32.mxu0 0.0
    %6619 = vmatmul.mubr.f32.gmra.mrb[0].mxu0 %v1630
    %v6620 = vpop.f32.mrb[0].mxu0
    %v6621 = vadd.f32 0.0, %v6620
    %v6622 = vpop.f32.mrb[0].mxu0
    %6623 = vmatprep.mubr.f32.mxu0 0.0
    %6624 = vmatmul.mubr.f32.gmra.mrb[0].mxu0 %v1633
    %v6625 = vpop.f32.mrb[0].mxu0
    %v6626 = vadd.f32 0.0, %v6625
    %v6627 = vpop.f32.mrb[0].mxu0
    %6628 = vmatprep.mubr.f32.mxu0 0.0
    %6629 = vmatmul.mubr.f32.gmra.mrb[0].mxu0 %v1636
    %v6630 = vpop.f32.mrb[0].mxu0
    %v6631 = vadd.f32 0.0, %v6630
    %v6632 = vpop.f32.mrb[0].mxu0
    %6633 = vmatprep.mubr.f32.mxu0 0.0
    %6634 = vmatmul.mubr.f32.gmra.mrb[0].mxu0 %v1639
    %v6635 = vpop.f32.mrb[0].mxu0
    %v6636 = vadd.f32 0.0, %v6635
    %v6637 = vpop.f32.mrb[0].mxu0
    %6638 = vmatprep.mubr.f32.mxu0 0.0
    %6639 = vmatmul.mubr.f32.gmra.mrb[0].mxu0 %v1642
    %v6640 = vpop.f32.mrb[0].mxu0
    %v6641 = vadd.f32 0.0, %v6640
    %v6642 = vpop.f32.mrb[0].mxu0
    %6643 = vmatprep.mubr.f32.mxu0 0.0
    %6644 = vmatmul.mubr.f32.gmra.mrb[0].mxu0 %v1645
    %v6645 = vpop.f32.mrb[0].mxu0
    %v6646 = vadd.f32 0.0, %v6645
    %v6647 = vpop.f32.mrb[0].mxu0
    %6648 = vmatprep.mubr.f32.mxu0 0.0
    %6649 = vmatmul.mubr.f32.gmra.mrb[0].mxu0 %v1648
    %v6650 = vpop.f32.mrb[0].mxu0
    %v6651 = vadd.f32 0.0, %v6650
    %v6652 = vpop.f32.mrb[0].mxu0
    %6653 = vmatprep.mubr.f32.mxu0 0.0
    %6654 = vmatmul.mubr.f32.gmra.mrb[0].mxu0 %v1651
    %v6655 = vpop.f32.mrb[0].mxu0
    %v6656 = vadd.f32 0.0, %v6655
    %v6657 = vpop.f32.mrb[0].mxu0
    %6658 = vmatprep.mubr.f32.mxu0 0.0
    %6659 = vmatmul.mubr.f32.gmra.mrb[0].mxu0 %v1654
    %v6660 = vpop.f32.mrb[0].mxu0
    %v6661 = vadd.f32 0.0, %v6660
    %v6662 = vpop.f32.mrb[0].mxu0
    %6663 = vmatprep.mubr.f32.mxu0 0.0
    %6664 = vmatmul.mubr.f32.gmra.mrb[0].mxu0 %v1657
    %v6665 = vpop.f32.mrb[0].mxu0
    %v6666 = vadd.f32 0.0, %v6665
    %v6667 = vpop.f32.mrb[0].mxu0
    %6668 = vmatprep.mubr.f32.mxu0 0.0
    %6669 = vmatmul.mubr.f32.gmra.mrb[0].mxu0 %v1660
    %v6670 = vpop.f32.mrb[0].mxu0
    %v6671 = vadd.f32 0.0, %v6670
    %v6672 = vpop.f32.mrb[0].mxu0
    %6673 = vmatprep.mubr.f32.mxu0 0.0
    %6674 = vmatmul.mubr.f32.gmra.mrb[0].mxu0 %v1663
    %v6675 = vpop.f32.mrb[0].mxu0
    %v6676 = vadd.f32 0.0, %v6675
    %v6677 = vpop.f32.mrb[0].mxu0
    %6678 = vmatprep.mubr.f32.mxu0 0.0
    %6679 = vmatmul.mubr.f32.gmra.mrb[0].mxu0 %v1666
    %v6680 = vpop.f32.mrb[0].mxu0
    %v6681 = vadd.f32 0.0, %v6680
    %v6682 = vpop.f32.mrb[0].mxu0
    %6683 = vmatprep.mubr.f32.mxu0 0.0
    %6684 = vmatmul.mubr.f32.gmra.mrb[0].mxu0 %v1669
    %v6685 = vpop.f32.mrb[0].mxu0
    %v6686 = vadd.f32 0.0, %v6685
    %v6687 = vpop.f32.mrb[0].mxu0
    %6688 = vmatprep.mubr.f32.mxu0 0.0
    %6689 = vmatmul.mubr.f32.gmra.mrb[0].mxu0 %v1672
    %v6690 = vpop.f32.mrb[0].mxu0
    %v6691 = vadd.f32 0.0, %v6690
    %v6692 = vpop.f32.mrb[0].mxu0
    %6693 = vmatprep.mubr.f32.mxu0 0.0
    %6694 = vmatmul.mubr.f32.gmra.mrb[0].mxu0 %v1675
    %v6695 = vpop.f32.mrb[0].mxu0
    %v6696 = vadd.f32 0.0, %v6695
    %v6697 = vpop.f32.mrb[0].mxu0
    %6698 = vmatprep.mubr.f32.mxu0 0.0
    %6699 = vmatmul.mubr.f32.gmra.mrb[0].mxu0 %v1678
    %v6700 = vpop.f32.mrb[0].mxu0
    %v6701 = vadd.f32 0.0, %v6700
    %v6702 = vpop.f32.mrb[0].mxu0
    %6703 = vmatprep.mubr.f32.mxu0 0.0
    %6704 = vmatmul.mubr.f32.gmra.mrb[0].mxu0 %v1681
    %v6705 = vpop.f32.mrb[0].mxu0
    %v6706 = vadd.f32 0.0, %v6705
    %v6707 = vpop.f32.mrb[0].mxu0
    %6708 = vmatprep.mubr.f32.mxu0 0.0
    %6709 = vmatmul.mubr.f32.gmra.mrb[0].mxu0 %v1684
    %v6710 = vpop.f32.mrb[0].mxu0
    %v6711 = vadd.f32 0.0, %v6710
    %v6712 = vpop.f32.mrb[0].mxu0
    %6713 = vmatprep.mubr.f32.mxu0 0.0
    %6714 = vmatmul.mubr.f32.gmra.mrb[0].mxu0 %v1687
    %v6715 = vpop.f32.mrb[0].mxu0
    %v6716 = vadd.f32 0.0, %v6715
    %v6717 = vpop.f32.mrb[0].mxu0
    %6718 = vmatprep.mubr.f32.mxu0 0.0
    %6719 = vmatmul.mubr.f32.gmra.mrb[0].mxu0 %v1690
    %v6720 = vpop.f32.mrb[0].mxu0
    %v6721 = vadd.f32 0.0, %v6720
    %v6722 = vpop.f32.mrb[0].mxu0
    %6723 = vmatprep.mubr.f32.mxu0 0.0
    %6724 = vmatmul.mubr.f32.gmra.mrb[0].mxu0 %v1693
    %v6725 = vpop.f32.mrb[0].mxu0
    %v6726 = vadd.f32 0.0, %v6725
    %v6727 = vpop.f32.mrb[0].mxu0
    %6728 = vmatprep.mubr.f32.mxu0 0.0
    %6729 = vmatmul.mubr.f32.gmra.mrb[0].mxu0 %v1696
    %v6730 = vpop.f32.mrb[0].mxu0
    %v6731 = vadd.f32 0.0, %v6730
    %v6732 = vpop.f32.mrb[0].mxu0
    %6733 = vmatprep.mubr.f32.mxu0 0.0
    %6734 = vmatmul.mubr.f32.gmra.mrb[0].mxu0 %v1699
    %v6735 = vpop.f32.mrb[0].mxu0
    %v6736 = vadd.f32 0.0, %v6735
    %v6737 = vpop.f32.mrb[0].mxu0
    %6738 = vmatprep.mubr.f32.mxu0 0.0
    %6739 = vmatmul.mubr.f32.gmra.mrb[0].mxu0 %v1702
    %v6740 = vpop.f32.mrb[0].mxu0
    %v6741 = vadd.f32 0.0, %v6740
    %v6742 = vpop.f32.mrb[0].mxu0
    %6743 = vmatprep.mubr.f32.mxu0 0.0
    %6744 = vmatmul.mubr.f32.gmra.mrb[0].mxu0 %v1705
    %v6745 = vpop.f32.mrb[0].mxu0
    %v6746 = vadd.f32 0.0, %v6745
    %v6747 = vpop.f32.mrb[0].mxu0
    %6748 = vmatprep.mubr.f32.mxu0 0.0
    %6749 = vmatmul.mubr.f32.gmra.mrb[0].mxu0 %v1708
    %v6750 = vpop.f32.mrb[0].mxu0
    %v6751 = vadd.f32 0.0, %v6750
    %v6752 = vpop.f32.mrb[0].mxu0
    %6753 = vmatprep.mubr.f32.mxu0 0.0
    %6754 = vmatmul.mubr.f32.gmra.mrb[0].mxu0 %v1711
    %v6755 = vpop.f32.mrb[0].mxu0
    %v6756 = vadd.f32 0.0, %v6755
    %v6757 = vpop.f32.mrb[0].mxu0
    %6758 = vmatprep.mubr.f32.mxu0 0.0
    %6759 = vmatmul.mubr.f32.gmra.mrb[0].mxu0 %v1714
    %v6760 = vpop.f32.mrb[0].mxu0
    %v6761 = vadd.f32 0.0, %v6760
    %v6762 = vpop.f32.mrb[0].mxu0
    %6763 = vmatprep.mubr.f32.mxu0 0.0
    %6764 = vmatmul.mubr.f32.gmra.mrb[0].mxu0 %v1717
    %v6765 = vpop.f32.mrb[0].mxu0
    %v6766 = vadd.f32 0.0, %v6765
    %v6767 = vpop.f32.mrb[0].mxu0
    %6768 = vmatprep.mubr.f32.mxu0 0.0
    %6769 = vmatmul.mubr.f32.gmra.mrb[0].mxu0 %v1720
    %v6770 = vpop.f32.mrb[0].mxu0
    %v6771 = vadd.f32 0.0, %v6770
    %v6772 = vpop.f32.mrb[0].mxu0
    %6773 = vmatprep.mubr.f32.mxu0 0.0
    %6774 = vmatmul.mubr.f32.gmra.mrb[0].mxu0 %v1723
    %v6775 = vpop.f32.mrb[0].mxu0
    %v6776 = vadd.f32 0.0, %v6775
    %v6777 = vpop.f32.mrb[0].mxu0
    %6778 = vmatprep.mubr.f32.mxu0 0.0
    %6779 = vmatmul.mubr.f32.gmra.mrb[0].mxu0 %v1726
    %v6780 = vpop.f32.mrb[0].mxu0
    %v6781 = vadd.f32 0.0, %v6780
    %v6782 = vpop.f32.mrb[0].mxu0
    %6783 = vmatprep.mubr.f32.mxu0 0.0
    %6784 = vmatmul.mubr.f32.gmra.mrb[0].mxu0 %v1729
    %v6785 = vpop.f32.mrb[0].mxu0
    %v6786 = vadd.f32 0.0, %v6785
    %v6787 = vpop.f32.mrb[0].mxu0
    %6788 = vmatprep.mubr.f32.mxu0 0.0
    %6789 = vmatmul.mubr.f32.gmra.mrb[0].mxu0 %v1732
    %v6790 = vpop.f32.mrb[0].mxu0
    %v6791 = vadd.f32 0.0, %v6790
    %v6792 = vpop.f32.mrb[0].mxu0
    %6793 = vmatprep.mubr.f32.mxu0 0.0
    %6794 = vmatmul.mubr.f32.gmra.mrb[0].mxu0 %v1735
    %v6795 = vpop.f32.mrb[0].mxu0
    %v6796 = vadd.f32 0.0, %v6795
    %v6797 = vpop.f32.mrb[0].mxu0
    %6798 = vmatprep.mubr.f32.mxu0 0.0
    %6799 = vmatmul.mubr.f32.gmra.mrb[0].mxu0 %v1738
    %v6800 = vpop.f32.mrb[0].mxu0
    %v6801 = vadd.f32 0.0, %v6800
    %v6802 = vpop.f32.mrb[0].mxu0
    %6803 = vmatprep.mubr.f32.mxu0 0.0
    %6804 = vmatmul.mubr.f32.gmra.mrb[0].mxu0 %v1741
    %v6805 = vpop.f32.mrb[0].mxu0
    %v6806 = vadd.f32 0.0, %v6805
    %v6807 = vpop.f32.mrb[0].mxu0
    %6808 = vmatprep.mubr.f32.mxu0 0.0
    %6809 = vmatmul.mubr.f32.gmra.mrb[0].mxu0 %v1744
    %v6810 = vpop.f32.mrb[0].mxu0
    %v6811 = vadd.f32 0.0, %v6810
    %v6812 = vpop.f32.mrb[0].mxu0
    %6813 = vmatprep.mubr.f32.mxu0 0.0
    %6814 = vmatmul.mubr.f32.gmra.mrb[0].mxu0 %v1747
    %v6815 = vpop.f32.mrb[0].mxu0
    %v6816 = vadd.f32 0.0, %v6815
    %v6817 = vpop.f32.mrb[0].mxu0
    %6818 = vmatprep.mubr.f32.mxu0 0.0
    %6819 = vmatmul.mubr.f32.gmra.mrb[0].mxu0 %v1750
    %v6820 = vpop.f32.mrb[0].mxu0
    %v6821 = vadd.f32 0.0, %v6820
    %v6822 = vpop.f32.mrb[0].mxu0
    %6823 = vmatprep.mubr.f32.mxu0 0.0
    %6824 = vmatmul.mubr.f32.gmra.mrb[0].mxu0 %v1753
    %v6825 = vpop.f32.mrb[0].mxu0
    %v6826 = vadd.f32 0.0, %v6825
    %v6827 = vpop.f32.mrb[0].mxu0
    %6828 = vmatprep.mubr.f32.mxu0 0.0
    %6829 = vmatmul.mubr.f32.gmra.mrb[0].mxu0 %v1756
    %v6830 = vpop.f32.mrb[0].mxu0
    %v6831 = vadd.f32 0.0, %v6830
    %v6832 = vpop.f32.mrb[0].mxu0
    %6833 = vmatprep.mubr.f32.mxu0 0.0
    %6834 = vmatmul.mubr.f32.gmra.mrb[0].mxu0 %v1759
    %v6835 = vpop.f32.mrb[0].mxu0
    %v6836 = vadd.f32 0.0, %v6835
    %v6837 = vpop.f32.mrb[0].mxu0
    %6838 = vmatprep.mubr.f32.mxu0 0.0
    %6839 = vmatmul.mubr.f32.gmra.mrb[0].mxu0 %v1762
    %v6840 = vpop.f32.mrb[0].mxu0
    %v6841 = vadd.f32 0.0, %v6840
    %v6842 = vpop.f32.mrb[0].mxu0
    %6843 = vmatprep.mubr.f32.mxu0 0.0
    %6844 = vmatmul.mubr.f32.gmra.mrb[0].mxu0 %v1765
    %v6845 = vpop.f32.mrb[0].mxu0
    %v6846 = vadd.f32 0.0, %v6845
    %v6847 = vpop.f32.mrb[0].mxu0
    %6848 = vmatprep.mubr.f32.mxu0 0.0
    %6849 = vmatmul.mubr.f32.gmra.mrb[0].mxu0 %v1768
    %v6850 = vpop.f32.mrb[0].mxu0
    %v6851 = vadd.f32 0.0, %v6850
    %v6852 = vpop.f32.mrb[0].mxu0
    %6853 = vmatprep.mubr.f32.mxu0 0.0
    %6854 = vmatmul.mubr.f32.gmra.mrb[0].mxu0 %v1771
    %v6855 = vpop.f32.mrb[0].mxu0
    %v6856 = vadd.f32 0.0, %v6855
    %v6857 = vpop.f32.mrb[0].mxu0
    %6858 = vmatprep.mubr.f32.mxu0 0.0
    %6859 = vmatmul.mubr.f32.gmra.mrb[0].mxu0 %v1774
    %v6860 = vpop.f32.mrb[0].mxu0
    %v6861 = vadd.f32 0.0, %v6860
    %v6862 = vpop.f32.mrb[0].mxu0
    %6863 = vmatprep.mubr.f32.mxu0 0.0
    %6864 = vmatmul.mubr.f32.gmra.mrb[0].mxu0 %v1777
    %v6865 = vpop.f32.mrb[0].mxu0
    %v6866 = vadd.f32 0.0, %v6865
    %v6867 = vpop.f32.mrb[0].mxu0
    %6868 = vmatprep.mubr.f32.mxu0 0.0
    %6869 = vmatmul.mubr.f32.gmra.mrb[0].mxu0 %v1780
    %v6870 = vpop.f32.mrb[0].mxu0
    %v6871 = vadd.f32 0.0, %v6870
    %v6872 = vpop.f32.mrb[0].mxu0
    %6873 = vmatprep.mubr.f32.mxu0 0.0
    %6874 = vmatmul.mubr.f32.gmra.mrb[0].mxu0 %v1783
    %v6875 = vpop.f32.mrb[0].mxu0
    %v6876 = vadd.f32 0.0, %v6875
    %v6877 = vpop.f32.mrb[0].mxu0
    %6878 = vmatprep.mubr.f32.mxu0 0.0
    %6879 = vmatmul.mubr.f32.gmra.mrb[0].mxu0 %v1786
    %v6880 = vpop.f32.mrb[0].mxu0
    %v6881 = vadd.f32 0.0, %v6880
    %v6882 = vpop.f32.mrb[0].mxu0
    %6883 = vmatprep.mubr.f32.mxu0 0.0
    %6884 = vmatmul.mubr.f32.gmra.mrb[0].mxu0 %v1789
    %v6885 = vpop.f32.mrb[0].mxu0
    %v6886 = vadd.f32 0.0, %v6885
    %v6887 = vpop.f32.mrb[0].mxu0
    %6888 = vmatprep.mubr.f32.mxu0 0.0
    %6889 = vmatmul.mubr.f32.gmra.mrb[0].mxu0 %v1792
    %v6890 = vpop.f32.mrb[0].mxu0
    %v6891 = vadd.f32 0.0, %v6890
    %v6892 = vpop.f32.mrb[0].mxu0
    %6893 = vmatprep.mubr.f32.mxu0 0.0
    %6894 = vmatmul.mubr.f32.gmra.mrb[0].mxu0 %v1795
    %v6895 = vpop.f32.mrb[0].mxu0
    %v6896 = vadd.f32 0.0, %v6895
    %v6897 = vpop.f32.mrb[0].mxu0
    %6898 = vmatprep.mubr.f32.mxu0 0.0
    %6899 = vmatmul.mubr.f32.gmra.mrb[0].mxu0 %v1798
    %v6900 = vpop.f32.mrb[0].mxu0
    %v6901 = vadd.f32 0.0, %v6900
    %v6902 = vpop.f32.mrb[0].mxu0
    %6903 = vmatprep.mubr.f32.mxu0 0.0
    %6904 = vmatmul.mubr.f32.gmra.mrb[0].mxu0 %v1801
    %v6905 = vpop.f32.mrb[0].mxu0
    %v6906 = vadd.f32 0.0, %v6905
    %v6907 = vpop.f32.mrb[0].mxu0
    %6908 = vmatprep.mubr.f32.mxu0 0.0
    %6909 = vmatmul.mubr.f32.gmra.mrb[0].mxu0 %v1804
    %v6910 = vpop.f32.mrb[0].mxu0
    %v6911 = vadd.f32 0.0, %v6910
    %v6912 = vpop.f32.mrb[0].mxu0
    %6913 = vdwg.mxu0
    %v6914 = vsub.f32 %v5571, %v6276
    %v6915 = vsub.f32 %v5576, %v6281
    %v6916 = vsub.f32 %v5581, %v6286
    %v6917 = vsub.f32 %v5586, %v6291
    %v6918 = vsub.f32 %v5591, %v6296
    %v6919 = vsub.f32 %v5596, %v6301
    %v6920 = vsub.f32 %v5601, %v6306
    %v6921 = vsub.f32 %v5606, %v6311
    %v6922 = vsub.f32 %v5611, %v6316
    %v6923 = vsub.f32 %v5616, %v6321
    %v6924 = vsub.f32 %v5621, %v6326
    %v6925 = vsub.f32 %v5626, %v6331
    %v6926 = vsub.f32 %v5631, %v6336
    %v6927 = vsub.f32 %v5636, %v6341
    %v6928 = vsub.f32 %v5641, %v6346
    %v6929 = vsub.f32 %v5646, %v6351
    %v6930 = vsub.f32 %v5651, %v6356
    %v6931 = vsub.f32 %v5656, %v6361
    %v6932 = vsub.f32 %v5661, %v6366
    %v6933 = vsub.f32 %v5666, %v6371
    %v6934 = vsub.f32 %v5671, %v6376
    %v6935 = vsub.f32 %v5676, %v6381
    %v6936 = vsub.f32 %v5681, %v6386
    %v6937 = vsub.f32 %v5686, %v6391
    %v6938 = vsub.f32 %v5691, %v6396
    %v6939 = vsub.f32 %v5696, %v6401
    %v6940 = vsub.f32 %v5701, %v6406
    %v6941 = vsub.f32 %v5706, %v6411
    %v6942 = vsub.f32 %v5711, %v6416
    %v6943 = vsub.f32 %v5716, %v6421
    %v6944 = vsub.f32 %v5721, %v6426
    %v6945 = vsub.f32 %v5726, %v6431
    %v6946 = vsub.f32 %v5731, %v6436
    %v6947 = vsub.f32 %v5736, %v6441
    %v6948 = vsub.f32 %v5741, %v6446
    %v6949 = vsub.f32 %v5746, %v6451
    %v6950 = vsub.f32 %v5751, %v6456
    %v6951 = vsub.f32 %v5756, %v6461
    %v6952 = vsub.f32 %v5761, %v6466
    %v6953 = vsub.f32 %v5766, %v6471
    %v6954 = vsub.f32 %v5771, %v6476
    %v6955 = vsub.f32 %v5776, %v6481
    %v6956 = vsub.f32 %v5781, %v6486
    %v6957 = vsub.f32 %v5786, %v6491
    %v6958 = vsub.f32 %v5791, %v6496
    %v6959 = vsub.f32 %v5796, %v6501
    %v6960 = vsub.f32 %v5801, %v6506
    %v6961 = vsub.f32 %v5806, %v6511
    %v6962 = vsub.f32 %v5811, %v6516
    %v6963 = vsub.f32 %v5816, %v6521
    %v6964 = vsub.f32 %v5821, %v6526
    %v6965 = vsub.f32 %v5826, %v6531
    %v6966 = vsub.f32 %v5831, %v6536
    %v6967 = vsub.f32 %v5836, %v6541
    %v6968 = vsub.f32 %v5841, %v6546
    %v6969 = vsub.f32 %v5846, %v6551
    %v6970 = vsub.f32 %v5851, %v6556
    %v6971 = vsub.f32 %v5856, %v6561
    %v6972 = vsub.f32 %v5861, %v6566
    %v6973 = vsub.f32 %v5866, %v6571
    %v6974 = vsub.f32 %v5871, %v6576
    %v6975 = vsub.f32 %v5876, %v6581
    %v6976 = vsub.f32 %v5881, %v6586
    %v6977 = vsub.f32 %v5886, %v6591
    %v6978 = vsub.f32 %v5891, %v6596
    %v6979 = vsub.f32 %v5896, %v6601
    %v6980 = vsub.f32 %v5901, %v6606
    %v6981 = vsub.f32 %v5906, %v6611
    %v6982 = vsub.f32 %v5911, %v6616
    %v6983 = vsub.f32 %v5916, %v6621
    %v6984 = vsub.f32 %v5921, %v6626
    %v6985 = vsub.f32 %v5926, %v6631
    %v6986 = vsub.f32 %v5931, %v6636
    %v6987 = vsub.f32 %v5936, %v6641
    %v6988 = vsub.f32 %v5941, %v6646
    %v6989 = vsub.f32 %v5946, %v6651
    %v6990 = vsub.f32 %v5951, %v6656
    %v6991 = vsub.f32 %v5956, %v6661
    %v6992 = vsub.f32 %v5961, %v6666
    %v6993 = vsub.f32 %v5966, %v6671
    %v6994 = vsub.f32 %v5971, %v6676
    %v6995 = vsub.f32 %v5976, %v6681
    %v6996 = vsub.f32 %v5981, %v6686
    %v6997 = vsub.f32 %v5986, %v6691
    %v6998 = vsub.f32 %v5991, %v6696
    %v6999 = vsub.f32 %v5996, %v6701
    %v7000 = vsub.f32 %v6001, %v6706
    %v7001 = vsub.f32 %v6006, %v6711
    %v7002 = vsub.f32 %v6011, %v6716
    %v7003 = vsub.f32 %v6016, %v6721
    %v7004 = vsub.f32 %v6021, %v6726
    %v7005 = vsub.f32 %v6026, %v6731
    %v7006 = vsub.f32 %v6031, %v6736
    %v7007 = vsub.f32 %v6036, %v6741
    %v7008 = vsub.f32 %v6041, %v6746
    %v7009 = vsub.f32 %v6046, %v6751
    %v7010 = vsub.f32 %v6051, %v6756
    %v7011 = vsub.f32 %v6056, %v6761
    %v7012 = vsub.f32 %v6061, %v6766
    %v7013 = vsub.f32 %v6066, %v6771
    %v7014 = vsub.f32 %v6071, %v6776
    %v7015 = vsub.f32 %v6076, %v6781
    %v7016 = vsub.f32 %v6081, %v6786
    %v7017 = vsub.f32 %v6086, %v6791
    %v7018 = vsub.f32 %v6091, %v6796
    %v7019 = vsub.f32 %v6096, %v6801
    %v7020 = vsub.f32 %v6101, %v6806
    %v7021 = vsub.f32 %v6106, %v6811
    %v7022 = vsub.f32 %v6111, %v6816
    %v7023 = vsub.f32 %v6116, %v6821
    %v7024 = vsub.f32 %v6121, %v6826
    %v7025 = vsub.f32 %v6126, %v6831
    %v7026 = vsub.f32 %v6131, %v6836
    %v7027 = vsub.f32 %v6136, %v6841
    %v7028 = vsub.f32 %v6141, %v6846
    %v7029 = vsub.f32 %v6146, %v6851
    %v7030 = vsub.f32 %v6151, %v6856
    %v7031 = vsub.f32 %v6156, %v6861
    %v7032 = vsub.f32 %v6161, %v6866
    %v7033 = vsub.f32 %v6166, %v6871
    %v7034 = vsub.f32 %v6171, %v6876
    %v7035 = vsub.f32 %v6176, %v6881
    %v7036 = vsub.f32 %v6181, %v6886
    %v7037 = vsub.f32 %v6186, %v6891
    %v7038 = vsub.f32 %v6191, %v6896
    %v7039 = vsub.f32 %v6196, %v6901
    %v7040 = vsub.f32 %v6201, %v6906
    %v7041 = vsub.f32 %v6206, %v6911
    %v7042 = vld [vmem:[%s9] sm:$0x1]
    %v7044 = vlaneseq
    %v7045 = vshrl.u32 %v7044, 7
    %v7046 = vsub.s32 0, %v7045
    %v7047 = vrot.slane %v7042, %v7046
    %v7049 = vadd.f32 %v6914, %v7047
    %v7050 = vadd.f32 %v6915, %v7047
    %v7051 = vadd.f32 %v6916, %v7047
    %v7052 = vadd.f32 %v6917, %v7047
    %v7053 = vadd.f32 %v6918, %v7047
    %v7054 = vadd.f32 %v6919, %v7047
    %v7055 = vadd.f32 %v6920, %v7047
    %v7056 = vadd.f32 %v6921, %v7047
    %v7057 = vadd.f32 %v6922, %v7047
    %v7058 = vadd.f32 %v6923, %v7047
    %v7059 = vadd.f32 %v6924, %v7047
    %v7060 = vadd.f32 %v6925, %v7047
    %v7061 = vadd.f32 %v6926, %v7047
    %v7062 = vadd.f32 %v6927, %v7047
    %v7063 = vadd.f32 %v6928, %v7047
    %v7064 = vadd.f32 %v6929, %v7047
    %v7065 = vadd.f32 %v6930, %v7047
    %v7066 = vadd.f32 %v6931, %v7047
    %v7067 = vadd.f32 %v6932, %v7047
    %v7068 = vadd.f32 %v6933, %v7047
    %v7069 = vadd.f32 %v6934, %v7047
    %v7070 = vadd.f32 %v6935, %v7047
    %v7071 = vadd.f32 %v6936, %v7047
    %v7072 = vadd.f32 %v6937, %v7047
    %v7073 = vadd.f32 %v6938, %v7047
    %v7074 = vadd.f32 %v6939, %v7047
    %v7075 = vadd.f32 %v6940, %v7047
    %v7076 = vadd.f32 %v6941, %v7047
    %v7077 = vadd.f32 %v6942, %v7047
    %v7078 = vadd.f32 %v6943, %v7047
    %v7079 = vadd.f32 %v6944, %v7047
    %v7080 = vadd.f32 %v6945, %v7047
    %v7081 = vadd.f32 %v6946, %v7047
    %v7082 = vadd.f32 %v6947, %v7047
    %v7083 = vadd.f32 %v6948, %v7047
    %v7084 = vadd.f32 %v6949, %v7047
    %v7085 = vadd.f32 %v6950, %v7047
    %v7086 = vadd.f32 %v6951, %v7047
    %v7087 = vadd.f32 %v6952, %v7047
    %v7088 = vadd.f32 %v6953, %v7047
    %v7089 = vadd.f32 %v6954, %v7047
    %v7090 = vadd.f32 %v6955, %v7047
    %v7091 = vadd.f32 %v6956, %v7047
    %v7092 = vadd.f32 %v6957, %v7047
    %v7093 = vadd.f32 %v6958, %v7047
    %v7094 = vadd.f32 %v6959, %v7047
    %v7095 = vadd.f32 %v6960, %v7047
    %v7096 = vadd.f32 %v6961, %v7047
    %v7097 = vadd.f32 %v6962, %v7047
    %v7098 = vadd.f32 %v6963, %v7047
    %v7099 = vadd.f32 %v6964, %v7047
    %v7100 = vadd.f32 %v6965, %v7047
    %v7101 = vadd.f32 %v6966, %v7047
    %v7102 = vadd.f32 %v6967, %v7047
    %v7103 = vadd.f32 %v6968, %v7047
    %v7104 = vadd.f32 %v6969, %v7047
    %v7105 = vadd.f32 %v6970, %v7047
    %v7106 = vadd.f32 %v6971, %v7047
    %v7107 = vadd.f32 %v6972, %v7047
    %v7108 = vadd.f32 %v6973, %v7047
    %v7109 = vadd.f32 %v6974, %v7047
    %v7110 = vadd.f32 %v6975, %v7047
    %v7111 = vadd.f32 %v6976, %v7047
    %v7112 = vadd.f32 %v6977, %v7047
    %v7113 = vadd.f32 %v6978, %v7047
    %v7114 = vadd.f32 %v6979, %v7047
    %v7115 = vadd.f32 %v6980, %v7047
    %v7116 = vadd.f32 %v6981, %v7047
    %v7117 = vadd.f32 %v6982, %v7047
    %v7118 = vadd.f32 %v6983, %v7047
    %v7119 = vadd.f32 %v6984, %v7047
    %v7120 = vadd.f32 %v6985, %v7047
    %v7121 = vadd.f32 %v6986, %v7047
    %v7122 = vadd.f32 %v6987, %v7047
    %v7123 = vadd.f32 %v6988, %v7047
    %v7124 = vadd.f32 %v6989, %v7047
    %v7125 = vadd.f32 %v6990, %v7047
    %v7126 = vadd.f32 %v6991, %v7047
    %v7127 = vadd.f32 %v6992, %v7047
    %v7128 = vadd.f32 %v6993, %v7047
    %v7129 = vadd.f32 %v6994, %v7047
    %v7130 = vadd.f32 %v6995, %v7047
    %v7131 = vadd.f32 %v6996, %v7047
    %v7132 = vadd.f32 %v6997, %v7047
    %v7133 = vadd.f32 %v6998, %v7047
    %v7134 = vadd.f32 %v6999, %v7047
    %v7135 = vadd.f32 %v7000, %v7047
    %v7136 = vadd.f32 %v7001, %v7047
    %v7137 = vadd.f32 %v7002, %v7047
    %v7138 = vadd.f32 %v7003, %v7047
    %v7139 = vadd.f32 %v7004, %v7047
    %v7140 = vadd.f32 %v7005, %v7047
    %v7141 = vadd.f32 %v7006, %v7047
    %v7142 = vadd.f32 %v7007, %v7047
    %v7143 = vadd.f32 %v7008, %v7047
    %v7144 = vadd.f32 %v7009, %v7047
    %v7145 = vadd.f32 %v7010, %v7047
    %v7146 = vadd.f32 %v7011, %v7047
    %v7147 = vadd.f32 %v7012, %v7047
    %v7148 = vadd.f32 %v7013, %v7047
    %v7149 = vadd.f32 %v7014, %v7047
    %v7150 = vadd.f32 %v7015, %v7047
    %v7151 = vadd.f32 %v7016, %v7047
    %v7152 = vadd.f32 %v7017, %v7047
    %v7153 = vadd.f32 %v7018, %v7047
    %v7154 = vadd.f32 %v7019, %v7047
    %v7155 = vadd.f32 %v7020, %v7047
    %v7156 = vadd.f32 %v7021, %v7047
    %v7157 = vadd.f32 %v7022, %v7047
    %v7158 = vadd.f32 %v7023, %v7047
    %v7159 = vadd.f32 %v7024, %v7047
    %v7160 = vadd.f32 %v7025, %v7047
    %v7161 = vadd.f32 %v7026, %v7047
    %v7162 = vadd.f32 %v7027, %v7047
    %v7163 = vadd.f32 %v7028, %v7047
    %v7164 = vadd.f32 %v7029, %v7047
    %v7165 = vadd.f32 %v7030, %v7047
    %v7166 = vadd.f32 %v7031, %v7047
    %v7167 = vadd.f32 %v7032, %v7047
    %v7168 = vadd.f32 %v7033, %v7047
    %v7169 = vadd.f32 %v7034, %v7047
    %v7170 = vadd.f32 %v7035, %v7047
    %v7171 = vadd.f32 %v7036, %v7047
    %v7172 = vadd.f32 %v7037, %v7047
    %v7173 = vadd.f32 %v7038, %v7047
    %v7174 = vadd.f32 %v7039, %v7047
    %v7175 = vadd.f32 %v7040, %v7047
    %v7176 = vadd.f32 %v7041, %v7047
    %v7177 = vmax.f32 %v7049, 0.0
    %v7178 = vmax.f32 %v7050, 0.0
    %v7179 = vmax.f32 %v7051, 0.0
    %v7180 = vmax.f32 %v7052, 0.0
    %v7181 = vmax.f32 %v7053, 0.0
    %v7182 = vmax.f32 %v7054, 0.0
    %v7183 = vmax.f32 %v7055, 0.0
    %v7184 = vmax.f32 %v7056, 0.0
    %v7185 = vmax.f32 %v7057, 0.0
    %v7186 = vmax.f32 %v7058, 0.0
    %v7187 = vmax.f32 %v7059, 0.0
    %v7188 = vmax.f32 %v7060, 0.0
    %v7189 = vmax.f32 %v7061, 0.0
    %v7190 = vmax.f32 %v7062, 0.0
    %v7191 = vmax.f32 %v7063, 0.0
    %v7192 = vmax.f32 %v7064, 0.0
    %v7193 = vmax.f32 %v7065, 0.0
    %v7194 = vmax.f32 %v7066, 0.0
    %v7195 = vmax.f32 %v7067, 0.0
    %v7196 = vmax.f32 %v7068, 0.0
    %v7197 = vmax.f32 %v7069, 0.0
    %v7198 = vmax.f32 %v7070, 0.0
    %v7199 = vmax.f32 %v7071, 0.0
    %v7200 = vmax.f32 %v7072, 0.0
    %v7201 = vmax.f32 %v7073, 0.0
    %v7202 = vmax.f32 %v7074, 0.0
    %v7203 = vmax.f32 %v7075, 0.0
    %v7204 = vmax.f32 %v7076, 0.0
    %v7205 = vmax.f32 %v7077, 0.0
    %v7206 = vmax.f32 %v7078, 0.0
    %v7207 = vmax.f32 %v7079, 0.0
    %v7208 = vmax.f32 %v7080, 0.0
    %v7209 = vmax.f32 %v7081, 0.0
    %v7210 = vmax.f32 %v7082, 0.0
    %v7211 = vmax.f32 %v7083, 0.0
    %v7212 = vmax.f32 %v7084, 0.0
    %v7213 = vmax.f32 %v7085, 0.0
    %v7214 = vmax.f32 %v7086, 0.0
    %v7215 = vmax.f32 %v7087, 0.0
    %v7216 = vmax.f32 %v7088, 0.0
    %v7217 = vmax.f32 %v7089, 0.0
    %v7218 = vmax.f32 %v7090, 0.0
    %v7219 = vmax.f32 %v7091, 0.0
    %v7220 = vmax.f32 %v7092, 0.0
    %v7221 = vmax.f32 %v7093, 0.0
    %v7222 = vmax.f32 %v7094, 0.0
    %v7223 = vmax.f32 %v7095, 0.0
    %v7224 = vmax.f32 %v7096, 0.0
    %v7225 = vmax.f32 %v7097, 0.0
    %v7226 = vmax.f32 %v7098, 0.0
    %v7227 = vmax.f32 %v7099, 0.0
    %v7228 = vmax.f32 %v7100, 0.0
    %v7229 = vmax.f32 %v7101, 0.0
    %v7230 = vmax.f32 %v7102, 0.0
    %v7231 = vmax.f32 %v7103, 0.0
    %v7232 = vmax.f32 %v7104, 0.0
    %v7233 = vmax.f32 %v7105, 0.0
    %v7234 = vmax.f32 %v7106, 0.0
    %v7235 = vmax.f32 %v7107, 0.0
    %v7236 = vmax.f32 %v7108, 0.0
    %v7237 = vmax.f32 %v7109, 0.0
    %v7238 = vmax.f32 %v7110, 0.0
    %v7239 = vmax.f32 %v7111, 0.0
    %v7240 = vmax.f32 %v7112, 0.0
    %v7241 = vmax.f32 %v7113, 0.0
    %v7242 = vmax.f32 %v7114, 0.0
    %v7243 = vmax.f32 %v7115, 0.0
    %v7244 = vmax.f32 %v7116, 0.0
    %v7245 = vmax.f32 %v7117, 0.0
    %v7246 = vmax.f32 %v7118, 0.0
    %v7247 = vmax.f32 %v7119, 0.0
    %v7248 = vmax.f32 %v7120, 0.0
    %v7249 = vmax.f32 %v7121, 0.0
    %v7250 = vmax.f32 %v7122, 0.0
    %v7251 = vmax.f32 %v7123, 0.0
    %v7252 = vmax.f32 %v7124, 0.0
    %v7253 = vmax.f32 %v7125, 0.0
    %v7254 = vmax.f32 %v7126, 0.0
    %v7255 = vmax.f32 %v7127, 0.0
    %v7256 = vmax.f32 %v7128, 0.0
    %v7257 = vmax.f32 %v7129, 0.0
    %v7258 = vmax.f32 %v7130, 0.0
    %v7259 = vmax.f32 %v7131, 0.0
    %v7260 = vmax.f32 %v7132, 0.0
    %v7261 = vmax.f32 %v7133, 0.0
    %v7262 = vmax.f32 %v7134, 0.0
    %v7263 = vmax.f32 %v7135, 0.0
    %v7264 = vmax.f32 %v7136, 0.0
    %v7265 = vmax.f32 %v7137, 0.0
    %v7266 = vmax.f32 %v7138, 0.0
    %v7267 = vmax.f32 %v7139, 0.0
    %v7268 = vmax.f32 %v7140, 0.0
    %v7269 = vmax.f32 %v7141, 0.0
    %v7270 = vmax.f32 %v7142, 0.0
    %v7271 = vmax.f32 %v7143, 0.0
    %v7272 = vmax.f32 %v7144, 0.0
    %v7273 = vmax.f32 %v7145, 0.0
    %v7274 = vmax.f32 %v7146, 0.0
    %v7275 = vmax.f32 %v7147, 0.0
    %v7276 = vmax.f32 %v7148, 0.0
    %v7277 = vmax.f32 %v7149, 0.0
    %v7278 = vmax.f32 %v7150, 0.0
    %v7279 = vmax.f32 %v7151, 0.0
    %v7280 = vmax.f32 %v7152, 0.0
    %v7281 = vmax.f32 %v7153, 0.0
    %v7282 = vmax.f32 %v7154, 0.0
    %v7283 = vmax.f32 %v7155, 0.0
    %v7284 = vmax.f32 %v7156, 0.0
    %v7285 = vmax.f32 %v7157, 0.0
    %v7286 = vmax.f32 %v7158, 0.0
    %v7287 = vmax.f32 %v7159, 0.0
    %v7288 = vmax.f32 %v7160, 0.0
    %v7289 = vmax.f32 %v7161, 0.0
    %v7290 = vmax.f32 %v7162, 0.0
    %v7291 = vmax.f32 %v7163, 0.0
    %v7292 = vmax.f32 %v7164, 0.0
    %v7293 = vmax.f32 %v7165, 0.0
    %v7294 = vmax.f32 %v7166, 0.0
    %v7295 = vmax.f32 %v7167, 0.0
    %v7296 = vmax.f32 %v7168, 0.0
    %v7297 = vmax.f32 %v7169, 0.0
    %v7298 = vmax.f32 %v7170, 0.0
    %v7299 = vmax.f32 %v7171, 0.0
    %v7300 = vmax.f32 %v7172, 0.0
    %v7301 = vmax.f32 %v7173, 0.0
    %v7302 = vmax.f32 %v7174, 0.0
    %v7303 = vmax.f32 %v7175, 0.0
    %v7304 = vmax.f32 %v7176, 0.0
    %v7305 = vld [vmem:[%s10] sm:$0xff]
    %v7306 = vld [vmem:[%s10 + $0x8] sm:$0xff]
    %v7307 = vld [vmem:[%s10 + $0x10] sm:$0xff]
    %v7308 = vld [vmem:[%s10 + $0x18] sm:$0xff]
    %v7309 = vld [vmem:[%s10 + $0x20] sm:$0xff]
    %v7310 = vld [vmem:[%s10 + $0x28] sm:$0xff]
    %v7311 = vld [vmem:[%s10 + $0x30] sm:$0xff]
    %v7312 = vld [vmem:[%s10 + $0x38] sm:$0xff]
    %v7313 = vld [vmem:[%s11] sm:$0x1]
    %v7315 = vlaneseq
    %v7316 = vshrl.u32 %v7315, 7
    %v7317 = vsub.s32 0, %v7316
    %v7318 = vrot.slane %v7313, %v7317
    %vm7320 = vcmask 523264
    %v7322 = vsel %vm7320, %v7177, 0
    %v7325 = vsel %vm7320, %v7178, 0
    %v7328 = vsel %vm7320, %v7179, 0
    %v7331 = vsel %vm7320, %v7180, 0
    %v7334 = vsel %vm7320, %v7181, 0
    %v7337 = vsel %vm7320, %v7182, 0
    %v7340 = vsel %vm7320, %v7183, 0
    %v7343 = vsel %vm7320, %v7184, 0
    %v7346 = vsel %vm7320, %v7185, 0
    %v7349 = vsel %vm7320, %v7186, 0
    %v7352 = vsel %vm7320, %v7187, 0
    %v7355 = vsel %vm7320, %v7188, 0
    %v7358 = vsel %vm7320, %v7189, 0
    %v7361 = vsel %vm7320, %v7190, 0
    %v7364 = vsel %vm7320, %v7191, 0
    %v7367 = vsel %vm7320, %v7192, 0
    %v7370 = vsel %vm7320, %v7193, 0
    %v7373 = vsel %vm7320, %v7194, 0
    %v7376 = vsel %vm7320, %v7195, 0
    %v7379 = vsel %vm7320, %v7196, 0
    %v7382 = vsel %vm7320, %v7197, 0
    %v7385 = vsel %vm7320, %v7198, 0
    %v7388 = vsel %vm7320, %v7199, 0
    %v7391 = vsel %vm7320, %v7200, 0
    %v7394 = vsel %vm7320, %v7201, 0
    %v7397 = vsel %vm7320, %v7202, 0
    %v7400 = vsel %vm7320, %v7203, 0
    %v7403 = vsel %vm7320, %v7204, 0
    %v7406 = vsel %vm7320, %v7205, 0
    %v7409 = vsel %vm7320, %v7206, 0
    %v7412 = vsel %vm7320, %v7207, 0
    %v7415 = vsel %vm7320, %v7208, 0
    %v7418 = vsel %vm7320, %v7209, 0
    %v7421 = vsel %vm7320, %v7210, 0
    %v7424 = vsel %vm7320, %v7211, 0
    %v7427 = vsel %vm7320, %v7212, 0
    %v7430 = vsel %vm7320, %v7213, 0
    %v7433 = vsel %vm7320, %v7214, 0
    %v7436 = vsel %vm7320, %v7215, 0
    %v7439 = vsel %vm7320, %v7216, 0
    %v7442 = vsel %vm7320, %v7217, 0
    %v7445 = vsel %vm7320, %v7218, 0
    %v7448 = vsel %vm7320, %v7219, 0
    %v7451 = vsel %vm7320, %v7220, 0
    %v7454 = vsel %vm7320, %v7221, 0
    %v7457 = vsel %vm7320, %v7222, 0
    %v7460 = vsel %vm7320, %v7223, 0
    %v7463 = vsel %vm7320, %v7224, 0
    %v7466 = vsel %vm7320, %v7225, 0
    %v7469 = vsel %vm7320, %v7226, 0
    %v7472 = vsel %vm7320, %v7227, 0
    %v7475 = vsel %vm7320, %v7228, 0
    %v7478 = vsel %vm7320, %v7229, 0
    %v7481 = vsel %vm7320, %v7230, 0
    %v7484 = vsel %vm7320, %v7231, 0
    %v7487 = vsel %vm7320, %v7232, 0
    %v7490 = vsel %vm7320, %v7233, 0
    %v7493 = vsel %vm7320, %v7234, 0
    %v7496 = vsel %vm7320, %v7235, 0
    %v7499 = vsel %vm7320, %v7236, 0
    %v7502 = vsel %vm7320, %v7237, 0
    %v7505 = vsel %vm7320, %v7238, 0
    %v7508 = vsel %vm7320, %v7239, 0
    %v7511 = vsel %vm7320, %v7240, 0
    %v7514 = vsel %vm7320, %v7241, 0
    %v7517 = vsel %vm7320, %v7242, 0
    %v7520 = vsel %vm7320, %v7243, 0
    %v7523 = vsel %vm7320, %v7244, 0
    %v7526 = vsel %vm7320, %v7245, 0
    %v7529 = vsel %vm7320, %v7246, 0
    %v7532 = vsel %vm7320, %v7247, 0
    %v7535 = vsel %vm7320, %v7248, 0
    %v7538 = vsel %vm7320, %v7249, 0
    %v7541 = vsel %vm7320, %v7250, 0
    %v7544 = vsel %vm7320, %v7251, 0
    %v7547 = vsel %vm7320, %v7252, 0
    %v7550 = vsel %vm7320, %v7253, 0
    %v7553 = vsel %vm7320, %v7254, 0
    %v7556 = vsel %vm7320, %v7255, 0
    %v7559 = vsel %vm7320, %v7256, 0
    %v7562 = vsel %vm7320, %v7257, 0
    %v7565 = vsel %vm7320, %v7258, 0
    %v7568 = vsel %vm7320, %v7259, 0
    %v7571 = vsel %vm7320, %v7260, 0
    %v7574 = vsel %vm7320, %v7261, 0
    %v7577 = vsel %vm7320, %v7262, 0
    %v7580 = vsel %vm7320, %v7263, 0
    %v7583 = vsel %vm7320, %v7264, 0
    %v7586 = vsel %vm7320, %v7265, 0
    %v7589 = vsel %vm7320, %v7266, 0
    %v7592 = vsel %vm7320, %v7267, 0
    %v7595 = vsel %vm7320, %v7268, 0
    %v7598 = vsel %vm7320, %v7269, 0
    %v7601 = vsel %vm7320, %v7270, 0
    %v7604 = vsel %vm7320, %v7271, 0
    %v7607 = vsel %vm7320, %v7272, 0
    %v7610 = vsel %vm7320, %v7273, 0
    %v7613 = vsel %vm7320, %v7274, 0
    %v7616 = vsel %vm7320, %v7275, 0
    %v7619 = vsel %vm7320, %v7276, 0
    %v7622 = vsel %vm7320, %v7277, 0
    %v7625 = vsel %vm7320, %v7278, 0
    %v7628 = vsel %vm7320, %v7279, 0
    %v7631 = vsel %vm7320, %v7280, 0
    %v7634 = vsel %vm7320, %v7281, 0
    %v7637 = vsel %vm7320, %v7282, 0
    %v7640 = vsel %vm7320, %v7283, 0
    %v7643 = vsel %vm7320, %v7284, 0
    %v7646 = vsel %vm7320, %v7285, 0
    %v7649 = vsel %vm7320, %v7286, 0
    %v7652 = vsel %vm7320, %v7287, 0
    %v7655 = vsel %vm7320, %v7288, 0
    %v7658 = vsel %vm7320, %v7289, 0
    %v7661 = vsel %vm7320, %v7290, 0
    %v7664 = vsel %vm7320, %v7291, 0
    %v7667 = vsel %vm7320, %v7292, 0
    %v7670 = vsel %vm7320, %v7293, 0
    %v7673 = vsel %vm7320, %v7294, 0
    %v7676 = vsel %vm7320, %v7295, 0
    %v7679 = vsel %vm7320, %v7296, 0
    %v7682 = vsel %vm7320, %v7297, 0
    %v7685 = vsel %vm7320, %v7298, 0
    %v7688 = vsel %vm7320, %v7299, 0
    %v7691 = vsel %vm7320, %v7300, 0
    %v7694 = vsel %vm7320, %v7301, 0
    %v7697 = vsel %vm7320, %v7302, 0
    %v7700 = vsel %vm7320, %v7303, 0
    %v7703 = vsel %vm7320, %v7304, 0
    %7705 = vmatprep.subr.mxu0 0.0
    %7706 = vmatpush1.msra.mxu0 %v7305
    %7707 = vmatprep.subr.mxu0 0.0
    %7708 = vmatpush1.msra.mxu0 %v7306
    %7709 = vmatprep.subr.mxu0 0.0
    %7710 = vmatpush1.msra.mxu0 %v7307
    %7711 = vmatprep.subr.mxu0 0.0
    %7712 = vmatpush1.msra.mxu0 %v7308
    %7713 = vmatprep.subr.mxu0 0.0
    %7714 = vmatpush1.msra.mxu0 %v7309
    %7715 = vmatprep.subr.mxu0 0.0
    %7716 = vmatpush1.msra.mxu0 %v7310
    %7717 = vmatprep.subr.mxu0 0.0
    %7718 = vmatpush1.msra.mxu0 %v7311
    %7719 = vmatprep.subr.mxu0 0.0
    %7720 = vmatpush1.msra.mxu0 %v7312
    %7721 = vmatprep.subr.mxu0 0.0
    %7722 = vmatpush1.msra.mxu0 0.0
    %7723 = vmatprep.subr.mxu0 0.0
    %7724 = vmatpush1.msra.mxu0 0.0
    %7725 = vmatprep.subr.mxu0 0.0
    %7726 = vmatpush1.msra.mxu0 0.0
    %7727 = vmatprep.subr.mxu0 0.0
    %7728 = vmatpush1.msra.mxu0 0.0
    %7729 = vmatprep.subr.mxu0 0.0
    %7730 = vmatpush1.msra.mxu0 0.0
    %7731 = vmatprep.subr.mxu0 0.0
    %7732 = vmatpush1.msra.mxu0 0.0
    %7733 = vmatprep.subr.mxu0 0.0
    %7734 = vmatpush1.msra.mxu0 0.0
    %7735 = vmatprep.subr.mxu0 0.0
    %7736 = vmatpush1.msra.mxu0 0.0
    %7737 = vmatprep.subr.mxu0 0.0
    %7738 = vmatpush1.msra.mxu0 0.0
    %7739 = vmatprep.subr.mxu0 0.0
    %7740 = vmatpush1.msra.mxu0 0.0
    %7741 = vmatprep.subr.mxu0 0.0
    %7742 = vmatpush1.msra.mxu0 0.0
    %7743 = vmatprep.subr.mxu0 0.0
    %7744 = vmatpush1.msra.mxu0 0.0
    %7745 = vmatprep.subr.mxu0 0.0
    %7746 = vmatpush1.msra.mxu0 0.0
    %7747 = vmatprep.subr.mxu0 0.0
    %7748 = vmatpush1.msra.mxu0 0.0
    %7749 = vmatprep.subr.mxu0 0.0
    %7750 = vmatpush1.msra.mxu0 0.0
    %7751 = vmatprep.subr.mxu0 0.0
    %7752 = vmatpush1.msra.mxu0 0.0
    %7753 = vmatprep.subr.mxu0 0.0
    %7754 = vmatpush1.msra.mxu0 0.0
    %7755 = vmatprep.subr.mxu0 0.0
    %7756 = vmatpush1.msra.mxu0 0.0
    %7757 = vmatprep.subr.mxu0 0.0
    %7758 = vmatpush1.msra.mxu0 0.0
    %7759 = vmatprep.subr.mxu0 0.0
    %7760 = vmatpush1.msra.mxu0 0.0
    %7761 = vmatprep.subr.mxu0 0.0
    %7762 = vmatpush1.msra.mxu0 0.0
    %7763 = vmatprep.subr.mxu0 0.0
    %7764 = vmatpush1.msra.mxu0 0.0
    %7765 = vmatprep.subr.mxu0 0.0
    %7766 = vmatpush1.msra.mxu0 0.0
    %7767 = vmatprep.subr.mxu0 0.0
    %7768 = vmatpush1.msra.mxu0 0.0
    %7769 = vmatprep.mubr.f32.mxu0 0.0
    %7770 = vmatmul.mubr.f32.gmra.mrb[0].mxu0 %v7322
    %v7771 = vpop.f32.mrb[0].mxu0
    %v7772 = vadd.f32 %v7318, %v7771
    %v7773 = vpop.f32.mrb[0].mxu0
    %7774 = vmatprep.mubr.f32.mxu0 0.0
    %7775 = vmatmul.mubr.f32.gmra.mrb[0].mxu0 %v7325
    %v7776 = vpop.f32.mrb[0].mxu0
    %v7777 = vadd.f32 %v7318, %v7776
    %v7778 = vpop.f32.mrb[0].mxu0
    %7779 = vmatprep.mubr.f32.mxu0 0.0
    %7780 = vmatmul.mubr.f32.gmra.mrb[0].mxu0 %v7328
    %v7781 = vpop.f32.mrb[0].mxu0
    %v7782 = vadd.f32 %v7318, %v7781
    %v7783 = vpop.f32.mrb[0].mxu0
    %7784 = vmatprep.mubr.f32.mxu0 0.0
    %7785 = vmatmul.mubr.f32.gmra.mrb[0].mxu0 %v7331
    %v7786 = vpop.f32.mrb[0].mxu0
    %v7787 = vadd.f32 %v7318, %v7786
    %v7788 = vpop.f32.mrb[0].mxu0
    %7789 = vmatprep.mubr.f32.mxu0 0.0
    %7790 = vmatmul.mubr.f32.gmra.mrb[0].mxu0 %v7334
    %v7791 = vpop.f32.mrb[0].mxu0
    %v7792 = vadd.f32 %v7318, %v7791
    %v7793 = vpop.f32.mrb[0].mxu0
    %7794 = vmatprep.mubr.f32.mxu0 0.0
    %7795 = vmatmul.mubr.f32.gmra.mrb[0].mxu0 %v7337
    %v7796 = vpop.f32.mrb[0].mxu0
    %v7797 = vadd.f32 %v7318, %v7796
    %v7798 = vpop.f32.mrb[0].mxu0
    %7799 = vmatprep.mubr.f32.mxu0 0.0
    %7800 = vmatmul.mubr.f32.gmra.mrb[0].mxu0 %v7340
    %v7801 = vpop.f32.mrb[0].mxu0
    %v7802 = vadd.f32 %v7318, %v7801
    %v7803 = vpop.f32.mrb[0].mxu0
    %7804 = vmatprep.mubr.f32.mxu0 0.0
    %7805 = vmatmul.mubr.f32.gmra.mrb[0].mxu0 %v7343
    %v7806 = vpop.f32.mrb[0].mxu0
    %v7807 = vadd.f32 %v7318, %v7806
    %v7808 = vpop.f32.mrb[0].mxu0
    %7809 = vmatprep.mubr.f32.mxu0 0.0
    %7810 = vmatmul.mubr.f32.gmra.mrb[0].mxu0 %v7346
    %v7811 = vpop.f32.mrb[0].mxu0
    %v7812 = vadd.f32 %v7318, %v7811
    %v7813 = vpop.f32.mrb[0].mxu0
    %7814 = vmatprep.mubr.f32.mxu0 0.0
    %7815 = vmatmul.mubr.f32.gmra.mrb[0].mxu0 %v7349
    %v7816 = vpop.f32.mrb[0].mxu0
    %v7817 = vadd.f32 %v7318, %v7816
    %v7818 = vpop.f32.mrb[0].mxu0
    %7819 = vmatprep.mubr.f32.mxu0 0.0
    %7820 = vmatmul.mubr.f32.gmra.mrb[0].mxu0 %v7352
    %v7821 = vpop.f32.mrb[0].mxu0
    %v7822 = vadd.f32 %v7318, %v7821
    %v7823 = vpop.f32.mrb[0].mxu0
    %7824 = vmatprep.mubr.f32.mxu0 0.0
    %7825 = vmatmul.mubr.f32.gmra.mrb[0].mxu0 %v7355
    %v7826 = vpop.f32.mrb[0].mxu0
    %v7827 = vadd.f32 %v7318, %v7826
    %v7828 = vpop.f32.mrb[0].mxu0
    %7829 = vmatprep.mubr.f32.mxu0 0.0
    %7830 = vmatmul.mubr.f32.gmra.mrb[0].mxu0 %v7358
    %v7831 = vpop.f32.mrb[0].mxu0
    %v7832 = vadd.f32 %v7318, %v7831
    %v7833 = vpop.f32.mrb[0].mxu0
    %7834 = vmatprep.mubr.f32.mxu0 0.0
    %7835 = vmatmul.mubr.f32.gmra.mrb[0].mxu0 %v7361
    %v7836 = vpop.f32.mrb[0].mxu0
    %v7837 = vadd.f32 %v7318, %v7836
    %v7838 = vpop.f32.mrb[0].mxu0
    %7839 = vmatprep.mubr.f32.mxu0 0.0
    %7840 = vmatmul.mubr.f32.gmra.mrb[0].mxu0 %v7364
    %v7841 = vpop.f32.mrb[0].mxu0
    %v7842 = vadd.f32 %v7318, %v7841
    %v7843 = vpop.f32.mrb[0].mxu0
    %7844 = vmatprep.mubr.f32.mxu0 0.0
    %7845 = vmatmul.mubr.f32.gmra.mrb[0].mxu0 %v7367
    %v7846 = vpop.f32.mrb[0].mxu0
    %v7847 = vadd.f32 %v7318, %v7846
    %v7848 = vpop.f32.mrb[0].mxu0
    %7849 = vmatprep.mubr.f32.mxu0 0.0
    %7850 = vmatmul.mubr.f32.gmra.mrb[0].mxu0 %v7370
    %v7851 = vpop.f32.mrb[0].mxu0
    %v7852 = vadd.f32 %v7318, %v7851
    %v7853 = vpop.f32.mrb[0].mxu0
    %7854 = vmatprep.mubr.f32.mxu0 0.0
    %7855 = vmatmul.mubr.f32.gmra.mrb[0].mxu0 %v7373
    %v7856 = vpop.f32.mrb[0].mxu0
    %v7857 = vadd.f32 %v7318, %v7856
    %v7858 = vpop.f32.mrb[0].mxu0
    %7859 = vmatprep.mubr.f32.mxu0 0.0
    %7860 = vmatmul.mubr.f32.gmra.mrb[0].mxu0 %v7376
    %v7861 = vpop.f32.mrb[0].mxu0
    %v7862 = vadd.f32 %v7318, %v7861
    %v7863 = vpop.f32.mrb[0].mxu0
    %7864 = vmatprep.mubr.f32.mxu0 0.0
    %7865 = vmatmul.mubr.f32.gmra.mrb[0].mxu0 %v7379
    %v7866 = vpop.f32.mrb[0].mxu0
    %v7867 = vadd.f32 %v7318, %v7866
    %v7868 = vpop.f32.mrb[0].mxu0
    %7869 = vmatprep.mubr.f32.mxu0 0.0
    %7870 = vmatmul.mubr.f32.gmra.mrb[0].mxu0 %v7382
    %v7871 = vpop.f32.mrb[0].mxu0
    %v7872 = vadd.f32 %v7318, %v7871
    %v7873 = vpop.f32.mrb[0].mxu0
    %7874 = vmatprep.mubr.f32.mxu0 0.0
    %7875 = vmatmul.mubr.f32.gmra.mrb[0].mxu0 %v7385
    %v7876 = vpop.f32.mrb[0].mxu0
    %v7877 = vadd.f32 %v7318, %v7876
    %v7878 = vpop.f32.mrb[0].mxu0
    %7879 = vmatprep.mubr.f32.mxu0 0.0
    %7880 = vmatmul.mubr.f32.gmra.mrb[0].mxu0 %v7388
    %v7881 = vpop.f32.mrb[0].mxu0
    %v7882 = vadd.f32 %v7318, %v7881
    %v7883 = vpop.f32.mrb[0].mxu0
    %7884 = vmatprep.mubr.f32.mxu0 0.0
    %7885 = vmatmul.mubr.f32.gmra.mrb[0].mxu0 %v7391
    %v7886 = vpop.f32.mrb[0].mxu0
    %v7887 = vadd.f32 %v7318, %v7886
    %v7888 = vpop.f32.mrb[0].mxu0
    %7889 = vmatprep.mubr.f32.mxu0 0.0
    %7890 = vmatmul.mubr.f32.gmra.mrb[0].mxu0 %v7394
    %v7891 = vpop.f32.mrb[0].mxu0
    %v7892 = vadd.f32 %v7318, %v7891
    %v7893 = vpop.f32.mrb[0].mxu0
    %7894 = vmatprep.mubr.f32.mxu0 0.0
    %7895 = vmatmul.mubr.f32.gmra.mrb[0].mxu0 %v7397
    %v7896 = vpop.f32.mrb[0].mxu0
    %v7897 = vadd.f32 %v7318, %v7896
    %v7898 = vpop.f32.mrb[0].mxu0
    %7899 = vmatprep.mubr.f32.mxu0 0.0
    %7900 = vmatmul.mubr.f32.gmra.mrb[0].mxu0 %v7400
    %v7901 = vpop.f32.mrb[0].mxu0
    %v7902 = vadd.f32 %v7318, %v7901
    %v7903 = vpop.f32.mrb[0].mxu0
    %7904 = vmatprep.mubr.f32.mxu0 0.0
    %7905 = vmatmul.mubr.f32.gmra.mrb[0].mxu0 %v7403
    %v7906 = vpop.f32.mrb[0].mxu0
    %v7907 = vadd.f32 %v7318, %v7906
    %v7908 = vpop.f32.mrb[0].mxu0
    %7909 = vmatprep.mubr.f32.mxu0 0.0
    %7910 = vmatmul.mubr.f32.gmra.mrb[0].mxu0 %v7406
    %v7911 = vpop.f32.mrb[0].mxu0
    %v7912 = vadd.f32 %v7318, %v7911
    %v7913 = vpop.f32.mrb[0].mxu0
    %7914 = vmatprep.mubr.f32.mxu0 0.0
    %7915 = vmatmul.mubr.f32.gmra.mrb[0].mxu0 %v7409
    %v7916 = vpop.f32.mrb[0].mxu0
    %v7917 = vadd.f32 %v7318, %v7916
    %v7918 = vpop.f32.mrb[0].mxu0
    %7919 = vmatprep.mubr.f32.mxu0 0.0
    %7920 = vmatmul.mubr.f32.gmra.mrb[0].mxu0 %v7412
    %v7921 = vpop.f32.mrb[0].mxu0
    %v7922 = vadd.f32 %v7318, %v7921
    %v7923 = vpop.f32.mrb[0].mxu0
    %7924 = vmatprep.mubr.f32.mxu0 0.0
    %7925 = vmatmul.mubr.f32.gmra.mrb[0].mxu0 %v7415
    %v7926 = vpop.f32.mrb[0].mxu0
    %v7927 = vadd.f32 %v7318, %v7926
    %v7928 = vpop.f32.mrb[0].mxu0
    %7929 = vmatprep.mubr.f32.mxu0 0.0
    %7930 = vmatmul.mubr.f32.gmra.mrb[0].mxu0 %v7418
    %v7931 = vpop.f32.mrb[0].mxu0
    %v7932 = vadd.f32 %v7318, %v7931
    %v7933 = vpop.f32.mrb[0].mxu0
    %7934 = vmatprep.mubr.f32.mxu0 0.0
    %7935 = vmatmul.mubr.f32.gmra.mrb[0].mxu0 %v7421
    %v7936 = vpop.f32.mrb[0].mxu0
    %v7937 = vadd.f32 %v7318, %v7936
    %v7938 = vpop.f32.mrb[0].mxu0
    %7939 = vmatprep.mubr.f32.mxu0 0.0
    %7940 = vmatmul.mubr.f32.gmra.mrb[0].mxu0 %v7424
    %v7941 = vpop.f32.mrb[0].mxu0
    %v7942 = vadd.f32 %v7318, %v7941
    %v7943 = vpop.f32.mrb[0].mxu0
    %7944 = vmatprep.mubr.f32.mxu0 0.0
    %7945 = vmatmul.mubr.f32.gmra.mrb[0].mxu0 %v7427
    %v7946 = vpop.f32.mrb[0].mxu0
    %v7947 = vadd.f32 %v7318, %v7946
    %v7948 = vpop.f32.mrb[0].mxu0
    %7949 = vmatprep.mubr.f32.mxu0 0.0
    %7950 = vmatmul.mubr.f32.gmra.mrb[0].mxu0 %v7430
    %v7951 = vpop.f32.mrb[0].mxu0
    %v7952 = vadd.f32 %v7318, %v7951
    %v7953 = vpop.f32.mrb[0].mxu0
    %7954 = vmatprep.mubr.f32.mxu0 0.0
    %7955 = vmatmul.mubr.f32.gmra.mrb[0].mxu0 %v7433
    %v7956 = vpop.f32.mrb[0].mxu0
    %v7957 = vadd.f32 %v7318, %v7956
    %v7958 = vpop.f32.mrb[0].mxu0
    %7959 = vmatprep.mubr.f32.mxu0 0.0
    %7960 = vmatmul.mubr.f32.gmra.mrb[0].mxu0 %v7436
    %v7961 = vpop.f32.mrb[0].mxu0
    %v7962 = vadd.f32 %v7318, %v7961
    %v7963 = vpop.f32.mrb[0].mxu0
    %7964 = vmatprep.mubr.f32.mxu0 0.0
    %7965 = vmatmul.mubr.f32.gmra.mrb[0].mxu0 %v7439
    %v7966 = vpop.f32.mrb[0].mxu0
    %v7967 = vadd.f32 %v7318, %v7966
    %v7968 = vpop.f32.mrb[0].mxu0
    %7969 = vmatprep.mubr.f32.mxu0 0.0
    %7970 = vmatmul.mubr.f32.gmra.mrb[0].mxu0 %v7442
    %v7971 = vpop.f32.mrb[0].mxu0
    %v7972 = vadd.f32 %v7318, %v7971
    %v7973 = vpop.f32.mrb[0].mxu0
    %7974 = vmatprep.mubr.f32.mxu0 0.0
    %7975 = vmatmul.mubr.f32.gmra.mrb[0].mxu0 %v7445
    %v7976 = vpop.f32.mrb[0].mxu0
    %v7977 = vadd.f32 %v7318, %v7976
    %v7978 = vpop.f32.mrb[0].mxu0
    %7979 = vmatprep.mubr.f32.mxu0 0.0
    %7980 = vmatmul.mubr.f32.gmra.mrb[0].mxu0 %v7448
    %v7981 = vpop.f32.mrb[0].mxu0
    %v7982 = vadd.f32 %v7318, %v7981
    %v7983 = vpop.f32.mrb[0].mxu0
    %7984 = vmatprep.mubr.f32.mxu0 0.0
    %7985 = vmatmul.mubr.f32.gmra.mrb[0].mxu0 %v7451
    %v7986 = vpop.f32.mrb[0].mxu0
    %v7987 = vadd.f32 %v7318, %v7986
    %v7988 = vpop.f32.mrb[0].mxu0
    %7989 = vmatprep.mubr.f32.mxu0 0.0
    %7990 = vmatmul.mubr.f32.gmra.mrb[0].mxu0 %v7454
    %v7991 = vpop.f32.mrb[0].mxu0
    %v7992 = vadd.f32 %v7318, %v7991
    %v7993 = vpop.f32.mrb[0].mxu0
    %7994 = vmatprep.mubr.f32.mxu0 0.0
    %7995 = vmatmul.mubr.f32.gmra.mrb[0].mxu0 %v7457
    %v7996 = vpop.f32.mrb[0].mxu0
    %v7997 = vadd.f32 %v7318, %v7996
    %v7998 = vpop.f32.mrb[0].mxu0
    %7999 = vmatprep.mubr.f32.mxu0 0.0
    %8000 = vmatmul.mubr.f32.gmra.mrb[0].mxu0 %v7460
    %v8001 = vpop.f32.mrb[0].mxu0
    %v8002 = vadd.f32 %v7318, %v8001
    %v8003 = vpop.f32.mrb[0].mxu0
    %8004 = vmatprep.mubr.f32.mxu0 0.0
    %8005 = vmatmul.mubr.f32.gmra.mrb[0].mxu0 %v7463
    %v8006 = vpop.f32.mrb[0].mxu0
    %v8007 = vadd.f32 %v7318, %v8006
    %v8008 = vpop.f32.mrb[0].mxu0
    %8009 = vmatprep.mubr.f32.mxu0 0.0
    %8010 = vmatmul.mubr.f32.gmra.mrb[0].mxu0 %v7466
    %v8011 = vpop.f32.mrb[0].mxu0
    %v8012 = vadd.f32 %v7318, %v8011
    %v8013 = vpop.f32.mrb[0].mxu0
    %8014 = vmatprep.mubr.f32.mxu0 0.0
    %8015 = vmatmul.mubr.f32.gmra.mrb[0].mxu0 %v7469
    %v8016 = vpop.f32.mrb[0].mxu0
    %v8017 = vadd.f32 %v7318, %v8016
    %v8018 = vpop.f32.mrb[0].mxu0
    %8019 = vmatprep.mubr.f32.mxu0 0.0
    %8020 = vmatmul.mubr.f32.gmra.mrb[0].mxu0 %v7472
    %v8021 = vpop.f32.mrb[0].mxu0
    %v8022 = vadd.f32 %v7318, %v8021
    %v8023 = vpop.f32.mrb[0].mxu0
    %8024 = vmatprep.mubr.f32.mxu0 0.0
    %8025 = vmatmul.mubr.f32.gmra.mrb[0].mxu0 %v7475
    %v8026 = vpop.f32.mrb[0].mxu0
    %v8027 = vadd.f32 %v7318, %v8026
    %v8028 = vpop.f32.mrb[0].mxu0
    %8029 = vmatprep.mubr.f32.mxu0 0.0
    %8030 = vmatmul.mubr.f32.gmra.mrb[0].mxu0 %v7478
    %v8031 = vpop.f32.mrb[0].mxu0
    %v8032 = vadd.f32 %v7318, %v8031
    %v8033 = vpop.f32.mrb[0].mxu0
    %8034 = vmatprep.mubr.f32.mxu0 0.0
    %8035 = vmatmul.mubr.f32.gmra.mrb[0].mxu0 %v7481
    %v8036 = vpop.f32.mrb[0].mxu0
    %v8037 = vadd.f32 %v7318, %v8036
    %v8038 = vpop.f32.mrb[0].mxu0
    %8039 = vmatprep.mubr.f32.mxu0 0.0
    %8040 = vmatmul.mubr.f32.gmra.mrb[0].mxu0 %v7484
    %v8041 = vpop.f32.mrb[0].mxu0
    %v8042 = vadd.f32 %v7318, %v8041
    %v8043 = vpop.f32.mrb[0].mxu0
    %8044 = vmatprep.mubr.f32.mxu0 0.0
    %8045 = vmatmul.mubr.f32.gmra.mrb[0].mxu0 %v7487
    %v8046 = vpop.f32.mrb[0].mxu0
    %v8047 = vadd.f32 %v7318, %v8046
    %v8048 = vpop.f32.mrb[0].mxu0
    %8049 = vmatprep.mubr.f32.mxu0 0.0
    %8050 = vmatmul.mubr.f32.gmra.mrb[0].mxu0 %v7490
    %v8051 = vpop.f32.mrb[0].mxu0
    %v8052 = vadd.f32 %v7318, %v8051
    %v8053 = vpop.f32.mrb[0].mxu0
    %8054 = vmatprep.mubr.f32.mxu0 0.0
    %8055 = vmatmul.mubr.f32.gmra.mrb[0].mxu0 %v7493
    %v8056 = vpop.f32.mrb[0].mxu0
    %v8057 = vadd.f32 %v7318, %v8056
    %v8058 = vpop.f32.mrb[0].mxu0
    %8059 = vmatprep.mubr.f32.mxu0 0.0
    %8060 = vmatmul.mubr.f32.gmra.mrb[0].mxu0 %v7496
    %v8061 = vpop.f32.mrb[0].mxu0
    %v8062 = vadd.f32 %v7318, %v8061
    %v8063 = vpop.f32.mrb[0].mxu0
    %8064 = vmatprep.mubr.f32.mxu0 0.0
    %8065 = vmatmul.mubr.f32.gmra.mrb[0].mxu0 %v7499
    %v8066 = vpop.f32.mrb[0].mxu0
    %v8067 = vadd.f32 %v7318, %v8066
    %v8068 = vpop.f32.mrb[0].mxu0
    %8069 = vmatprep.mubr.f32.mxu0 0.0
    %8070 = vmatmul.mubr.f32.gmra.mrb[0].mxu0 %v7502
    %v8071 = vpop.f32.mrb[0].mxu0
    %v8072 = vadd.f32 %v7318, %v8071
    %v8073 = vpop.f32.mrb[0].mxu0
    %8074 = vmatprep.mubr.f32.mxu0 0.0
    %8075 = vmatmul.mubr.f32.gmra.mrb[0].mxu0 %v7505
    %v8076 = vpop.f32.mrb[0].mxu0
    %v8077 = vadd.f32 %v7318, %v8076
    %v8078 = vpop.f32.mrb[0].mxu0
    %8079 = vmatprep.mubr.f32.mxu0 0.0
    %8080 = vmatmul.mubr.f32.gmra.mrb[0].mxu0 %v7508
    %v8081 = vpop.f32.mrb[0].mxu0
    %v8082 = vadd.f32 %v7318, %v8081
    %v8083 = vpop.f32.mrb[0].mxu0
    %8084 = vmatprep.mubr.f32.mxu0 0.0
    %8085 = vmatmul.mubr.f32.gmra.mrb[0].mxu0 %v7511
    %v8086 = vpop.f32.mrb[0].mxu0
    %v8087 = vadd.f32 %v7318, %v8086
    %v8088 = vpop.f32.mrb[0].mxu0
    %8089 = vmatprep.mubr.f32.mxu0 0.0
    %8090 = vmatmul.mubr.f32.gmra.mrb[0].mxu0 %v7514
    %v8091 = vpop.f32.mrb[0].mxu0
    %v8092 = vadd.f32 %v7318, %v8091
    %v8093 = vpop.f32.mrb[0].mxu0
    %8094 = vmatprep.mubr.f32.mxu0 0.0
    %8095 = vmatmul.mubr.f32.gmra.mrb[0].mxu0 %v7517
    %v8096 = vpop.f32.mrb[0].mxu0
    %v8097 = vadd.f32 %v7318, %v8096
    %v8098 = vpop.f32.mrb[0].mxu0
    %8099 = vmatprep.mubr.f32.mxu0 0.0
    %8100 = vmatmul.mubr.f32.gmra.mrb[0].mxu0 %v7520
    %v8101 = vpop.f32.mrb[0].mxu0
    %v8102 = vadd.f32 %v7318, %v8101
    %v8103 = vpop.f32.mrb[0].mxu0
    %8104 = vmatprep.mubr.f32.mxu0 0.0
    %8105 = vmatmul.mubr.f32.gmra.mrb[0].mxu0 %v7523
    %v8106 = vpop.f32.mrb[0].mxu0
    %v8107 = vadd.f32 %v7318, %v8106
    %v8108 = vpop.f32.mrb[0].mxu0
    %8109 = vmatprep.mubr.f32.mxu0 0.0
    %8110 = vmatmul.mubr.f32.gmra.mrb[0].mxu0 %v7526
    %v8111 = vpop.f32.mrb[0].mxu0
    %v8112 = vadd.f32 %v7318, %v8111
    %v8113 = vpop.f32.mrb[0].mxu0
    %8114 = vmatprep.mubr.f32.mxu0 0.0
    %8115 = vmatmul.mubr.f32.gmra.mrb[0].mxu0 %v7529
    %v8116 = vpop.f32.mrb[0].mxu0
    %v8117 = vadd.f32 %v7318, %v8116
    %v8118 = vpop.f32.mrb[0].mxu0
    %8119 = vmatprep.mubr.f32.mxu0 0.0
    %8120 = vmatmul.mubr.f32.gmra.mrb[0].mxu0 %v7532
    %v8121 = vpop.f32.mrb[0].mxu0
    %v8122 = vadd.f32 %v7318, %v8121
    %v8123 = vpop.f32.mrb[0].mxu0
    %8124 = vmatprep.mubr.f32.mxu0 0.0
    %8125 = vmatmul.mubr.f32.gmra.mrb[0].mxu0 %v7535
    %v8126 = vpop.f32.mrb[0].mxu0
    %v8127 = vadd.f32 %v7318, %v8126
    %v8128 = vpop.f32.mrb[0].mxu0
    %8129 = vmatprep.mubr.f32.mxu0 0.0
    %8130 = vmatmul.mubr.f32.gmra.mrb[0].mxu0 %v7538
    %v8131 = vpop.f32.mrb[0].mxu0
    %v8132 = vadd.f32 %v7318, %v8131
    %v8133 = vpop.f32.mrb[0].mxu0
    %8134 = vmatprep.mubr.f32.mxu0 0.0
    %8135 = vmatmul.mubr.f32.gmra.mrb[0].mxu0 %v7541
    %v8136 = vpop.f32.mrb[0].mxu0
    %v8137 = vadd.f32 %v7318, %v8136
    %v8138 = vpop.f32.mrb[0].mxu0
    %8139 = vmatprep.mubr.f32.mxu0 0.0
    %8140 = vmatmul.mubr.f32.gmra.mrb[0].mxu0 %v7544
    %v8141 = vpop.f32.mrb[0].mxu0
    %v8142 = vadd.f32 %v7318, %v8141
    %v8143 = vpop.f32.mrb[0].mxu0
    %8144 = vmatprep.mubr.f32.mxu0 0.0
    %8145 = vmatmul.mubr.f32.gmra.mrb[0].mxu0 %v7547
    %v8146 = vpop.f32.mrb[0].mxu0
    %v8147 = vadd.f32 %v7318, %v8146
    %v8148 = vpop.f32.mrb[0].mxu0
    %8149 = vmatprep.mubr.f32.mxu0 0.0
    %8150 = vmatmul.mubr.f32.gmra.mrb[0].mxu0 %v7550
    %v8151 = vpop.f32.mrb[0].mxu0
    %v8152 = vadd.f32 %v7318, %v8151
    %v8153 = vpop.f32.mrb[0].mxu0
    %8154 = vmatprep.mubr.f32.mxu0 0.0
    %8155 = vmatmul.mubr.f32.gmra.mrb[0].mxu0 %v7553
    %v8156 = vpop.f32.mrb[0].mxu0
    %v8157 = vadd.f32 %v7318, %v8156
    %v8158 = vpop.f32.mrb[0].mxu0
    %8159 = vmatprep.mubr.f32.mxu0 0.0
    %8160 = vmatmul.mubr.f32.gmra.mrb[0].mxu0 %v7556
    %v8161 = vpop.f32.mrb[0].mxu0
    %v8162 = vadd.f32 %v7318, %v8161
    %v8163 = vpop.f32.mrb[0].mxu0
    %8164 = vmatprep.mubr.f32.mxu0 0.0
    %8165 = vmatmul.mubr.f32.gmra.mrb[0].mxu0 %v7559
    %v8166 = vpop.f32.mrb[0].mxu0
    %v8167 = vadd.f32 %v7318, %v8166
    %v8168 = vpop.f32.mrb[0].mxu0
    %8169 = vmatprep.mubr.f32.mxu0 0.0
    %8170 = vmatmul.mubr.f32.gmra.mrb[0].mxu0 %v7562
    %v8171 = vpop.f32.mrb[0].mxu0
    %v8172 = vadd.f32 %v7318, %v8171
    %v8173 = vpop.f32.mrb[0].mxu0
    %8174 = vmatprep.mubr.f32.mxu0 0.0
    %8175 = vmatmul.mubr.f32.gmra.mrb[0].mxu0 %v7565
    %v8176 = vpop.f32.mrb[0].mxu0
    %v8177 = vadd.f32 %v7318, %v8176
    %v8178 = vpop.f32.mrb[0].mxu0
    %8179 = vmatprep.mubr.f32.mxu0 0.0
    %8180 = vmatmul.mubr.f32.gmra.mrb[0].mxu0 %v7568
    %v8181 = vpop.f32.mrb[0].mxu0
    %v8182 = vadd.f32 %v7318, %v8181
    %v8183 = vpop.f32.mrb[0].mxu0
    %8184 = vmatprep.mubr.f32.mxu0 0.0
    %8185 = vmatmul.mubr.f32.gmra.mrb[0].mxu0 %v7571
    %v8186 = vpop.f32.mrb[0].mxu0
    %v8187 = vadd.f32 %v7318, %v8186
    %v8188 = vpop.f32.mrb[0].mxu0
    %8189 = vmatprep.mubr.f32.mxu0 0.0
    %8190 = vmatmul.mubr.f32.gmra.mrb[0].mxu0 %v7574
    %v8191 = vpop.f32.mrb[0].mxu0
    %v8192 = vadd.f32 %v7318, %v8191
    %v8193 = vpop.f32.mrb[0].mxu0
    %8194 = vmatprep.mubr.f32.mxu0 0.0
    %8195 = vmatmul.mubr.f32.gmra.mrb[0].mxu0 %v7577
    %v8196 = vpop.f32.mrb[0].mxu0
    %v8197 = vadd.f32 %v7318, %v8196
    %v8198 = vpop.f32.mrb[0].mxu0
    %8199 = vmatprep.mubr.f32.mxu0 0.0
    %8200 = vmatmul.mubr.f32.gmra.mrb[0].mxu0 %v7580
    %v8201 = vpop.f32.mrb[0].mxu0
    %v8202 = vadd.f32 %v7318, %v8201
    %v8203 = vpop.f32.mrb[0].mxu0
    %8204 = vmatprep.mubr.f32.mxu0 0.0
    %8205 = vmatmul.mubr.f32.gmra.mrb[0].mxu0 %v7583
    %v8206 = vpop.f32.mrb[0].mxu0
    %v8207 = vadd.f32 %v7318, %v8206
    %v8208 = vpop.f32.mrb[0].mxu0
    %8209 = vmatprep.mubr.f32.mxu0 0.0
    %8210 = vmatmul.mubr.f32.gmra.mrb[0].mxu0 %v7586
    %v8211 = vpop.f32.mrb[0].mxu0
    %v8212 = vadd.f32 %v7318, %v8211
    %v8213 = vpop.f32.mrb[0].mxu0
    %8214 = vmatprep.mubr.f32.mxu0 0.0
    %8215 = vmatmul.mubr.f32.gmra.mrb[0].mxu0 %v7589
    %v8216 = vpop.f32.mrb[0].mxu0
    %v8217 = vadd.f32 %v7318, %v8216
    %v8218 = vpop.f32.mrb[0].mxu0
    %8219 = vmatprep.mubr.f32.mxu0 0.0
    %8220 = vmatmul.mubr.f32.gmra.mrb[0].mxu0 %v7592
    %v8221 = vpop.f32.mrb[0].mxu0
    %v8222 = vadd.f32 %v7318, %v8221
    %v8223 = vpop.f32.mrb[0].mxu0
    %8224 = vmatprep.mubr.f32.mxu0 0.0
    %8225 = vmatmul.mubr.f32.gmra.mrb[0].mxu0 %v7595
    %v8226 = vpop.f32.mrb[0].mxu0
    %v8227 = vadd.f32 %v7318, %v8226
    %v8228 = vpop.f32.mrb[0].mxu0
    %8229 = vmatprep.mubr.f32.mxu0 0.0
    %8230 = vmatmul.mubr.f32.gmra.mrb[0].mxu0 %v7598
    %v8231 = vpop.f32.mrb[0].mxu0
    %v8232 = vadd.f32 %v7318, %v8231
    %v8233 = vpop.f32.mrb[0].mxu0
    %8234 = vmatprep.mubr.f32.mxu0 0.0
    %8235 = vmatmul.mubr.f32.gmra.mrb[0].mxu0 %v7601
    %v8236 = vpop.f32.mrb[0].mxu0
    %v8237 = vadd.f32 %v7318, %v8236
    %v8238 = vpop.f32.mrb[0].mxu0
    %8239 = vmatprep.mubr.f32.mxu0 0.0
    %8240 = vmatmul.mubr.f32.gmra.mrb[0].mxu0 %v7604
    %v8241 = vpop.f32.mrb[0].mxu0
    %v8242 = vadd.f32 %v7318, %v8241
    %v8243 = vpop.f32.mrb[0].mxu0
    %8244 = vmatprep.mubr.f32.mxu0 0.0
    %8245 = vmatmul.mubr.f32.gmra.mrb[0].mxu0 %v7607
    %v8246 = vpop.f32.mrb[0].mxu0
    %v8247 = vadd.f32 %v7318, %v8246
    %v8248 = vpop.f32.mrb[0].mxu0
    %8249 = vmatprep.mubr.f32.mxu0 0.0
    %8250 = vmatmul.mubr.f32.gmra.mrb[0].mxu0 %v7610
    %v8251 = vpop.f32.mrb[0].mxu0
    %v8252 = vadd.f32 %v7318, %v8251
    %v8253 = vpop.f32.mrb[0].mxu0
    %8254 = vmatprep.mubr.f32.mxu0 0.0
    %8255 = vmatmul.mubr.f32.gmra.mrb[0].mxu0 %v7613
    %v8256 = vpop.f32.mrb[0].mxu0
    %v8257 = vadd.f32 %v7318, %v8256
    %v8258 = vpop.f32.mrb[0].mxu0
    %8259 = vmatprep.mubr.f32.mxu0 0.0
    %8260 = vmatmul.mubr.f32.gmra.mrb[0].mxu0 %v7616
    %v8261 = vpop.f32.mrb[0].mxu0
    %v8262 = vadd.f32 %v7318, %v8261
    %v8263 = vpop.f32.mrb[0].mxu0
    %8264 = vmatprep.mubr.f32.mxu0 0.0
    %8265 = vmatmul.mubr.f32.gmra.mrb[0].mxu0 %v7619
    %v8266 = vpop.f32.mrb[0].mxu0
    %v8267 = vadd.f32 %v7318, %v8266
    %v8268 = vpop.f32.mrb[0].mxu0
    %8269 = vmatprep.mubr.f32.mxu0 0.0
    %8270 = vmatmul.mubr.f32.gmra.mrb[0].mxu0 %v7622
    %v8271 = vpop.f32.mrb[0].mxu0
    %v8272 = vadd.f32 %v7318, %v8271
    %v8273 = vpop.f32.mrb[0].mxu0
    %8274 = vmatprep.mubr.f32.mxu0 0.0
    %8275 = vmatmul.mubr.f32.gmra.mrb[0].mxu0 %v7625
    %v8276 = vpop.f32.mrb[0].mxu0
    %v8277 = vadd.f32 %v7318, %v8276
    %v8278 = vpop.f32.mrb[0].mxu0
    %8279 = vmatprep.mubr.f32.mxu0 0.0
    %8280 = vmatmul.mubr.f32.gmra.mrb[0].mxu0 %v7628
    %v8281 = vpop.f32.mrb[0].mxu0
    %v8282 = vadd.f32 %v7318, %v8281
    %v8283 = vpop.f32.mrb[0].mxu0
    %8284 = vmatprep.mubr.f32.mxu0 0.0
    %8285 = vmatmul.mubr.f32.gmra.mrb[0].mxu0 %v7631
    %v8286 = vpop.f32.mrb[0].mxu0
    %v8287 = vadd.f32 %v7318, %v8286
    %v8288 = vpop.f32.mrb[0].mxu0
    %8289 = vmatprep.mubr.f32.mxu0 0.0
    %8290 = vmatmul.mubr.f32.gmra.mrb[0].mxu0 %v7634
    %v8291 = vpop.f32.mrb[0].mxu0
    %v8292 = vadd.f32 %v7318, %v8291
    %v8293 = vpop.f32.mrb[0].mxu0
    %8294 = vmatprep.mubr.f32.mxu0 0.0
    %8295 = vmatmul.mubr.f32.gmra.mrb[0].mxu0 %v7637
    %v8296 = vpop.f32.mrb[0].mxu0
    %v8297 = vadd.f32 %v7318, %v8296
    %v8298 = vpop.f32.mrb[0].mxu0
    %8299 = vmatprep.mubr.f32.mxu0 0.0
    %8300 = vmatmul.mubr.f32.gmra.mrb[0].mxu0 %v7640
    %v8301 = vpop.f32.mrb[0].mxu0
    %v8302 = vadd.f32 %v7318, %v8301
    %v8303 = vpop.f32.mrb[0].mxu0
    %8304 = vmatprep.mubr.f32.mxu0 0.0
    %8305 = vmatmul.mubr.f32.gmra.mrb[0].mxu0 %v7643
    %v8306 = vpop.f32.mrb[0].mxu0
    %v8307 = vadd.f32 %v7318, %v8306
    %v8308 = vpop.f32.mrb[0].mxu0
    %8309 = vmatprep.mubr.f32.mxu0 0.0
    %8310 = vmatmul.mubr.f32.gmra.mrb[0].mxu0 %v7646
    %v8311 = vpop.f32.mrb[0].mxu0
    %v8312 = vadd.f32 %v7318, %v8311
    %v8313 = vpop.f32.mrb[0].mxu0
    %8314 = vmatprep.mubr.f32.mxu0 0.0
    %8315 = vmatmul.mubr.f32.gmra.mrb[0].mxu0 %v7649
    %v8316 = vpop.f32.mrb[0].mxu0
    %v8317 = vadd.f32 %v7318, %v8316
    %v8318 = vpop.f32.mrb[0].mxu0
    %8319 = vmatprep.mubr.f32.mxu0 0.0
    %8320 = vmatmul.mubr.f32.gmra.mrb[0].mxu0 %v7652
    %v8321 = vpop.f32.mrb[0].mxu0
    %v8322 = vadd.f32 %v7318, %v8321
    %v8323 = vpop.f32.mrb[0].mxu0
    %8324 = vmatprep.mubr.f32.mxu0 0.0
    %8325 = vmatmul.mubr.f32.gmra.mrb[0].mxu0 %v7655
    %v8326 = vpop.f32.mrb[0].mxu0
    %v8327 = vadd.f32 %v7318, %v8326
    %v8328 = vpop.f32.mrb[0].mxu0
    %8329 = vmatprep.mubr.f32.mxu0 0.0
    %8330 = vmatmul.mubr.f32.gmra.mrb[0].mxu0 %v7658
    %v8331 = vpop.f32.mrb[0].mxu0
    %v8332 = vadd.f32 %v7318, %v8331
    %v8333 = vpop.f32.mrb[0].mxu0
    %8334 = vmatprep.mubr.f32.mxu0 0.0
    %8335 = vmatmul.mubr.f32.gmra.mrb[0].mxu0 %v7661
    %v8336 = vpop.f32.mrb[0].mxu0
    %v8337 = vadd.f32 %v7318, %v8336
    %v8338 = vpop.f32.mrb[0].mxu0
    %8339 = vmatprep.mubr.f32.mxu0 0.0
    %8340 = vmatmul.mubr.f32.gmra.mrb[0].mxu0 %v7664
    %v8341 = vpop.f32.mrb[0].mxu0
    %v8342 = vadd.f32 %v7318, %v8341
    %v8343 = vpop.f32.mrb[0].mxu0
    %8344 = vmatprep.mubr.f32.mxu0 0.0
    %8345 = vmatmul.mubr.f32.gmra.mrb[0].mxu0 %v7667
    %v8346 = vpop.f32.mrb[0].mxu0
    %v8347 = vadd.f32 %v7318, %v8346
    %v8348 = vpop.f32.mrb[0].mxu0
    %8349 = vmatprep.mubr.f32.mxu0 0.0
    %8350 = vmatmul.mubr.f32.gmra.mrb[0].mxu0 %v7670
    %v8351 = vpop.f32.mrb[0].mxu0
    %v8352 = vadd.f32 %v7318, %v8351
    %v8353 = vpop.f32.mrb[0].mxu0
    %8354 = vmatprep.mubr.f32.mxu0 0.0
    %8355 = vmatmul.mubr.f32.gmra.mrb[0].mxu0 %v7673
    %v8356 = vpop.f32.mrb[0].mxu0
    %v8357 = vadd.f32 %v7318, %v8356
    %v8358 = vpop.f32.mrb[0].mxu0
    %8359 = vmatprep.mubr.f32.mxu0 0.0
    %8360 = vmatmul.mubr.f32.gmra.mrb[0].mxu0 %v7676
    %v8361 = vpop.f32.mrb[0].mxu0
    %v8362 = vadd.f32 %v7318, %v8361
    %v8363 = vpop.f32.mrb[0].mxu0
    %8364 = vmatprep.mubr.f32.mxu0 0.0
    %8365 = vmatmul.mubr.f32.gmra.mrb[0].mxu0 %v7679
    %v8366 = vpop.f32.mrb[0].mxu0
    %v8367 = vadd.f32 %v7318, %v8366
    %v8368 = vpop.f32.mrb[0].mxu0
    %8369 = vmatprep.mubr.f32.mxu0 0.0
    %8370 = vmatmul.mubr.f32.gmra.mrb[0].mxu0 %v7682
    %v8371 = vpop.f32.mrb[0].mxu0
    %v8372 = vadd.f32 %v7318, %v8371
    %v8373 = vpop.f32.mrb[0].mxu0
    %8374 = vmatprep.mubr.f32.mxu0 0.0
    %8375 = vmatmul.mubr.f32.gmra.mrb[0].mxu0 %v7685
    %v8376 = vpop.f32.mrb[0].mxu0
    %v8377 = vadd.f32 %v7318, %v8376
    %v8378 = vpop.f32.mrb[0].mxu0
    %8379 = vmatprep.mubr.f32.mxu0 0.0
    %8380 = vmatmul.mubr.f32.gmra.mrb[0].mxu0 %v7688
    %v8381 = vpop.f32.mrb[0].mxu0
    %v8382 = vadd.f32 %v7318, %v8381
    %v8383 = vpop.f32.mrb[0].mxu0
    %8384 = vmatprep.mubr.f32.mxu0 0.0
    %8385 = vmatmul.mubr.f32.gmra.mrb[0].mxu0 %v7691
    %v8386 = vpop.f32.mrb[0].mxu0
    %v8387 = vadd.f32 %v7318, %v8386
    %v8388 = vpop.f32.mrb[0].mxu0
    %8389 = vmatprep.mubr.f32.mxu0 0.0
    %8390 = vmatmul.mubr.f32.gmra.mrb[0].mxu0 %v7694
    %v8391 = vpop.f32.mrb[0].mxu0
    %v8392 = vadd.f32 %v7318, %v8391
    %v8393 = vpop.f32.mrb[0].mxu0
    %8394 = vmatprep.mubr.f32.mxu0 0.0
    %8395 = vmatmul.mubr.f32.gmra.mrb[0].mxu0 %v7697
    %v8396 = vpop.f32.mrb[0].mxu0
    %v8397 = vadd.f32 %v7318, %v8396
    %v8398 = vpop.f32.mrb[0].mxu0
    %8399 = vmatprep.mubr.f32.mxu0 0.0
    %8400 = vmatmul.mubr.f32.gmra.mrb[0].mxu0 %v7700
    %v8401 = vpop.f32.mrb[0].mxu0
    %v8402 = vadd.f32 %v7318, %v8401
    %v8403 = vpop.f32.mrb[0].mxu0
    %8404 = vmatprep.mubr.f32.mxu0 0.0
    %8405 = vmatmul.mubr.f32.gmra.mrb[0].mxu0 %v7703
    %v8406 = vpop.f32.mrb[0].mxu0
    %v8407 = vadd.f32 %v7318, %v8406
    %v8408 = vpop.f32.mrb[0].mxu0
    %8409 = vdwg.mxu0
    %v8410 = vmax.f32 %v7772, 0.0
    %v8411 = vmax.f32 %v7777, 0.0
    %v8412 = vmax.f32 %v7782, 0.0
    %v8413 = vmax.f32 %v7787, 0.0
    %v8414 = vmax.f32 %v7792, 0.0
    %v8415 = vmax.f32 %v7797, 0.0
    %v8416 = vmax.f32 %v7802, 0.0
    %v8417 = vmax.f32 %v7807, 0.0
    %v8418 = vmax.f32 %v7812, 0.0
    %v8419 = vmax.f32 %v7817, 0.0
    %v8420 = vmax.f32 %v7822, 0.0
    %v8421 = vmax.f32 %v7827, 0.0
    %v8422 = vmax.f32 %v7832, 0.0
    %v8423 = vmax.f32 %v7837, 0.0
    %v8424 = vmax.f32 %v7842, 0.0
    %v8425 = vmax.f32 %v7847, 0.0
    %v8426 = vmax.f32 %v7852, 0.0
    %v8427 = vmax.f32 %v7857, 0.0
    %v8428 = vmax.f32 %v7862, 0.0
    %v8429 = vmax.f32 %v7867, 0.0
    %v8430 = vmax.f32 %v7872, 0.0
    %v8431 = vmax.f32 %v7877, 0.0
    %v8432 = vmax.f32 %v7882, 0.0
    %v8433 = vmax.f32 %v7887, 0.0
    %v8434 = vmax.f32 %v7892, 0.0
    %v8435 = vmax.f32 %v7897, 0.0
    %v8436 = vmax.f32 %v7902, 0.0
    %v8437 = vmax.f32 %v7907, 0.0
    %v8438 = vmax.f32 %v7912, 0.0
    %v8439 = vmax.f32 %v7917, 0.0
    %v8440 = vmax.f32 %v7922, 0.0
    %v8441 = vmax.f32 %v7927, 0.0
    %v8442 = vmax.f32 %v7932, 0.0
    %v8443 = vmax.f32 %v7937, 0.0
    %v8444 = vmax.f32 %v7942, 0.0
    %v8445 = vmax.f32 %v7947, 0.0
    %v8446 = vmax.f32 %v7952, 0.0
    %v8447 = vmax.f32 %v7957, 0.0
    %v8448 = vmax.f32 %v7962, 0.0
    %v8449 = vmax.f32 %v7967, 0.0
    %v8450 = vmax.f32 %v7972, 0.0
    %v8451 = vmax.f32 %v7977, 0.0
    %v8452 = vmax.f32 %v7982, 0.0
    %v8453 = vmax.f32 %v7987, 0.0
    %v8454 = vmax.f32 %v7992, 0.0
    %v8455 = vmax.f32 %v7997, 0.0
    %v8456 = vmax.f32 %v8002, 0.0
    %v8457 = vmax.f32 %v8007, 0.0
    %v8458 = vmax.f32 %v8012, 0.0
    %v8459 = vmax.f32 %v8017, 0.0
    %v8460 = vmax.f32 %v8022, 0.0
    %v8461 = vmax.f32 %v8027, 0.0
    %v8462 = vmax.f32 %v8032, 0.0
    %v8463 = vmax.f32 %v8037, 0.0
    %v8464 = vmax.f32 %v8042, 0.0
    %v8465 = vmax.f32 %v8047, 0.0
    %v8466 = vmax.f32 %v8052, 0.0
    %v8467 = vmax.f32 %v8057, 0.0
    %v8468 = vmax.f32 %v8062, 0.0
    %v8469 = vmax.f32 %v8067, 0.0
    %v8470 = vmax.f32 %v8072, 0.0
    %v8471 = vmax.f32 %v8077, 0.0
    %v8472 = vmax.f32 %v8082, 0.0
    %v8473 = vmax.f32 %v8087, 0.0
    %v8474 = vmax.f32 %v8092, 0.0
    %v8475 = vmax.f32 %v8097, 0.0
    %v8476 = vmax.f32 %v8102, 0.0
    %v8477 = vmax.f32 %v8107, 0.0
    %v8478 = vmax.f32 %v8112, 0.0
    %v8479 = vmax.f32 %v8117, 0.0
    %v8480 = vmax.f32 %v8122, 0.0
    %v8481 = vmax.f32 %v8127, 0.0
    %v8482 = vmax.f32 %v8132, 0.0
    %v8483 = vmax.f32 %v8137, 0.0
    %v8484 = vmax.f32 %v8142, 0.0
    %v8485 = vmax.f32 %v8147, 0.0
    %v8486 = vmax.f32 %v8152, 0.0
    %v8487 = vmax.f32 %v8157, 0.0
    %v8488 = vmax.f32 %v8162, 0.0
    %v8489 = vmax.f32 %v8167, 0.0
    %v8490 = vmax.f32 %v8172, 0.0
    %v8491 = vmax.f32 %v8177, 0.0
    %v8492 = vmax.f32 %v8182, 0.0
    %v8493 = vmax.f32 %v8187, 0.0
    %v8494 = vmax.f32 %v8192, 0.0
    %v8495 = vmax.f32 %v8197, 0.0
    %v8496 = vmax.f32 %v8202, 0.0
    %v8497 = vmax.f32 %v8207, 0.0
    %v8498 = vmax.f32 %v8212, 0.0
    %v8499 = vmax.f32 %v8217, 0.0
    %v8500 = vmax.f32 %v8222, 0.0
    %v8501 = vmax.f32 %v8227, 0.0
    %v8502 = vmax.f32 %v8232, 0.0
    %v8503 = vmax.f32 %v8237, 0.0
    %v8504 = vmax.f32 %v8242, 0.0
    %v8505 = vmax.f32 %v8247, 0.0
    %v8506 = vmax.f32 %v8252, 0.0
    %v8507 = vmax.f32 %v8257, 0.0
    %v8508 = vmax.f32 %v8262, 0.0
    %v8509 = vmax.f32 %v8267, 0.0
    %v8510 = vmax.f32 %v8272, 0.0
    %v8511 = vmax.f32 %v8277, 0.0
    %v8512 = vmax.f32 %v8282, 0.0
    %v8513 = vmax.f32 %v8287, 0.0
    %v8514 = vmax.f32 %v8292, 0.0
    %v8515 = vmax.f32 %v8297, 0.0
    %v8516 = vmax.f32 %v8302, 0.0
    %v8517 = vmax.f32 %v8307, 0.0
    %v8518 = vmax.f32 %v8312, 0.0
    %v8519 = vmax.f32 %v8317, 0.0
    %v8520 = vmax.f32 %v8322, 0.0
    %v8521 = vmax.f32 %v8327, 0.0
    %v8522 = vmax.f32 %v8332, 0.0
    %v8523 = vmax.f32 %v8337, 0.0
    %v8524 = vmax.f32 %v8342, 0.0
    %v8525 = vmax.f32 %v8347, 0.0
    %v8526 = vmax.f32 %v8352, 0.0
    %v8527 = vmax.f32 %v8357, 0.0
    %v8528 = vmax.f32 %v8362, 0.0
    %v8529 = vmax.f32 %v8367, 0.0
    %v8530 = vmax.f32 %v8372, 0.0
    %v8531 = vmax.f32 %v8377, 0.0
    %v8532 = vmax.f32 %v8382, 0.0
    %v8533 = vmax.f32 %v8387, 0.0
    %v8534 = vmax.f32 %v8392, 0.0
    %v8535 = vmax.f32 %v8397, 0.0
    %v8536 = vmax.f32 %v8402, 0.0
    %v8537 = vmax.f32 %v8407, 0.0
    %v8538 = vld [vmem:[%s12] sm:$0xff]
    %v8539 = vld [vmem:[%s12 + $0x8] sm:$0xff]
    %v8540 = vld [vmem:[%s12 + $0x10] sm:$0xff]
    %v8541 = vld [vmem:[%s12 + $0x18] sm:$0xff]
    %v8542 = vld [vmem:[%s12 + $0x20] sm:$0xff]
    %v8543 = vld [vmem:[%s12 + $0x28] sm:$0xff]
    %v8544 = vld [vmem:[%s12 + $0x30] sm:$0xff]
    %v8545 = vld [vmem:[%s12 + $0x38] sm:$0xff]
    %v8546 = vld [vmem:[%s13] sm:$0x1]
    %v8548 = vlaneseq
    %v8549 = vshrl.u32 %v8548, 7
    %v8550 = vsub.s32 0, %v8549
    %v8551 = vrot.slane %v8546, %v8550
    %v8554 = vsel %vm7320, %v8410, 0
    %v8557 = vsel %vm7320, %v8411, 0
    %v8560 = vsel %vm7320, %v8412, 0
    %v8563 = vsel %vm7320, %v8413, 0
    %v8566 = vsel %vm7320, %v8414, 0
    %v8569 = vsel %vm7320, %v8415, 0
    %v8572 = vsel %vm7320, %v8416, 0
    %v8575 = vsel %vm7320, %v8417, 0
    %v8578 = vsel %vm7320, %v8418, 0
    %v8581 = vsel %vm7320, %v8419, 0
    %v8584 = vsel %vm7320, %v8420, 0
    %v8587 = vsel %vm7320, %v8421, 0
    %v8590 = vsel %vm7320, %v8422, 0
    %v8593 = vsel %vm7320, %v8423, 0
    %v8596 = vsel %vm7320, %v8424, 0
    %v8599 = vsel %vm7320, %v8425, 0
    %v8602 = vsel %vm7320, %v8426, 0
    %v8605 = vsel %vm7320, %v8427, 0
    %v8608 = vsel %vm7320, %v8428, 0
    %v8611 = vsel %vm7320, %v8429, 0
    %v8614 = vsel %vm7320, %v8430, 0
    %v8617 = vsel %vm7320, %v8431, 0
    %v8620 = vsel %vm7320, %v8432, 0
    %v8623 = vsel %vm7320, %v8433, 0
    %v8626 = vsel %vm7320, %v8434, 0
    %v8629 = vsel %vm7320, %v8435, 0
    %v8632 = vsel %vm7320, %v8436, 0
    %v8635 = vsel %vm7320, %v8437, 0
    %v8638 = vsel %vm7320, %v8438, 0
    %v8641 = vsel %vm7320, %v8439, 0
    %v8644 = vsel %vm7320, %v8440, 0
    %v8647 = vsel %vm7320, %v8441, 0
    %v8650 = vsel %vm7320, %v8442, 0
    %v8653 = vsel %vm7320, %v8443, 0
    %v8656 = vsel %vm7320, %v8444, 0
    %v8659 = vsel %vm7320, %v8445, 0
    %v8662 = vsel %vm7320, %v8446, 0
    %v8665 = vsel %vm7320, %v8447, 0
    %v8668 = vsel %vm7320, %v8448, 0
    %v8671 = vsel %vm7320, %v8449, 0
    %v8674 = vsel %vm7320, %v8450, 0
    %v8677 = vsel %vm7320, %v8451, 0
    %v8680 = vsel %vm7320, %v8452, 0
    %v8683 = vsel %vm7320, %v8453, 0
    %v8686 = vsel %vm7320, %v8454, 0
    %v8689 = vsel %vm7320, %v8455, 0
    %v8692 = vsel %vm7320, %v8456, 0
    %v8695 = vsel %vm7320, %v8457, 0
    %v8698 = vsel %vm7320, %v8458, 0
    %v8701 = vsel %vm7320, %v8459, 0
    %v8704 = vsel %vm7320, %v8460, 0
    %v8707 = vsel %vm7320, %v8461, 0
    %v8710 = vsel %vm7320, %v8462, 0
    %v8713 = vsel %vm7320, %v8463, 0
    %v8716 = vsel %vm7320, %v8464, 0
    %v8719 = vsel %vm7320, %v8465, 0
    %v8722 = vsel %vm7320, %v8466, 0
    %v8725 = vsel %vm7320, %v8467, 0
    %v8728 = vsel %vm7320, %v8468, 0
    %v8731 = vsel %vm7320, %v8469, 0
    %v8734 = vsel %vm7320, %v8470, 0
    %v8737 = vsel %vm7320, %v8471, 0
    %v8740 = vsel %vm7320, %v8472, 0
    %v8743 = vsel %vm7320, %v8473, 0
    %v8746 = vsel %vm7320, %v8474, 0
    %v8749 = vsel %vm7320, %v8475, 0
    %v8752 = vsel %vm7320, %v8476, 0
    %v8755 = vsel %vm7320, %v8477, 0
    %v8758 = vsel %vm7320, %v8478, 0
    %v8761 = vsel %vm7320, %v8479, 0
    %v8764 = vsel %vm7320, %v8480, 0
    %v8767 = vsel %vm7320, %v8481, 0
    %v8770 = vsel %vm7320, %v8482, 0
    %v8773 = vsel %vm7320, %v8483, 0
    %v8776 = vsel %vm7320, %v8484, 0
    %v8779 = vsel %vm7320, %v8485, 0
    %v8782 = vsel %vm7320, %v8486, 0
    %v8785 = vsel %vm7320, %v8487, 0
    %v8788 = vsel %vm7320, %v8488, 0
    %v8791 = vsel %vm7320, %v8489, 0
    %v8794 = vsel %vm7320, %v8490, 0
    %v8797 = vsel %vm7320, %v8491, 0
    %v8800 = vsel %vm7320, %v8492, 0
    %v8803 = vsel %vm7320, %v8493, 0
    %v8806 = vsel %vm7320, %v8494, 0
    %v8809 = vsel %vm7320, %v8495, 0
    %v8812 = vsel %vm7320, %v8496, 0
    %v8815 = vsel %vm7320, %v8497, 0
    %v8818 = vsel %vm7320, %v8498, 0
    %v8821 = vsel %vm7320, %v8499, 0
    %v8824 = vsel %vm7320, %v8500, 0
    %v8827 = vsel %vm7320, %v8501, 0
    %v8830 = vsel %vm7320, %v8502, 0
    %v8833 = vsel %vm7320, %v8503, 0
    %v8836 = vsel %vm7320, %v8504, 0
    %v8839 = vsel %vm7320, %v8505, 0
    %v8842 = vsel %vm7320, %v8506, 0
    %v8845 = vsel %vm7320, %v8507, 0
    %v8848 = vsel %vm7320, %v8508, 0
    %v8851 = vsel %vm7320, %v8509, 0
    %v8854 = vsel %vm7320, %v8510, 0
    %v8857 = vsel %vm7320, %v8511, 0
    %v8860 = vsel %vm7320, %v8512, 0
    %v8863 = vsel %vm7320, %v8513, 0
    %v8866 = vsel %vm7320, %v8514, 0
    %v8869 = vsel %vm7320, %v8515, 0
    %v8872 = vsel %vm7320, %v8516, 0
    %v8875 = vsel %vm7320, %v8517, 0
    %v8878 = vsel %vm7320, %v8518, 0
    %v8881 = vsel %vm7320, %v8519, 0
    %v8884 = vsel %vm7320, %v8520, 0
    %v8887 = vsel %vm7320, %v8521, 0
    %v8890 = vsel %vm7320, %v8522, 0
    %v8893 = vsel %vm7320, %v8523, 0
    %v8896 = vsel %vm7320, %v8524, 0
    %v8899 = vsel %vm7320, %v8525, 0
    %v8902 = vsel %vm7320, %v8526, 0
    %v8905 = vsel %vm7320, %v8527, 0
    %v8908 = vsel %vm7320, %v8528, 0
    %v8911 = vsel %vm7320, %v8529, 0
    %v8914 = vsel %vm7320, %v8530, 0
    %v8917 = vsel %vm7320, %v8531, 0
    %v8920 = vsel %vm7320, %v8532, 0
    %v8923 = vsel %vm7320, %v8533, 0
    %v8926 = vsel %vm7320, %v8534, 0
    %v8929 = vsel %vm7320, %v8535, 0
    %v8932 = vsel %vm7320, %v8536, 0
    %v8935 = vsel %vm7320, %v8537, 0
    %8937 = vmatprep.subr.mxu0 0.0
    %8938 = vmatpush1.msra.mxu0 %v8538
    %8939 = vmatprep.subr.mxu0 0.0
    %8940 = vmatpush1.msra.mxu0 %v8539
    %8941 = vmatprep.subr.mxu0 0.0
    %8942 = vmatpush1.msra.mxu0 %v8540
    %8943 = vmatprep.subr.mxu0 0.0
    %8944 = vmatpush1.msra.mxu0 %v8541
    %8945 = vmatprep.subr.mxu0 0.0
    %8946 = vmatpush1.msra.mxu0 %v8542
    %8947 = vmatprep.subr.mxu0 0.0
    %8948 = vmatpush1.msra.mxu0 %v8543
    %8949 = vmatprep.subr.mxu0 0.0
    %8950 = vmatpush1.msra.mxu0 %v8544
    %8951 = vmatprep.subr.mxu0 0.0
    %8952 = vmatpush1.msra.mxu0 %v8545
    %8953 = vmatprep.subr.mxu0 0.0
    %8954 = vmatpush1.msra.mxu0 0.0
    %8955 = vmatprep.subr.mxu0 0.0
    %8956 = vmatpush1.msra.mxu0 0.0
    %8957 = vmatprep.subr.mxu0 0.0
    %8958 = vmatpush1.msra.mxu0 0.0
    %8959 = vmatprep.subr.mxu0 0.0
    %8960 = vmatpush1.msra.mxu0 0.0
    %8961 = vmatprep.subr.mxu0 0.0
    %8962 = vmatpush1.msra.mxu0 0.0
    %8963 = vmatprep.subr.mxu0 0.0
    %8964 = vmatpush1.msra.mxu0 0.0
    %8965 = vmatprep.subr.mxu0 0.0
    %8966 = vmatpush1.msra.mxu0 0.0
    %8967 = vmatprep.subr.mxu0 0.0
    %8968 = vmatpush1.msra.mxu0 0.0
    %8969 = vmatprep.subr.mxu0 0.0
    %8970 = vmatpush1.msra.mxu0 0.0
    %8971 = vmatprep.subr.mxu0 0.0
    %8972 = vmatpush1.msra.mxu0 0.0
    %8973 = vmatprep.subr.mxu0 0.0
    %8974 = vmatpush1.msra.mxu0 0.0
    %8975 = vmatprep.subr.mxu0 0.0
    %8976 = vmatpush1.msra.mxu0 0.0
    %8977 = vmatprep.subr.mxu0 0.0
    %8978 = vmatpush1.msra.mxu0 0.0
    %8979 = vmatprep.subr.mxu0 0.0
    %8980 = vmatpush1.msra.mxu0 0.0
    %8981 = vmatprep.subr.mxu0 0.0
    %8982 = vmatpush1.msra.mxu0 0.0
    %8983 = vmatprep.subr.mxu0 0.0
    %8984 = vmatpush1.msra.mxu0 0.0
    %8985 = vmatprep.subr.mxu0 0.0
    %8986 = vmatpush1.msra.mxu0 0.0
    %8987 = vmatprep.subr.mxu0 0.0
    %8988 = vmatpush1.msra.mxu0 0.0
    %8989 = vmatprep.subr.mxu0 0.0
    %8990 = vmatpush1.msra.mxu0 0.0
    %8991 = vmatprep.subr.mxu0 0.0
    %8992 = vmatpush1.msra.mxu0 0.0
    %8993 = vmatprep.subr.mxu0 0.0
    %8994 = vmatpush1.msra.mxu0 0.0
    %8995 = vmatprep.subr.mxu0 0.0
    %8996 = vmatpush1.msra.mxu0 0.0
    %8997 = vmatprep.subr.mxu0 0.0
    %8998 = vmatpush1.msra.mxu0 0.0
    %8999 = vmatprep.subr.mxu0 0.0
    %9000 = vmatpush1.msra.mxu0 0.0
    %9001 = vmatprep.mubr.f32.mxu0 0.0
    %9002 = vmatmul.mubr.f32.gmra.mrb[0].mxu0 %v8554
    %v9003 = vpop.f32.mrb[0].mxu0
    %v9004 = vadd.f32 %v8551, %v9003
    %v9005 = vpop.f32.mrb[0].mxu0
    %9006 = vmatprep.mubr.f32.mxu0 0.0
    %9007 = vmatmul.mubr.f32.gmra.mrb[0].mxu0 %v8557
    %v9008 = vpop.f32.mrb[0].mxu0
    %v9009 = vadd.f32 %v8551, %v9008
    %v9010 = vpop.f32.mrb[0].mxu0
    %9011 = vmatprep.mubr.f32.mxu0 0.0
    %9012 = vmatmul.mubr.f32.gmra.mrb[0].mxu0 %v8560
    %v9013 = vpop.f32.mrb[0].mxu0
    %v9014 = vadd.f32 %v8551, %v9013
    %v9015 = vpop.f32.mrb[0].mxu0
    %9016 = vmatprep.mubr.f32.mxu0 0.0
    %9017 = vmatmul.mubr.f32.gmra.mrb[0].mxu0 %v8563
    %v9018 = vpop.f32.mrb[0].mxu0
    %v9019 = vadd.f32 %v8551, %v9018
    %v9020 = vpop.f32.mrb[0].mxu0
    %9021 = vmatprep.mubr.f32.mxu0 0.0
    %9022 = vmatmul.mubr.f32.gmra.mrb[0].mxu0 %v8566
    %v9023 = vpop.f32.mrb[0].mxu0
    %v9024 = vadd.f32 %v8551, %v9023
    %v9025 = vpop.f32.mrb[0].mxu0
    %9026 = vmatprep.mubr.f32.mxu0 0.0
    %9027 = vmatmul.mubr.f32.gmra.mrb[0].mxu0 %v8569
    %v9028 = vpop.f32.mrb[0].mxu0
    %v9029 = vadd.f32 %v8551, %v9028
    %v9030 = vpop.f32.mrb[0].mxu0
    %9031 = vmatprep.mubr.f32.mxu0 0.0
    %9032 = vmatmul.mubr.f32.gmra.mrb[0].mxu0 %v8572
    %v9033 = vpop.f32.mrb[0].mxu0
    %v9034 = vadd.f32 %v8551, %v9033
    %v9035 = vpop.f32.mrb[0].mxu0
    %9036 = vmatprep.mubr.f32.mxu0 0.0
    %9037 = vmatmul.mubr.f32.gmra.mrb[0].mxu0 %v8575
    %v9038 = vpop.f32.mrb[0].mxu0
    %v9039 = vadd.f32 %v8551, %v9038
    %v9040 = vpop.f32.mrb[0].mxu0
    %9041 = vmatprep.mubr.f32.mxu0 0.0
    %9042 = vmatmul.mubr.f32.gmra.mrb[0].mxu0 %v8578
    %v9043 = vpop.f32.mrb[0].mxu0
    %v9044 = vadd.f32 %v8551, %v9043
    %v9045 = vpop.f32.mrb[0].mxu0
    %9046 = vmatprep.mubr.f32.mxu0 0.0
    %9047 = vmatmul.mubr.f32.gmra.mrb[0].mxu0 %v8581
    %v9048 = vpop.f32.mrb[0].mxu0
    %v9049 = vadd.f32 %v8551, %v9048
    %v9050 = vpop.f32.mrb[0].mxu0
    %9051 = vmatprep.mubr.f32.mxu0 0.0
    %9052 = vmatmul.mubr.f32.gmra.mrb[0].mxu0 %v8584
    %v9053 = vpop.f32.mrb[0].mxu0
    %v9054 = vadd.f32 %v8551, %v9053
    %v9055 = vpop.f32.mrb[0].mxu0
    %9056 = vmatprep.mubr.f32.mxu0 0.0
    %9057 = vmatmul.mubr.f32.gmra.mrb[0].mxu0 %v8587
    %v9058 = vpop.f32.mrb[0].mxu0
    %v9059 = vadd.f32 %v8551, %v9058
    %v9060 = vpop.f32.mrb[0].mxu0
    %9061 = vmatprep.mubr.f32.mxu0 0.0
    %9062 = vmatmul.mubr.f32.gmra.mrb[0].mxu0 %v8590
    %v9063 = vpop.f32.mrb[0].mxu0
    %v9064 = vadd.f32 %v8551, %v9063
    %v9065 = vpop.f32.mrb[0].mxu0
    %9066 = vmatprep.mubr.f32.mxu0 0.0
    %9067 = vmatmul.mubr.f32.gmra.mrb[0].mxu0 %v8593
    %v9068 = vpop.f32.mrb[0].mxu0
    %v9069 = vadd.f32 %v8551, %v9068
    %v9070 = vpop.f32.mrb[0].mxu0
    %9071 = vmatprep.mubr.f32.mxu0 0.0
    %9072 = vmatmul.mubr.f32.gmra.mrb[0].mxu0 %v8596
    %v9073 = vpop.f32.mrb[0].mxu0
    %v9074 = vadd.f32 %v8551, %v9073
    %v9075 = vpop.f32.mrb[0].mxu0
    %9076 = vmatprep.mubr.f32.mxu0 0.0
    %9077 = vmatmul.mubr.f32.gmra.mrb[0].mxu0 %v8599
    %v9078 = vpop.f32.mrb[0].mxu0
    %v9079 = vadd.f32 %v8551, %v9078
    %v9080 = vpop.f32.mrb[0].mxu0
    %9081 = vmatprep.mubr.f32.mxu0 0.0
    %9082 = vmatmul.mubr.f32.gmra.mrb[0].mxu0 %v8602
    %v9083 = vpop.f32.mrb[0].mxu0
    %v9084 = vadd.f32 %v8551, %v9083
    %v9085 = vpop.f32.mrb[0].mxu0
    %9086 = vmatprep.mubr.f32.mxu0 0.0
    %9087 = vmatmul.mubr.f32.gmra.mrb[0].mxu0 %v8605
    %v9088 = vpop.f32.mrb[0].mxu0
    %v9089 = vadd.f32 %v8551, %v9088
    %v9090 = vpop.f32.mrb[0].mxu0
    %9091 = vmatprep.mubr.f32.mxu0 0.0
    %9092 = vmatmul.mubr.f32.gmra.mrb[0].mxu0 %v8608
    %v9093 = vpop.f32.mrb[0].mxu0
    %v9094 = vadd.f32 %v8551, %v9093
    %v9095 = vpop.f32.mrb[0].mxu0
    %9096 = vmatprep.mubr.f32.mxu0 0.0
    %9097 = vmatmul.mubr.f32.gmra.mrb[0].mxu0 %v8611
    %v9098 = vpop.f32.mrb[0].mxu0
    %v9099 = vadd.f32 %v8551, %v9098
    %v9100 = vpop.f32.mrb[0].mxu0
    %9101 = vmatprep.mubr.f32.mxu0 0.0
    %9102 = vmatmul.mubr.f32.gmra.mrb[0].mxu0 %v8614
    %v9103 = vpop.f32.mrb[0].mxu0
    %v9104 = vadd.f32 %v8551, %v9103
    %v9105 = vpop.f32.mrb[0].mxu0
    %9106 = vmatprep.mubr.f32.mxu0 0.0
    %9107 = vmatmul.mubr.f32.gmra.mrb[0].mxu0 %v8617
    %v9108 = vpop.f32.mrb[0].mxu0
    %v9109 = vadd.f32 %v8551, %v9108
    %v9110 = vpop.f32.mrb[0].mxu0
    %9111 = vmatprep.mubr.f32.mxu0 0.0
    %9112 = vmatmul.mubr.f32.gmra.mrb[0].mxu0 %v8620
    %v9113 = vpop.f32.mrb[0].mxu0
    %v9114 = vadd.f32 %v8551, %v9113
    %v9115 = vpop.f32.mrb[0].mxu0
    %9116 = vmatprep.mubr.f32.mxu0 0.0
    %9117 = vmatmul.mubr.f32.gmra.mrb[0].mxu0 %v8623
    %v9118 = vpop.f32.mrb[0].mxu0
    %v9119 = vadd.f32 %v8551, %v9118
    %v9120 = vpop.f32.mrb[0].mxu0
    %9121 = vmatprep.mubr.f32.mxu0 0.0
    %9122 = vmatmul.mubr.f32.gmra.mrb[0].mxu0 %v8626
    %v9123 = vpop.f32.mrb[0].mxu0
    %v9124 = vadd.f32 %v8551, %v9123
    %v9125 = vpop.f32.mrb[0].mxu0
    %9126 = vmatprep.mubr.f32.mxu0 0.0
    %9127 = vmatmul.mubr.f32.gmra.mrb[0].mxu0 %v8629
    %v9128 = vpop.f32.mrb[0].mxu0
    %v9129 = vadd.f32 %v8551, %v9128
    %v9130 = vpop.f32.mrb[0].mxu0
    %9131 = vmatprep.mubr.f32.mxu0 0.0
    %9132 = vmatmul.mubr.f32.gmra.mrb[0].mxu0 %v8632
    %v9133 = vpop.f32.mrb[0].mxu0
    %v9134 = vadd.f32 %v8551, %v9133
    %v9135 = vpop.f32.mrb[0].mxu0
    %9136 = vmatprep.mubr.f32.mxu0 0.0
    %9137 = vmatmul.mubr.f32.gmra.mrb[0].mxu0 %v8635
    %v9138 = vpop.f32.mrb[0].mxu0
    %v9139 = vadd.f32 %v8551, %v9138
    %v9140 = vpop.f32.mrb[0].mxu0
    %9141 = vmatprep.mubr.f32.mxu0 0.0
    %9142 = vmatmul.mubr.f32.gmra.mrb[0].mxu0 %v8638
    %v9143 = vpop.f32.mrb[0].mxu0
    %v9144 = vadd.f32 %v8551, %v9143
    %v9145 = vpop.f32.mrb[0].mxu0
    %9146 = vmatprep.mubr.f32.mxu0 0.0
    %9147 = vmatmul.mubr.f32.gmra.mrb[0].mxu0 %v8641
    %v9148 = vpop.f32.mrb[0].mxu0
    %v9149 = vadd.f32 %v8551, %v9148
    %v9150 = vpop.f32.mrb[0].mxu0
    %9151 = vmatprep.mubr.f32.mxu0 0.0
    %9152 = vmatmul.mubr.f32.gmra.mrb[0].mxu0 %v8644
    %v9153 = vpop.f32.mrb[0].mxu0
    %v9154 = vadd.f32 %v8551, %v9153
    %v9155 = vpop.f32.mrb[0].mxu0
    %9156 = vmatprep.mubr.f32.mxu0 0.0
    %9157 = vmatmul.mubr.f32.gmra.mrb[0].mxu0 %v8647
    %v9158 = vpop.f32.mrb[0].mxu0
    %v9159 = vadd.f32 %v8551, %v9158
    %v9160 = vpop.f32.mrb[0].mxu0
    %9161 = vmatprep.mubr.f32.mxu0 0.0
    %9162 = vmatmul.mubr.f32.gmra.mrb[0].mxu0 %v8650
    %v9163 = vpop.f32.mrb[0].mxu0
    %v9164 = vadd.f32 %v8551, %v9163
    %v9165 = vpop.f32.mrb[0].mxu0
    %9166 = vmatprep.mubr.f32.mxu0 0.0
    %9167 = vmatmul.mubr.f32.gmra.mrb[0].mxu0 %v8653
    %v9168 = vpop.f32.mrb[0].mxu0
    %v9169 = vadd.f32 %v8551, %v9168
    %v9170 = vpop.f32.mrb[0].mxu0
    %9171 = vmatprep.mubr.f32.mxu0 0.0
    %9172 = vmatmul.mubr.f32.gmra.mrb[0].mxu0 %v8656
    %v9173 = vpop.f32.mrb[0].mxu0
    %v9174 = vadd.f32 %v8551, %v9173
    %v9175 = vpop.f32.mrb[0].mxu0
    %9176 = vmatprep.mubr.f32.mxu0 0.0
    %9177 = vmatmul.mubr.f32.gmra.mrb[0].mxu0 %v8659
    %v9178 = vpop.f32.mrb[0].mxu0
    %v9179 = vadd.f32 %v8551, %v9178
    %v9180 = vpop.f32.mrb[0].mxu0
    %9181 = vmatprep.mubr.f32.mxu0 0.0
    %9182 = vmatmul.mubr.f32.gmra.mrb[0].mxu0 %v8662
    %v9183 = vpop.f32.mrb[0].mxu0
    %v9184 = vadd.f32 %v8551, %v9183
    %v9185 = vpop.f32.mrb[0].mxu0
    %9186 = vmatprep.mubr.f32.mxu0 0.0
    %9187 = vmatmul.mubr.f32.gmra.mrb[0].mxu0 %v8665
    %v9188 = vpop.f32.mrb[0].mxu0
    %v9189 = vadd.f32 %v8551, %v9188
    %v9190 = vpop.f32.mrb[0].mxu0
    %9191 = vmatprep.mubr.f32.mxu0 0.0
    %9192 = vmatmul.mubr.f32.gmra.mrb[0].mxu0 %v8668
    %v9193 = vpop.f32.mrb[0].mxu0
    %v9194 = vadd.f32 %v8551, %v9193
    %v9195 = vpop.f32.mrb[0].mxu0
    %9196 = vmatprep.mubr.f32.mxu0 0.0
    %9197 = vmatmul.mubr.f32.gmra.mrb[0].mxu0 %v8671
    %v9198 = vpop.f32.mrb[0].mxu0
    %v9199 = vadd.f32 %v8551, %v9198
    %v9200 = vpop.f32.mrb[0].mxu0
    %9201 = vmatprep.mubr.f32.mxu0 0.0
    %9202 = vmatmul.mubr.f32.gmra.mrb[0].mxu0 %v8674
    %v9203 = vpop.f32.mrb[0].mxu0
    %v9204 = vadd.f32 %v8551, %v9203
    %v9205 = vpop.f32.mrb[0].mxu0
    %9206 = vmatprep.mubr.f32.mxu0 0.0
    %9207 = vmatmul.mubr.f32.gmra.mrb[0].mxu0 %v8677
    %v9208 = vpop.f32.mrb[0].mxu0
    %v9209 = vadd.f32 %v8551, %v9208
    %v9210 = vpop.f32.mrb[0].mxu0
    %9211 = vmatprep.mubr.f32.mxu0 0.0
    %9212 = vmatmul.mubr.f32.gmra.mrb[0].mxu0 %v8680
    %v9213 = vpop.f32.mrb[0].mxu0
    %v9214 = vadd.f32 %v8551, %v9213
    %v9215 = vpop.f32.mrb[0].mxu0
    %9216 = vmatprep.mubr.f32.mxu0 0.0
    %9217 = vmatmul.mubr.f32.gmra.mrb[0].mxu0 %v8683
    %v9218 = vpop.f32.mrb[0].mxu0
    %v9219 = vadd.f32 %v8551, %v9218
    %v9220 = vpop.f32.mrb[0].mxu0
    %9221 = vmatprep.mubr.f32.mxu0 0.0
    %9222 = vmatmul.mubr.f32.gmra.mrb[0].mxu0 %v8686
    %v9223 = vpop.f32.mrb[0].mxu0
    %v9224 = vadd.f32 %v8551, %v9223
    %v9225 = vpop.f32.mrb[0].mxu0
    %9226 = vmatprep.mubr.f32.mxu0 0.0
    %9227 = vmatmul.mubr.f32.gmra.mrb[0].mxu0 %v8689
    %v9228 = vpop.f32.mrb[0].mxu0
    %v9229 = vadd.f32 %v8551, %v9228
    %v9230 = vpop.f32.mrb[0].mxu0
    %9231 = vmatprep.mubr.f32.mxu0 0.0
    %9232 = vmatmul.mubr.f32.gmra.mrb[0].mxu0 %v8692
    %v9233 = vpop.f32.mrb[0].mxu0
    %v9234 = vadd.f32 %v8551, %v9233
    %v9235 = vpop.f32.mrb[0].mxu0
    %9236 = vmatprep.mubr.f32.mxu0 0.0
    %9237 = vmatmul.mubr.f32.gmra.mrb[0].mxu0 %v8695
    %v9238 = vpop.f32.mrb[0].mxu0
    %v9239 = vadd.f32 %v8551, %v9238
    %v9240 = vpop.f32.mrb[0].mxu0
    %9241 = vmatprep.mubr.f32.mxu0 0.0
    %9242 = vmatmul.mubr.f32.gmra.mrb[0].mxu0 %v8698
    %v9243 = vpop.f32.mrb[0].mxu0
    %v9244 = vadd.f32 %v8551, %v9243
    %v9245 = vpop.f32.mrb[0].mxu0
    %9246 = vmatprep.mubr.f32.mxu0 0.0
    %9247 = vmatmul.mubr.f32.gmra.mrb[0].mxu0 %v8701
    %v9248 = vpop.f32.mrb[0].mxu0
    %v9249 = vadd.f32 %v8551, %v9248
    %v9250 = vpop.f32.mrb[0].mxu0
    %9251 = vmatprep.mubr.f32.mxu0 0.0
    %9252 = vmatmul.mubr.f32.gmra.mrb[0].mxu0 %v8704
    %v9253 = vpop.f32.mrb[0].mxu0
    %v9254 = vadd.f32 %v8551, %v9253
    %v9255 = vpop.f32.mrb[0].mxu0
    %9256 = vmatprep.mubr.f32.mxu0 0.0
    %9257 = vmatmul.mubr.f32.gmra.mrb[0].mxu0 %v8707
    %v9258 = vpop.f32.mrb[0].mxu0
    %v9259 = vadd.f32 %v8551, %v9258
    %v9260 = vpop.f32.mrb[0].mxu0
    %9261 = vmatprep.mubr.f32.mxu0 0.0
    %9262 = vmatmul.mubr.f32.gmra.mrb[0].mxu0 %v8710
    %v9263 = vpop.f32.mrb[0].mxu0
    %v9264 = vadd.f32 %v8551, %v9263
    %v9265 = vpop.f32.mrb[0].mxu0
    %9266 = vmatprep.mubr.f32.mxu0 0.0
    %9267 = vmatmul.mubr.f32.gmra.mrb[0].mxu0 %v8713
    %v9268 = vpop.f32.mrb[0].mxu0
    %v9269 = vadd.f32 %v8551, %v9268
    %v9270 = vpop.f32.mrb[0].mxu0
    %9271 = vmatprep.mubr.f32.mxu0 0.0
    %9272 = vmatmul.mubr.f32.gmra.mrb[0].mxu0 %v8716
    %v9273 = vpop.f32.mrb[0].mxu0
    %v9274 = vadd.f32 %v8551, %v9273
    %v9275 = vpop.f32.mrb[0].mxu0
    %9276 = vmatprep.mubr.f32.mxu0 0.0
    %9277 = vmatmul.mubr.f32.gmra.mrb[0].mxu0 %v8719
    %v9278 = vpop.f32.mrb[0].mxu0
    %v9279 = vadd.f32 %v8551, %v9278
    %v9280 = vpop.f32.mrb[0].mxu0
    %9281 = vmatprep.mubr.f32.mxu0 0.0
    %9282 = vmatmul.mubr.f32.gmra.mrb[0].mxu0 %v8722
    %v9283 = vpop.f32.mrb[0].mxu0
    %v9284 = vadd.f32 %v8551, %v9283
    %v9285 = vpop.f32.mrb[0].mxu0
    %9286 = vmatprep.mubr.f32.mxu0 0.0
    %9287 = vmatmul.mubr.f32.gmra.mrb[0].mxu0 %v8725
    %v9288 = vpop.f32.mrb[0].mxu0
    %v9289 = vadd.f32 %v8551, %v9288
    %v9290 = vpop.f32.mrb[0].mxu0
    %9291 = vmatprep.mubr.f32.mxu0 0.0
    %9292 = vmatmul.mubr.f32.gmra.mrb[0].mxu0 %v8728
    %v9293 = vpop.f32.mrb[0].mxu0
    %v9294 = vadd.f32 %v8551, %v9293
    %v9295 = vpop.f32.mrb[0].mxu0
    %9296 = vmatprep.mubr.f32.mxu0 0.0
    %9297 = vmatmul.mubr.f32.gmra.mrb[0].mxu0 %v8731
    %v9298 = vpop.f32.mrb[0].mxu0
    %v9299 = vadd.f32 %v8551, %v9298
    %v9300 = vpop.f32.mrb[0].mxu0
    %9301 = vmatprep.mubr.f32.mxu0 0.0
    %9302 = vmatmul.mubr.f32.gmra.mrb[0].mxu0 %v8734
    %v9303 = vpop.f32.mrb[0].mxu0
    %v9304 = vadd.f32 %v8551, %v9303
    %v9305 = vpop.f32.mrb[0].mxu0
    %9306 = vmatprep.mubr.f32.mxu0 0.0
    %9307 = vmatmul.mubr.f32.gmra.mrb[0].mxu0 %v8737
    %v9308 = vpop.f32.mrb[0].mxu0
    %v9309 = vadd.f32 %v8551, %v9308
    %v9310 = vpop.f32.mrb[0].mxu0
    %9311 = vmatprep.mubr.f32.mxu0 0.0
    %9312 = vmatmul.mubr.f32.gmra.mrb[0].mxu0 %v8740
    %v9313 = vpop.f32.mrb[0].mxu0
    %v9314 = vadd.f32 %v8551, %v9313
    %v9315 = vpop.f32.mrb[0].mxu0
    %9316 = vmatprep.mubr.f32.mxu0 0.0
    %9317 = vmatmul.mubr.f32.gmra.mrb[0].mxu0 %v8743
    %v9318 = vpop.f32.mrb[0].mxu0
    %v9319 = vadd.f32 %v8551, %v9318
    %v9320 = vpop.f32.mrb[0].mxu0
    %9321 = vmatprep.mubr.f32.mxu0 0.0
    %9322 = vmatmul.mubr.f32.gmra.mrb[0].mxu0 %v8746
    %v9323 = vpop.f32.mrb[0].mxu0
    %v9324 = vadd.f32 %v8551, %v9323
    %v9325 = vpop.f32.mrb[0].mxu0
    %9326 = vmatprep.mubr.f32.mxu0 0.0
    %9327 = vmatmul.mubr.f32.gmra.mrb[0].mxu0 %v8749
    %v9328 = vpop.f32.mrb[0].mxu0
    %v9329 = vadd.f32 %v8551, %v9328
    %v9330 = vpop.f32.mrb[0].mxu0
    %9331 = vmatprep.mubr.f32.mxu0 0.0
    %9332 = vmatmul.mubr.f32.gmra.mrb[0].mxu0 %v8752
    %v9333 = vpop.f32.mrb[0].mxu0
    %v9334 = vadd.f32 %v8551, %v9333
    %v9335 = vpop.f32.mrb[0].mxu0
    %9336 = vmatprep.mubr.f32.mxu0 0.0
    %9337 = vmatmul.mubr.f32.gmra.mrb[0].mxu0 %v8755
    %v9338 = vpop.f32.mrb[0].mxu0
    %v9339 = vadd.f32 %v8551, %v9338
    %v9340 = vpop.f32.mrb[0].mxu0
    %9341 = vmatprep.mubr.f32.mxu0 0.0
    %9342 = vmatmul.mubr.f32.gmra.mrb[0].mxu0 %v8758
    %v9343 = vpop.f32.mrb[0].mxu0
    %v9344 = vadd.f32 %v8551, %v9343
    %v9345 = vpop.f32.mrb[0].mxu0
    %9346 = vmatprep.mubr.f32.mxu0 0.0
    %9347 = vmatmul.mubr.f32.gmra.mrb[0].mxu0 %v8761
    %v9348 = vpop.f32.mrb[0].mxu0
    %v9349 = vadd.f32 %v8551, %v9348
    %v9350 = vpop.f32.mrb[0].mxu0
    %9351 = vmatprep.mubr.f32.mxu0 0.0
    %9352 = vmatmul.mubr.f32.gmra.mrb[0].mxu0 %v8764
    %v9353 = vpop.f32.mrb[0].mxu0
    %v9354 = vadd.f32 %v8551, %v9353
    %v9355 = vpop.f32.mrb[0].mxu0
    %9356 = vmatprep.mubr.f32.mxu0 0.0
    %9357 = vmatmul.mubr.f32.gmra.mrb[0].mxu0 %v8767
    %v9358 = vpop.f32.mrb[0].mxu0
    %v9359 = vadd.f32 %v8551, %v9358
    %v9360 = vpop.f32.mrb[0].mxu0
    %9361 = vmatprep.mubr.f32.mxu0 0.0
    %9362 = vmatmul.mubr.f32.gmra.mrb[0].mxu0 %v8770
    %v9363 = vpop.f32.mrb[0].mxu0
    %v9364 = vadd.f32 %v8551, %v9363
    %v9365 = vpop.f32.mrb[0].mxu0
    %9366 = vmatprep.mubr.f32.mxu0 0.0
    %9367 = vmatmul.mubr.f32.gmra.mrb[0].mxu0 %v8773
    %v9368 = vpop.f32.mrb[0].mxu0
    %v9369 = vadd.f32 %v8551, %v9368
    %v9370 = vpop.f32.mrb[0].mxu0
    %9371 = vmatprep.mubr.f32.mxu0 0.0
    %9372 = vmatmul.mubr.f32.gmra.mrb[0].mxu0 %v8776
    %v9373 = vpop.f32.mrb[0].mxu0
    %v9374 = vadd.f32 %v8551, %v9373
    %v9375 = vpop.f32.mrb[0].mxu0
    %9376 = vmatprep.mubr.f32.mxu0 0.0
    %9377 = vmatmul.mubr.f32.gmra.mrb[0].mxu0 %v8779
    %v9378 = vpop.f32.mrb[0].mxu0
    %v9379 = vadd.f32 %v8551, %v9378
    %v9380 = vpop.f32.mrb[0].mxu0
    %9381 = vmatprep.mubr.f32.mxu0 0.0
    %9382 = vmatmul.mubr.f32.gmra.mrb[0].mxu0 %v8782
    %v9383 = vpop.f32.mrb[0].mxu0
    %v9384 = vadd.f32 %v8551, %v9383
    %v9385 = vpop.f32.mrb[0].mxu0
    %9386 = vmatprep.mubr.f32.mxu0 0.0
    %9387 = vmatmul.mubr.f32.gmra.mrb[0].mxu0 %v8785
    %v9388 = vpop.f32.mrb[0].mxu0
    %v9389 = vadd.f32 %v8551, %v9388
    %v9390 = vpop.f32.mrb[0].mxu0
    %9391 = vmatprep.mubr.f32.mxu0 0.0
    %9392 = vmatmul.mubr.f32.gmra.mrb[0].mxu0 %v8788
    %v9393 = vpop.f32.mrb[0].mxu0
    %v9394 = vadd.f32 %v8551, %v9393
    %v9395 = vpop.f32.mrb[0].mxu0
    %9396 = vmatprep.mubr.f32.mxu0 0.0
    %9397 = vmatmul.mubr.f32.gmra.mrb[0].mxu0 %v8791
    %v9398 = vpop.f32.mrb[0].mxu0
    %v9399 = vadd.f32 %v8551, %v9398
    %v9400 = vpop.f32.mrb[0].mxu0
    %9401 = vmatprep.mubr.f32.mxu0 0.0
    %9402 = vmatmul.mubr.f32.gmra.mrb[0].mxu0 %v8794
    %v9403 = vpop.f32.mrb[0].mxu0
    %v9404 = vadd.f32 %v8551, %v9403
    %v9405 = vpop.f32.mrb[0].mxu0
    %9406 = vmatprep.mubr.f32.mxu0 0.0
    %9407 = vmatmul.mubr.f32.gmra.mrb[0].mxu0 %v8797
    %v9408 = vpop.f32.mrb[0].mxu0
    %v9409 = vadd.f32 %v8551, %v9408
    %v9410 = vpop.f32.mrb[0].mxu0
    %9411 = vmatprep.mubr.f32.mxu0 0.0
    %9412 = vmatmul.mubr.f32.gmra.mrb[0].mxu0 %v8800
    %v9413 = vpop.f32.mrb[0].mxu0
    %v9414 = vadd.f32 %v8551, %v9413
    %v9415 = vpop.f32.mrb[0].mxu0
    %9416 = vmatprep.mubr.f32.mxu0 0.0
    %9417 = vmatmul.mubr.f32.gmra.mrb[0].mxu0 %v8803
    %v9418 = vpop.f32.mrb[0].mxu0
    %v9419 = vadd.f32 %v8551, %v9418
    %v9420 = vpop.f32.mrb[0].mxu0
    %9421 = vmatprep.mubr.f32.mxu0 0.0
    %9422 = vmatmul.mubr.f32.gmra.mrb[0].mxu0 %v8806
    %v9423 = vpop.f32.mrb[0].mxu0
    %v9424 = vadd.f32 %v8551, %v9423
    %v9425 = vpop.f32.mrb[0].mxu0
    %9426 = vmatprep.mubr.f32.mxu0 0.0
    %9427 = vmatmul.mubr.f32.gmra.mrb[0].mxu0 %v8809
    %v9428 = vpop.f32.mrb[0].mxu0
    %v9429 = vadd.f32 %v8551, %v9428
    %v9430 = vpop.f32.mrb[0].mxu0
    %9431 = vmatprep.mubr.f32.mxu0 0.0
    %9432 = vmatmul.mubr.f32.gmra.mrb[0].mxu0 %v8812
    %v9433 = vpop.f32.mrb[0].mxu0
    %v9434 = vadd.f32 %v8551, %v9433
    %v9435 = vpop.f32.mrb[0].mxu0
    %9436 = vmatprep.mubr.f32.mxu0 0.0
    %9437 = vmatmul.mubr.f32.gmra.mrb[0].mxu0 %v8815
    %v9438 = vpop.f32.mrb[0].mxu0
    %v9439 = vadd.f32 %v8551, %v9438
    %v9440 = vpop.f32.mrb[0].mxu0
    %9441 = vmatprep.mubr.f32.mxu0 0.0
    %9442 = vmatmul.mubr.f32.gmra.mrb[0].mxu0 %v8818
    %v9443 = vpop.f32.mrb[0].mxu0
    %v9444 = vadd.f32 %v8551, %v9443
    %v9445 = vpop.f32.mrb[0].mxu0
    %9446 = vmatprep.mubr.f32.mxu0 0.0
    %9447 = vmatmul.mubr.f32.gmra.mrb[0].mxu0 %v8821
    %v9448 = vpop.f32.mrb[0].mxu0
    %v9449 = vadd.f32 %v8551, %v9448
    %v9450 = vpop.f32.mrb[0].mxu0
    %9451 = vmatprep.mubr.f32.mxu0 0.0
    %9452 = vmatmul.mubr.f32.gmra.mrb[0].mxu0 %v8824
    %v9453 = vpop.f32.mrb[0].mxu0
    %v9454 = vadd.f32 %v8551, %v9453
    %v9455 = vpop.f32.mrb[0].mxu0
    %9456 = vmatprep.mubr.f32.mxu0 0.0
    %9457 = vmatmul.mubr.f32.gmra.mrb[0].mxu0 %v8827
    %v9458 = vpop.f32.mrb[0].mxu0
    %v9459 = vadd.f32 %v8551, %v9458
    %v9460 = vpop.f32.mrb[0].mxu0
    %9461 = vmatprep.mubr.f32.mxu0 0.0
    %9462 = vmatmul.mubr.f32.gmra.mrb[0].mxu0 %v8830
    %v9463 = vpop.f32.mrb[0].mxu0
    %v9464 = vadd.f32 %v8551, %v9463
    %v9465 = vpop.f32.mrb[0].mxu0
    %9466 = vmatprep.mubr.f32.mxu0 0.0
    %9467 = vmatmul.mubr.f32.gmra.mrb[0].mxu0 %v8833
    %v9468 = vpop.f32.mrb[0].mxu0
    %v9469 = vadd.f32 %v8551, %v9468
    %v9470 = vpop.f32.mrb[0].mxu0
    %9471 = vmatprep.mubr.f32.mxu0 0.0
    %9472 = vmatmul.mubr.f32.gmra.mrb[0].mxu0 %v8836
    %v9473 = vpop.f32.mrb[0].mxu0
    %v9474 = vadd.f32 %v8551, %v9473
    %v9475 = vpop.f32.mrb[0].mxu0
    %9476 = vmatprep.mubr.f32.mxu0 0.0
    %9477 = vmatmul.mubr.f32.gmra.mrb[0].mxu0 %v8839
    %v9478 = vpop.f32.mrb[0].mxu0
    %v9479 = vadd.f32 %v8551, %v9478
    %v9480 = vpop.f32.mrb[0].mxu0
    %9481 = vmatprep.mubr.f32.mxu0 0.0
    %9482 = vmatmul.mubr.f32.gmra.mrb[0].mxu0 %v8842
    %v9483 = vpop.f32.mrb[0].mxu0
    %v9484 = vadd.f32 %v8551, %v9483
    %v9485 = vpop.f32.mrb[0].mxu0
    %9486 = vmatprep.mubr.f32.mxu0 0.0
    %9487 = vmatmul.mubr.f32.gmra.mrb[0].mxu0 %v8845
    %v9488 = vpop.f32.mrb[0].mxu0
    %v9489 = vadd.f32 %v8551, %v9488
    %v9490 = vpop.f32.mrb[0].mxu0
    %9491 = vmatprep.mubr.f32.mxu0 0.0
    %9492 = vmatmul.mubr.f32.gmra.mrb[0].mxu0 %v8848
    %v9493 = vpop.f32.mrb[0].mxu0
    %v9494 = vadd.f32 %v8551, %v9493
    %v9495 = vpop.f32.mrb[0].mxu0
    %9496 = vmatprep.mubr.f32.mxu0 0.0
    %9497 = vmatmul.mubr.f32.gmra.mrb[0].mxu0 %v8851
    %v9498 = vpop.f32.mrb[0].mxu0
    %v9499 = vadd.f32 %v8551, %v9498
    %v9500 = vpop.f32.mrb[0].mxu0
    %9501 = vmatprep.mubr.f32.mxu0 0.0
    %9502 = vmatmul.mubr.f32.gmra.mrb[0].mxu0 %v8854
    %v9503 = vpop.f32.mrb[0].mxu0
    %v9504 = vadd.f32 %v8551, %v9503
    %v9505 = vpop.f32.mrb[0].mxu0
    %9506 = vmatprep.mubr.f32.mxu0 0.0
    %9507 = vmatmul.mubr.f32.gmra.mrb[0].mxu0 %v8857
    %v9508 = vpop.f32.mrb[0].mxu0
    %v9509 = vadd.f32 %v8551, %v9508
    %v9510 = vpop.f32.mrb[0].mxu0
    %9511 = vmatprep.mubr.f32.mxu0 0.0
    %9512 = vmatmul.mubr.f32.gmra.mrb[0].mxu0 %v8860
    %v9513 = vpop.f32.mrb[0].mxu0
    %v9514 = vadd.f32 %v8551, %v9513
    %v9515 = vpop.f32.mrb[0].mxu0
    %9516 = vmatprep.mubr.f32.mxu0 0.0
    %9517 = vmatmul.mubr.f32.gmra.mrb[0].mxu0 %v8863
    %v9518 = vpop.f32.mrb[0].mxu0
    %v9519 = vadd.f32 %v8551, %v9518
    %v9520 = vpop.f32.mrb[0].mxu0
    %9521 = vmatprep.mubr.f32.mxu0 0.0
    %9522 = vmatmul.mubr.f32.gmra.mrb[0].mxu0 %v8866
    %v9523 = vpop.f32.mrb[0].mxu0
    %v9524 = vadd.f32 %v8551, %v9523
    %v9525 = vpop.f32.mrb[0].mxu0
    %9526 = vmatprep.mubr.f32.mxu0 0.0
    %9527 = vmatmul.mubr.f32.gmra.mrb[0].mxu0 %v8869
    %v9528 = vpop.f32.mrb[0].mxu0
    %v9529 = vadd.f32 %v8551, %v9528
    %v9530 = vpop.f32.mrb[0].mxu0
    %9531 = vmatprep.mubr.f32.mxu0 0.0
    %9532 = vmatmul.mubr.f32.gmra.mrb[0].mxu0 %v8872
    %v9533 = vpop.f32.mrb[0].mxu0
    %v9534 = vadd.f32 %v8551, %v9533
    %v9535 = vpop.f32.mrb[0].mxu0
    %9536 = vmatprep.mubr.f32.mxu0 0.0
    %9537 = vmatmul.mubr.f32.gmra.mrb[0].mxu0 %v8875
    %v9538 = vpop.f32.mrb[0].mxu0
    %v9539 = vadd.f32 %v8551, %v9538
    %v9540 = vpop.f32.mrb[0].mxu0
    %9541 = vmatprep.mubr.f32.mxu0 0.0
    %9542 = vmatmul.mubr.f32.gmra.mrb[0].mxu0 %v8878
    %v9543 = vpop.f32.mrb[0].mxu0
    %v9544 = vadd.f32 %v8551, %v9543
    %v9545 = vpop.f32.mrb[0].mxu0
    %9546 = vmatprep.mubr.f32.mxu0 0.0
    %9547 = vmatmul.mubr.f32.gmra.mrb[0].mxu0 %v8881
    %v9548 = vpop.f32.mrb[0].mxu0
    %v9549 = vadd.f32 %v8551, %v9548
    %v9550 = vpop.f32.mrb[0].mxu0
    %9551 = vmatprep.mubr.f32.mxu0 0.0
    %9552 = vmatmul.mubr.f32.gmra.mrb[0].mxu0 %v8884
    %v9553 = vpop.f32.mrb[0].mxu0
    %v9554 = vadd.f32 %v8551, %v9553
    %v9555 = vpop.f32.mrb[0].mxu0
    %9556 = vmatprep.mubr.f32.mxu0 0.0
    %9557 = vmatmul.mubr.f32.gmra.mrb[0].mxu0 %v8887
    %v9558 = vpop.f32.mrb[0].mxu0
    %v9559 = vadd.f32 %v8551, %v9558
    %v9560 = vpop.f32.mrb[0].mxu0
    %9561 = vmatprep.mubr.f32.mxu0 0.0
    %9562 = vmatmul.mubr.f32.gmra.mrb[0].mxu0 %v8890
    %v9563 = vpop.f32.mrb[0].mxu0
    %v9564 = vadd.f32 %v8551, %v9563
    %v9565 = vpop.f32.mrb[0].mxu0
    %9566 = vmatprep.mubr.f32.mxu0 0.0
    %9567 = vmatmul.mubr.f32.gmra.mrb[0].mxu0 %v8893
    %v9568 = vpop.f32.mrb[0].mxu0
    %v9569 = vadd.f32 %v8551, %v9568
    %v9570 = vpop.f32.mrb[0].mxu0
    %9571 = vmatprep.mubr.f32.mxu0 0.0
    %9572 = vmatmul.mubr.f32.gmra.mrb[0].mxu0 %v8896
    %v9573 = vpop.f32.mrb[0].mxu0
    %v9574 = vadd.f32 %v8551, %v9573
    %v9575 = vpop.f32.mrb[0].mxu0
    %9576 = vmatprep.mubr.f32.mxu0 0.0
    %9577 = vmatmul.mubr.f32.gmra.mrb[0].mxu0 %v8899
    %v9578 = vpop.f32.mrb[0].mxu0
    %v9579 = vadd.f32 %v8551, %v9578
    %v9580 = vpop.f32.mrb[0].mxu0
    %9581 = vmatprep.mubr.f32.mxu0 0.0
    %9582 = vmatmul.mubr.f32.gmra.mrb[0].mxu0 %v8902
    %v9583 = vpop.f32.mrb[0].mxu0
    %v9584 = vadd.f32 %v8551, %v9583
    %v9585 = vpop.f32.mrb[0].mxu0
    %9586 = vmatprep.mubr.f32.mxu0 0.0
    %9587 = vmatmul.mubr.f32.gmra.mrb[0].mxu0 %v8905
    %v9588 = vpop.f32.mrb[0].mxu0
    %v9589 = vadd.f32 %v8551, %v9588
    %v9590 = vpop.f32.mrb[0].mxu0
    %9591 = vmatprep.mubr.f32.mxu0 0.0
    %9592 = vmatmul.mubr.f32.gmra.mrb[0].mxu0 %v8908
    %v9593 = vpop.f32.mrb[0].mxu0
    %v9594 = vadd.f32 %v8551, %v9593
    %v9595 = vpop.f32.mrb[0].mxu0
    %9596 = vmatprep.mubr.f32.mxu0 0.0
    %9597 = vmatmul.mubr.f32.gmra.mrb[0].mxu0 %v8911
    %v9598 = vpop.f32.mrb[0].mxu0
    %v9599 = vadd.f32 %v8551, %v9598
    %v9600 = vpop.f32.mrb[0].mxu0
    %9601 = vmatprep.mubr.f32.mxu0 0.0
    %9602 = vmatmul.mubr.f32.gmra.mrb[0].mxu0 %v8914
    %v9603 = vpop.f32.mrb[0].mxu0
    %v9604 = vadd.f32 %v8551, %v9603
    %v9605 = vpop.f32.mrb[0].mxu0
    %9606 = vmatprep.mubr.f32.mxu0 0.0
    %9607 = vmatmul.mubr.f32.gmra.mrb[0].mxu0 %v8917
    %v9608 = vpop.f32.mrb[0].mxu0
    %v9609 = vadd.f32 %v8551, %v9608
    %v9610 = vpop.f32.mrb[0].mxu0
    %9611 = vmatprep.mubr.f32.mxu0 0.0
    %9612 = vmatmul.mubr.f32.gmra.mrb[0].mxu0 %v8920
    %v9613 = vpop.f32.mrb[0].mxu0
    %v9614 = vadd.f32 %v8551, %v9613
    %v9615 = vpop.f32.mrb[0].mxu0
    %9616 = vmatprep.mubr.f32.mxu0 0.0
    %9617 = vmatmul.mubr.f32.gmra.mrb[0].mxu0 %v8923
    %v9618 = vpop.f32.mrb[0].mxu0
    %v9619 = vadd.f32 %v8551, %v9618
    %v9620 = vpop.f32.mrb[0].mxu0
    %9621 = vmatprep.mubr.f32.mxu0 0.0
    %9622 = vmatmul.mubr.f32.gmra.mrb[0].mxu0 %v8926
    %v9623 = vpop.f32.mrb[0].mxu0
    %v9624 = vadd.f32 %v8551, %v9623
    %v9625 = vpop.f32.mrb[0].mxu0
    %9626 = vmatprep.mubr.f32.mxu0 0.0
    %9627 = vmatmul.mubr.f32.gmra.mrb[0].mxu0 %v8929
    %v9628 = vpop.f32.mrb[0].mxu0
    %v9629 = vadd.f32 %v8551, %v9628
    %v9630 = vpop.f32.mrb[0].mxu0
    %9631 = vmatprep.mubr.f32.mxu0 0.0
    %9632 = vmatmul.mubr.f32.gmra.mrb[0].mxu0 %v8932
    %v9633 = vpop.f32.mrb[0].mxu0
    %v9634 = vadd.f32 %v8551, %v9633
    %v9635 = vpop.f32.mrb[0].mxu0
    %9636 = vmatprep.mubr.f32.mxu0 0.0
    %9637 = vmatmul.mubr.f32.gmra.mrb[0].mxu0 %v8935
    %v9638 = vpop.f32.mrb[0].mxu0
    %v9639 = vadd.f32 %v8551, %v9638
    %v9640 = vpop.f32.mrb[0].mxu0
    %9641 = vdwg.mxu0
    %v9642 = vsel %vm5074, 1, 0
    %v9643 = vsel %vm5075, 1, 0
    %v9644 = vsel %vm5076, 1, 0
    %v9645 = vsel %vm5077, 1, 0
    %v9646 = vsel %vm5078, 1, 0
    %v9647 = vsel %vm5079, 1, 0
    %v9648 = vsel %vm5080, 1, 0
    %v9649 = vsel %vm5081, 1, 0
    %v9650 = vsel %vm5082, 1, 0
    %v9651 = vsel %vm5083, 1, 0
    %v9652 = vsel %vm5084, 1, 0
    %v9653 = vsel %vm5085, 1, 0
    %v9654 = vsel %vm5086, 1, 0
    %v9655 = vsel %vm5087, 1, 0
    %v9656 = vsel %vm5088, 1, 0
    %v9657 = vsel %vm5089, 1, 0
    %v9658 = vsel %vm5090, 1, 0
    %v9659 = vsel %vm5091, 1, 0
    %v9660 = vsel %vm5092, 1, 0
    %v9661 = vsel %vm5093, 1, 0
    %v9662 = vsel %vm5094, 1, 0
    %v9663 = vsel %vm5095, 1, 0
    %v9664 = vsel %vm5096, 1, 0
    %v9665 = vsel %vm5097, 1, 0
    %v9666 = vsel %vm5098, 1, 0
    %v9667 = vsel %vm5099, 1, 0
    %v9668 = vsel %vm5100, 1, 0
    %v9669 = vsel %vm5101, 1, 0
    %v9670 = vsel %vm5102, 1, 0
    %v9671 = vsel %vm5103, 1, 0
    %v9672 = vsel %vm5104, 1, 0
    %v9673 = vsel %vm5105, 1, 0
    %v9674 = vsel %vm5106, 1, 0
    %v9675 = vsel %vm5107, 1, 0
    %v9676 = vsel %vm5108, 1, 0
    %v9677 = vsel %vm5109, 1, 0
    %v9678 = vsel %vm5110, 1, 0
    %v9679 = vsel %vm5111, 1, 0
    %v9680 = vsel %vm5112, 1, 0
    %v9681 = vsel %vm5113, 1, 0
    %v9682 = vsel %vm5114, 1, 0
    %v9683 = vsel %vm5115, 1, 0
    %v9684 = vsel %vm5116, 1, 0
    %v9685 = vsel %vm5117, 1, 0
    %v9686 = vsel %vm5118, 1, 0
    %v9687 = vsel %vm5119, 1, 0
    %v9688 = vsel %vm5120, 1, 0
    %v9689 = vsel %vm5121, 1, 0
    %v9690 = vsel %vm5122, 1, 0
    %v9691 = vsel %vm5123, 1, 0
    %v9692 = vsel %vm5124, 1, 0
    %v9693 = vsel %vm5125, 1, 0
    %v9694 = vsel %vm5126, 1, 0
    %v9695 = vsel %vm5127, 1, 0
    %v9696 = vsel %vm5128, 1, 0
    %v9697 = vsel %vm5129, 1, 0
    %v9698 = vsel %vm5130, 1, 0
    %v9699 = vsel %vm5131, 1, 0
    %v9700 = vsel %vm5132, 1, 0
    %v9701 = vsel %vm5133, 1, 0
    %v9702 = vsel %vm5134, 1, 0
    %v9703 = vsel %vm5135, 1, 0
    %v9704 = vsel %vm5136, 1, 0
    %v9705 = vsel %vm5137, 1, 0
    %v9706 = vsel %vm5138, 1, 0
    %v9707 = vsel %vm5139, 1, 0
    %v9708 = vsel %vm5140, 1, 0
    %v9709 = vsel %vm5141, 1, 0
    %v9710 = vsel %vm5142, 1, 0
    %v9711 = vsel %vm5143, 1, 0
    %v9712 = vsel %vm5144, 1, 0
    %v9713 = vsel %vm5145, 1, 0
    %v9714 = vsel %vm5146, 1, 0
    %v9715 = vsel %vm5147, 1, 0
    %v9716 = vsel %vm5148, 1, 0
    %v9717 = vsel %vm5149, 1, 0
    %v9718 = vsel %vm5150, 1, 0
    %v9719 = vsel %vm5151, 1, 0
    %v9720 = vsel %vm5152, 1, 0
    %v9721 = vsel %vm5153, 1, 0
    %v9722 = vsel %vm5154, 1, 0
    %v9723 = vsel %vm5155, 1, 0
    %v9724 = vsel %vm5156, 1, 0
    %v9725 = vsel %vm5157, 1, 0
    %v9726 = vsel %vm5158, 1, 0
    %v9727 = vsel %vm5159, 1, 0
    %v9728 = vsel %vm5160, 1, 0
    %v9729 = vsel %vm5161, 1, 0
    %v9730 = vsel %vm5162, 1, 0
    %v9731 = vsel %vm5163, 1, 0
    %v9732 = vsel %vm5164, 1, 0
    %v9733 = vsel %vm5165, 1, 0
    %v9734 = vsel %vm5166, 1, 0
    %v9735 = vsel %vm5167, 1, 0
    %v9736 = vsel %vm5168, 1, 0
    %v9737 = vsel %vm5169, 1, 0
    %v9738 = vsel %vm5170, 1, 0
    %v9739 = vsel %vm5171, 1, 0
    %v9740 = vsel %vm5172, 1, 0
    %v9741 = vsel %vm5173, 1, 0
    %v9742 = vsel %vm5174, 1, 0
    %v9743 = vsel %vm5175, 1, 0
    %v9744 = vsel %vm5176, 1, 0
    %v9745 = vsel %vm5177, 1, 0
    %v9746 = vsel %vm5178, 1, 0
    %v9747 = vsel %vm5179, 1, 0
    %v9748 = vsel %vm5180, 1, 0
    %v9749 = vsel %vm5181, 1, 0
    %v9750 = vsel %vm5182, 1, 0
    %v9751 = vsel %vm5183, 1, 0
    %v9752 = vsel %vm5184, 1, 0
    %v9753 = vsel %vm5185, 1, 0
    %v9754 = vsel %vm5186, 1, 0
    %v9755 = vsel %vm5187, 1, 0
    %v9756 = vsel %vm5188, 1, 0
    %v9757 = vsel %vm5189, 1, 0
    %v9758 = vsel %vm5190, 1, 0
    %v9759 = vsel %vm5191, 1, 0
    %v9760 = vsel %vm5192, 1, 0
    %v9761 = vsel %vm5193, 1, 0
    %v9762 = vsel %vm5194, 1, 0
    %v9763 = vsel %vm5195, 1, 0
    %v9764 = vsel %vm5196, 1, 0
    %v9765 = vsel %vm5197, 1, 0
    %v9766 = vsel %vm5198, 1, 0
    %v9767 = vsel %vm5199, 1, 0
    %v9768 = vsel %vm5200, 1, 0
    %v9769 = vsel %vm5201, 1, 0
    %9770 = vset.pattern.permute.xlu0 0
    %9771 = vperm.xlu0 %9770, %v9642
    %v9772 = vpop.permute.xlu0 %9771
    %9773 = vset.pattern.permute.xlu0 0
    %9774 = vperm.xlu0 %9773, %v9643
    %v9775 = vpop.permute.xlu0 %9774
    %9776 = vset.pattern.permute.xlu0 0
    %9777 = vperm.xlu0 %9776, %v9644
    %v9778 = vpop.permute.xlu0 %9777
    %9779 = vset.pattern.permute.xlu0 0
    %9780 = vperm.xlu0 %9779, %v9645
    %v9781 = vpop.permute.xlu0 %9780
    %9782 = vset.pattern.permute.xlu0 0
    %9783 = vperm.xlu0 %9782, %v9646
    %v9784 = vpop.permute.xlu0 %9783
    %9785 = vset.pattern.permute.xlu0 0
    %9786 = vperm.xlu0 %9785, %v9647
    %v9787 = vpop.permute.xlu0 %9786
    %9788 = vset.pattern.permute.xlu0 0
    %9789 = vperm.xlu0 %9788, %v9648
    %v9790 = vpop.permute.xlu0 %9789
    %9791 = vset.pattern.permute.xlu0 0
    %9792 = vperm.xlu0 %9791, %v9649
    %v9793 = vpop.permute.xlu0 %9792
    %9794 = vset.pattern.permute.xlu0 0
    %9795 = vperm.xlu0 %9794, %v9650
    %v9796 = vpop.permute.xlu0 %9795
    %9797 = vset.pattern.permute.xlu0 0
    %9798 = vperm.xlu0 %9797, %v9651
    %v9799 = vpop.permute.xlu0 %9798
    %9800 = vset.pattern.permute.xlu0 0
    %9801 = vperm.xlu0 %9800, %v9652
    %v9802 = vpop.permute.xlu0 %9801
    %9803 = vset.pattern.permute.xlu0 0
    %9804 = vperm.xlu0 %9803, %v9653
    %v9805 = vpop.permute.xlu0 %9804
    %9806 = vset.pattern.permute.xlu0 0
    %9807 = vperm.xlu0 %9806, %v9654
    %v9808 = vpop.permute.xlu0 %9807
    %9809 = vset.pattern.permute.xlu0 0
    %9810 = vperm.xlu0 %9809, %v9655
    %v9811 = vpop.permute.xlu0 %9810
    %9812 = vset.pattern.permute.xlu0 0
    %9813 = vperm.xlu0 %9812, %v9656
    %v9814 = vpop.permute.xlu0 %9813
    %9815 = vset.pattern.permute.xlu0 0
    %9816 = vperm.xlu0 %9815, %v9657
    %v9817 = vpop.permute.xlu0 %9816
    %9818 = vset.pattern.permute.xlu0 0
    %9819 = vperm.xlu0 %9818, %v9658
    %v9820 = vpop.permute.xlu0 %9819
    %9821 = vset.pattern.permute.xlu0 0
    %9822 = vperm.xlu0 %9821, %v9659
    %v9823 = vpop.permute.xlu0 %9822
    %9824 = vset.pattern.permute.xlu0 0
    %9825 = vperm.xlu0 %9824, %v9660
    %v9826 = vpop.permute.xlu0 %9825
    %9827 = vset.pattern.permute.xlu0 0
    %9828 = vperm.xlu0 %9827, %v9661
    %v9829 = vpop.permute.xlu0 %9828
    %9830 = vset.pattern.permute.xlu0 0
    %9831 = vperm.xlu0 %9830, %v9662
    %v9832 = vpop.permute.xlu0 %9831
    %9833 = vset.pattern.permute.xlu0 0
    %9834 = vperm.xlu0 %9833, %v9663
    %v9835 = vpop.permute.xlu0 %9834
    %9836 = vset.pattern.permute.xlu0 0
    %9837 = vperm.xlu0 %9836, %v9664
    %v9838 = vpop.permute.xlu0 %9837
    %9839 = vset.pattern.permute.xlu0 0
    %9840 = vperm.xlu0 %9839, %v9665
    %v9841 = vpop.permute.xlu0 %9840
    %9842 = vset.pattern.permute.xlu0 0
    %9843 = vperm.xlu0 %9842, %v9666
    %v9844 = vpop.permute.xlu0 %9843
    %9845 = vset.pattern.permute.xlu0 0
    %9846 = vperm.xlu0 %9845, %v9667
    %v9847 = vpop.permute.xlu0 %9846
    %9848 = vset.pattern.permute.xlu0 0
    %9849 = vperm.xlu0 %9848, %v9668
    %v9850 = vpop.permute.xlu0 %9849
    %9851 = vset.pattern.permute.xlu0 0
    %9852 = vperm.xlu0 %9851, %v9669
    %v9853 = vpop.permute.xlu0 %9852
    %9854 = vset.pattern.permute.xlu0 0
    %9855 = vperm.xlu0 %9854, %v9670
    %v9856 = vpop.permute.xlu0 %9855
    %9857 = vset.pattern.permute.xlu0 0
    %9858 = vperm.xlu0 %9857, %v9671
    %v9859 = vpop.permute.xlu0 %9858
    %9860 = vset.pattern.permute.xlu0 0
    %9861 = vperm.xlu0 %9860, %v9672
    %v9862 = vpop.permute.xlu0 %9861
    %9863 = vset.pattern.permute.xlu0 0
    %9864 = vperm.xlu0 %9863, %v9673
    %v9865 = vpop.permute.xlu0 %9864
    %9866 = vset.pattern.permute.xlu0 0
    %9867 = vperm.xlu0 %9866, %v9674
    %v9868 = vpop.permute.xlu0 %9867
    %9869 = vset.pattern.permute.xlu0 0
    %9870 = vperm.xlu0 %9869, %v9675
    %v9871 = vpop.permute.xlu0 %9870
    %9872 = vset.pattern.permute.xlu0 0
    %9873 = vperm.xlu0 %9872, %v9676
    %v9874 = vpop.permute.xlu0 %9873
    %9875 = vset.pattern.permute.xlu0 0
    %9876 = vperm.xlu0 %9875, %v9677
    %v9877 = vpop.permute.xlu0 %9876
    %9878 = vset.pattern.permute.xlu0 0
    %9879 = vperm.xlu0 %9878, %v9678
    %v9880 = vpop.permute.xlu0 %9879
    %9881 = vset.pattern.permute.xlu0 0
    %9882 = vperm.xlu0 %9881, %v9679
    %v9883 = vpop.permute.xlu0 %9882
    %9884 = vset.pattern.permute.xlu0 0
    %9885 = vperm.xlu0 %9884, %v9680
    %v9886 = vpop.permute.xlu0 %9885
    %9887 = vset.pattern.permute.xlu0 0
    %9888 = vperm.xlu0 %9887, %v9681
    %v9889 = vpop.permute.xlu0 %9888
    %9890 = vset.pattern.permute.xlu0 0
    %9891 = vperm.xlu0 %9890, %v9682
    %v9892 = vpop.permute.xlu0 %9891
    %9893 = vset.pattern.permute.xlu0 0
    %9894 = vperm.xlu0 %9893, %v9683
    %v9895 = vpop.permute.xlu0 %9894
    %9896 = vset.pattern.permute.xlu0 0
    %9897 = vperm.xlu0 %9896, %v9684
    %v9898 = vpop.permute.xlu0 %9897
    %9899 = vset.pattern.permute.xlu0 0
    %9900 = vperm.xlu0 %9899, %v9685
    %v9901 = vpop.permute.xlu0 %9900
    %9902 = vset.pattern.permute.xlu0 0
    %9903 = vperm.xlu0 %9902, %v9686
    %v9904 = vpop.permute.xlu0 %9903
    %9905 = vset.pattern.permute.xlu0 0
    %9906 = vperm.xlu0 %9905, %v9687
    %v9907 = vpop.permute.xlu0 %9906
    %9908 = vset.pattern.permute.xlu0 0
    %9909 = vperm.xlu0 %9908, %v9688
    %v9910 = vpop.permute.xlu0 %9909
    %9911 = vset.pattern.permute.xlu0 0
    %9912 = vperm.xlu0 %9911, %v9689
    %v9913 = vpop.permute.xlu0 %9912
    %9914 = vset.pattern.permute.xlu0 0
    %9915 = vperm.xlu0 %9914, %v9690
    %v9916 = vpop.permute.xlu0 %9915
    %9917 = vset.pattern.permute.xlu0 0
    %9918 = vperm.xlu0 %9917, %v9691
    %v9919 = vpop.permute.xlu0 %9918
    %9920 = vset.pattern.permute.xlu0 0
    %9921 = vperm.xlu0 %9920, %v9692
    %v9922 = vpop.permute.xlu0 %9921
    %9923 = vset.pattern.permute.xlu0 0
    %9924 = vperm.xlu0 %9923, %v9693
    %v9925 = vpop.permute.xlu0 %9924
    %9926 = vset.pattern.permute.xlu0 0
    %9927 = vperm.xlu0 %9926, %v9694
    %v9928 = vpop.permute.xlu0 %9927
    %9929 = vset.pattern.permute.xlu0 0
    %9930 = vperm.xlu0 %9929, %v9695
    %v9931 = vpop.permute.xlu0 %9930
    %9932 = vset.pattern.permute.xlu0 0
    %9933 = vperm.xlu0 %9932, %v9696
    %v9934 = vpop.permute.xlu0 %9933
    %9935 = vset.pattern.permute.xlu0 0
    %9936 = vperm.xlu0 %9935, %v9697
    %v9937 = vpop.permute.xlu0 %9936
    %9938 = vset.pattern.permute.xlu0 0
    %9939 = vperm.xlu0 %9938, %v9698
    %v9940 = vpop.permute.xlu0 %9939
    %9941 = vset.pattern.permute.xlu0 0
    %9942 = vperm.xlu0 %9941, %v9699
    %v9943 = vpop.permute.xlu0 %9942
    %9944 = vset.pattern.permute.xlu0 0
    %9945 = vperm.xlu0 %9944, %v9700
    %v9946 = vpop.permute.xlu0 %9945
    %9947 = vset.pattern.permute.xlu0 0
    %9948 = vperm.xlu0 %9947, %v9701
    %v9949 = vpop.permute.xlu0 %9948
    %9950 = vset.pattern.permute.xlu0 0
    %9951 = vperm.xlu0 %9950, %v9702
    %v9952 = vpop.permute.xlu0 %9951
    %9953 = vset.pattern.permute.xlu0 0
    %9954 = vperm.xlu0 %9953, %v9703
    %v9955 = vpop.permute.xlu0 %9954
    %9956 = vset.pattern.permute.xlu0 0
    %9957 = vperm.xlu0 %9956, %v9704
    %v9958 = vpop.permute.xlu0 %9957
    %9959 = vset.pattern.permute.xlu0 0
    %9960 = vperm.xlu0 %9959, %v9705
    %v9961 = vpop.permute.xlu0 %9960
    %9962 = vset.pattern.permute.xlu0 0
    %9963 = vperm.xlu0 %9962, %v9706
    %v9964 = vpop.permute.xlu0 %9963
    %9965 = vset.pattern.permute.xlu0 0
    %9966 = vperm.xlu0 %9965, %v9707
    %v9967 = vpop.permute.xlu0 %9966
    %9968 = vset.pattern.permute.xlu0 0
    %9969 = vperm.xlu0 %9968, %v9708
    %v9970 = vpop.permute.xlu0 %9969
    %9971 = vset.pattern.permute.xlu0 0
    %9972 = vperm.xlu0 %9971, %v9709
    %v9973 = vpop.permute.xlu0 %9972
    %9974 = vset.pattern.permute.xlu0 0
    %9975 = vperm.xlu0 %9974, %v9710
    %v9976 = vpop.permute.xlu0 %9975
    %9977 = vset.pattern.permute.xlu0 0
    %9978 = vperm.xlu0 %9977, %v9711
    %v9979 = vpop.permute.xlu0 %9978
    %9980 = vset.pattern.permute.xlu0 0
    %9981 = vperm.xlu0 %9980, %v9712
    %v9982 = vpop.permute.xlu0 %9981
    %9983 = vset.pattern.permute.xlu0 0
    %9984 = vperm.xlu0 %9983, %v9713
    %v9985 = vpop.permute.xlu0 %9984
    %9986 = vset.pattern.permute.xlu0 0
    %9987 = vperm.xlu0 %9986, %v9714
    %v9988 = vpop.permute.xlu0 %9987
    %9989 = vset.pattern.permute.xlu0 0
    %9990 = vperm.xlu0 %9989, %v9715
    %v9991 = vpop.permute.xlu0 %9990
    %9992 = vset.pattern.permute.xlu0 0
    %9993 = vperm.xlu0 %9992, %v9716
    %v9994 = vpop.permute.xlu0 %9993
    %9995 = vset.pattern.permute.xlu0 0
    %9996 = vperm.xlu0 %9995, %v9717
    %v9997 = vpop.permute.xlu0 %9996
    %9998 = vset.pattern.permute.xlu0 0
    %9999 = vperm.xlu0 %9998, %v9718
    %v10000 = vpop.permute.xlu0 %9999
    %10001 = vset.pattern.permute.xlu0 0
    %10002 = vperm.xlu0 %10001, %v9719
    %v10003 = vpop.permute.xlu0 %10002
    %10004 = vset.pattern.permute.xlu0 0
    %10005 = vperm.xlu0 %10004, %v9720
    %v10006 = vpop.permute.xlu0 %10005
    %10007 = vset.pattern.permute.xlu0 0
    %10008 = vperm.xlu0 %10007, %v9721
    %v10009 = vpop.permute.xlu0 %10008
    %10010 = vset.pattern.permute.xlu0 0
    %10011 = vperm.xlu0 %10010, %v9722
    %v10012 = vpop.permute.xlu0 %10011
    %10013 = vset.pattern.permute.xlu0 0
    %10014 = vperm.xlu0 %10013, %v9723
    %v10015 = vpop.permute.xlu0 %10014
    %10016 = vset.pattern.permute.xlu0 0
    %10017 = vperm.xlu0 %10016, %v9724
    %v10018 = vpop.permute.xlu0 %10017
    %10019 = vset.pattern.permute.xlu0 0
    %10020 = vperm.xlu0 %10019, %v9725
    %v10021 = vpop.permute.xlu0 %10020
    %10022 = vset.pattern.permute.xlu0 0
    %10023 = vperm.xlu0 %10022, %v9726
    %v10024 = vpop.permute.xlu0 %10023
    %10025 = vset.pattern.permute.xlu0 0
    %10026 = vperm.xlu0 %10025, %v9727
    %v10027 = vpop.permute.xlu0 %10026
    %10028 = vset.pattern.permute.xlu0 0
    %10029 = vperm.xlu0 %10028, %v9728
    %v10030 = vpop.permute.xlu0 %10029
    %10031 = vset.pattern.permute.xlu0 0
    %10032 = vperm.xlu0 %10031, %v9729
    %v10033 = vpop.permute.xlu0 %10032
    %10034 = vset.pattern.permute.xlu0 0
    %10035 = vperm.xlu0 %10034, %v9730
    %v10036 = vpop.permute.xlu0 %10035
    %10037 = vset.pattern.permute.xlu0 0
    %10038 = vperm.xlu0 %10037, %v9731
    %v10039 = vpop.permute.xlu0 %10038
    %10040 = vset.pattern.permute.xlu0 0
    %10041 = vperm.xlu0 %10040, %v9732
    %v10042 = vpop.permute.xlu0 %10041
    %10043 = vset.pattern.permute.xlu0 0
    %10044 = vperm.xlu0 %10043, %v9733
    %v10045 = vpop.permute.xlu0 %10044
    %10046 = vset.pattern.permute.xlu0 0
    %10047 = vperm.xlu0 %10046, %v9734
    %v10048 = vpop.permute.xlu0 %10047
    %10049 = vset.pattern.permute.xlu0 0
    %10050 = vperm.xlu0 %10049, %v9735
    %v10051 = vpop.permute.xlu0 %10050
    %10052 = vset.pattern.permute.xlu0 0
    %10053 = vperm.xlu0 %10052, %v9736
    %v10054 = vpop.permute.xlu0 %10053
    %10055 = vset.pattern.permute.xlu0 0
    %10056 = vperm.xlu0 %10055, %v9737
    %v10057 = vpop.permute.xlu0 %10056
    %10058 = vset.pattern.permute.xlu0 0
    %10059 = vperm.xlu0 %10058, %v9738
    %v10060 = vpop.permute.xlu0 %10059
    %10061 = vset.pattern.permute.xlu0 0
    %10062 = vperm.xlu0 %10061, %v9739
    %v10063 = vpop.permute.xlu0 %10062
    %10064 = vset.pattern.permute.xlu0 0
    %10065 = vperm.xlu0 %10064, %v9740
    %v10066 = vpop.permute.xlu0 %10065
    %10067 = vset.pattern.permute.xlu0 0
    %10068 = vperm.xlu0 %10067, %v9741
    %v10069 = vpop.permute.xlu0 %10068
    %10070 = vset.pattern.permute.xlu0 0
    %10071 = vperm.xlu0 %10070, %v9742
    %v10072 = vpop.permute.xlu0 %10071
    %10073 = vset.pattern.permute.xlu0 0
    %10074 = vperm.xlu0 %10073, %v9743
    %v10075 = vpop.permute.xlu0 %10074
    %10076 = vset.pattern.permute.xlu0 0
    %10077 = vperm.xlu0 %10076, %v9744
    %v10078 = vpop.permute.xlu0 %10077
    %10079 = vset.pattern.permute.xlu0 0
    %10080 = vperm.xlu0 %10079, %v9745
    %v10081 = vpop.permute.xlu0 %10080
    %10082 = vset.pattern.permute.xlu0 0
    %10083 = vperm.xlu0 %10082, %v9746
    %v10084 = vpop.permute.xlu0 %10083
    %10085 = vset.pattern.permute.xlu0 0
    %10086 = vperm.xlu0 %10085, %v9747
    %v10087 = vpop.permute.xlu0 %10086
    %10088 = vset.pattern.permute.xlu0 0
    %10089 = vperm.xlu0 %10088, %v9748
    %v10090 = vpop.permute.xlu0 %10089
    %10091 = vset.pattern.permute.xlu0 0
    %10092 = vperm.xlu0 %10091, %v9749
    %v10093 = vpop.permute.xlu0 %10092
    %10094 = vset.pattern.permute.xlu0 0
    %10095 = vperm.xlu0 %10094, %v9750
    %v10096 = vpop.permute.xlu0 %10095
    %10097 = vset.pattern.permute.xlu0 0
    %10098 = vperm.xlu0 %10097, %v9751
    %v10099 = vpop.permute.xlu0 %10098
    %10100 = vset.pattern.permute.xlu0 0
    %10101 = vperm.xlu0 %10100, %v9752
    %v10102 = vpop.permute.xlu0 %10101
    %10103 = vset.pattern.permute.xlu0 0
    %10104 = vperm.xlu0 %10103, %v9753
    %v10105 = vpop.permute.xlu0 %10104
    %10106 = vset.pattern.permute.xlu0 0
    %10107 = vperm.xlu0 %10106, %v9754
    %v10108 = vpop.permute.xlu0 %10107
    %10109 = vset.pattern.permute.xlu0 0
    %10110 = vperm.xlu0 %10109, %v9755
    %v10111 = vpop.permute.xlu0 %10110
    %10112 = vset.pattern.permute.xlu0 0
    %10113 = vperm.xlu0 %10112, %v9756
    %v10114 = vpop.permute.xlu0 %10113
    %10115 = vset.pattern.permute.xlu0 0
    %10116 = vperm.xlu0 %10115, %v9757
    %v10117 = vpop.permute.xlu0 %10116
    %10118 = vset.pattern.permute.xlu0 0
    %10119 = vperm.xlu0 %10118, %v9758
    %v10120 = vpop.permute.xlu0 %10119
    %10121 = vset.pattern.permute.xlu0 0
    %10122 = vperm.xlu0 %10121, %v9759
    %v10123 = vpop.permute.xlu0 %10122
    %10124 = vset.pattern.permute.xlu0 0
    %10125 = vperm.xlu0 %10124, %v9760
    %v10126 = vpop.permute.xlu0 %10125
    %10127 = vset.pattern.permute.xlu0 0
    %10128 = vperm.xlu0 %10127, %v9761
    %v10129 = vpop.permute.xlu0 %10128
    %10130 = vset.pattern.permute.xlu0 0
    %10131 = vperm.xlu0 %10130, %v9762
    %v10132 = vpop.permute.xlu0 %10131
    %10133 = vset.pattern.permute.xlu0 0
    %10134 = vperm.xlu0 %10133, %v9763
    %v10135 = vpop.permute.xlu0 %10134
    %10136 = vset.pattern.permute.xlu0 0
    %10137 = vperm.xlu0 %10136, %v9764
    %v10138 = vpop.permute.xlu0 %10137
    %10139 = vset.pattern.permute.xlu0 0
    %10140 = vperm.xlu0 %10139, %v9765
    %v10141 = vpop.permute.xlu0 %10140
    %10142 = vset.pattern.permute.xlu0 0
    %10143 = vperm.xlu0 %10142, %v9766
    %v10144 = vpop.permute.xlu0 %10143
    %10145 = vset.pattern.permute.xlu0 0
    %10146 = vperm.xlu0 %10145, %v9767
    %v10147 = vpop.permute.xlu0 %10146
    %10148 = vset.pattern.permute.xlu0 0
    %10149 = vperm.xlu0 %10148, %v9768
    %v10150 = vpop.permute.xlu0 %10149
    %10151 = vset.pattern.permute.xlu0 0
    %10152 = vperm.xlu0 %10151, %v9769
    %v10153 = vpop.permute.xlu0 %10152
    %vm10154 = vcmp.eq.s32.totalorder %v9772, 1
    %vm10155 = vcmp.eq.s32.totalorder %v9775, 1
    %vm10156 = vcmp.eq.s32.totalorder %v9778, 1
    %vm10157 = vcmp.eq.s32.totalorder %v9781, 1
    %vm10158 = vcmp.eq.s32.totalorder %v9784, 1
    %vm10159 = vcmp.eq.s32.totalorder %v9787, 1
    %vm10160 = vcmp.eq.s32.totalorder %v9790, 1
    %vm10161 = vcmp.eq.s32.totalorder %v9793, 1
    %vm10162 = vcmp.eq.s32.totalorder %v9796, 1
    %vm10163 = vcmp.eq.s32.totalorder %v9799, 1
    %vm10164 = vcmp.eq.s32.totalorder %v9802, 1
    %vm10165 = vcmp.eq.s32.totalorder %v9805, 1
    %vm10166 = vcmp.eq.s32.totalorder %v9808, 1
    %vm10167 = vcmp.eq.s32.totalorder %v9811, 1
    %vm10168 = vcmp.eq.s32.totalorder %v9814, 1
    %vm10169 = vcmp.eq.s32.totalorder %v9817, 1
    %vm10170 = vcmp.eq.s32.totalorder %v9820, 1
    %vm10171 = vcmp.eq.s32.totalorder %v9823, 1
    %vm10172 = vcmp.eq.s32.totalorder %v9826, 1
    %vm10173 = vcmp.eq.s32.totalorder %v9829, 1
    %vm10174 = vcmp.eq.s32.totalorder %v9832, 1
    %vm10175 = vcmp.eq.s32.totalorder %v9835, 1
    %vm10176 = vcmp.eq.s32.totalorder %v9838, 1
    %vm10177 = vcmp.eq.s32.totalorder %v9841, 1
    %vm10178 = vcmp.eq.s32.totalorder %v9844, 1
    %vm10179 = vcmp.eq.s32.totalorder %v9847, 1
    %vm10180 = vcmp.eq.s32.totalorder %v9850, 1
    %vm10181 = vcmp.eq.s32.totalorder %v9853, 1
    %vm10182 = vcmp.eq.s32.totalorder %v9856, 1
    %vm10183 = vcmp.eq.s32.totalorder %v9859, 1
    %vm10184 = vcmp.eq.s32.totalorder %v9862, 1
    %vm10185 = vcmp.eq.s32.totalorder %v9865, 1
    %vm10186 = vcmp.eq.s32.totalorder %v9868, 1
    %vm10187 = vcmp.eq.s32.totalorder %v9871, 1
    %vm10188 = vcmp.eq.s32.totalorder %v9874, 1
    %vm10189 = vcmp.eq.s32.totalorder %v9877, 1
    %vm10190 = vcmp.eq.s32.totalorder %v9880, 1
    %vm10191 = vcmp.eq.s32.totalorder %v9883, 1
    %vm10192 = vcmp.eq.s32.totalorder %v9886, 1
    %vm10193 = vcmp.eq.s32.totalorder %v9889, 1
    %vm10194 = vcmp.eq.s32.totalorder %v9892, 1
    %vm10195 = vcmp.eq.s32.totalorder %v9895, 1
    %vm10196 = vcmp.eq.s32.totalorder %v9898, 1
    %vm10197 = vcmp.eq.s32.totalorder %v9901, 1
    %vm10198 = vcmp.eq.s32.totalorder %v9904, 1
    %vm10199 = vcmp.eq.s32.totalorder %v9907, 1
    %vm10200 = vcmp.eq.s32.totalorder %v9910, 1
    %vm10201 = vcmp.eq.s32.totalorder %v9913, 1
    %vm10202 = vcmp.eq.s32.totalorder %v9916, 1
    %vm10203 = vcmp.eq.s32.totalorder %v9919, 1
    %vm10204 = vcmp.eq.s32.totalorder %v9922, 1
    %vm10205 = vcmp.eq.s32.totalorder %v9925, 1
    %vm10206 = vcmp.eq.s32.totalorder %v9928, 1
    %vm10207 = vcmp.eq.s32.totalorder %v9931, 1
    %vm10208 = vcmp.eq.s32.totalorder %v9934, 1
    %vm10209 = vcmp.eq.s32.totalorder %v9937, 1
    %vm10210 = vcmp.eq.s32.totalorder %v9940, 1
    %vm10211 = vcmp.eq.s32.totalorder %v9943, 1
    %vm10212 = vcmp.eq.s32.totalorder %v9946, 1
    %vm10213 = vcmp.eq.s32.totalorder %v9949, 1
    %vm10214 = vcmp.eq.s32.totalorder %v9952, 1
    %vm10215 = vcmp.eq.s32.totalorder %v9955, 1
    %vm10216 = vcmp.eq.s32.totalorder %v9958, 1
    %vm10217 = vcmp.eq.s32.totalorder %v9961, 1
    %vm10218 = vcmp.eq.s32.totalorder %v9964, 1
    %vm10219 = vcmp.eq.s32.totalorder %v9967, 1
    %vm10220 = vcmp.eq.s32.totalorder %v9970, 1
    %vm10221 = vcmp.eq.s32.totalorder %v9973, 1
    %vm10222 = vcmp.eq.s32.totalorder %v9976, 1
    %vm10223 = vcmp.eq.s32.totalorder %v9979, 1
    %vm10224 = vcmp.eq.s32.totalorder %v9982, 1
    %vm10225 = vcmp.eq.s32.totalorder %v9985, 1
    %vm10226 = vcmp.eq.s32.totalorder %v9988, 1
    %vm10227 = vcmp.eq.s32.totalorder %v9991, 1
    %vm10228 = vcmp.eq.s32.totalorder %v9994, 1
    %vm10229 = vcmp.eq.s32.totalorder %v9997, 1
    %vm10230 = vcmp.eq.s32.totalorder %v10000, 1
    %vm10231 = vcmp.eq.s32.totalorder %v10003, 1
    %vm10232 = vcmp.eq.s32.totalorder %v10006, 1
    %vm10233 = vcmp.eq.s32.totalorder %v10009, 1
    %vm10234 = vcmp.eq.s32.totalorder %v10012, 1
    %vm10235 = vcmp.eq.s32.totalorder %v10015, 1
    %vm10236 = vcmp.eq.s32.totalorder %v10018, 1
    %vm10237 = vcmp.eq.s32.totalorder %v10021, 1
    %vm10238 = vcmp.eq.s32.totalorder %v10024, 1
    %vm10239 = vcmp.eq.s32.totalorder %v10027, 1
    %vm10240 = vcmp.eq.s32.totalorder %v10030, 1
    %vm10241 = vcmp.eq.s32.totalorder %v10033, 1
    %vm10242 = vcmp.eq.s32.totalorder %v10036, 1
    %vm10243 = vcmp.eq.s32.totalorder %v10039, 1
    %vm10244 = vcmp.eq.s32.totalorder %v10042, 1
    %vm10245 = vcmp.eq.s32.totalorder %v10045, 1
    %vm10246 = vcmp.eq.s32.totalorder %v10048, 1
    %vm10247 = vcmp.eq.s32.totalorder %v10051, 1
    %vm10248 = vcmp.eq.s32.totalorder %v10054, 1
    %vm10249 = vcmp.eq.s32.totalorder %v10057, 1
    %vm10250 = vcmp.eq.s32.totalorder %v10060, 1
    %vm10251 = vcmp.eq.s32.totalorder %v10063, 1
    %vm10252 = vcmp.eq.s32.totalorder %v10066, 1
    %vm10253 = vcmp.eq.s32.totalorder %v10069, 1
    %vm10254 = vcmp.eq.s32.totalorder %v10072, 1
    %vm10255 = vcmp.eq.s32.totalorder %v10075, 1
    %vm10256 = vcmp.eq.s32.totalorder %v10078, 1
    %vm10257 = vcmp.eq.s32.totalorder %v10081, 1
    %vm10258 = vcmp.eq.s32.totalorder %v10084, 1
    %vm10259 = vcmp.eq.s32.totalorder %v10087, 1
    %vm10260 = vcmp.eq.s32.totalorder %v10090, 1
    %vm10261 = vcmp.eq.s32.totalorder %v10093, 1
    %vm10262 = vcmp.eq.s32.totalorder %v10096, 1
    %vm10263 = vcmp.eq.s32.totalorder %v10099, 1
    %vm10264 = vcmp.eq.s32.totalorder %v10102, 1
    %vm10265 = vcmp.eq.s32.totalorder %v10105, 1
    %vm10266 = vcmp.eq.s32.totalorder %v10108, 1
    %vm10267 = vcmp.eq.s32.totalorder %v10111, 1
    %vm10268 = vcmp.eq.s32.totalorder %v10114, 1
    %vm10269 = vcmp.eq.s32.totalorder %v10117, 1
    %vm10270 = vcmp.eq.s32.totalorder %v10120, 1
    %vm10271 = vcmp.eq.s32.totalorder %v10123, 1
    %vm10272 = vcmp.eq.s32.totalorder %v10126, 1
    %vm10273 = vcmp.eq.s32.totalorder %v10129, 1
    %vm10274 = vcmp.eq.s32.totalorder %v10132, 1
    %vm10275 = vcmp.eq.s32.totalorder %v10135, 1
    %vm10276 = vcmp.eq.s32.totalorder %v10138, 1
    %vm10277 = vcmp.eq.s32.totalorder %v10141, 1
    %vm10278 = vcmp.eq.s32.totalorder %v10144, 1
    %vm10279 = vcmp.eq.s32.totalorder %v10147, 1
    %vm10280 = vcmp.eq.s32.totalorder %v10150, 1
    %vm10281 = vcmp.eq.s32.totalorder %v10153, 1
    %v10282 = vsel %vm10154, %v9004, -inf
    %v10283 = vsel %vm10155, %v9009, -inf
    %v10284 = vsel %vm10156, %v9014, -inf
    %v10285 = vsel %vm10157, %v9019, -inf
    %v10286 = vsel %vm10158, %v9024, -inf
    %v10287 = vsel %vm10159, %v9029, -inf
    %v10288 = vsel %vm10160, %v9034, -inf
    %v10289 = vsel %vm10161, %v9039, -inf
    %v10290 = vsel %vm10162, %v9044, -inf
    %v10291 = vsel %vm10163, %v9049, -inf
    %v10292 = vsel %vm10164, %v9054, -inf
    %v10293 = vsel %vm10165, %v9059, -inf
    %v10294 = vsel %vm10166, %v9064, -inf
    %v10295 = vsel %vm10167, %v9069, -inf
    %v10296 = vsel %vm10168, %v9074, -inf
    %v10297 = vsel %vm10169, %v9079, -inf
    %v10298 = vsel %vm10170, %v9084, -inf
    %v10299 = vsel %vm10171, %v9089, -inf
    %v10300 = vsel %vm10172, %v9094, -inf
    %v10301 = vsel %vm10173, %v9099, -inf
    %v10302 = vsel %vm10174, %v9104, -inf
    %v10303 = vsel %vm10175, %v9109, -inf
    %v10304 = vsel %vm10176, %v9114, -inf
    %v10305 = vsel %vm10177, %v9119, -inf
    %v10306 = vsel %vm10178, %v9124, -inf
    %v10307 = vsel %vm10179, %v9129, -inf
    %v10308 = vsel %vm10180, %v9134, -inf
    %v10309 = vsel %vm10181, %v9139, -inf
    %v10310 = vsel %vm10182, %v9144, -inf
    %v10311 = vsel %vm10183, %v9149, -inf
    %v10312 = vsel %vm10184, %v9154, -inf
    %v10313 = vsel %vm10185, %v9159, -inf
    %v10314 = vsel %vm10186, %v9164, -inf
    %v10315 = vsel %vm10187, %v9169, -inf
    %v10316 = vsel %vm10188, %v9174, -inf
    %v10317 = vsel %vm10189, %v9179, -inf
    %v10318 = vsel %vm10190, %v9184, -inf
    %v10319 = vsel %vm10191, %v9189, -inf
    %v10320 = vsel %vm10192, %v9194, -inf
    %v10321 = vsel %vm10193, %v9199, -inf
    %v10322 = vsel %vm10194, %v9204, -inf
    %v10323 = vsel %vm10195, %v9209, -inf
    %v10324 = vsel %vm10196, %v9214, -inf
    %v10325 = vsel %vm10197, %v9219, -inf
    %v10326 = vsel %vm10198, %v9224, -inf
    %v10327 = vsel %vm10199, %v9229, -inf
    %v10328 = vsel %vm10200, %v9234, -inf
    %v10329 = vsel %vm10201, %v9239, -inf
    %v10330 = vsel %vm10202, %v9244, -inf
    %v10331 = vsel %vm10203, %v9249, -inf
    %v10332 = vsel %vm10204, %v9254, -inf
    %v10333 = vsel %vm10205, %v9259, -inf
    %v10334 = vsel %vm10206, %v9264, -inf
    %v10335 = vsel %vm10207, %v9269, -inf
    %v10336 = vsel %vm10208, %v9274, -inf
    %v10337 = vsel %vm10209, %v9279, -inf
    %v10338 = vsel %vm10210, %v9284, -inf
    %v10339 = vsel %vm10211, %v9289, -inf
    %v10340 = vsel %vm10212, %v9294, -inf
    %v10341 = vsel %vm10213, %v9299, -inf
    %v10342 = vsel %vm10214, %v9304, -inf
    %v10343 = vsel %vm10215, %v9309, -inf
    %v10344 = vsel %vm10216, %v9314, -inf
    %v10345 = vsel %vm10217, %v9319, -inf
    %v10346 = vsel %vm10218, %v9324, -inf
    %v10347 = vsel %vm10219, %v9329, -inf
    %v10348 = vsel %vm10220, %v9334, -inf
    %v10349 = vsel %vm10221, %v9339, -inf
    %v10350 = vsel %vm10222, %v9344, -inf
    %v10351 = vsel %vm10223, %v9349, -inf
    %v10352 = vsel %vm10224, %v9354, -inf
    %v10353 = vsel %vm10225, %v9359, -inf
    %v10354 = vsel %vm10226, %v9364, -inf
    %v10355 = vsel %vm10227, %v9369, -inf
    %v10356 = vsel %vm10228, %v9374, -inf
    %v10357 = vsel %vm10229, %v9379, -inf
    %v10358 = vsel %vm10230, %v9384, -inf
    %v10359 = vsel %vm10231, %v9389, -inf
    %v10360 = vsel %vm10232, %v9394, -inf
    %v10361 = vsel %vm10233, %v9399, -inf
    %v10362 = vsel %vm10234, %v9404, -inf
    %v10363 = vsel %vm10235, %v9409, -inf
    %v10364 = vsel %vm10236, %v9414, -inf
    %v10365 = vsel %vm10237, %v9419, -inf
    %v10366 = vsel %vm10238, %v9424, -inf
    %v10367 = vsel %vm10239, %v9429, -inf
    %v10368 = vsel %vm10240, %v9434, -inf
    %v10369 = vsel %vm10241, %v9439, -inf
    %v10370 = vsel %vm10242, %v9444, -inf
    %v10371 = vsel %vm10243, %v9449, -inf
    %v10372 = vsel %vm10244, %v9454, -inf
    %v10373 = vsel %vm10245, %v9459, -inf
    %v10374 = vsel %vm10246, %v9464, -inf
    %v10375 = vsel %vm10247, %v9469, -inf
    %v10376 = vsel %vm10248, %v9474, -inf
    %v10377 = vsel %vm10249, %v9479, -inf
    %v10378 = vsel %vm10250, %v9484, -inf
    %v10379 = vsel %vm10251, %v9489, -inf
    %v10380 = vsel %vm10252, %v9494, -inf
    %v10381 = vsel %vm10253, %v9499, -inf
    %v10382 = vsel %vm10254, %v9504, -inf
    %v10383 = vsel %vm10255, %v9509, -inf
    %v10384 = vsel %vm10256, %v9514, -inf
    %v10385 = vsel %vm10257, %v9519, -inf
    %v10386 = vsel %vm10258, %v9524, -inf
    %v10387 = vsel %vm10259, %v9529, -inf
    %v10388 = vsel %vm10260, %v9534, -inf
    %v10389 = vsel %vm10261, %v9539, -inf
    %v10390 = vsel %vm10262, %v9544, -inf
    %v10391 = vsel %vm10263, %v9549, -inf
    %v10392 = vsel %vm10264, %v9554, -inf
    %v10393 = vsel %vm10265, %v9559, -inf
    %v10394 = vsel %vm10266, %v9564, -inf
    %v10395 = vsel %vm10267, %v9569, -inf
    %v10396 = vsel %vm10268, %v9574, -inf
    %v10397 = vsel %vm10269, %v9579, -inf
    %v10398 = vsel %vm10270, %v9584, -inf
    %v10399 = vsel %vm10271, %v9589, -inf
    %v10400 = vsel %vm10272, %v9594, -inf
    %v10401 = vsel %vm10273, %v9599, -inf
    %v10402 = vsel %vm10274, %v9604, -inf
    %v10403 = vsel %vm10275, %v9609, -inf
    %v10404 = vsel %vm10276, %v9614, -inf
    %v10405 = vsel %vm10277, %v9619, -inf
    %v10406 = vsel %vm10278, %v9624, -inf
    %v10407 = vsel %vm10279, %v9629, -inf
    %v10408 = vsel %vm10280, %v9634, -inf
    %v10409 = vsel %vm10281, %v9639, -inf
    %v10410 = vmax.f32 %v10282, %v10346
    %v10411 = vmax.f32 %v10283, %v10347
    %v10412 = vmax.f32 %v10284, %v10348
    %v10413 = vmax.f32 %v10285, %v10349
    %v10414 = vmax.f32 %v10286, %v10350
    %v10415 = vmax.f32 %v10287, %v10351
    %v10416 = vmax.f32 %v10288, %v10352
    %v10417 = vmax.f32 %v10289, %v10353
    %v10418 = vmax.f32 %v10290, %v10354
    %v10419 = vmax.f32 %v10291, %v10355
    %v10420 = vmax.f32 %v10292, %v10356
    %v10421 = vmax.f32 %v10293, %v10357
    %v10422 = vmax.f32 %v10294, %v10358
    %v10423 = vmax.f32 %v10295, %v10359
    %v10424 = vmax.f32 %v10296, %v10360
    %v10425 = vmax.f32 %v10297, %v10361
    %v10426 = vmax.f32 %v10298, %v10362
    %v10427 = vmax.f32 %v10299, %v10363
    %v10428 = vmax.f32 %v10300, %v10364
    %v10429 = vmax.f32 %v10301, %v10365
    %v10430 = vmax.f32 %v10302, %v10366
    %v10431 = vmax.f32 %v10303, %v10367
    %v10432 = vmax.f32 %v10304, %v10368
    %v10433 = vmax.f32 %v10305, %v10369
    %v10434 = vmax.f32 %v10306, %v10370
    %v10435 = vmax.f32 %v10307, %v10371
    %v10436 = vmax.f32 %v10308, %v10372
    %v10437 = vmax.f32 %v10309, %v10373
    %v10438 = vmax.f32 %v10310, %v10374
    %v10439 = vmax.f32 %v10311, %v10375
    %v10440 = vmax.f32 %v10312, %v10376
    %v10441 = vmax.f32 %v10313, %v10377
    %v10442 = vmax.f32 %v10314, %v10378
    %v10443 = vmax.f32 %v10315, %v10379
    %v10444 = vmax.f32 %v10316, %v10380
    %v10445 = vmax.f32 %v10317, %v10381
    %v10446 = vmax.f32 %v10318, %v10382
    %v10447 = vmax.f32 %v10319, %v10383
    %v10448 = vmax.f32 %v10320, %v10384
    %v10449 = vmax.f32 %v10321, %v10385
    %v10450 = vmax.f32 %v10322, %v10386
    %v10451 = vmax.f32 %v10323, %v10387
    %v10452 = vmax.f32 %v10324, %v10388
    %v10453 = vmax.f32 %v10325, %v10389
    %v10454 = vmax.f32 %v10326, %v10390
    %v10455 = vmax.f32 %v10327, %v10391
    %v10456 = vmax.f32 %v10328, %v10392
    %v10457 = vmax.f32 %v10329, %v10393
    %v10458 = vmax.f32 %v10330, %v10394
    %v10459 = vmax.f32 %v10331, %v10395
    %v10460 = vmax.f32 %v10332, %v10396
    %v10461 = vmax.f32 %v10333, %v10397
    %v10462 = vmax.f32 %v10334, %v10398
    %v10463 = vmax.f32 %v10335, %v10399
    %v10464 = vmax.f32 %v10336, %v10400
    %v10465 = vmax.f32 %v10337, %v10401
    %v10466 = vmax.f32 %v10338, %v10402
    %v10467 = vmax.f32 %v10339, %v10403
    %v10468 = vmax.f32 %v10340, %v10404
    %v10469 = vmax.f32 %v10341, %v10405
    %v10470 = vmax.f32 %v10342, %v10406
    %v10471 = vmax.f32 %v10343, %v10407
    %v10472 = vmax.f32 %v10344, %v10408
    %v10473 = vmax.f32 %v10345, %v10409
    %v10474 = vmax.f32 %v10410, %v10442
    %v10475 = vmax.f32 %v10411, %v10443
    %v10476 = vmax.f32 %v10412, %v10444
    %v10477 = vmax.f32 %v10413, %v10445
    %v10478 = vmax.f32 %v10414, %v10446
    %v10479 = vmax.f32 %v10415, %v10447
    %v10480 = vmax.f32 %v10416, %v10448
    %v10481 = vmax.f32 %v10417, %v10449
    %v10482 = vmax.f32 %v10418, %v10450
    %v10483 = vmax.f32 %v10419, %v10451
    %v10484 = vmax.f32 %v10420, %v10452
    %v10485 = vmax.f32 %v10421, %v10453
    %v10486 = vmax.f32 %v10422, %v10454
    %v10487 = vmax.f32 %v10423, %v10455
    %v10488 = vmax.f32 %v10424, %v10456
    %v10489 = vmax.f32 %v10425, %v10457
    %v10490 = vmax.f32 %v10426, %v10458
    %v10491 = vmax.f32 %v10427, %v10459
    %v10492 = vmax.f32 %v10428, %v10460
    %v10493 = vmax.f32 %v10429, %v10461
    %v10494 = vmax.f32 %v10430, %v10462
    %v10495 = vmax.f32 %v10431, %v10463
    %v10496 = vmax.f32 %v10432, %v10464
    %v10497 = vmax.f32 %v10433, %v10465
    %v10498 = vmax.f32 %v10434, %v10466
    %v10499 = vmax.f32 %v10435, %v10467
    %v10500 = vmax.f32 %v10436, %v10468
    %v10501 = vmax.f32 %v10437, %v10469
    %v10502 = vmax.f32 %v10438, %v10470
    %v10503 = vmax.f32 %v10439, %v10471
    %v10504 = vmax.f32 %v10440, %v10472
    %v10505 = vmax.f32 %v10441, %v10473
    %v10506 = vmax.f32 %v10474, %v10490
    %v10507 = vmax.f32 %v10475, %v10491
    %v10508 = vmax.f32 %v10476, %v10492
    %v10509 = vmax.f32 %v10477, %v10493
    %v10510 = vmax.f32 %v10478, %v10494
    %v10511 = vmax.f32 %v10479, %v10495
    %v10512 = vmax.f32 %v10480, %v10496
    %v10513 = vmax.f32 %v10481, %v10497
    %v10514 = vmax.f32 %v10482, %v10498
    %v10515 = vmax.f32 %v10483, %v10499
    %v10516 = vmax.f32 %v10484, %v10500
    %v10517 = vmax.f32 %v10485, %v10501
    %v10518 = vmax.f32 %v10486, %v10502
    %v10519 = vmax.f32 %v10487, %v10503
    %v10520 = vmax.f32 %v10488, %v10504
    %v10521 = vmax.f32 %v10489, %v10505
    %v10522 = vmax.f32 %v10506, %v10514
    %v10523 = vmax.f32 %v10507, %v10515
    %v10524 = vmax.f32 %v10508, %v10516
    %v10525 = vmax.f32 %v10509, %v10517
    %v10526 = vmax.f32 %v10510, %v10518
    %v10527 = vmax.f32 %v10511, %v10519
    %v10528 = vmax.f32 %v10512, %v10520
    %v10529 = vmax.f32 %v10513, %v10521
    %v10530 = vmax.f32 %v10522, %v10526
    %v10531 = vmax.f32 %v10523, %v10527
    %v10532 = vmax.f32 %v10524, %v10528
    %v10533 = vmax.f32 %v10525, %v10529
    %v10534 = vld [vmem:[#allocation2] sm:$0xff]
    %v10535 = vld [vmem:[#allocation2 + $0x8] sm:$0xff]
    %v10536 = vld [vmem:[#allocation2 + $0x10] sm:$0xff]
    %v10537 = vld [vmem:[#allocation2 + $0x18] sm:$0xff]
    %v10538 = vmax.f32 %v10534, %v10530
    %v10539 = vmax.f32 %v10535, %v10531
    %v10540 = vmax.f32 %v10536, %v10532
    %v10541 = vmax.f32 %v10537, %v10533
    %10542 = vst [vmem:[#allocation2] sm:$0xff] %v10538
    %10543 = vst [vmem:[#allocation2 + $0x8] sm:$0xff] %v10539
    %10544 = vst [vmem:[#allocation2 + $0x10] sm:$0xff] %v10540
    %10545 = vst [vmem:[#allocation2 + $0x18] sm:$0xff] %v10541
    // Predicated region
    $region62: #{tpu_custom_call.1} parent=1 // pred_check
      %p10546 = pneg %p48
    $region63: #{tpu_custom_call.1} parent=1 // pred_check_branch
      %10548 = sbr.rel (%p10546) target = $region65
    $region64: #{tpu_custom_call.1} parent=1 // pred_region
      %v10549 = vld [vmem:[#allocation2] sm:$0xff]
      %v10550 = vld [vmem:[#allocation2 + $0x8] sm:$0xff]
      %v10551 = vld [vmem:[#allocation2 + $0x10] sm:$0xff]
      %v10552 = vld [vmem:[#allocation2 + $0x18] sm:$0xff]
      %vm10553 = vcmp.eq.f32.partialorder %v10549, -inf
      %vm10554 = vcmp.eq.f32.partialorder %v10550, -inf
      %vm10555 = vcmp.eq.f32.partialorder %v10551, -inf
      %vm10556 = vcmp.eq.f32.partialorder %v10552, -inf
      %v10557 = vsel %vm10553, 0.0, %v10549
      %v10558 = vsel %vm10554, 0.0, %v10550
      %v10559 = vsel %vm10555, 0.0, %v10551
      %v10560 = vsel %vm10556, 0.0, %v10552
      %10561 = vst [vmem:[#allocation3] sm:$0xff] %v10557
      %10562 = vst [vmem:[#allocation3 + $0x8] sm:$0xff] %v10558
      %10563 = vst [vmem:[#allocation3 + $0x10] sm:$0xff] %v10559
      %10564 = vst [vmem:[#allocation3 + $0x18] sm:$0xff] %v10560
    $region65: #{tpu_custom_call.1} parent=1 // pred_fallthru
      _
    // Predicated region
    $region66: #{tpu_custom_call.1} parent=1 // pred_check
      _
    $region67: #{tpu_custom_call.1} parent=1 // pred_check_branch
      %10566 = sbr.rel (0) target = $region69
    $region68: #{tpu_custom_call.1} parent=1 // pred_region
      %s10568 = ssub.s32 512, 512
      %10569 = vsyncadd [#allocation4], %s10568
      %s10570 = sshll.u32 [#allocation3], 4
      %s10571 = int_to_ptr.vmem [resolvable:$true] %s10570
      %10576 = dma.vmem_to_hbm [thread:$0]  %s10571, 512, %s14, [#allocation4], 128, 128, 8
    $region69: #{tpu_custom_call.1} parent=1 // pred_fallthru
      _
    // Predicated region
    $region70: #{tpu_custom_call.1} parent=1 // pred_check
      _
    $region71: #{tpu_custom_call.1} parent=1 // pred_check_branch
      %10578 = sbr.rel (0) target = $region73
    $region72: #{tpu_custom_call.1} parent=1 // pred_region
      %10579 = dma.done [#allocation4], 512
    $region73: #{tpu_custom_call.1} parent=1 // pred_fallthru
      _
    %10580 = vsyncpa [#allocation4], 1

</llo_original>
